<compile_context>
chip_gen: v5e
topology: v5e:2x2
jax: 0.10.0
libtpu: 0.0.40
codegen_flags: <defaults>
</compile_context>

<pallas_src>
import functools
import math

import jax
import jax.numpy as jnp
from jax import lax
from jax.experimental import pallas as pl
from jax.experimental.pallas import tpu as pltpu

_PARALLEL = pltpu.CompilerParams(dimension_semantics=("parallel",))


# ----------------------------- in-kernel helpers -----------------------------

def _layernorm_f32(x, a, b, eps):
    # torch module semantics: a * (x - mean) / (std + eps) + b, unbiased std (d-1).
    d = x.shape[-1]
    mean = jnp.mean(x, axis=-1, keepdims=True)
    xc = x - mean
    var = jnp.sum(xc * xc, axis=-1, keepdims=True) * (1.0 / (d - 1))
    inv = pl.reciprocal(jnp.sqrt(var) + eps, approx=True)  # EUP, frees VALU slots
    return a * xc * inv + b


def _mm(a, b):
    # (M, K) @ (K, N); weights stored (K, N) so no transpose needed.
    return jnp.dot(a, b, preferred_element_type=jnp.float32)


def _mm_nt(a, b):
    # (M, K) x (N, K) -> (M, N): contract last dims directly (no materialized .T).
    return lax.dot_general(a, b, (((1,), (1,)), ((), ())),
                           preferred_element_type=jnp.float32)


def _mha_core(nq, kv, mask, wq, bq, wk, bk, wv, bv, wo, bo, *, h, scale):
    # nq: (Sq, D) query input (already normed); kv: (Skv, D); mask: (Sq|1, Skv) f32.
    sq, d = nq.shape
    skv = kv.shape[0]
    dk = d // h
    q = _mm(nq, wq) + bq
    k = _mm(kv, wk) + bk
    v = _mm(kv, wv) + bv
    mask_b = jnp.broadcast_to(mask, (sq, skv))  # hoisted out of the head loop
    out = jnp.zeros((sq, d), jnp.float32)
    for i in range(h):  # static unroll over heads; concat folded into Wo row-slices
        sl = slice(i * dk, (i + 1) * dk)
        s = _mm_nt(q[:, sl], k[:, sl]) * scale                 # (Sq, Skv)
        s = jnp.where(mask_b == 0.0, jnp.float32(-1e9), s)     # masked_fill(mask==0,-1e9)
        s = s - jnp.max(s, axis=-1, keepdims=True)
        p = jnp.exp(s)
        p = p * pl.reciprocal(jnp.sum(p, axis=-1, keepdims=True), approx=True)
        ctx = _mm(p, v[:, sl])                                 # (Sq, dk)
        out = out + _mm(ctx, wo[sl, :])                        # += ctx @ Wo[head rows]
    return out + bo


# --------------------------------- kernels -----------------------------------

def _self_attn_kernel(x_ref, mask_ref, ln_a_ref, ln_b_ref,
                      wq_ref, bq_ref, wk_ref, bk_ref,
                      wv_ref, bv_ref, wo_ref, bo_ref,
                      o_ref, *, h, eps, scale):
    x = x_ref[0].astype(jnp.float32)                       # (S, D)
    nx = _layernorm_f32(x, ln_a_ref[...], ln_b_ref[...], eps)
    attn = _mha_core(nx, nx, mask_ref[0],
                     wq_ref[...], bq_ref[...], wk_ref[...], bk_ref[...],
                     wv_ref[...], bv_ref[...], wo_ref[...], bo_ref[...],
                     h=h, scale=scale)
    o_ref[0] = (x + attn).astype(o_ref.dtype)              # residual in epilogue


def _src_attn_kernel(x_ref, mem_ref, mask_ref, ln_a_ref, ln_b_ref,
                     wq_ref, bq_ref, wk_ref, bk_ref,
                     wv_ref, bv_ref, wo_ref, bo_ref,
                     o_ref, *, h, eps, scale):
    x = x_ref[0].astype(jnp.float32)
    mem = mem_ref[0].astype(jnp.float32)                   # memory is NOT normed
    nx = _layernorm_f32(x, ln_a_ref[...], ln_b_ref[...], eps)
    attn = _mha_core(nx, mem, mask_ref[0],
                     wq_ref[...], bq_ref[...], wk_ref[...], bk_ref[...],
                     wv_ref[...], bv_ref[...], wo_ref[...], bo_ref[...],
                     h=h, scale=scale)
    o_ref[0] = (x + attn).astype(o_ref.dtype)


def _ffn_kernel(x_ref, ln_a_ref, ln_b_ref, w1_ref, b1_ref, w2_ref, b2_ref,
                o_ref, *, eps):
    x = x_ref[0].astype(jnp.float32)
    nx = _layernorm_f32(x, ln_a_ref[...], ln_b_ref[...], eps)
    hdn = jnp.maximum(_mm(nx, w1_ref[...]) + b1_ref[...], 0.0)
    out = _mm(hdn, w2_ref[...]) + b2_ref[...]
    o_ref[0] = (x + out).astype(o_ref.dtype)


def _final_norm_kernel(x_ref, a_ref, b_ref, o_ref, *, eps):
    x = x_ref[0].astype(jnp.float32)
    o_ref[0] = _layernorm_f32(x, a_ref[...], b_ref[...], eps).astype(o_ref.dtype)


# ------------------------------ BlockSpec helpers -----------------------------

def _row_spec(shape):
    # (B, ...) arrays: one batch element per grid step.
    nd = len(shape)
    return pl.BlockSpec((1,) + tuple(shape[1:]), lambda b: (b,) + (0,) * (nd - 1))


def _resident_spec(a):
    # Weights / biases / LN params: same block every grid step -> stays in VMEM.
    nd = a.ndim
    return pl.BlockSpec(a.shape, lambda b: (0,) * nd)


def _mask_spec(mask):
    # (1, Sq, Sk) causal mask is grid-invariant (resident); (B, 1, Sk) indexes by b.
    bm, sqm, sk = mask.shape
    if bm > 1:
        return pl.BlockSpec((1, sqm, sk), lambda b: (b, 0, 0))
    return pl.BlockSpec((1, sqm, sk), lambda b: (0, 0, 0))


# --------------------------------- wrappers -----------------------------------

def self_attn_sublayer(x, mask, ln_a, ln_b, p, h, eps=1e-6):
    B, S, D = x.shape
    scale = 1.0 / math.sqrt(D // h)
    args = (x, mask, ln_a, ln_b, p["wq"], p["bq"], p["wk"], p["bk"],
            p["wv"], p["bv"], p["wo"], p["bo"])
    in_specs = [_row_spec(x.shape), _mask_spec(mask)] + \
               [_resident_spec(a) for a in args[2:]]
    return pl.pallas_call(
        functools.partial(_self_attn_kernel, h=h, eps=eps, scale=scale),
        out_shape=jax.ShapeDtypeStruct(x.shape, x.dtype),
        grid=(B,),
        in_specs=in_specs,
        out_specs=_row_spec(x.shape),
        input_output_aliases={0: 0},
        compiler_params=_PARALLEL,
    )(*args)


def src_attn_sublayer(x, memory, mask, ln_a, ln_b, p, h, eps=1e-6):
    B, S, D = x.shape
    scale = 1.0 / math.sqrt(D // h)
    args = (x, memory, mask, ln_a, ln_b, p["wq"], p["bq"], p["wk"], p["bk"],
            p["wv"], p["bv"], p["wo"], p["bo"])
    in_specs = [_row_spec(x.shape), _row_spec(memory.shape), _mask_spec(mask)] + \
               [_resident_spec(a) for a in args[3:]]
    return pl.pallas_call(
        functools.partial(_src_attn_kernel, h=h, eps=eps, scale=scale),
        out_shape=jax.ShapeDtypeStruct(x.shape, x.dtype),
        grid=(B,),
        in_specs=in_specs,
        out_specs=_row_spec(x.shape),
        input_output_aliases={0: 0},
        compiler_params=_PARALLEL,
    )(*args)


def ffn_sublayer(x, ln_a, ln_b, w1, b1, w2, b2, eps=1e-6):
    B = x.shape[0]
    args = (x, ln_a, ln_b, w1, b1, w2, b2)
    in_specs = [_row_spec(x.shape)] + [_resident_spec(a) for a in args[1:]]
    return pl.pallas_call(
        functools.partial(_ffn_kernel, eps=eps),
        out_shape=jax.ShapeDtypeStruct(x.shape, x.dtype),
        grid=(B,),
        in_specs=in_specs,
        out_specs=_row_spec(x.shape),
        input_output_aliases={0: 0},
        compiler_params=_PARALLEL,
    )(*args)


def final_layer_norm(x, a, b, eps=1e-6):
    B = x.shape[0]
    return pl.pallas_call(
        functools.partial(_final_norm_kernel, eps=eps),
        out_shape=jax.ShapeDtypeStruct(x.shape, x.dtype),
        grid=(B,),
        in_specs=[_row_spec(x.shape), _resident_spec(a), _resident_spec(b)],
        out_specs=_row_spec(x.shape),
        compiler_params=_PARALLEL,
    )(x, a, b)


def my_decoder(x, memory, src_mask, tgt_mask, params, h):
    for lp in params["layers"]:
        x = self_attn_sublayer(x, tgt_mask, lp["ln1_a"], lp["ln1_b"], lp["self_attn"], h)
        x = src_attn_sublayer(x, memory, src_mask, lp["ln2_a"], lp["ln2_b"], lp["src_attn"], h)
        x = ffn_sublayer(x, lp["ln3_a"], lp["ln3_b"], lp["w1"], lp["b1"], lp["w2"], lp["b2"])
    return final_layer_norm(x, params["norm_a"], params["norm_b"])


# ------------------------------ parameter init --------------------------------

def init_params(key, d_model, d_ff, h, n_layers):
    def lin_init(k, din, dout):
        # torch nn.Linear init (uniform +-1/sqrt(fan_in)); stored pre-transposed (din, dout).
        k1, k2 = jax.random.split(k)
        bound = 1.0 / math.sqrt(din)
        w = jax.random.uniform(k1, (din, dout), jnp.float32, -bound, bound)
        b = jax.random.uniform(k2, (1, dout), jnp.float32, -bound, bound)
        return w, b

    def attn_init(k):
        kk = jax.random.split(k, 4)
        wq, bq = lin_init(kk[0], d_model, d_model)
        wk, bk = lin_init(kk[1], d_model, d_model)
        wv, bv = lin_init(kk[2], d_model, d_model)
        wo, bo = lin_init(kk[3], d_model, d_model)
        return dict(wq=wq, bq=bq, wk=wk, bk=bk, wv=wv, bv=bv, wo=wo, bo=bo)

    ones = jnp.ones((1, d_model), jnp.float32)
    zeros = jnp.zeros((1, d_model), jnp.float32)
    layers = []
    keys = jax.random.split(key, n_layers)
    for lk in keys:
        ks = jax.random.split(lk, 4)
        w1, b1 = lin_init(ks[2], d_model, d_ff)
        w2, b2 = lin_init(ks[3], d_ff, d_model)
        layers.append(dict(
            self_attn=attn_init(ks[0]), src_attn=attn_init(ks[1]),
            w1=w1, b1=b1, w2=w2, b2=b2,
            ln1_a=ones, ln1_b=zeros,
            ln2_a=ones, ln2_b=zeros,
            ln3_a=ones, ln3_b=zeros,
        ))
    return dict(layers=layers, norm_a=ones, norm_b=zeros)


if __name__ == "__main__":
    B, S_tgt, S_src = 2, 8, 8
    d_model, d_ff, h, n_layers = 32, 64, 4, 2

    key = jax.random.PRNGKey(0)
    kx, km, kp = jax.random.split(key, 3)
    x = jax.random.normal(kx, (B, S_tgt, d_model), jnp.float32)
    memory = jax.random.normal(km, (B, S_src, d_model), jnp.float32)
    src_mask = jnp.ones((B, 1, S_src), jnp.float32)                   # all src positions visible
    tgt_mask = jnp.tril(jnp.ones((S_tgt, S_tgt), jnp.float32))[None]  # (1, S, S) causal mask

    params = init_params(kp, d_model, d_ff, h, n_layers)

    run = jax.jit(my_decoder, static_argnames=("h",))
    out = run(x, memory, src_mask, tgt_mask, params, h=h)
    out = jax.block_until_ready(out)
    assert out.shape == (B, S_tgt, d_model)
    assert bool(jnp.all(jnp.isfinite(out)))
    print("KERNEL_OK")
</pallas_src>

<mosaic_0001>
module attributes {stable_mosaic.version = 11 : i64} {
  func.func @_ffn_kernel(%arg0: i32, %arg1: memref<1x8x32xf32, #tpu.memory_space<vmem>>, %arg2: memref<1x32xf32, #tpu.memory_space<vmem>>, %arg3: memref<1x32xf32, #tpu.memory_space<vmem>>, %arg4: memref<32x64xf32, #tpu.memory_space<vmem>>, %arg5: memref<1x64xf32, #tpu.memory_space<vmem>>, %arg6: memref<64x32xf32, #tpu.memory_space<vmem>>, %arg7: memref<1x32xf32, #tpu.memory_space<vmem>>, %arg8: memref<1x8x32xf32, #tpu.memory_space<vmem>>) attributes {dimension_semantics = [#tpu.dimension_semantics<parallel>], iteration_bounds = array<i64: 2>, scalar_prefetch = 0 : i64, scratch_operands = 0 : i64, tpu.core_type = #tpu.core_type<tc>, window_params = [{transform_indices = @transform_0, window_bounds = array<i64: 1, 8, 32>}, {pipeline_mode = #tpu.pipeline_mode<synchronous>, transform_indices = @transform_1, window_bounds = array<i64: 1, 32>}, {pipeline_mode = #tpu.pipeline_mode<synchronous>, transform_indices = @transform_2, window_bounds = array<i64: 1, 32>}, {pipeline_mode = #tpu.pipeline_mode<synchronous>, transform_indices = @transform_3, window_bounds = array<i64: 32, 64>}, {pipeline_mode = #tpu.pipeline_mode<synchronous>, transform_indices = @transform_4, window_bounds = array<i64: 1, 64>}, {pipeline_mode = #tpu.pipeline_mode<synchronous>, transform_indices = @transform_5, window_bounds = array<i64: 64, 32>}, {pipeline_mode = #tpu.pipeline_mode<synchronous>, transform_indices = @transform_6, window_bounds = array<i64: 1, 32>}, {transform_indices = @transform_7, window_bounds = array<i64: 1, 8, 32>}]} {
    %c0 = arith.constant 0 : index
    %c0_0 = arith.constant 0 : index
    %c0_1 = arith.constant 0 : index
    %0 = vector.load %arg1[%c0, %c0_0, %c0_1] : memref<1x8x32xf32, #tpu.memory_space<vmem>>, vector<1x8x32xf32>
    %1 = vector.shape_cast %0 : vector<1x8x32xf32> to vector<8x32xf32>
    %c0_2 = arith.constant 0 : index
    %c0_3 = arith.constant 0 : index
    %2 = vector.load %arg2[%c0_2, %c0_3] : memref<1x32xf32, #tpu.memory_space<vmem>>, vector<1x32xf32>
    %c0_4 = arith.constant 0 : index
    %c0_5 = arith.constant 0 : index
    %3 = vector.load %arg3[%c0_4, %c0_5] : memref<1x32xf32, #tpu.memory_space<vmem>>, vector<1x32xf32>
    %cst = arith.constant dense<0.000000e+00> : vector<8xf32>
    %4 = vector.multi_reduction <add>, %1, %cst [1] : vector<8x32xf32> to vector<8xf32>
    %5 = vector.shape_cast %4 : vector<8xf32> to vector<8x1xf32>
    %cst_6 = arith.constant 3.200000e+01 : f32
    %6 = vector.broadcast %cst_6 : f32 to vector<8x1xf32>
    %7 = arith.divf %5, %6 : vector<8x1xf32>
    %8 = vector.broadcast %7 : vector<8x1xf32> to vector<8x32xf32>
    %9 = arith.subf %1, %8 : vector<8x32xf32>
    %10 = arith.mulf %9, %9 : vector<8x32xf32>
    %cst_7 = arith.constant dense<0.000000e+00> : vector<8xf32>
    %11 = vector.multi_reduction <add>, %10, %cst_7 [1] : vector<8x32xf32> to vector<8xf32>
    %12 = vector.shape_cast %11 : vector<8xf32> to vector<8x1xf32>
    %cst_8 = arith.constant 0.0322580636 : f32
    %13 = vector.broadcast %cst_8 : f32 to vector<8x1xf32>
    %14 = arith.mulf %12, %13 : vector<8x1xf32>
    %15 = math.sqrt %14 : vector<8x1xf32>
    %cst_9 = arith.constant 9.99999997E-7 : f32
    %16 = vector.broadcast %cst_9 : f32 to vector<8x1xf32>
    %17 = arith.addf %15, %16 : vector<8x1xf32>
    %18 = tpu.reciprocal %17 {approx = true} : vector<8x1xf32> -> vector<8x1xf32>
    %19 = vector.broadcast %2 : vector<1x32xf32> to vector<8x32xf32>
    %20 = arith.mulf %19, %9 : vector<8x32xf32>
    %21 = vector.broadcast %18 : vector<8x1xf32> to vector<8x32xf32>
    %22 = arith.mulf %20, %21 : vector<8x32xf32>
    %23 = vector.broadcast %3 : vector<1x32xf32> to vector<8x32xf32>
    %24 = arith.addf %22, %23 : vector<8x32xf32>
    %c0_10 = arith.constant 0 : index
    %c0_11 = arith.constant 0 : index
    %25 = vector.load %arg4[%c0_10, %c0_11] : memref<32x64xf32, #tpu.memory_space<vmem>>, vector<32x64xf32>
    %cst_12 = arith.constant dense<0.000000e+00> : vector<8x64xf32>
    %26 = tpu.matmul %24, %25, %cst_12 {dimension_numbers = #tpu.dot_dimension_numbers<[1], [0], [0], [1], [0, 0, 1, 1], [], []>} : vector<8x32xf32>, vector<32x64xf32>, vector<8x64xf32> -> vector<8x64xf32>
    %c0_13 = arith.constant 0 : index
    %c0_14 = arith.constant 0 : index
    %27 = vector.load %arg5[%c0_13, %c0_14] : memref<1x64xf32, #tpu.memory_space<vmem>>, vector<1x64xf32>
    %28 = vector.broadcast %27 : vector<1x64xf32> to vector<8x64xf32>
    %29 = arith.addf %26, %28 : vector<8x64xf32>
    %cst_15 = arith.constant 0.000000e+00 : f32
    %30 = vector.broadcast %cst_15 : f32 to vector<8x64xf32>
    %31 = arith.maximumf %29, %30 : vector<8x64xf32>
    %c0_16 = arith.constant 0 : index
    %c0_17 = arith.constant 0 : index
    %32 = vector.load %arg6[%c0_16, %c0_17] : memref<64x32xf32, #tpu.memory_space<vmem>>, vector<64x32xf32>
    %cst_18 = arith.constant dense<0.000000e+00> : vector<8x32xf32>
    %33 = tpu.matmul %31, %32, %cst_18 {dimension_numbers = #tpu.dot_dimension_numbers<[1], [0], [0], [1], [0, 0, 1, 1], [], []>} : vector<8x64xf32>, vector<64x32xf32>, vector<8x32xf32> -> vector<8x32xf32>
    %c0_19 = arith.constant 0 : index
    %c0_20 = arith.constant 0 : index
    %34 = vector.load %arg7[%c0_19, %c0_20] : memref<1x32xf32, #tpu.memory_space<vmem>>, vector<1x32xf32>
    %35 = vector.broadcast %34 : vector<1x32xf32> to vector<8x32xf32>
    %36 = arith.addf %33, %35 : vector<8x32xf32>
    %37 = arith.addf %1, %36 : vector<8x32xf32>
    %c0_21 = arith.constant 0 : index
    %c0_22 = arith.constant 0 : index
    %c0_23 = arith.constant 0 : index
    %38 = vector.load %arg8[%c0_21, %c0_22, %c0_23] : memref<1x8x32xf32, #tpu.memory_space<vmem>>, vector<1x8x32xf32>
    %39 = vector.shape_cast %38 : vector<1x8x32xf32> to vector<8x32xf32>
    %40 = vector.shape_cast %37 : vector<8x32xf32> to vector<1x8x32xf32>
    tpu.vector_store %arg8[%c0_21, %c0_22, %c0_23], %40 {strides = array<i32>} : memref<1x8x32xf32, #tpu.memory_space<vmem>>, vector<1x8x32xf32>,
    return
  }
  func.func @transform_0(%arg0: i32) -> (i32, i32, i32) {
    %c0_i32 = arith.constant 0 : i32
    %c0_i32_0 = arith.constant 0 : i32
    %c0_i32_1 = arith.constant 0 : i32
    return %arg0, %c0_i32, %c0_i32_0 : i32, i32, i32
  }
  func.func @transform_1(%arg0: i32) -> (i32, i32) {
    %c0_i32 = arith.constant 0 : i32
    %c0_i32_0 = arith.constant 0 : i32
    %c0_i32_1 = arith.constant 0 : i32
    return %c0_i32, %c0_i32_0 : i32, i32
  }
  func.func @transform_2(%arg0: i32) -> (i32, i32) {
    %c0_i32 = arith.constant 0 : i32
    %c0_i32_0 = arith.constant 0 : i32
    %c0_i32_1 = arith.constant 0 : i32
    return %c0_i32, %c0_i32_0 : i32, i32
  }
  func.func @transform_3(%arg0: i32) -> (i32, i32) {
    %c0_i32 = arith.constant 0 : i32
    %c0_i32_0 = arith.constant 0 : i32
    %c0_i32_1 = arith.constant 0 : i32
    return %c0_i32, %c0_i32_0 : i32, i32
  }
  func.func @transform_4(%arg0: i32) -> (i32, i32) {
    %c0_i32 = arith.constant 0 : i32
    %c0_i32_0 = arith.constant 0 : i32
    %c0_i32_1 = arith.constant 0 : i32
    return %c0_i32, %c0_i32_0 : i32, i32
  }
  func.func @transform_5(%arg0: i32) -> (i32, i32) {
    %c0_i32 = arith.constant 0 : i32
    %c0_i32_0 = arith.constant 0 : i32
    %c0_i32_1 = arith.constant 0 : i32
    return %c0_i32, %c0_i32_0 : i32, i32
  }
  func.func @transform_6(%arg0: i32) -> (i32, i32) {
    %c0_i32 = arith.constant 0 : i32
    %c0_i32_0 = arith.constant 0 : i32
    %c0_i32_1 = arith.constant 0 : i32
    return %c0_i32, %c0_i32_0 : i32, i32
  }
  func.func @transform_7(%arg0: i32) -> (i32, i32, i32) {
    %c0_i32 = arith.constant 0 : i32
    %c0_i32_0 = arith.constant 0 : i32
    %c0_i32_1 = arith.constant 0 : i32
    return %arg0, %c0_i32, %c0_i32_0 : i32, i32, i32
  }
}

module attributes {stable_mosaic.version = 11 : i64} {
  func.func @_src_attn_kernel(%arg0: i32, %arg1: memref<1x8x32xf32, #tpu.memory_space<vmem>>, %arg2: memref<1x8x32xf32, #tpu.memory_space<vmem>>, %arg3: memref<1x1x8xf32, #tpu.memory_space<vmem>>, %arg4: memref<1x32xf32, #tpu.memory_space<vmem>>, %arg5: memref<1x32xf32, #tpu.memory_space<vmem>>, %arg6: memref<32x32xf32, #tpu.memory_space<vmem>>, %arg7: memref<1x32xf32, #tpu.memory_space<vmem>>, %arg8: memref<32x32xf32, #tpu.memory_space<vmem>>, %arg9: memref<1x32xf32, #tpu.memory_space<vmem>>, %arg10: memref<32x32xf32, #tpu.memory_space<vmem>>, %arg11: memref<1x32xf32, #tpu.memory_space<vmem>>, %arg12: memref<32x32xf32, #tpu.memory_space<vmem>>, %arg13: memref<1x32xf32, #tpu.memory_space<vmem>>, %arg14: memref<1x8x32xf32, #tpu.memory_space<vmem>>) attributes {dimension_semantics = [#tpu.dimension_semantics<parallel>], iteration_bounds = array<i64: 2>, scalar_prefetch = 0 : i64, scratch_operands = 0 : i64, tpu.core_type = #tpu.core_type<tc>, window_params = [{transform_indices = @transform_0, window_bounds = array<i64: 1, 8, 32>}, {transform_indices = @transform_1, window_bounds = array<i64: 1, 8, 32>}, {transform_indices = @transform_2, window_bounds = array<i64: 1, 1, 8>}, {pipeline_mode = #tpu.pipeline_mode<synchronous>, transform_indices = @transform_3, window_bounds = array<i64: 1, 32>}, {pipeline_mode = #tpu.pipeline_mode<synchronous>, transform_indices = @transform_4, window_bounds = array<i64: 1, 32>}, {pipeline_mode = #tpu.pipeline_mode<synchronous>, transform_indices = @transform_5, window_bounds = array<i64: 32, 32>}, {pipeline_mode = #tpu.pipeline_mode<synchronous>, transform_indices = @transform_6, window_bounds = array<i64: 1, 32>}, {pipeline_mode = #tpu.pipeline_mode<synchronous>, transform_indices = @transform_7, window_bounds = array<i64: 32, 32>}, {pipeline_mode = #tpu.pipeline_mode<synchronous>, transform_indices = @transform_8, window_bounds = array<i64: 1, 32>}, {pipeline_mode = #tpu.pipeline_mode<synchronous>, transform_indices = @transform_9, window_bounds = array<i64: 32, 32>}, {pipeline_mode = #tpu.pipeline_mode<synchronous>, transform_indices = @transform_10, window_bounds = array<i64: 1, 32>}, {pipeline_mode = #tpu.pipeline_mode<synchronous>, transform_indices = @transform_11, window_bounds = array<i64: 32, 32>}, {pipeline_mode = #tpu.pipeline_mode<synchronous>, transform_indices = @transform_12, window_bounds = array<i64: 1, 32>}, {transform_indices = @transform_13, window_bounds = array<i64: 1, 8, 32>}]} {
    %c0 = arith.constant 0 : index
    %c0_0 = arith.constant 0 : index
    %c0_1 = arith.constant 0 : index
    %0 = vector.load %arg1[%c0, %c0_0, %c0_1] : memref<1x8x32xf32, #tpu.memory_space<vmem>>, vector<1x8x32xf32>
    %1 = vector.shape_cast %0 : vector<1x8x32xf32> to vector<8x32xf32>
    %c0_2 = arith.constant 0 : index
    %c0_3 = arith.constant 0 : index
    %c0_4 = arith.constant 0 : index
    %2 = vector.load %arg2[%c0_2, %c0_3, %c0_4] : memref<1x8x32xf32, #tpu.memory_space<vmem>>, vector<1x8x32xf32>
    %3 = vector.shape_cast %2 : vector<1x8x32xf32> to vector<8x32xf32>
    %c0_5 = arith.constant 0 : index
    %c0_6 = arith.constant 0 : index
    %4 = vector.load %arg4[%c0_5, %c0_6] : memref<1x32xf32, #tpu.memory_space<vmem>>, vector<1x32xf32>
    %c0_7 = arith.constant 0 : index
    %c0_8 = arith.constant 0 : index
    %5 = vector.load %arg5[%c0_7, %c0_8] : memref<1x32xf32, #tpu.memory_space<vmem>>, vector<1x32xf32>
    %cst = arith.constant dense<0.000000e+00> : vector<8xf32>
    %6 = vector.multi_reduction <add>, %1, %cst [1] : vector<8x32xf32> to vector<8xf32>
    %7 = vector.shape_cast %6 : vector<8xf32> to vector<8x1xf32>
    %cst_9 = arith.constant 3.200000e+01 : f32
    %8 = vector.broadcast %cst_9 : f32 to vector<8x1xf32>
    %9 = arith.divf %7, %8 : vector<8x1xf32>
    %10 = vector.broadcast %9 : vector<8x1xf32> to vector<8x32xf32>
    %11 = arith.subf %1, %10 : vector<8x32xf32>
    %12 = arith.mulf %11, %11 : vector<8x32xf32>
    %cst_10 = arith.constant dense<0.000000e+00> : vector<8xf32>
    %13 = vector.multi_reduction <add>, %12, %cst_10 [1] : vector<8x32xf32> to vector<8xf32>
    %14 = vector.shape_cast %13 : vector<8xf32> to vector<8x1xf32>
    %cst_11 = arith.constant 0.0322580636 : f32
    %15 = vector.broadcast %cst_11 : f32 to vector<8x1xf32>
    %16 = arith.mulf %14, %15 : vector<8x1xf32>
    %17 = math.sqrt %16 : vector<8x1xf32>
    %cst_12 = arith.constant 9.99999997E-7 : f32
    %18 = vector.broadcast %cst_12 : f32 to vector<8x1xf32>
    %19 = arith.addf %17, %18 : vector<8x1xf32>
    %20 = tpu.reciprocal %19 {approx = true} : vector<8x1xf32> -> vector<8x1xf32>
    %21 = vector.broadcast %4 : vector<1x32xf32> to vector<8x32xf32>
    %22 = arith.mulf %21, %11 : vector<8x32xf32>
    %23 = vector.broadcast %20 : vector<8x1xf32> to vector<8x32xf32>
    %24 = arith.mulf %22, %23 : vector<8x32xf32>
    %25 = vector.broadcast %5 : vector<1x32xf32> to vector<8x32xf32>
    %26 = arith.addf %24, %25 : vector<8x32xf32>
    %c0_13 = arith.constant 0 : index
    %c0_14 = arith.constant 0 : index
    %c0_15 = arith.constant 0 : index
    %27 = vector.load %arg3[%c0_13, %c0_14, %c0_15] : memref<1x1x8xf32, #tpu.memory_space<vmem>>, vector<1x1x8xf32>
    %28 = vector.shape_cast %27 : vector<1x1x8xf32> to vector<1x8xf32>
    %c0_16 = arith.constant 0 : index
    %c0_17 = arith.constant 0 : index
    %29 = vector.load %arg6[%c0_16, %c0_17] : memref<32x32xf32, #tpu.memory_space<vmem>>, vector<32x32xf32>
    %c0_18 = arith.constant 0 : index
    %c0_19 = arith.constant 0 : index
    %30 = vector.load %arg7[%c0_18, %c0_19] : memref<1x32xf32, #tpu.memory_space<vmem>>, vector<1x32xf32>
    %c0_20 = arith.constant 0 : index
    %c0_21 = arith.constant 0 : index
    %31 = vector.load %arg8[%c0_20, %c0_21] : memref<32x32xf32, #tpu.memory_space<vmem>>, vector<32x32xf32>
    %c0_22 = arith.constant 0 : index
    %c0_23 = arith.constant 0 : index
    %32 = vector.load %arg9[%c0_22, %c0_23] : memref<1x32xf32, #tpu.memory_space<vmem>>, vector<1x32xf32>
    %c0_24 = arith.constant 0 : index
    %c0_25 = arith.constant 0 : index
    %33 = vector.load %arg10[%c0_24, %c0_25] : memref<32x32xf32, #tpu.memory_space<vmem>>, vector<32x32xf32>
    %c0_26 = arith.constant 0 : index
    %c0_27 = arith.constant 0 : index
    %34 = vector.load %arg11[%c0_26, %c0_27] : memref<1x32xf32, #tpu.memory_space<vmem>>, vector<1x32xf32>
    %c0_28 = arith.constant 0 : index
    %c0_29 = arith.constant 0 : index
    %35 = vector.load %arg12[%c0_28, %c0_29] : memref<32x32xf32, #tpu.memory_space<vmem>>, vector<32x32xf32>
    %c0_30 = arith.constant 0 : index
    %c0_31 = arith.constant 0 : index
    %36 = vector.load %arg13[%c0_30, %c0_31] : memref<1x32xf32, #tpu.memory_space<vmem>>, vector<1x32xf32>
    %cst_32 = arith.constant dense<0.000000e+00> : vector<8x32xf32>
    %37 = tpu.matmul %26, %29, %cst_32 {dimension_numbers = #tpu.dot_dimension_numbers<[1], [0], [0], [1], [0, 0, 1, 1], [], []>} : vector<8x32xf32>, vector<32x32xf32>, vector<8x32xf32> -> vector<8x32xf32>
    %38 = vector.broadcast %30 : vector<1x32xf32> to vector<8x32xf32>
    %39 = arith.addf %37, %38 : vector<8x32xf32>
    %cst_33 = arith.constant dense<0.000000e+00> : vector<8x32xf32>
    %40 = tpu.matmul %3, %31, %cst_33 {dimension_numbers = #tpu.dot_dimension_numbers<[1], [0], [0], [1], [0, 0, 1, 1], [], []>} : vector<8x32xf32>, vector<32x32xf32>, vector<8x32xf32> -> vector<8x32xf32>
    %41 = vector.broadcast %32 : vector<1x32xf32> to vector<8x32xf32>
    %42 = arith.addf %40, %41 : vector<8x32xf32>
    %cst_34 = arith.constant dense<0.000000e+00> : vector<8x32xf32>
    %43 = tpu.matmul %3, %33, %cst_34 {dimension_numbers = #tpu.dot_dimension_numbers<[1], [0], [0], [1], [0, 0, 1, 1], [], []>} : vector<8x32xf32>, vector<32x32xf32>, vector<8x32xf32> -> vector<8x32xf32>
    %44 = vector.broadcast %34 : vector<1x32xf32> to vector<8x32xf32>
    %45 = arith.addf %43, %44 : vector<8x32xf32>
    %46 = vector.shape_cast %28 : vector<1x8xf32> to vector<1x8xf32>
    %47 = vector.broadcast %46 : vector<1x8xf32> to vector<8x8xf32>
    %cst_35 = arith.constant 0.000000e+00 : f32
    %48 = vector.broadcast %cst_35 : f32 to vector<8x32xf32>
    %49 = vector.extract_strided_slice %39 {offsets = [0, 0], sizes = [8, 8], strides = [1, 1]} : vector<8x32xf32> to vector<8x8xf32>
    %50 = vector.extract_strided_slice %42 {offsets = [0, 0], sizes = [8, 8], strides = [1, 1]} : vector<8x32xf32> to vector<8x8xf32>
    %cst_36 = arith.constant dense<0.000000e+00> : vector<8x8xf32>
    %51 = tpu.matmul %49, %50, %cst_36 {dimension_numbers = #tpu.dot_dimension_numbers<[1], [1], [0], [0], [0, 0, 1, 0], [], []>} : vector<8x8xf32>, vector<8x8xf32>, vector<8x8xf32> -> vector<8x8xf32>
    %cst_37 = arith.constant 0.353553385 : f32
    %52 = vector.broadcast %cst_37 : f32 to vector<8x8xf32>
    %53 = arith.mulf %51, %52 : vector<8x8xf32>
    %cst_38 = arith.constant 0.000000e+00 : f32
    %54 = vector.broadcast %cst_38 : f32 to vector<8x8xf32>
    %55 = arith.cmpf oeq, %47, %54 : vector<8x8xf32>
    %cst_39 = arith.constant -1.000000e+09 : f32
    %56 = vector.broadcast %cst_39 : f32 to vector<8x8xf32>
    %57 = arith.select %55, %56, %53 : vector<8x8xi1>, vector<8x8xf32>
    %cst_40 = arith.constant dense<0xFF800000> : vector<8xf32>
    %58 = vector.multi_reduction <maximumf>, %57, %cst_40 [1] : vector<8x8xf32> to vector<8xf32>
    %59 = vector.shape_cast %58 : vector<8xf32> to vector<8x1xf32>
    %60 = vector.broadcast %59 : vector<8x1xf32> to vector<8x8xf32>
    %61 = arith.subf %57, %60 : vector<8x8xf32>
    %62 = math.exp %61 : vector<8x8xf32>
    %cst_41 = arith.constant dense<0.000000e+00> : vector<8xf32>
    %63 = vector.multi_reduction <add>, %62, %cst_41 [1] : vector<8x8xf32> to vector<8xf32>
    %64 = vector.shape_cast %63 : vector<8xf32> to vector<8x1xf32>
    %65 = tpu.reciprocal %64 {approx = true} : vector<8x1xf32> -> vector<8x1xf32>
    %66 = vector.broadcast %65 : vector<8x1xf32> to vector<8x8xf32>
    %67 = arith.mulf %62, %66 : vector<8x8xf32>
    %68 = vector.extract_strided_slice %45 {offsets = [0, 0], sizes = [8, 8], strides = [1, 1]} : vector<8x32xf32> to vector<8x8xf32>
    %cst_42 = arith.constant dense<0.000000e+00> : vector<8x8xf32>
    %69 = tpu.matmul %67, %68, %cst_42 {dimension_numbers = #tpu.dot_dimension_numbers<[1], [0], [0], [1], [0, 0, 1, 1], [], []>} : vector<8x8xf32>, vector<8x8xf32>, vector<8x8xf32> -> vector<8x8xf32>
    %70 = vector.extract_strided_slice %35 {offsets = [0, 0], sizes = [8, 32], strides = [1, 1]} : vector<32x32xf32> to vector<8x32xf32>
    %cst_43 = arith.constant dense<0.000000e+00> : vector<8x32xf32>
    %71 = tpu.matmul %69, %70, %cst_43 {dimension_numbers = #tpu.dot_dimension_numbers<[1], [0], [0], [1], [0, 0, 1, 1], [], []>} : vector<8x8xf32>, vector<8x32xf32>, vector<8x32xf32> -> vector<8x32xf32>
    %72 = arith.addf %48, %71 : vector<8x32xf32>
    %73 = vector.extract_strided_slice %39 {offsets = [0, 8], sizes = [8, 8], strides = [1, 1]} : vector<8x32xf32> to vector<8x8xf32>
    %74 = vector.extract_strided_slice %42 {offsets = [0, 8], sizes = [8, 8], strides = [1, 1]} : vector<8x32xf32> to vector<8x8xf32>
    %cst_44 = arith.constant dense<0.000000e+00> : vector<8x8xf32>
    %75 = tpu.matmul %73, %74, %cst_44 {dimension_numbers = #tpu.dot_dimension_numbers<[1], [1], [0], [0], [0, 0, 1, 0], [], []>} : vector<8x8xf32>, vector<8x8xf32>, vector<8x8xf32> -> vector<8x8xf32>
    %cst_45 = arith.constant 0.353553385 : f32
    %76 = vector.broadcast %cst_45 : f32 to vector<8x8xf32>
    %77 = arith.mulf %75, %76 : vector<8x8xf32>
    %cst_46 = arith.constant 0.000000e+00 : f32
    %78 = vector.broadcast %cst_46 : f32 to vector<8x8xf32>
    %79 = arith.cmpf oeq, %47, %78 : vector<8x8xf32>
    %cst_47 = arith.constant -1.000000e+09 : f32
    %80 = vector.broadcast %cst_47 : f32 to vector<8x8xf32>
    %81 = arith.select %79, %80, %77 : vector<8x8xi1>, vector<8x8xf32>
    %cst_48 = arith.constant dense<0xFF800000> : vector<8xf32>
    %82 = vector.multi_reduction <maximumf>, %81, %cst_48 [1] : vector<8x8xf32> to vector<8xf32>
    %83 = vector.shape_cast %82 : vector<8xf32> to vector<8x1xf32>
    %84 = vector.broadcast %83 : vector<8x1xf32> to vector<8x8xf32>
    %85 = arith.subf %81, %84 : vector<8x8xf32>
    %86 = math.exp %85 : vector<8x8xf32>
    %cst_49 = arith.constant dense<0.000000e+00> : vector<8xf32>
    %87 = vector.multi_reduction <add>, %86, %cst_49 [1] : vector<8x8xf32> to vector<8xf32>
    %88 = vector.shape_cast %87 : vector<8xf32> to vector<8x1xf32>
    %89 = tpu.reciprocal %88 {approx = true} : vector<8x1xf32> -> vector<8x1xf32>
    %90 = vector.broadcast %89 : vector<8x1xf32> to vector<8x8xf32>
    %91 = arith.mulf %86, %90 : vector<8x8xf32>
    %92 = vector.extract_strided_slice %45 {offsets = [0, 8], sizes = [8, 8], strides = [1, 1]} : vector<8x32xf32> to vector<8x8xf32>
    %cst_50 = arith.constant dense<0.000000e+00> : vector<8x8xf32>
    %93 = tpu.matmul %91, %92, %cst_50 {dimension_numbers = #tpu.dot_dimension_numbers<[1], [0], [0], [1], [0, 0, 1, 1], [], []>} : vector<8x8xf32>, vector<8x8xf32>, vector<8x8xf32> -> vector<8x8xf32>
    %94 = vector.extract_strided_slice %35 {offsets = [8, 0], sizes = [8, 32], strides = [1, 1]} : vector<32x32xf32> to vector<8x32xf32>
    %cst_51 = arith.constant dense<0.000000e+00> : vector<8x32xf32>
    %95 = tpu.matmul %93, %94, %cst_51 {dimension_numbers = #tpu.dot_dimension_numbers<[1], [0], [0], [1], [0, 0, 1, 1], [], []>} : vector<8x8xf32>, vector<8x32xf32>, vector<8x32xf32> -> vector<8x32xf32>
    %96 = arith.addf %72, %95 : vector<8x32xf32>
    %97 = vector.extract_strided_slice %39 {offsets = [0, 16], sizes = [8, 8], strides = [1, 1]} : vector<8x32xf32> to vector<8x8xf32>
    %98 = vector.extract_strided_slice %42 {offsets = [0, 16], sizes = [8, 8], strides = [1, 1]} : vector<8x32xf32> to vector<8x8xf32>
    %cst_52 = arith.constant dense<0.000000e+00> : vector<8x8xf32>
    %99 = tpu.matmul %97, %98, %cst_52 {dimension_numbers = #tpu.dot_dimension_numbers<[1], [1], [0], [0], [0, 0, 1, 0], [], []>} : vector<8x8xf32>, vector<8x8xf32>, vector<8x8xf32> -> vector<8x8xf32>
    %cst_53 = arith.constant 0.353553385 : f32
    %100 = vector.broadcast %cst_53 : f32 to vector<8x8xf32>
    %101 = arith.mulf %99, %100 : vector<8x8xf32>
    %cst_54 = arith.constant 0.000000e+00 : f32
    %102 = vector.broadcast %cst_54 : f32 to vector<8x8xf32>
    %103 = arith.cmpf oeq, %47, %102 : vector<8x8xf32>
    %cst_55 = arith.constant -1.000000e+09 : f32
    %104 = vector.broadcast %cst_55 : f32 to vector<8x8xf32>
    %105 = arith.select %103, %104, %101 : vector<8x8xi1>, vector<8x8xf32>
    %cst_56 = arith.constant dense<0xFF800000> : vector<8xf32>
    %106 = vector.multi_reduction <maximumf>, %105, %cst_56 [1] : vector<8x8xf32> to vector<8xf32>
    %107 = vector.shape_cast %106 : vector<8xf32> to vector<8x1xf32>
    %108 = vector.broadcast %107 : vector<8x1xf32> to vector<8x8xf32>
    %109 = arith.subf %105, %108 : vector<8x8xf32>
    %110 = math.exp %109 : vector<8x8xf32>
    %cst_57 = arith.constant dense<0.000000e+00> : vector<8xf32>
    %111 = vector.multi_reduction <add>, %110, %cst_57 [1] : vector<8x8xf32> to vector<8xf32>
    %112 = vector.shape_cast %111 : vector<8xf32> to vector<8x1xf32>
    %113 = tpu.reciprocal %112 {approx = true} : vector<8x1xf32> -> vector<8x1xf32>
    %114 = vector.broadcast %113 : vector<8x1xf32> to vector<8x8xf32>
    %115 = arith.mulf %110, %114 : vector<8x8xf32>
    %116 = vector.extract_strided_slice %45 {offsets = [0, 16], sizes = [8, 8], strides = [1, 1]} : vector<8x32xf32> to vector<8x8xf32>
    %cst_58 = arith.constant dense<0.000000e+00> : vector<8x8xf32>
    %117 = tpu.matmul %115, %116, %cst_58 {dimension_numbers = #tpu.dot_dimension_numbers<[1], [0], [0], [1], [0, 0, 1, 1], [], []>} : vector<8x8xf32>, vector<8x8xf32>, vector<8x8xf32> -> vector<8x8xf32>
    %118 = vector.extract_strided_slice %35 {offsets = [16, 0], sizes = [8, 32], strides = [1, 1]} : vector<32x32xf32> to vector<8x32xf32>
    %cst_59 = arith.constant dense<0.000000e+00> : vector<8x32xf32>
    %119 = tpu.matmul %117, %118, %cst_59 {dimension_numbers = #tpu.dot_dimension_numbers<[1], [0], [0], [1], [0, 0, 1, 1], [], []>} : vector<8x8xf32>, vector<8x32xf32>, vector<8x32xf32> -> vector<8x32xf32>
    %120 = arith.addf %96, %119 : vector<8x32xf32>
    %121 = vector.extract_strided_slice %39 {offsets = [0, 24], sizes = [8, 8], strides = [1, 1]} : vector<8x32xf32> to vector<8x8xf32>
    %122 = vector.extract_strided_slice %42 {offsets = [0, 24], sizes = [8, 8], strides = [1, 1]} : vector<8x32xf32> to vector<8x8xf32>
    %cst_60 = arith.constant dense<0.000000e+00> : vector<8x8xf32>
    %123 = tpu.matmul %121, %122, %cst_60 {dimension_numbers = #tpu.dot_dimension_numbers<[1], [1], [0], [0], [0, 0, 1, 0], [], []>} : vector<8x8xf32>, vector<8x8xf32>, vector<8x8xf32> -> vector<8x8xf32>
    %cst_61 = arith.constant 0.353553385 : f32
    %124 = vector.broadcast %cst_61 : f32 to vector<8x8xf32>
    %125 = arith.mulf %123, %124 : vector<8x8xf32>
    %cst_62 = arith.constant 0.000000e+00 : f32
    %126 = vector.broadcast %cst_62 : f32 to vector<8x8xf32>
    %127 = arith.cmpf oeq, %47, %126 : vector<8x8xf32>
    %cst_63 = arith.constant -1.000000e+09 : f32
    %128 = vector.broadcast %cst_63 : f32 to vector<8x8xf32>
    %129 = arith.select %127, %128, %125 : vector<8x8xi1>, vector<8x8xf32>
    %cst_64 = arith.constant dense<0xFF800000> : vector<8xf32>
    %130 = vector.multi_reduction <maximumf>, %129, %cst_64 [1] : vector<8x8xf32> to vector<8xf32>
    %131 = vector.shape_cast %130 : vector<8xf32> to vector<8x1xf32>
    %132 = vector.broadcast %131 : vector<8x1xf32> to vector<8x8xf32>
    %133 = arith.subf %129, %132 : vector<8x8xf32>
    %134 = math.exp %133 : vector<8x8xf32>
    %cst_65 = arith.constant dense<0.000000e+00> : vector<8xf32>
    %135 = vector.multi_reduction <add>, %134, %cst_65 [1] : vector<8x8xf32> to vector<8xf32>
    %136 = vector.shape_cast %135 : vector<8xf32> to vector<8x1xf32>
    %137 = tpu.reciprocal %136 {approx = true} : vector<8x1xf32> -> vector<8x1xf32>
    %138 = vector.broadcast %137 : vector<8x1xf32> to vector<8x8xf32>
    %139 = arith.mulf %134, %138 : vector<8x8xf32>
    %140 = vector.extract_strided_slice %45 {offsets = [0, 24], sizes = [8, 8], strides = [1, 1]} : vector<8x32xf32> to vector<8x8xf32>
    %cst_66 = arith.constant dense<0.000000e+00> : vector<8x8xf32>
    %141 = tpu.matmul %139, %140, %cst_66 {dimension_numbers = #tpu.dot_dimension_numbers<[1], [0], [0], [1], [0, 0, 1, 1], [], []>} : vector<8x8xf32>, vector<8x8xf32>, vector<8x8xf32> -> vector<8x8xf32>
    %142 = vector.extract_strided_slice %35 {offsets = [24, 0], sizes = [8, 32], strides = [1, 1]} : vector<32x32xf32> to vector<8x32xf32>
    %cst_67 = arith.constant dense<0.000000e+00> : vector<8x32xf32>
    %143 = tpu.matmul %141, %142, %cst_67 {dimension_numbers = #tpu.dot_dimension_numbers<[1], [0], [0], [1], [0, 0, 1, 1], [], []>} : vector<8x8xf32>, vector<8x32xf32>, vector<8x32xf32> -> vector<8x32xf32>
    %144 = arith.addf %120, %143 : vector<8x32xf32>
    %145 = vector.broadcast %36 : vector<1x32xf32> to vector<8x32xf32>
    %146 = arith.addf %144, %145 : vector<8x32xf32>
    %147 = arith.addf %1, %146 : vector<8x32xf32>
    %c0_68 = arith.constant 0 : index
    %c0_69 = arith.constant 0 : index
    %c0_70 = arith.constant 0 : index
    %148 = vector.load %arg14[%c0_68, %c0_69, %c0_70] : memref<1x8x32xf32, #tpu.memory_space<vmem>>, vector<1x8x32xf32>
    %149 = vector.shape_cast %148 : vector<1x8x32xf32> to vector<8x32xf32>
    %150 = vector.shape_cast %147 : vector<8x32xf32> to vector<1x8x32xf32>
    tpu.vector_store %arg14[%c0_68, %c0_69, %c0_70], %150 {strides = array<i32>} : memref<1x8x32xf32, #tpu.memory_space<vmem>>, vector<1x8x32xf32>,
    return
  }
  func.func @transform_0(%arg0: i32) -> (i32, i32, i32) {
    %c0_i32 = arith.constant 0 : i32
    %c0_i32_0 = arith.constant 0 : i32
    %c0_i32_1 = arith.constant 0 : i32
    return %arg0, %c0_i32, %c0_i32_0 : i32, i32, i32
  }
  func.func @transform_1(%arg0: i32) -> (i32, i32, i32) {
    %c0_i32 = arith.constant 0 : i32
    %c0_i32_0 = arith.constant 0 : i32
    %c0_i32_1 = arith.constant 0 : i32
    return %arg0, %c0_i32, %c0_i32_0 : i32, i32, i32
  }
  func.func @transform_2(%arg0: i32) -> (i32, i32, i32) {
    %c0_i32 = arith.constant 0 : i32
    %c0_i32_0 = arith.constant 0 : i32
    %c0_i32_1 = arith.constant 0 : i32
    return %arg0, %c0_i32, %c0_i32_0 : i32, i32, i32
  }
  func.func @transform_3(%arg0: i32) -> (i32, i32) {
    %c0_i32 = arith.constant 0 : i32
    %c0_i32_0 = arith.constant 0 : i32
    %c0_i32_1 = arith.constant 0 : i32
    return %c0_i32, %c0_i32_0 : i32, i32
  }
  func.func @transform_4(%arg0: i32) -> (i32, i32) {
    %c0_i32 = arith.constant 0 : i32
    %c0_i32_0 = arith.constant 0 : i32
    %c0_i32_1 = arith.constant 0 : i32
    return %c0_i32, %c0_i32_0 : i32, i32
  }
  func.func @transform_5(%arg0: i32) -> (i32, i32) {
    %c0_i32 = arith.constant 0 : i32
    %c0_i32_0 = arith.constant 0 : i32
    %c0_i32_1 = arith.constant 0 : i32
    return %c0_i32, %c0_i32_0 : i32, i32
  }
  func.func @transform_6(%arg0: i32) -> (i32, i32) {
    %c0_i32 = arith.constant 0 : i32
    %c0_i32_0 = arith.constant 0 : i32
    %c0_i32_1 = arith.constant 0 : i32
    return %c0_i32, %c0_i32_0 : i32, i32
  }
  func.func @transform_7(%arg0: i32) -> (i32, i32) {
    %c0_i32 = arith.constant 0 : i32
    %c0_i32_0 = arith.constant 0 : i32
    %c0_i32_1 = arith.constant 0 : i32
    return %c0_i32, %c0_i32_0 : i32, i32
  }
  func.func @transform_8(%arg0: i32) -> (i32, i32) {
    %c0_i32 = arith.constant 0 : i32
    %c0_i32_0 = arith.constant 0 : i32
    %c0_i32_1 = arith.constant 0 : i32
    return %c0_i32, %c0_i32_0 : i32, i32
  }
  func.func @transform_9(%arg0: i32) -> (i32, i32) {
    %c0_i32 = arith.constant 0 : i32
    %c0_i32_0 = arith.constant 0 : i32
    %c0_i32_1 = arith.constant 0 : i32
    return %c0_i32, %c0_i32_0 : i32, i32
  }
  func.func @transform_10(%arg0: i32) -> (i32, i32) {
    %c0_i32 = arith.constant 0 : i32
    %c0_i32_0 = arith.constant 0 : i32
    %c0_i32_1 = arith.constant 0 : i32
    return %c0_i32, %c0_i32_0 : i32, i32
  }
  func.func @transform_11(%arg0: i32) -> (i32, i32) {
    %c0_i32 = arith.constant 0 : i32
    %c0_i32_0 = arith.constant 0 : i32
    %c0_i32_1 = arith.constant 0 : i32
    return %c0_i32, %c0_i32_0 : i32, i32
  }
  func.func @transform_12(%arg0: i32) -> (i32, i32) {
    %c0_i32 = arith.constant 0 : i32
    %c0_i32_0 = arith.constant 0 : i32
    %c0_i32_1 = arith.constant 0 : i32
    return %c0_i32, %c0_i32_0 : i32, i32
  }
  func.func @transform_13(%arg0: i32) -> (i32, i32, i32) {
    %c0_i32 = arith.constant 0 : i32
    %c0_i32_0 = arith.constant 0 : i32
    %c0_i32_1 = arith.constant 0 : i32
    return %arg0, %c0_i32, %c0_i32_0 : i32, i32, i32
  }
}

module attributes {stable_mosaic.version = 11 : i64} {
  func.func @_self_attn_kernel(%arg0: i32, %arg1: memref<1x8x32xf32, #tpu.memory_space<vmem>>, %arg2: memref<1x8x8xf32, #tpu.memory_space<vmem>>, %arg3: memref<1x32xf32, #tpu.memory_space<vmem>>, %arg4: memref<1x32xf32, #tpu.memory_space<vmem>>, %arg5: memref<32x32xf32, #tpu.memory_space<vmem>>, %arg6: memref<1x32xf32, #tpu.memory_space<vmem>>, %arg7: memref<32x32xf32, #tpu.memory_space<vmem>>, %arg8: memref<1x32xf32, #tpu.memory_space<vmem>>, %arg9: memref<32x32xf32, #tpu.memory_space<vmem>>, %arg10: memref<1x32xf32, #tpu.memory_space<vmem>>, %arg11: memref<32x32xf32, #tpu.memory_space<vmem>>, %arg12: memref<1x32xf32, #tpu.memory_space<vmem>>, %arg13: memref<1x8x32xf32, #tpu.memory_space<vmem>>) attributes {dimension_semantics = [#tpu.dimension_semantics<parallel>], iteration_bounds = array<i64: 2>, scalar_prefetch = 0 : i64, scratch_operands = 0 : i64, tpu.core_type = #tpu.core_type<tc>, window_params = [{transform_indices = @transform_0, window_bounds = array<i64: 1, 8, 32>}, {pipeline_mode = #tpu.pipeline_mode<synchronous>, transform_indices = @transform_1, window_bounds = array<i64: 1, 8, 8>}, {pipeline_mode = #tpu.pipeline_mode<synchronous>, transform_indices = @transform_2, window_bounds = array<i64: 1, 32>}, {pipeline_mode = #tpu.pipeline_mode<synchronous>, transform_indices = @transform_3, window_bounds = array<i64: 1, 32>}, {pipeline_mode = #tpu.pipeline_mode<synchronous>, transform_indices = @transform_4, window_bounds = array<i64: 32, 32>}, {pipeline_mode = #tpu.pipeline_mode<synchronous>, transform_indices = @transform_5, window_bounds = array<i64: 1, 32>}, {pipeline_mode = #tpu.pipeline_mode<synchronous>, transform_indices = @transform_6, window_bounds = array<i64: 32, 32>}, {pipeline_mode = #tpu.pipeline_mode<synchronous>, transform_indices = @transform_7, window_bounds = array<i64: 1, 32>}, {pipeline_mode = #tpu.pipeline_mode<synchronous>, transform_indices = @transform_8, window_bounds = array<i64: 32, 32>}, {pipeline_mode = #tpu.pipeline_mode<synchronous>, transform_indices = @transform_9, window_bounds = array<i64: 1, 32>}, {pipeline_mode = #tpu.pipeline_mode<synchronous>, transform_indices = @transform_10, window_bounds = array<i64: 32, 32>}, {pipeline_mode = #tpu.pipeline_mode<synchronous>, transform_indices = @transform_11, window_bounds = array<i64: 1, 32>}, {transform_indices = @transform_12, window_bounds = array<i64: 1, 8, 32>}]} {
    %c0 = arith.constant 0 : index
    %c0_0 = arith.constant 0 : index
    %c0_1 = arith.constant 0 : index
    %0 = vector.load %arg1[%c0, %c0_0, %c0_1] : memref<1x8x32xf32, #tpu.memory_space<vmem>>, vector<1x8x32xf32>
    %1 = vector.shape_cast %0 : vector<1x8x32xf32> to vector<8x32xf32>
    %c0_2 = arith.constant 0 : index
    %c0_3 = arith.constant 0 : index
    %2 = vector.load %arg3[%c0_2, %c0_3] : memref<1x32xf32, #tpu.memory_space<vmem>>, vector<1x32xf32>
    %c0_4 = arith.constant 0 : index
    %c0_5 = arith.constant 0 : index
    %3 = vector.load %arg4[%c0_4, %c0_5] : memref<1x32xf32, #tpu.memory_space<vmem>>, vector<1x32xf32>
    %cst = arith.constant dense<0.000000e+00> : vector<8xf32>
    %4 = vector.multi_reduction <add>, %1, %cst [1] : vector<8x32xf32> to vector<8xf32>
    %5 = vector.shape_cast %4 : vector<8xf32> to vector<8x1xf32>
    %cst_6 = arith.constant 3.200000e+01 : f32
    %6 = vector.broadcast %cst_6 : f32 to vector<8x1xf32>
    %7 = arith.divf %5, %6 : vector<8x1xf32>
    %8 = vector.broadcast %7 : vector<8x1xf32> to vector<8x32xf32>
    %9 = arith.subf %1, %8 : vector<8x32xf32>
    %10 = arith.mulf %9, %9 : vector<8x32xf32>
    %cst_7 = arith.constant dense<0.000000e+00> : vector<8xf32>
    %11 = vector.multi_reduction <add>, %10, %cst_7 [1] : vector<8x32xf32> to vector<8xf32>
    %12 = vector.shape_cast %11 : vector<8xf32> to vector<8x1xf32>
    %cst_8 = arith.constant 0.0322580636 : f32
    %13 = vector.broadcast %cst_8 : f32 to vector<8x1xf32>
    %14 = arith.mulf %12, %13 : vector<8x1xf32>
    %15 = math.sqrt %14 : vector<8x1xf32>
    %cst_9 = arith.constant 9.99999997E-7 : f32
    %16 = vector.broadcast %cst_9 : f32 to vector<8x1xf32>
    %17 = arith.addf %15, %16 : vector<8x1xf32>
    %18 = tpu.reciprocal %17 {approx = true} : vector<8x1xf32> -> vector<8x1xf32>
    %19 = vector.broadcast %2 : vector<1x32xf32> to vector<8x32xf32>
    %20 = arith.mulf %19, %9 : vector<8x32xf32>
    %21 = vector.broadcast %18 : vector<8x1xf32> to vector<8x32xf32>
    %22 = arith.mulf %20, %21 : vector<8x32xf32>
    %23 = vector.broadcast %3 : vector<1x32xf32> to vector<8x32xf32>
    %24 = arith.addf %22, %23 : vector<8x32xf32>
    %c0_10 = arith.constant 0 : index
    %c0_11 = arith.constant 0 : index
    %c0_12 = arith.constant 0 : index
    %25 = vector.load %arg2[%c0_10, %c0_11, %c0_12] : memref<1x8x8xf32, #tpu.memory_space<vmem>>, vector<1x8x8xf32>
    %26 = vector.shape_cast %25 : vector<1x8x8xf32> to vector<8x8xf32>
    %c0_13 = arith.constant 0 : index
    %c0_14 = arith.constant 0 : index
    %27 = vector.load %arg5[%c0_13, %c0_14] : memref<32x32xf32, #tpu.memory_space<vmem>>, vector<32x32xf32>
    %c0_15 = arith.constant 0 : index
    %c0_16 = arith.constant 0 : index
    %28 = vector.load %arg6[%c0_15, %c0_16] : memref<1x32xf32, #tpu.memory_space<vmem>>, vector<1x32xf32>
    %c0_17 = arith.constant 0 : index
    %c0_18 = arith.constant 0 : index
    %29 = vector.load %arg7[%c0_17, %c0_18] : memref<32x32xf32, #tpu.memory_space<vmem>>, vector<32x32xf32>
    %c0_19 = arith.constant 0 : index
    %c0_20 = arith.constant 0 : index
    %30 = vector.load %arg8[%c0_19, %c0_20] : memref<1x32xf32, #tpu.memory_space<vmem>>, vector<1x32xf32>
    %c0_21 = arith.constant 0 : index
    %c0_22 = arith.constant 0 : index
    %31 = vector.load %arg9[%c0_21, %c0_22] : memref<32x32xf32, #tpu.memory_space<vmem>>, vector<32x32xf32>
    %c0_23 = arith.constant 0 : index
    %c0_24 = arith.constant 0 : index
    %32 = vector.load %arg10[%c0_23, %c0_24] : memref<1x32xf32, #tpu.memory_space<vmem>>, vector<1x32xf32>
    %c0_25 = arith.constant 0 : index
    %c0_26 = arith.constant 0 : index
    %33 = vector.load %arg11[%c0_25, %c0_26] : memref<32x32xf32, #tpu.memory_space<vmem>>, vector<32x32xf32>
    %c0_27 = arith.constant 0 : index
    %c0_28 = arith.constant 0 : index
    %34 = vector.load %arg12[%c0_27, %c0_28] : memref<1x32xf32, #tpu.memory_space<vmem>>, vector<1x32xf32>
    %cst_29 = arith.constant dense<0.000000e+00> : vector<8x32xf32>
    %35 = tpu.matmul %24, %27, %cst_29 {dimension_numbers = #tpu.dot_dimension_numbers<[1], [0], [0], [1], [0, 0, 1, 1], [], []>} : vector<8x32xf32>, vector<32x32xf32>, vector<8x32xf32> -> vector<8x32xf32>
    %36 = vector.broadcast %28 : vector<1x32xf32> to vector<8x32xf32>
    %37 = arith.addf %35, %36 : vector<8x32xf32>
    %cst_30 = arith.constant dense<0.000000e+00> : vector<8x32xf32>
    %38 = tpu.matmul %24, %29, %cst_30 {dimension_numbers = #tpu.dot_dimension_numbers<[1], [0], [0], [1], [0, 0, 1, 1], [], []>} : vector<8x32xf32>, vector<32x32xf32>, vector<8x32xf32> -> vector<8x32xf32>
    %39 = vector.broadcast %30 : vector<1x32xf32> to vector<8x32xf32>
    %40 = arith.addf %38, %39 : vector<8x32xf32>
    %cst_31 = arith.constant dense<0.000000e+00> : vector<8x32xf32>
    %41 = tpu.matmul %24, %31, %cst_31 {dimension_numbers = #tpu.dot_dimension_numbers<[1], [0], [0], [1], [0, 0, 1, 1], [], []>} : vector<8x32xf32>, vector<32x32xf32>, vector<8x32xf32> -> vector<8x32xf32>
    %42 = vector.broadcast %32 : vector<1x32xf32> to vector<8x32xf32>
    %43 = arith.addf %41, %42 : vector<8x32xf32>
    %cst_32 = arith.constant 0.000000e+00 : f32
    %44 = vector.broadcast %cst_32 : f32 to vector<8x32xf32>
    %45 = vector.extract_strided_slice %37 {offsets = [0, 0], sizes = [8, 8], strides = [1, 1]} : vector<8x32xf32> to vector<8x8xf32>
    %46 = vector.extract_strided_slice %40 {offsets = [0, 0], sizes = [8, 8], strides = [1, 1]} : vector<8x32xf32> to vector<8x8xf32>
    %cst_33 = arith.constant dense<0.000000e+00> : vector<8x8xf32>
    %47 = tpu.matmul %45, %46, %cst_33 {dimension_numbers = #tpu.dot_dimension_numbers<[1], [1], [0], [0], [0, 0, 1, 0], [], []>} : vector<8x8xf32>, vector<8x8xf32>, vector<8x8xf32> -> vector<8x8xf32>
    %cst_34 = arith.constant 0.353553385 : f32
    %48 = vector.broadcast %cst_34 : f32 to vector<8x8xf32>
    %49 = arith.mulf %47, %48 : vector<8x8xf32>
    %cst_35 = arith.constant 0.000000e+00 : f32
    %50 = vector.broadcast %cst_35 : f32 to vector<8x8xf32>
    %51 = arith.cmpf oeq, %26, %50 : vector<8x8xf32>
    %cst_36 = arith.constant -1.000000e+09 : f32
    %52 = vector.broadcast %cst_36 : f32 to vector<8x8xf32>
    %53 = arith.select %51, %52, %49 : vector<8x8xi1>, vector<8x8xf32>
    %cst_37 = arith.constant dense<0xFF800000> : vector<8xf32>
    %54 = vector.multi_reduction <maximumf>, %53, %cst_37 [1] : vector<8x8xf32> to vector<8xf32>
    %55 = vector.shape_cast %54 : vector<8xf32> to vector<8x1xf32>
    %56 = vector.broadcast %55 : vector<8x1xf32> to vector<8x8xf32>
    %57 = arith.subf %53, %56 : vector<8x8xf32>
    %58 = math.exp %57 : vector<8x8xf32>
    %cst_38 = arith.constant dense<0.000000e+00> : vector<8xf32>
    %59 = vector.multi_reduction <add>, %58, %cst_38 [1] : vector<8x8xf32> to vector<8xf32>
    %60 = vector.shape_cast %59 : vector<8xf32> to vector<8x1xf32>
    %61 = tpu.reciprocal %60 {approx = true} : vector<8x1xf32> -> vector<8x1xf32>
    %62 = vector.broadcast %61 : vector<8x1xf32> to vector<8x8xf32>
    %63 = arith.mulf %58, %62 : vector<8x8xf32>
    %64 = vector.extract_strided_slice %43 {offsets = [0, 0], sizes = [8, 8], strides = [1, 1]} : vector<8x32xf32> to vector<8x8xf32>
    %cst_39 = arith.constant dense<0.000000e+00> : vector<8x8xf32>
    %65 = tpu.matmul %63, %64, %cst_39 {dimension_numbers = #tpu.dot_dimension_numbers<[1], [0], [0], [1], [0, 0, 1, 1], [], []>} : vector<8x8xf32>, vector<8x8xf32>, vector<8x8xf32> -> vector<8x8xf32>
    %66 = vector.extract_strided_slice %33 {offsets = [0, 0], sizes = [8, 32], strides = [1, 1]} : vector<32x32xf32> to vector<8x32xf32>
    %cst_40 = arith.constant dense<0.000000e+00> : vector<8x32xf32>
    %67 = tpu.matmul %65, %66, %cst_40 {dimension_numbers = #tpu.dot_dimension_numbers<[1], [0], [0], [1], [0, 0, 1, 1], [], []>} : vector<8x8xf32>, vector<8x32xf32>, vector<8x32xf32> -> vector<8x32xf32>
    %68 = arith.addf %44, %67 : vector<8x32xf32>
    %69 = vector.extract_strided_slice %37 {offsets = [0, 8], sizes = [8, 8], strides = [1, 1]} : vector<8x32xf32> to vector<8x8xf32>
    %70 = vector.extract_strided_slice %40 {offsets = [0, 8], sizes = [8, 8], strides = [1, 1]} : vector<8x32xf32> to vector<8x8xf32>
    %cst_41 = arith.constant dense<0.000000e+00> : vector<8x8xf32>
    %71 = tpu.matmul %69, %70, %cst_41 {dimension_numbers = #tpu.dot_dimension_numbers<[1], [1], [0], [0], [0, 0, 1, 0], [], []>} : vector<8x8xf32>, vector<8x8xf32>, vector<8x8xf32> -> vector<8x8xf32>
    %cst_42 = arith.constant 0.353553385 : f32
    %72 = vector.broadcast %cst_42 : f32 to vector<8x8xf32>
    %73 = arith.mulf %71, %72 : vector<8x8xf32>
    %cst_43 = arith.constant 0.000000e+00 : f32
    %74 = vector.broadcast %cst_43 : f32 to vector<8x8xf32>
    %75 = arith.cmpf oeq, %26, %74 : vector<8x8xf32>
    %cst_44 = arith.constant -1.000000e+09 : f32
    %76 = vector.broadcast %cst_44 : f32 to vector<8x8xf32>
    %77 = arith.select %75, %76, %73 : vector<8x8xi1>, vector<8x8xf32>
    %cst_45 = arith.constant dense<0xFF800000> : vector<8xf32>
    %78 = vector.multi_reduction <maximumf>, %77, %cst_45 [1] : vector<8x8xf32> to vector<8xf32>
    %79 = vector.shape_cast %78 : vector<8xf32> to vector<8x1xf32>
    %80 = vector.broadcast %79 : vector<8x1xf32> to vector<8x8xf32>
    %81 = arith.subf %77, %80 : vector<8x8xf32>
    %82 = math.exp %81 : vector<8x8xf32>
    %cst_46 = arith.constant dense<0.000000e+00> : vector<8xf32>
    %83 = vector.multi_reduction <add>, %82, %cst_46 [1] : vector<8x8xf32> to vector<8xf32>
    %84 = vector.shape_cast %83 : vector<8xf32> to vector<8x1xf32>
    %85 = tpu.reciprocal %84 {approx = true} : vector<8x1xf32> -> vector<8x1xf32>
    %86 = vector.broadcast %85 : vector<8x1xf32> to vector<8x8xf32>
    %87 = arith.mulf %82, %86 : vector<8x8xf32>
    %88 = vector.extract_strided_slice %43 {offsets = [0, 8], sizes = [8, 8], strides = [1, 1]} : vector<8x32xf32> to vector<8x8xf32>
    %cst_47 = arith.constant dense<0.000000e+00> : vector<8x8xf32>
    %89 = tpu.matmul %87, %88, %cst_47 {dimension_numbers = #tpu.dot_dimension_numbers<[1], [0], [0], [1], [0, 0, 1, 1], [], []>} : vector<8x8xf32>, vector<8x8xf32>, vector<8x8xf32> -> vector<8x8xf32>
    %90 = vector.extract_strided_slice %33 {offsets = [8, 0], sizes = [8, 32], strides = [1, 1]} : vector<32x32xf32> to vector<8x32xf32>
    %cst_48 = arith.constant dense<0.000000e+00> : vector<8x32xf32>
    %91 = tpu.matmul %89, %90, %cst_48 {dimension_numbers = #tpu.dot_dimension_numbers<[1], [0], [0], [1], [0, 0, 1, 1], [], []>} : vector<8x8xf32>, vector<8x32xf32>, vector<8x32xf32> -> vector<8x32xf32>
    %92 = arith.addf %68, %91 : vector<8x32xf32>
    %93 = vector.extract_strided_slice %37 {offsets = [0, 16], sizes = [8, 8], strides = [1, 1]} : vector<8x32xf32> to vector<8x8xf32>
    %94 = vector.extract_strided_slice %40 {offsets = [0, 16], sizes = [8, 8], strides = [1, 1]} : vector<8x32xf32> to vector<8x8xf32>
    %cst_49 = arith.constant dense<0.000000e+00> : vector<8x8xf32>
    %95 = tpu.matmul %93, %94, %cst_49 {dimension_numbers = #tpu.dot_dimension_numbers<[1], [1], [0], [0], [0, 0, 1, 0], [], []>} : vector<8x8xf32>, vector<8x8xf32>, vector<8x8xf32> -> vector<8x8xf32>
    %cst_50 = arith.constant 0.353553385 : f32
    %96 = vector.broadcast %cst_50 : f32 to vector<8x8xf32>
    %97 = arith.mulf %95, %96 : vector<8x8xf32>
    %cst_51 = arith.constant 0.000000e+00 : f32
    %98 = vector.broadcast %cst_51 : f32 to vector<8x8xf32>
    %99 = arith.cmpf oeq, %26, %98 : vector<8x8xf32>
    %cst_52 = arith.constant -1.000000e+09 : f32
    %100 = vector.broadcast %cst_52 : f32 to vector<8x8xf32>
    %101 = arith.select %99, %100, %97 : vector<8x8xi1>, vector<8x8xf32>
    %cst_53 = arith.constant dense<0xFF800000> : vector<8xf32>
    %102 = vector.multi_reduction <maximumf>, %101, %cst_53 [1] : vector<8x8xf32> to vector<8xf32>
    %103 = vector.shape_cast %102 : vector<8xf32> to vector<8x1xf32>
    %104 = vector.broadcast %103 : vector<8x1xf32> to vector<8x8xf32>
    %105 = arith.subf %101, %104 : vector<8x8xf32>
    %106 = math.exp %105 : vector<8x8xf32>
    %cst_54 = arith.constant dense<0.000000e+00> : vector<8xf32>
    %107 = vector.multi_reduction <add>, %106, %cst_54 [1] : vector<8x8xf32> to vector<8xf32>
    %108 = vector.shape_cast %107 : vector<8xf32> to vector<8x1xf32>
    %109 = tpu.reciprocal %108 {approx = true} : vector<8x1xf32> -> vector<8x1xf32>
    %110 = vector.broadcast %109 : vector<8x1xf32> to vector<8x8xf32>
    %111 = arith.mulf %106, %110 : vector<8x8xf32>
    %112 = vector.extract_strided_slice %43 {offsets = [0, 16], sizes = [8, 8], strides = [1, 1]} : vector<8x32xf32> to vector<8x8xf32>
    %cst_55 = arith.constant dense<0.000000e+00> : vector<8x8xf32>
    %113 = tpu.matmul %111, %112, %cst_55 {dimension_numbers = #tpu.dot_dimension_numbers<[1], [0], [0], [1], [0, 0, 1, 1], [], []>} : vector<8x8xf32>, vector<8x8xf32>, vector<8x8xf32> -> vector<8x8xf32>
    %114 = vector.extract_strided_slice %33 {offsets = [16, 0], sizes = [8, 32], strides = [1, 1]} : vector<32x32xf32> to vector<8x32xf32>
    %cst_56 = arith.constant dense<0.000000e+00> : vector<8x32xf32>
    %115 = tpu.matmul %113, %114, %cst_56 {dimension_numbers = #tpu.dot_dimension_numbers<[1], [0], [0], [1], [0, 0, 1, 1], [], []>} : vector<8x8xf32>, vector<8x32xf32>, vector<8x32xf32> -> vector<8x32xf32>
    %116 = arith.addf %92, %115 : vector<8x32xf32>
    %117 = vector.extract_strided_slice %37 {offsets = [0, 24], sizes = [8, 8], strides = [1, 1]} : vector<8x32xf32> to vector<8x8xf32>
    %118 = vector.extract_strided_slice %40 {offsets = [0, 24], sizes = [8, 8], strides = [1, 1]} : vector<8x32xf32> to vector<8x8xf32>
    %cst_57 = arith.constant dense<0.000000e+00> : vector<8x8xf32>
    %119 = tpu.matmul %117, %118, %cst_57 {dimension_numbers = #tpu.dot_dimension_numbers<[1], [1], [0], [0], [0, 0, 1, 0], [], []>} : vector<8x8xf32>, vector<8x8xf32>, vector<8x8xf32> -> vector<8x8xf32>
    %cst_58 = arith.constant 0.353553385 : f32
    %120 = vector.broadcast %cst_58 : f32 to vector<8x8xf32>
    %121 = arith.mulf %119, %120 : vector<8x8xf32>
    %cst_59 = arith.constant 0.000000e+00 : f32
    %122 = vector.broadcast %cst_59 : f32 to vector<8x8xf32>
    %123 = arith.cmpf oeq, %26, %122 : vector<8x8xf32>
    %cst_60 = arith.constant -1.000000e+09 : f32
    %124 = vector.broadcast %cst_60 : f32 to vector<8x8xf32>
    %125 = arith.select %123, %124, %121 : vector<8x8xi1>, vector<8x8xf32>
    %cst_61 = arith.constant dense<0xFF800000> : vector<8xf32>
    %126 = vector.multi_reduction <maximumf>, %125, %cst_61 [1] : vector<8x8xf32> to vector<8xf32>
    %127 = vector.shape_cast %126 : vector<8xf32> to vector<8x1xf32>
    %128 = vector.broadcast %127 : vector<8x1xf32> to vector<8x8xf32>
    %129 = arith.subf %125, %128 : vector<8x8xf32>
    %130 = math.exp %129 : vector<8x8xf32>
    %cst_62 = arith.constant dense<0.000000e+00> : vector<8xf32>
    %131 = vector.multi_reduction <add>, %130, %cst_62 [1] : vector<8x8xf32> to vector<8xf32>
    %132 = vector.shape_cast %131 : vector<8xf32> to vector<8x1xf32>
    %133 = tpu.reciprocal %132 {approx = true} : vector<8x1xf32> -> vector<8x1xf32>
    %134 = vector.broadcast %133 : vector<8x1xf32> to vector<8x8xf32>
    %135 = arith.mulf %130, %134 : vector<8x8xf32>
    %136 = vector.extract_strided_slice %43 {offsets = [0, 24], sizes = [8, 8], strides = [1, 1]} : vector<8x32xf32> to vector<8x8xf32>
    %cst_63 = arith.constant dense<0.000000e+00> : vector<8x8xf32>
    %137 = tpu.matmul %135, %136, %cst_63 {dimension_numbers = #tpu.dot_dimension_numbers<[1], [0], [0], [1], [0, 0, 1, 1], [], []>} : vector<8x8xf32>, vector<8x8xf32>, vector<8x8xf32> -> vector<8x8xf32>
    %138 = vector.extract_strided_slice %33 {offsets = [24, 0], sizes = [8, 32], strides = [1, 1]} : vector<32x32xf32> to vector<8x32xf32>
    %cst_64 = arith.constant dense<0.000000e+00> : vector<8x32xf32>
    %139 = tpu.matmul %137, %138, %cst_64 {dimension_numbers = #tpu.dot_dimension_numbers<[1], [0], [0], [1], [0, 0, 1, 1], [], []>} : vector<8x8xf32>, vector<8x32xf32>, vector<8x32xf32> -> vector<8x32xf32>
    %140 = arith.addf %116, %139 : vector<8x32xf32>
    %141 = vector.broadcast %34 : vector<1x32xf32> to vector<8x32xf32>
    %142 = arith.addf %140, %141 : vector<8x32xf32>
    %143 = arith.addf %1, %142 : vector<8x32xf32>
    %c0_65 = arith.constant 0 : index
    %c0_66 = arith.constant 0 : index
    %c0_67 = arith.constant 0 : index
    %144 = vector.load %arg13[%c0_65, %c0_66, %c0_67] : memref<1x8x32xf32, #tpu.memory_space<vmem>>, vector<1x8x32xf32>
    %145 = vector.shape_cast %144 : vector<1x8x32xf32> to vector<8x32xf32>
    %146 = vector.shape_cast %143 : vector<8x32xf32> to vector<1x8x32xf32>
    tpu.vector_store %arg13[%c0_65, %c0_66, %c0_67], %146 {strides = array<i32>} : memref<1x8x32xf32, #tpu.memory_space<vmem>>, vector<1x8x32xf32>,
    return
  }
  func.func @transform_0(%arg0: i32) -> (i32, i32, i32) {
    %c0_i32 = arith.constant 0 : i32
    %c0_i32_0 = arith.constant 0 : i32
    %c0_i32_1 = arith.constant 0 : i32
    return %arg0, %c0_i32, %c0_i32_0 : i32, i32, i32
  }
  func.func @transform_1(%arg0: i32) -> (i32, i32, i32) {
    %c0_i32 = arith.constant 0 : i32
    %c0_i32_0 = arith.constant 0 : i32
    %c0_i32_1 = arith.constant 0 : i32
    %c0_i32_2 = arith.constant 0 : i32
    return %c0_i32, %c0_i32_0, %c0_i32_1 : i32, i32, i32
  }
  func.func @transform_2(%arg0: i32) -> (i32, i32) {
    %c0_i32 = arith.constant 0 : i32
    %c0_i32_0 = arith.constant 0 : i32
    %c0_i32_1 = arith.constant 0 : i32
    return %c0_i32, %c0_i32_0 : i32, i32
  }
  func.func @transform_3(%arg0: i32) -> (i32, i32) {
    %c0_i32 = arith.constant 0 : i32
    %c0_i32_0 = arith.constant 0 : i32
    %c0_i32_1 = arith.constant 0 : i32
    return %c0_i32, %c0_i32_0 : i32, i32
  }
  func.func @transform_4(%arg0: i32) -> (i32, i32) {
    %c0_i32 = arith.constant 0 : i32
    %c0_i32_0 = arith.constant 0 : i32
    %c0_i32_1 = arith.constant 0 : i32
    return %c0_i32, %c0_i32_0 : i32, i32
  }
  func.func @transform_5(%arg0: i32) -> (i32, i32) {
    %c0_i32 = arith.constant 0 : i32
    %c0_i32_0 = arith.constant 0 : i32
    %c0_i32_1 = arith.constant 0 : i32
    return %c0_i32, %c0_i32_0 : i32, i32
  }
  func.func @transform_6(%arg0: i32) -> (i32, i32) {
    %c0_i32 = arith.constant 0 : i32
    %c0_i32_0 = arith.constant 0 : i32
    %c0_i32_1 = arith.constant 0 : i32
    return %c0_i32, %c0_i32_0 : i32, i32
  }
  func.func @transform_7(%arg0: i32) -> (i32, i32) {
    %c0_i32 = arith.constant 0 : i32
    %c0_i32_0 = arith.constant 0 : i32
    %c0_i32_1 = arith.constant 0 : i32
    return %c0_i32, %c0_i32_0 : i32, i32
  }
  func.func @transform_8(%arg0: i32) -> (i32, i32) {
    %c0_i32 = arith.constant 0 : i32
    %c0_i32_0 = arith.constant 0 : i32
    %c0_i32_1 = arith.constant 0 : i32
    return %c0_i32, %c0_i32_0 : i32, i32
  }
  func.func @transform_9(%arg0: i32) -> (i32, i32) {
    %c0_i32 = arith.constant 0 : i32
    %c0_i32_0 = arith.constant 0 : i32
    %c0_i32_1 = arith.constant 0 : i32
    return %c0_i32, %c0_i32_0 : i32, i32
  }
  func.func @transform_10(%arg0: i32) -> (i32, i32) {
    %c0_i32 = arith.constant 0 : i32
    %c0_i32_0 = arith.constant 0 : i32
    %c0_i32_1 = arith.constant 0 : i32
    return %c0_i32, %c0_i32_0 : i32, i32
  }
  func.func @transform_11(%arg0: i32) -> (i32, i32) {
    %c0_i32 = arith.constant 0 : i32
    %c0_i32_0 = arith.constant 0 : i32
    %c0_i32_1 = arith.constant 0 : i32
    return %c0_i32, %c0_i32_0 : i32, i32
  }
  func.func @transform_12(%arg0: i32) -> (i32, i32, i32) {
    %c0_i32 = arith.constant 0 : i32
    %c0_i32_0 = arith.constant 0 : i32
    %c0_i32_1 = arith.constant 0 : i32
    return %arg0, %c0_i32, %c0_i32_0 : i32, i32, i32
  }
}

module attributes {stable_mosaic.version = 11 : i64} {
  func.func @_self_attn_kernel(%arg0: i32, %arg1: memref<1x8x32xf32, #tpu.memory_space<vmem>>, %arg2: memref<1x8x8xf32, #tpu.memory_space<vmem>>, %arg3: memref<1x32xf32, #tpu.memory_space<vmem>>, %arg4: memref<1x32xf32, #tpu.memory_space<vmem>>, %arg5: memref<32x32xf32, #tpu.memory_space<vmem>>, %arg6: memref<1x32xf32, #tpu.memory_space<vmem>>, %arg7: memref<32x32xf32, #tpu.memory_space<vmem>>, %arg8: memref<1x32xf32, #tpu.memory_space<vmem>>, %arg9: memref<32x32xf32, #tpu.memory_space<vmem>>, %arg10: memref<1x32xf32, #tpu.memory_space<vmem>>, %arg11: memref<32x32xf32, #tpu.memory_space<vmem>>, %arg12: memref<1x32xf32, #tpu.memory_space<vmem>>, %arg13: memref<1x8x32xf32, #tpu.memory_space<vmem>>) attributes {dimension_semantics = [#tpu.dimension_semantics<parallel>], iteration_bounds = array<i64: 2>, scalar_prefetch = 0 : i64, scratch_operands = 0 : i64, tpu.core_type = #tpu.core_type<tc>, window_params = [{transform_indices = @transform_0, window_bounds = array<i64: 1, 8, 32>}, {pipeline_mode = #tpu.pipeline_mode<synchronous>, transform_indices = @transform_1, window_bounds = array<i64: 1, 8, 8>}, {pipeline_mode = #tpu.pipeline_mode<synchronous>, transform_indices = @transform_2, window_bounds = array<i64: 1, 32>}, {pipeline_mode = #tpu.pipeline_mode<synchronous>, transform_indices = @transform_3, window_bounds = array<i64: 1, 32>}, {pipeline_mode = #tpu.pipeline_mode<synchronous>, transform_indices = @transform_4, window_bounds = array<i64: 32, 32>}, {pipeline_mode = #tpu.pipeline_mode<synchronous>, transform_indices = @transform_5, window_bounds = array<i64: 1, 32>}, {pipeline_mode = #tpu.pipeline_mode<synchronous>, transform_indices = @transform_6, window_bounds = array<i64: 32, 32>}, {pipeline_mode = #tpu.pipeline_mode<synchronous>, transform_indices = @transform_7, window_bounds = array<i64: 1, 32>}, {pipeline_mode = #tpu.pipeline_mode<synchronous>, transform_indices = @transform_8, window_bounds = array<i64: 32, 32>}, {pipeline_mode = #tpu.pipeline_mode<synchronous>, transform_indices = @transform_9, window_bounds = array<i64: 1, 32>}, {pipeline_mode = #tpu.pipeline_mode<synchronous>, transform_indices = @transform_10, window_bounds = array<i64: 32, 32>}, {pipeline_mode = #tpu.pipeline_mode<synchronous>, transform_indices = @transform_11, window_bounds = array<i64: 1, 32>}, {transform_indices = @transform_12, window_bounds = array<i64: 1, 8, 32>}]} {
    %c0 = arith.constant 0 : index
    %c0_0 = arith.constant 0 : index
    %c0_1 = arith.constant 0 : index
    %0 = vector.load %arg1[%c0, %c0_0, %c0_1] : memref<1x8x32xf32, #tpu.memory_space<vmem>>, vector<1x8x32xf32>
    %1 = vector.shape_cast %0 : vector<1x8x32xf32> to vector<8x32xf32>
    %c0_2 = arith.constant 0 : index
    %c0_3 = arith.constant 0 : index
    %2 = vector.load %arg3[%c0_2, %c0_3] : memref<1x32xf32, #tpu.memory_space<vmem>>, vector<1x32xf32>
    %c0_4 = arith.constant 0 : index
    %c0_5 = arith.constant 0 : index
    %3 = vector.load %arg4[%c0_4, %c0_5] : memref<1x32xf32, #tpu.memory_space<vmem>>, vector<1x32xf32>
    %cst = arith.constant dense<0.000000e+00> : vector<8xf32>
    %4 = vector.multi_reduction <add>, %1, %cst [1] : vector<8x32xf32> to vector<8xf32>
    %5 = vector.shape_cast %4 : vector<8xf32> to vector<8x1xf32>
    %cst_6 = arith.constant 3.200000e+01 : f32
    %6 = vector.broadcast %cst_6 : f32 to vector<8x1xf32>
    %7 = arith.divf %5, %6 : vector<8x1xf32>
    %8 = vector.broadcast %7 : vector<8x1xf32> to vector<8x32xf32>
    %9 = arith.subf %1, %8 : vector<8x32xf32>
    %10 = arith.mulf %9, %9 : vector<8x32xf32>
    %cst_7 = arith.constant dense<0.000000e+00> : vector<8xf32>
    %11 = vector.multi_reduction <add>, %10, %cst_7 [1] : vector<8x32xf32> to vector<8xf32>
    %12 = vector.shape_cast %11 : vector<8xf32> to vector<8x1xf32>
    %cst_8 = arith.constant 0.0322580636 : f32
    %13 = vector.broadcast %cst_8 : f32 to vector<8x1xf32>
    %14 = arith.mulf %12, %13 : vector<8x1xf32>
    %15 = math.sqrt %14 : vector<8x1xf32>
    %cst_9 = arith.constant 9.99999997E-7 : f32
    %16 = vector.broadcast %cst_9 : f32 to vector<8x1xf32>
    %17 = arith.addf %15, %16 : vector<8x1xf32>
    %18 = tpu.reciprocal %17 {approx = true} : vector<8x1xf32> -> vector<8x1xf32>
    %19 = vector.broadcast %2 : vector<1x32xf32> to vector<8x32xf32>
    %20 = arith.mulf %19, %9 : vector<8x32xf32>
    %21 = vector.broadcast %18 : vector<8x1xf32> to vector<8x32xf32>
    %22 = arith.mulf %20, %21 : vector<8x32xf32>
    %23 = vector.broadcast %3 : vector<1x32xf32> to vector<8x32xf32>
    %24 = arith.addf %22, %23 : vector<8x32xf32>
    %c0_10 = arith.constant 0 : index
    %c0_11 = arith.constant 0 : index
    %c0_12 = arith.constant 0 : index
    %25 = vector.load %arg2[%c0_10, %c0_11, %c0_12] : memref<1x8x8xf32, #tpu.memory_space<vmem>>, vector<1x8x8xf32>
    %26 = vector.shape_cast %25 : vector<1x8x8xf32> to vector<8x8xf32>
    %c0_13 = arith.constant 0 : index
    %c0_14 = arith.constant 0 : index
    %27 = vector.load %arg5[%c0_13, %c0_14] : memref<32x32xf32, #tpu.memory_space<vmem>>, vector<32x32xf32>
    %c0_15 = arith.constant 0 : index
    %c0_16 = arith.constant 0 : index
    %28 = vector.load %arg6[%c0_15, %c0_16] : memref<1x32xf32, #tpu.memory_space<vmem>>, vector<1x32xf32>
    %c0_17 = arith.constant 0 : index
    %c0_18 = arith.constant 0 : index
    %29 = vector.load %arg7[%c0_17, %c0_18] : memref<32x32xf32, #tpu.memory_space<vmem>>, vector<32x32xf32>
    %c0_19 = arith.constant 0 : index
    %c0_20 = arith.constant 0 : index
    %30 = vector.load %arg8[%c0_19, %c0_20] : memref<1x32xf32, #tpu.memory_space<vmem>>, vector<1x32xf32>
    %c0_21 = arith.constant 0 : index
    %c0_22 = arith.constant 0 : index
    %31 = vector.load %arg9[%c0_21, %c0_22] : memref<32x32xf32, #tpu.memory_space<vmem>>, vector<32x32xf32>
    %c0_23 = arith.constant 0 : index
    %c0_24 = arith.constant 0 : index
    %32 = vector.load %arg10[%c0_23, %c0_24] : memref<1x32xf32, #tpu.memory_space<vmem>>, vector<1x32xf32>
    %c0_25 = arith.constant 0 : index
    %c0_26 = arith.constant 0 : index
    %33 = vector.load %arg11[%c0_25, %c0_26] : memref<32x32xf32, #tpu.memory_space<vmem>>, vector<32x32xf32>
    %c0_27 = arith.constant 0 : index
    %c0_28 = arith.constant 0 : index
    %34 = vector.load %arg12[%c0_27, %c0_28] : memref<1x32xf32, #tpu.memory_space<vmem>>, vector<1x32xf32>
    %cst_29 = arith.constant dense<0.000000e+00> : vector<8x32xf32>
    %35 = tpu.matmul %24, %27, %cst_29 {dimension_numbers = #tpu.dot_dimension_numbers<[1], [0], [0], [1], [0, 0, 1, 1], [], []>} : vector<8x32xf32>, vector<32x32xf32>, vector<8x32xf32> -> vector<8x32xf32>
    %36 = vector.broadcast %28 : vector<1x32xf32> to vector<8x32xf32>
    %37 = arith.addf %35, %36 : vector<8x32xf32>
    %cst_30 = arith.constant dense<0.000000e+00> : vector<8x32xf32>
    %38 = tpu.matmul %24, %29, %cst_30 {dimension_numbers = #tpu.dot_dimension_numbers<[1], [0], [0], [1], [0, 0, 1, 1], [], []>} : vector<8x32xf32>, vector<32x32xf32>, vector<8x32xf32> -> vector<8x32xf32>
    %39 = vector.broadcast %30 : vector<1x32xf32> to vector<8x32xf32>
    %40 = arith.addf %38, %39 : vector<8x32xf32>
    %cst_31 = arith.constant dense<0.000000e+00> : vector<8x32xf32>
    %41 = tpu.matmul %24, %31, %cst_31 {dimension_numbers = #tpu.dot_dimension_numbers<[1], [0], [0], [1], [0, 0, 1, 1], [], []>} : vector<8x32xf32>, vector<32x32xf32>, vector<8x32xf32> -> vector<8x32xf32>
    %42 = vector.broadcast %32 : vector<1x32xf32> to vector<8x32xf32>
    %43 = arith.addf %41, %42 : vector<8x32xf32>
    %cst_32 = arith.constant 0.000000e+00 : f32
    %44 = vector.broadcast %cst_32 : f32 to vector<8x32xf32>
    %45 = vector.extract_strided_slice %37 {offsets = [0, 0], sizes = [8, 8], strides = [1, 1]} : vector<8x32xf32> to vector<8x8xf32>
    %46 = vector.extract_strided_slice %40 {offsets = [0, 0], sizes = [8, 8], strides = [1, 1]} : vector<8x32xf32> to vector<8x8xf32>
    %cst_33 = arith.constant dense<0.000000e+00> : vector<8x8xf32>
    %47 = tpu.matmul %45, %46, %cst_33 {dimension_numbers = #tpu.dot_dimension_numbers<[1], [1], [0], [0], [0, 0, 1, 0], [], []>} : vector<8x8xf32>, vector<8x8xf32>, vector<8x8xf32> -> vector<8x8xf32>
    %cst_34 = arith.constant 0.353553385 : f32
    %48 = vector.broadcast %cst_34 : f32 to vector<8x8xf32>
    %49 = arith.mulf %47, %48 : vector<8x8xf32>
    %cst_35 = arith.constant 0.000000e+00 : f32
    %50 = vector.broadcast %cst_35 : f32 to vector<8x8xf32>
    %51 = arith.cmpf oeq, %26, %50 : vector<8x8xf32>
    %cst_36 = arith.constant -1.000000e+09 : f32
    %52 = vector.broadcast %cst_36 : f32 to vector<8x8xf32>
    %53 = arith.select %51, %52, %49 : vector<8x8xi1>, vector<8x8xf32>
    %cst_37 = arith.constant dense<0xFF800000> : vector<8xf32>
    %54 = vector.multi_reduction <maximumf>, %53, %cst_37 [1] : vector<8x8xf32> to vector<8xf32>
    %55 = vector.shape_cast %54 : vector<8xf32> to vector<8x1xf32>
    %56 = vector.broadcast %55 : vector<8x1xf32> to vector<8x8xf32>
    %57 = arith.subf %53, %56 : vector<8x8xf32>
    %58 = math.exp %57 : vector<8x8xf32>
    %cst_38 = arith.constant dense<0.000000e+00> : vector<8xf32>
    %59 = vector.multi_reduction <add>, %58, %cst_38 [1] : vector<8x8xf32> to vector<8xf32>
    %60 = vector.shape_cast %59 : vector<8xf32> to vector<8x1xf32>
    %61 = tpu.reciprocal %60 {approx = true} : vector<8x1xf32> -> vector<8x1xf32>
    %62 = vector.broadcast %61 : vector<8x1xf32> to vector<8x8xf32>
    %63 = arith.mulf %58, %62 : vector<8x8xf32>
    %64 = vector.extract_strided_slice %43 {offsets = [0, 0], sizes = [8, 8], strides = [1, 1]} : vector<8x32xf32> to vector<8x8xf32>
    %cst_39 = arith.constant dense<0.000000e+00> : vector<8x8xf32>
    %65 = tpu.matmul %63, %64, %cst_39 {dimension_numbers = #tpu.dot_dimension_numbers<[1], [0], [0], [1], [0, 0, 1, 1], [], []>} : vector<8x8xf32>, vector<8x8xf32>, vector<8x8xf32> -> vector<8x8xf32>
    %66 = vector.extract_strided_slice %33 {offsets = [0, 0], sizes = [8, 32], strides = [1, 1]} : vector<32x32xf32> to vector<8x32xf32>
    %cst_40 = arith.constant dense<0.000000e+00> : vector<8x32xf32>
    %67 = tpu.matmul %65, %66, %cst_40 {dimension_numbers = #tpu.dot_dimension_numbers<[1], [0], [0], [1], [0, 0, 1, 1], [], []>} : vector<8x8xf32>, vector<8x32xf32>, vector<8x32xf32> -> vector<8x32xf32>
    %68 = arith.addf %44, %67 : vector<8x32xf32>
    %69 = vector.extract_strided_slice %37 {offsets = [0, 8], sizes = [8, 8], strides = [1, 1]} : vector<8x32xf32> to vector<8x8xf32>
    %70 = vector.extract_strided_slice %40 {offsets = [0, 8], sizes = [8, 8], strides = [1, 1]} : vector<8x32xf32> to vector<8x8xf32>
    %cst_41 = arith.constant dense<0.000000e+00> : vector<8x8xf32>
    %71 = tpu.matmul %69, %70, %cst_41 {dimension_numbers = #tpu.dot_dimension_numbers<[1], [1], [0], [0], [0, 0, 1, 0], [], []>} : vector<8x8xf32>, vector<8x8xf32>, vector<8x8xf32> -> vector<8x8xf32>
    %cst_42 = arith.constant 0.353553385 : f32
    %72 = vector.broadcast %cst_42 : f32 to vector<8x8xf32>
    %73 = arith.mulf %71, %72 : vector<8x8xf32>
    %cst_43 = arith.constant 0.000000e+00 : f32
    %74 = vector.broadcast %cst_43 : f32 to vector<8x8xf32>
    %75 = arith.cmpf oeq, %26, %74 : vector<8x8xf32>
    %cst_44 = arith.constant -1.000000e+09 : f32
    %76 = vector.broadcast %cst_44 : f32 to vector<8x8xf32>
    %77 = arith.select %75, %76, %73 : vector<8x8xi1>, vector<8x8xf32>
    %cst_45 = arith.constant dense<0xFF800000> : vector<8xf32>
    %78 = vector.multi_reduction <maximumf>, %77, %cst_45 [1] : vector<8x8xf32> to vector<8xf32>
    %79 = vector.shape_cast %78 : vector<8xf32> to vector<8x1xf32>
    %80 = vector.broadcast %79 : vector<8x1xf32> to vector<8x8xf32>
    %81 = arith.subf %77, %80 : vector<8x8xf32>
    %82 = math.exp %81 : vector<8x8xf32>
    %cst_46 = arith.constant dense<0.000000e+00> : vector<8xf32>
    %83 = vector.multi_reduction <add>, %82, %cst_46 [1] : vector<8x8xf32> to vector<8xf32>
    %84 = vector.shape_cast %83 : vector<8xf32> to vector<8x1xf32>
    %85 = tpu.reciprocal %84 {approx = true} : vector<8x1xf32> -> vector<8x1xf32>
    %86 = vector.broadcast %85 : vector<8x1xf32> to vector<8x8xf32>
    %87 = arith.mulf %82, %86 : vector<8x8xf32>
    %88 = vector.extract_strided_slice %43 {offsets = [0, 8], sizes = [8, 8], strides = [1, 1]} : vector<8x32xf32> to vector<8x8xf32>
    %cst_47 = arith.constant dense<0.000000e+00> : vector<8x8xf32>
    %89 = tpu.matmul %87, %88, %cst_47 {dimension_numbers = #tpu.dot_dimension_numbers<[1], [0], [0], [1], [0, 0, 1, 1], [], []>} : vector<8x8xf32>, vector<8x8xf32>, vector<8x8xf32> -> vector<8x8xf32>
    %90 = vector.extract_strided_slice %33 {offsets = [8, 0], sizes = [8, 32], strides = [1, 1]} : vector<32x32xf32> to vector<8x32xf32>
    %cst_48 = arith.constant dense<0.000000e+00> : vector<8x32xf32>
    %91 = tpu.matmul %89, %90, %cst_48 {dimension_numbers = #tpu.dot_dimension_numbers<[1], [0], [0], [1], [0, 0, 1, 1], [], []>} : vector<8x8xf32>, vector<8x32xf32>, vector<8x32xf32> -> vector<8x32xf32>
    %92 = arith.addf %68, %91 : vector<8x32xf32>
    %93 = vector.extract_strided_slice %37 {offsets = [0, 16], sizes = [8, 8], strides = [1, 1]} : vector<8x32xf32> to vector<8x8xf32>
    %94 = vector.extract_strided_slice %40 {offsets = [0, 16], sizes = [8, 8], strides = [1, 1]} : vector<8x32xf32> to vector<8x8xf32>
    %cst_49 = arith.constant dense<0.000000e+00> : vector<8x8xf32>
    %95 = tpu.matmul %93, %94, %cst_49 {dimension_numbers = #tpu.dot_dimension_numbers<[1], [1], [0], [0], [0, 0, 1, 0], [], []>} : vector<8x8xf32>, vector<8x8xf32>, vector<8x8xf32> -> vector<8x8xf32>
    %cst_50 = arith.constant 0.353553385 : f32
    %96 = vector.broadcast %cst_50 : f32 to vector<8x8xf32>
    %97 = arith.mulf %95, %96 : vector<8x8xf32>
    %cst_51 = arith.constant 0.000000e+00 : f32
    %98 = vector.broadcast %cst_51 : f32 to vector<8x8xf32>
    %99 = arith.cmpf oeq, %26, %98 : vector<8x8xf32>
    %cst_52 = arith.constant -1.000000e+09 : f32
    %100 = vector.broadcast %cst_52 : f32 to vector<8x8xf32>
    %101 = arith.select %99, %100, %97 : vector<8x8xi1>, vector<8x8xf32>
    %cst_53 = arith.constant dense<0xFF800000> : vector<8xf32>
    %102 = vector.multi_reduction <maximumf>, %101, %cst_53 [1] : vector<8x8xf32> to vector<8xf32>
    %103 = vector.shape_cast %102 : vector<8xf32> to vector<8x1xf32>
    %104 = vector.broadcast %103 : vector<8x1xf32> to vector<8x8xf32>
    %105 = arith.subf %101, %104 : vector<8x8xf32>
    %106 = math.exp %105 : vector<8x8xf32>
    %cst_54 = arith.constant dense<0.000000e+00> : vector<8xf32>
    %107 = vector.multi_reduction <add>, %106, %cst_54 [1] : vector<8x8xf32> to vector<8xf32>
    %108 = vector.shape_cast %107 : vector<8xf32> to vector<8x1xf32>
    %109 = tpu.reciprocal %108 {approx = true} : vector<8x1xf32> -> vector<8x1xf32>
    %110 = vector.broadcast %109 : vector<8x1xf32> to vector<8x8xf32>
    %111 = arith.mulf %106, %110 : vector<8x8xf32>
    %112 = vector.extract_strided_slice %43 {offsets = [0, 16], sizes = [8, 8], strides = [1, 1]} : vector<8x32xf32> to vector<8x8xf32>
    %cst_55 = arith.constant dense<0.000000e+00> : vector<8x8xf32>
    %113 = tpu.matmul %111, %112, %cst_55 {dimension_numbers = #tpu.dot_dimension_numbers<[1], [0], [0], [1], [0, 0, 1, 1], [], []>} : vector<8x8xf32>, vector<8x8xf32>, vector<8x8xf32> -> vector<8x8xf32>
    %114 = vector.extract_strided_slice %33 {offsets = [16, 0], sizes = [8, 32], strides = [1, 1]} : vector<32x32xf32> to vector<8x32xf32>
    %cst_56 = arith.constant dense<0.000000e+00> : vector<8x32xf32>
    %115 = tpu.matmul %113, %114, %cst_56 {dimension_numbers = #tpu.dot_dimension_numbers<[1], [0], [0], [1], [0, 0, 1, 1], [], []>} : vector<8x8xf32>, vector<8x32xf32>, vector<8x32xf32> -> vector<8x32xf32>
    %116 = arith.addf %92, %115 : vector<8x32xf32>
    %117 = vector.extract_strided_slice %37 {offsets = [0, 24], sizes = [8, 8], strides = [1, 1]} : vector<8x32xf32> to vector<8x8xf32>
    %118 = vector.extract_strided_slice %40 {offsets = [0, 24], sizes = [8, 8], strides = [1, 1]} : vector<8x32xf32> to vector<8x8xf32>
    %cst_57 = arith.constant dense<0.000000e+00> : vector<8x8xf32>
    %119 = tpu.matmul %117, %118, %cst_57 {dimension_numbers = #tpu.dot_dimension_numbers<[1], [1], [0], [0], [0, 0, 1, 0], [], []>} : vector<8x8xf32>, vector<8x8xf32>, vector<8x8xf32> -> vector<8x8xf32>
    %cst_58 = arith.constant 0.353553385 : f32
    %120 = vector.broadcast %cst_58 : f32 to vector<8x8xf32>
    %121 = arith.mulf %119, %120 : vector<8x8xf32>
    %cst_59 = arith.constant 0.000000e+00 : f32
    %122 = vector.broadcast %cst_59 : f32 to vector<8x8xf32>
    %123 = arith.cmpf oeq, %26, %122 : vector<8x8xf32>
    %cst_60 = arith.constant -1.000000e+09 : f32
    %124 = vector.broadcast %cst_60 : f32 to vector<8x8xf32>
    %125 = arith.select %123, %124, %121 : vector<8x8xi1>, vector<8x8xf32>
    %cst_61 = arith.constant dense<0xFF800000> : vector<8xf32>
    %126 = vector.multi_reduction <maximumf>, %125, %cst_61 [1] : vector<8x8xf32> to vector<8xf32>
    %127 = vector.shape_cast %126 : vector<8xf32> to vector<8x1xf32>
    %128 = vector.broadcast %127 : vector<8x1xf32> to vector<8x8xf32>
    %129 = arith.subf %125, %128 : vector<8x8xf32>
    %130 = math.exp %129 : vector<8x8xf32>
    %cst_62 = arith.constant dense<0.000000e+00> : vector<8xf32>
    %131 = vector.multi_reduction <add>, %130, %cst_62 [1] : vector<8x8xf32> to vector<8xf32>
    %132 = vector.shape_cast %131 : vector<8xf32> to vector<8x1xf32>
    %133 = tpu.reciprocal %132 {approx = true} : vector<8x1xf32> -> vector<8x1xf32>
    %134 = vector.broadcast %133 : vector<8x1xf32> to vector<8x8xf32>
    %135 = arith.mulf %130, %134 : vector<8x8xf32>
    %136 = vector.extract_strided_slice %43 {offsets = [0, 24], sizes = [8, 8], strides = [1, 1]} : vector<8x32xf32> to vector<8x8xf32>
    %cst_63 = arith.constant dense<0.000000e+00> : vector<8x8xf32>
    %137 = tpu.matmul %135, %136, %cst_63 {dimension_numbers = #tpu.dot_dimension_numbers<[1], [0], [0], [1], [0, 0, 1, 1], [], []>} : vector<8x8xf32>, vector<8x8xf32>, vector<8x8xf32> -> vector<8x8xf32>
    %138 = vector.extract_strided_slice %33 {offsets = [24, 0], sizes = [8, 32], strides = [1, 1]} : vector<32x32xf32> to vector<8x32xf32>
    %cst_64 = arith.constant dense<0.000000e+00> : vector<8x32xf32>
    %139 = tpu.matmul %137, %138, %cst_64 {dimension_numbers = #tpu.dot_dimension_numbers<[1], [0], [0], [1], [0, 0, 1, 1], [], []>} : vector<8x8xf32>, vector<8x32xf32>, vector<8x32xf32> -> vector<8x32xf32>
    %140 = arith.addf %116, %139 : vector<8x32xf32>
    %141 = vector.broadcast %34 : vector<1x32xf32> to vector<8x32xf32>
    %142 = arith.addf %140, %141 : vector<8x32xf32>
    %143 = arith.addf %1, %142 : vector<8x32xf32>
    %c0_65 = arith.constant 0 : index
    %c0_66 = arith.constant 0 : index
    %c0_67 = arith.constant 0 : index
    %144 = vector.load %arg13[%c0_65, %c0_66, %c0_67] : memref<1x8x32xf32, #tpu.memory_space<vmem>>, vector<1x8x32xf32>
    %145 = vector.shape_cast %144 : vector<1x8x32xf32> to vector<8x32xf32>
    %146 = vector.shape_cast %143 : vector<8x32xf32> to vector<1x8x32xf32>
    tpu.vector_store %arg13[%c0_65, %c0_66, %c0_67], %146 {strides = array<i32>} : memref<1x8x32xf32, #tpu.memory_space<vmem>>, vector<1x8x32xf32>,
    return
  }
  func.func @transform_0(%arg0: i32) -> (i32, i32, i32) {
    %c0_i32 = arith.constant 0 : i32
    %c0_i32_0 = arith.constant 0 : i32
    %c0_i32_1 = arith.constant 0 : i32
    return %arg0, %c0_i32, %c0_i32_0 : i32, i32, i32
  }
  func.func @transform_1(%arg0: i32) -> (i32, i32, i32) {
    %c0_i32 = arith.constant 0 : i32
    %c0_i32_0 = arith.constant 0 : i32
    %c0_i32_1 = arith.constant 0 : i32
    %c0_i32_2 = arith.constant 0 : i32
    return %c0_i32, %c0_i32_0, %c0_i32_1 : i32, i32, i32
  }
  func.func @transform_2(%arg0: i32) -> (i32, i32) {
    %c0_i32 = arith.constant 0 : i32
    %c0_i32_0 = arith.constant 0 : i32
    %c0_i32_1 = arith.constant 0 : i32
    return %c0_i32, %c0_i32_0 : i32, i32
  }
  func.func @transform_3(%arg0: i32) -> (i32, i32) {
    %c0_i32 = arith.constant 0 : i32
    %c0_i32_0 = arith.constant 0 : i32
    %c0_i32_1 = arith.constant 0 : i32
    return %c0_i32, %c0_i32_0 : i32, i32
  }
  func.func @transform_4(%arg0: i32) -> (i32, i32) {
    %c0_i32 = arith.constant 0 : i32
    %c0_i32_0 = arith.constant 0 : i32
    %c0_i32_1 = arith.constant 0 : i32
    return %c0_i32, %c0_i32_0 : i32, i32
  }
  func.func @transform_5(%arg0: i32) -> (i32, i32) {
    %c0_i32 = arith.constant 0 : i32
    %c0_i32_0 = arith.constant 0 : i32
    %c0_i32_1 = arith.constant 0 : i32
    return %c0_i32, %c0_i32_0 : i32, i32
  }
  func.func @transform_6(%arg0: i32) -> (i32, i32) {
    %c0_i32 = arith.constant 0 : i32
    %c0_i32_0 = arith.constant 0 : i32
    %c0_i32_1 = arith.constant 0 : i32
    return %c0_i32, %c0_i32_0 : i32, i32
  }
  func.func @transform_7(%arg0: i32) -> (i32, i32) {
    %c0_i32 = arith.constant 0 : i32
    %c0_i32_0 = arith.constant 0 : i32
    %c0_i32_1 = arith.constant 0 : i32
    return %c0_i32, %c0_i32_0 : i32, i32
  }
  func.func @transform_8(%arg0: i32) -> (i32, i32) {
    %c0_i32 = arith.constant 0 : i32
    %c0_i32_0 = arith.constant 0 : i32
    %c0_i32_1 = arith.constant 0 : i32
    return %c0_i32, %c0_i32_0 : i32, i32
  }
  func.func @transform_9(%arg0: i32) -> (i32, i32) {
    %c0_i32 = arith.constant 0 : i32
    %c0_i32_0 = arith.constant 0 : i32
    %c0_i32_1 = arith.constant 0 : i32
    return %c0_i32, %c0_i32_0 : i32, i32
  }
  func.func @transform_10(%arg0: i32) -> (i32, i32) {
    %c0_i32 = arith.constant 0 : i32
    %c0_i32_0 = arith.constant 0 : i32
    %c0_i32_1 = arith.constant 0 : i32
    return %c0_i32, %c0_i32_0 : i32, i32
  }
  func.func @transform_11(%arg0: i32) -> (i32, i32) {
    %c0_i32 = arith.constant 0 : i32
    %c0_i32_0 = arith.constant 0 : i32
    %c0_i32_1 = arith.constant 0 : i32
    return %c0_i32, %c0_i32_0 : i32, i32
  }
  func.func @transform_12(%arg0: i32) -> (i32, i32, i32) {
    %c0_i32 = arith.constant 0 : i32
    %c0_i32_0 = arith.constant 0 : i32
    %c0_i32_1 = arith.constant 0 : i32
    return %arg0, %c0_i32, %c0_i32_0 : i32, i32, i32
  }
}

module attributes {stable_mosaic.version = 11 : i64} {
  func.func @_src_attn_kernel(%arg0: i32, %arg1: memref<1x8x32xf32, #tpu.memory_space<vmem>>, %arg2: memref<1x8x32xf32, #tpu.memory_space<vmem>>, %arg3: memref<1x1x8xf32, #tpu.memory_space<vmem>>, %arg4: memref<1x32xf32, #tpu.memory_space<vmem>>, %arg5: memref<1x32xf32, #tpu.memory_space<vmem>>, %arg6: memref<32x32xf32, #tpu.memory_space<vmem>>, %arg7: memref<1x32xf32, #tpu.memory_space<vmem>>, %arg8: memref<32x32xf32, #tpu.memory_space<vmem>>, %arg9: memref<1x32xf32, #tpu.memory_space<vmem>>, %arg10: memref<32x32xf32, #tpu.memory_space<vmem>>, %arg11: memref<1x32xf32, #tpu.memory_space<vmem>>, %arg12: memref<32x32xf32, #tpu.memory_space<vmem>>, %arg13: memref<1x32xf32, #tpu.memory_space<vmem>>, %arg14: memref<1x8x32xf32, #tpu.memory_space<vmem>>) attributes {dimension_semantics = [#tpu.dimension_semantics<parallel>], iteration_bounds = array<i64: 2>, scalar_prefetch = 0 : i64, scratch_operands = 0 : i64, tpu.core_type = #tpu.core_type<tc>, window_params = [{transform_indices = @transform_0, window_bounds = array<i64: 1, 8, 32>}, {transform_indices = @transform_1, window_bounds = array<i64: 1, 8, 32>}, {transform_indices = @transform_2, window_bounds = array<i64: 1, 1, 8>}, {pipeline_mode = #tpu.pipeline_mode<synchronous>, transform_indices = @transform_3, window_bounds = array<i64: 1, 32>}, {pipeline_mode = #tpu.pipeline_mode<synchronous>, transform_indices = @transform_4, window_bounds = array<i64: 1, 32>}, {pipeline_mode = #tpu.pipeline_mode<synchronous>, transform_indices = @transform_5, window_bounds = array<i64: 32, 32>}, {pipeline_mode = #tpu.pipeline_mode<synchronous>, transform_indices = @transform_6, window_bounds = array<i64: 1, 32>}, {pipeline_mode = #tpu.pipeline_mode<synchronous>, transform_indices = @transform_7, window_bounds = array<i64: 32, 32>}, {pipeline_mode = #tpu.pipeline_mode<synchronous>, transform_indices = @transform_8, window_bounds = array<i64: 1, 32>}, {pipeline_mode = #tpu.pipeline_mode<synchronous>, transform_indices = @transform_9, window_bounds = array<i64: 32, 32>}, {pipeline_mode = #tpu.pipeline_mode<synchronous>, transform_indices = @transform_10, window_bounds = array<i64: 1, 32>}, {pipeline_mode = #tpu.pipeline_mode<synchronous>, transform_indices = @transform_11, window_bounds = array<i64: 32, 32>}, {pipeline_mode = #tpu.pipeline_mode<synchronous>, transform_indices = @transform_12, window_bounds = array<i64: 1, 32>}, {transform_indices = @transform_13, window_bounds = array<i64: 1, 8, 32>}]} {
    %c0 = arith.constant 0 : index
    %c0_0 = arith.constant 0 : index
    %c0_1 = arith.constant 0 : index
    %0 = vector.load %arg1[%c0, %c0_0, %c0_1] : memref<1x8x32xf32, #tpu.memory_space<vmem>>, vector<1x8x32xf32>
    %1 = vector.shape_cast %0 : vector<1x8x32xf32> to vector<8x32xf32>
    %c0_2 = arith.constant 0 : index
    %c0_3 = arith.constant 0 : index
    %c0_4 = arith.constant 0 : index
    %2 = vector.load %arg2[%c0_2, %c0_3, %c0_4] : memref<1x8x32xf32, #tpu.memory_space<vmem>>, vector<1x8x32xf32>
    %3 = vector.shape_cast %2 : vector<1x8x32xf32> to vector<8x32xf32>
    %c0_5 = arith.constant 0 : index
    %c0_6 = arith.constant 0 : index
    %4 = vector.load %arg4[%c0_5, %c0_6] : memref<1x32xf32, #tpu.memory_space<vmem>>, vector<1x32xf32>
    %c0_7 = arith.constant 0 : index
    %c0_8 = arith.constant 0 : index
    %5 = vector.load %arg5[%c0_7, %c0_8] : memref<1x32xf32, #tpu.memory_space<vmem>>, vector<1x32xf32>
    %cst = arith.constant dense<0.000000e+00> : vector<8xf32>
    %6 = vector.multi_reduction <add>, %1, %cst [1] : vector<8x32xf32> to vector<8xf32>
    %7 = vector.shape_cast %6 : vector<8xf32> to vector<8x1xf32>
    %cst_9 = arith.constant 3.200000e+01 : f32
    %8 = vector.broadcast %cst_9 : f32 to vector<8x1xf32>
    %9 = arith.divf %7, %8 : vector<8x1xf32>
    %10 = vector.broadcast %9 : vector<8x1xf32> to vector<8x32xf32>
    %11 = arith.subf %1, %10 : vector<8x32xf32>
    %12 = arith.mulf %11, %11 : vector<8x32xf32>
    %cst_10 = arith.constant dense<0.000000e+00> : vector<8xf32>
    %13 = vector.multi_reduction <add>, %12, %cst_10 [1] : vector<8x32xf32> to vector<8xf32>
    %14 = vector.shape_cast %13 : vector<8xf32> to vector<8x1xf32>
    %cst_11 = arith.constant 0.0322580636 : f32
    %15 = vector.broadcast %cst_11 : f32 to vector<8x1xf32>
    %16 = arith.mulf %14, %15 : vector<8x1xf32>
    %17 = math.sqrt %16 : vector<8x1xf32>
    %cst_12 = arith.constant 9.99999997E-7 : f32
    %18 = vector.broadcast %cst_12 : f32 to vector<8x1xf32>
    %19 = arith.addf %17, %18 : vector<8x1xf32>
    %20 = tpu.reciprocal %19 {approx = true} : vector<8x1xf32> -> vector<8x1xf32>
    %21 = vector.broadcast %4 : vector<1x32xf32> to vector<8x32xf32>
    %22 = arith.mulf %21, %11 : vector<8x32xf32>
    %23 = vector.broadcast %20 : vector<8x1xf32> to vector<8x32xf32>
    %24 = arith.mulf %22, %23 : vector<8x32xf32>
    %25 = vector.broadcast %5 : vector<1x32xf32> to vector<8x32xf32>
    %26 = arith.addf %24, %25 : vector<8x32xf32>
    %c0_13 = arith.constant 0 : index
    %c0_14 = arith.constant 0 : index
    %c0_15 = arith.constant 0 : index
    %27 = vector.load %arg3[%c0_13, %c0_14, %c0_15] : memref<1x1x8xf32, #tpu.memory_space<vmem>>, vector<1x1x8xf32>
    %28 = vector.shape_cast %27 : vector<1x1x8xf32> to vector<1x8xf32>
    %c0_16 = arith.constant 0 : index
    %c0_17 = arith.constant 0 : index
    %29 = vector.load %arg6[%c0_16, %c0_17] : memref<32x32xf32, #tpu.memory_space<vmem>>, vector<32x32xf32>
    %c0_18 = arith.constant 0 : index
    %c0_19 = arith.constant 0 : index
    %30 = vector.load %arg7[%c0_18, %c0_19] : memref<1x32xf32, #tpu.memory_space<vmem>>, vector<1x32xf32>
    %c0_20 = arith.constant 0 : index
    %c0_21 = arith.constant 0 : index
    %31 = vector.load %arg8[%c0_20, %c0_21] : memref<32x32xf32, #tpu.memory_space<vmem>>, vector<32x32xf32>
    %c0_22 = arith.constant 0 : index
    %c0_23 = arith.constant 0 : index
    %32 = vector.load %arg9[%c0_22, %c0_23] : memref<1x32xf32, #tpu.memory_space<vmem>>, vector<1x32xf32>
    %c0_24 = arith.constant 0 : index
    %c0_25 = arith.constant 0 : index
    %33 = vector.load %arg10[%c0_24, %c0_25] : memref<32x32xf32, #tpu.memory_space<vmem>>, vector<32x32xf32>
    %c0_26 = arith.constant 0 : index
    %c0_27 = arith.constant 0 : index
    %34 = vector.load %arg11[%c0_26, %c0_27] : memref<1x32xf32, #tpu.memory_space<vmem>>, vector<1x32xf32>
    %c0_28 = arith.constant 0 : index
    %c0_29 = arith.constant 0 : index
    %35 = vector.load %arg12[%c0_28, %c0_29] : memref<32x32xf32, #tpu.memory_space<vmem>>, vector<32x32xf32>
    %c0_30 = arith.constant 0 : index
    %c0_31 = arith.constant 0 : index
    %36 = vector.load %arg13[%c0_30, %c0_31] : memref<1x32xf32, #tpu.memory_space<vmem>>, vector<1x32xf32>
    %cst_32 = arith.constant dense<0.000000e+00> : vector<8x32xf32>
    %37 = tpu.matmul %26, %29, %cst_32 {dimension_numbers = #tpu.dot_dimension_numbers<[1], [0], [0], [1], [0, 0, 1, 1], [], []>} : vector<8x32xf32>, vector<32x32xf32>, vector<8x32xf32> -> vector<8x32xf32>
    %38 = vector.broadcast %30 : vector<1x32xf32> to vector<8x32xf32>
    %39 = arith.addf %37, %38 : vector<8x32xf32>
    %cst_33 = arith.constant dense<0.000000e+00> : vector<8x32xf32>
    %40 = tpu.matmul %3, %31, %cst_33 {dimension_numbers = #tpu.dot_dimension_numbers<[1], [0], [0], [1], [0, 0, 1, 1], [], []>} : vector<8x32xf32>, vector<32x32xf32>, vector<8x32xf32> -> vector<8x32xf32>
    %41 = vector.broadcast %32 : vector<1x32xf32> to vector<8x32xf32>
    %42 = arith.addf %40, %41 : vector<8x32xf32>
    %cst_34 = arith.constant dense<0.000000e+00> : vector<8x32xf32>
    %43 = tpu.matmul %3, %33, %cst_34 {dimension_numbers = #tpu.dot_dimension_numbers<[1], [0], [0], [1], [0, 0, 1, 1], [], []>} : vector<8x32xf32>, vector<32x32xf32>, vector<8x32xf32> -> vector<8x32xf32>
    %44 = vector.broadcast %34 : vector<1x32xf32> to vector<8x32xf32>
    %45 = arith.addf %43, %44 : vector<8x32xf32>
    %46 = vector.shape_cast %28 : vector<1x8xf32> to vector<1x8xf32>
    %47 = vector.broadcast %46 : vector<1x8xf32> to vector<8x8xf32>
    %cst_35 = arith.constant 0.000000e+00 : f32
    %48 = vector.broadcast %cst_35 : f32 to vector<8x32xf32>
    %49 = vector.extract_strided_slice %39 {offsets = [0, 0], sizes = [8, 8], strides = [1, 1]} : vector<8x32xf32> to vector<8x8xf32>
    %50 = vector.extract_strided_slice %42 {offsets = [0, 0], sizes = [8, 8], strides = [1, 1]} : vector<8x32xf32> to vector<8x8xf32>
    %cst_36 = arith.constant dense<0.000000e+00> : vector<8x8xf32>
    %51 = tpu.matmul %49, %50, %cst_36 {dimension_numbers = #tpu.dot_dimension_numbers<[1], [1], [0], [0], [0, 0, 1, 0], [], []>} : vector<8x8xf32>, vector<8x8xf32>, vector<8x8xf32> -> vector<8x8xf32>
    %cst_37 = arith.constant 0.353553385 : f32
    %52 = vector.broadcast %cst_37 : f32 to vector<8x8xf32>
    %53 = arith.mulf %51, %52 : vector<8x8xf32>
    %cst_38 = arith.constant 0.000000e+00 : f32
    %54 = vector.broadcast %cst_38 : f32 to vector<8x8xf32>
    %55 = arith.cmpf oeq, %47, %54 : vector<8x8xf32>
    %cst_39 = arith.constant -1.000000e+09 : f32
    %56 = vector.broadcast %cst_39 : f32 to vector<8x8xf32>
    %57 = arith.select %55, %56, %53 : vector<8x8xi1>, vector<8x8xf32>
    %cst_40 = arith.constant dense<0xFF800000> : vector<8xf32>
    %58 = vector.multi_reduction <maximumf>, %57, %cst_40 [1] : vector<8x8xf32> to vector<8xf32>
    %59 = vector.shape_cast %58 : vector<8xf32> to vector<8x1xf32>
    %60 = vector.broadcast %59 : vector<8x1xf32> to vector<8x8xf32>
    %61 = arith.subf %57, %60 : vector<8x8xf32>
    %62 = math.exp %61 : vector<8x8xf32>
    %cst_41 = arith.constant dense<0.000000e+00> : vector<8xf32>
    %63 = vector.multi_reduction <add>, %62, %cst_41 [1] : vector<8x8xf32> to vector<8xf32>
    %64 = vector.shape_cast %63 : vector<8xf32> to vector<8x1xf32>
    %65 = tpu.reciprocal %64 {approx = true} : vector<8x1xf32> -> vector<8x1xf32>
    %66 = vector.broadcast %65 : vector<8x1xf32> to vector<8x8xf32>
    %67 = arith.mulf %62, %66 : vector<8x8xf32>
    %68 = vector.extract_strided_slice %45 {offsets = [0, 0], sizes = [8, 8], strides = [1, 1]} : vector<8x32xf32> to vector<8x8xf32>
    %cst_42 = arith.constant dense<0.000000e+00> : vector<8x8xf32>
    %69 = tpu.matmul %67, %68, %cst_42 {dimension_numbers = #tpu.dot_dimension_numbers<[1], [0], [0], [1], [0, 0, 1, 1], [], []>} : vector<8x8xf32>, vector<8x8xf32>, vector<8x8xf32> -> vector<8x8xf32>
    %70 = vector.extract_strided_slice %35 {offsets = [0, 0], sizes = [8, 32], strides = [1, 1]} : vector<32x32xf32> to vector<8x32xf32>
    %cst_43 = arith.constant dense<0.000000e+00> : vector<8x32xf32>
    %71 = tpu.matmul %69, %70, %cst_43 {dimension_numbers = #tpu.dot_dimension_numbers<[1], [0], [0], [1], [0, 0, 1, 1], [], []>} : vector<8x8xf32>, vector<8x32xf32>, vector<8x32xf32> -> vector<8x32xf32>
    %72 = arith.addf %48, %71 : vector<8x32xf32>
    %73 = vector.extract_strided_slice %39 {offsets = [0, 8], sizes = [8, 8], strides = [1, 1]} : vector<8x32xf32> to vector<8x8xf32>
    %74 = vector.extract_strided_slice %42 {offsets = [0, 8], sizes = [8, 8], strides = [1, 1]} : vector<8x32xf32> to vector<8x8xf32>
    %cst_44 = arith.constant dense<0.000000e+00> : vector<8x8xf32>
    %75 = tpu.matmul %73, %74, %cst_44 {dimension_numbers = #tpu.dot_dimension_numbers<[1], [1], [0], [0], [0, 0, 1, 0], [], []>} : vector<8x8xf32>, vector<8x8xf32>, vector<8x8xf32> -> vector<8x8xf32>
    %cst_45 = arith.constant 0.353553385 : f32
    %76 = vector.broadcast %cst_45 : f32 to vector<8x8xf32>
    %77 = arith.mulf %75, %76 : vector<8x8xf32>
    %cst_46 = arith.constant 0.000000e+00 : f32
    %78 = vector.broadcast %cst_46 : f32 to vector<8x8xf32>
    %79 = arith.cmpf oeq, %47, %78 : vector<8x8xf32>
    %cst_47 = arith.constant -1.000000e+09 : f32
    %80 = vector.broadcast %cst_47 : f32 to vector<8x8xf32>
    %81 = arith.select %79, %80, %77 : vector<8x8xi1>, vector<8x8xf32>
    %cst_48 = arith.constant dense<0xFF800000> : vector<8xf32>
    %82 = vector.multi_reduction <maximumf>, %81, %cst_48 [1] : vector<8x8xf32> to vector<8xf32>
    %83 = vector.shape_cast %82 : vector<8xf32> to vector<8x1xf32>
    %84 = vector.broadcast %83 : vector<8x1xf32> to vector<8x8xf32>
    %85 = arith.subf %81, %84 : vector<8x8xf32>
    %86 = math.exp %85 : vector<8x8xf32>
    %cst_49 = arith.constant dense<0.000000e+00> : vector<8xf32>
    %87 = vector.multi_reduction <add>, %86, %cst_49 [1] : vector<8x8xf32> to vector<8xf32>
    %88 = vector.shape_cast %87 : vector<8xf32> to vector<8x1xf32>
    %89 = tpu.reciprocal %88 {approx = true} : vector<8x1xf32> -> vector<8x1xf32>
    %90 = vector.broadcast %89 : vector<8x1xf32> to vector<8x8xf32>
    %91 = arith.mulf %86, %90 : vector<8x8xf32>
    %92 = vector.extract_strided_slice %45 {offsets = [0, 8], sizes = [8, 8], strides = [1, 1]} : vector<8x32xf32> to vector<8x8xf32>
    %cst_50 = arith.constant dense<0.000000e+00> : vector<8x8xf32>
    %93 = tpu.matmul %91, %92, %cst_50 {dimension_numbers = #tpu.dot_dimension_numbers<[1], [0], [0], [1], [0, 0, 1, 1], [], []>} : vector<8x8xf32>, vector<8x8xf32>, vector<8x8xf32> -> vector<8x8xf32>
    %94 = vector.extract_strided_slice %35 {offsets = [8, 0], sizes = [8, 32], strides = [1, 1]} : vector<32x32xf32> to vector<8x32xf32>
    %cst_51 = arith.constant dense<0.000000e+00> : vector<8x32xf32>
    %95 = tpu.matmul %93, %94, %cst_51 {dimension_numbers = #tpu.dot_dimension_numbers<[1], [0], [0], [1], [0, 0, 1, 1], [], []>} : vector<8x8xf32>, vector<8x32xf32>, vector<8x32xf32> -> vector<8x32xf32>
    %96 = arith.addf %72, %95 : vector<8x32xf32>
    %97 = vector.extract_strided_slice %39 {offsets = [0, 16], sizes = [8, 8], strides = [1, 1]} : vector<8x32xf32> to vector<8x8xf32>
    %98 = vector.extract_strided_slice %42 {offsets = [0, 16], sizes = [8, 8], strides = [1, 1]} : vector<8x32xf32> to vector<8x8xf32>
    %cst_52 = arith.constant dense<0.000000e+00> : vector<8x8xf32>
    %99 = tpu.matmul %97, %98, %cst_52 {dimension_numbers = #tpu.dot_dimension_numbers<[1], [1], [0], [0], [0, 0, 1, 0], [], []>} : vector<8x8xf32>, vector<8x8xf32>, vector<8x8xf32> -> vector<8x8xf32>
    %cst_53 = arith.constant 0.353553385 : f32
    %100 = vector.broadcast %cst_53 : f32 to vector<8x8xf32>
    %101 = arith.mulf %99, %100 : vector<8x8xf32>
    %cst_54 = arith.constant 0.000000e+00 : f32
    %102 = vector.broadcast %cst_54 : f32 to vector<8x8xf32>
    %103 = arith.cmpf oeq, %47, %102 : vector<8x8xf32>
    %cst_55 = arith.constant -1.000000e+09 : f32
    %104 = vector.broadcast %cst_55 : f32 to vector<8x8xf32>
    %105 = arith.select %103, %104, %101 : vector<8x8xi1>, vector<8x8xf32>
    %cst_56 = arith.constant dense<0xFF800000> : vector<8xf32>
    %106 = vector.multi_reduction <maximumf>, %105, %cst_56 [1] : vector<8x8xf32> to vector<8xf32>
    %107 = vector.shape_cast %106 : vector<8xf32> to vector<8x1xf32>
    %108 = vector.broadcast %107 : vector<8x1xf32> to vector<8x8xf32>
    %109 = arith.subf %105, %108 : vector<8x8xf32>
    %110 = math.exp %109 : vector<8x8xf32>
    %cst_57 = arith.constant dense<0.000000e+00> : vector<8xf32>
    %111 = vector.multi_reduction <add>, %110, %cst_57 [1] : vector<8x8xf32> to vector<8xf32>
    %112 = vector.shape_cast %111 : vector<8xf32> to vector<8x1xf32>
    %113 = tpu.reciprocal %112 {approx = true} : vector<8x1xf32> -> vector<8x1xf32>
    %114 = vector.broadcast %113 : vector<8x1xf32> to vector<8x8xf32>
    %115 = arith.mulf %110, %114 : vector<8x8xf32>
    %116 = vector.extract_strided_slice %45 {offsets = [0, 16], sizes = [8, 8], strides = [1, 1]} : vector<8x32xf32> to vector<8x8xf32>
    %cst_58 = arith.constant dense<0.000000e+00> : vector<8x8xf32>
    %117 = tpu.matmul %115, %116, %cst_58 {dimension_numbers = #tpu.dot_dimension_numbers<[1], [0], [0], [1], [0, 0, 1, 1], [], []>} : vector<8x8xf32>, vector<8x8xf32>, vector<8x8xf32> -> vector<8x8xf32>
    %118 = vector.extract_strided_slice %35 {offsets = [16, 0], sizes = [8, 32], strides = [1, 1]} : vector<32x32xf32> to vector<8x32xf32>
    %cst_59 = arith.constant dense<0.000000e+00> : vector<8x32xf32>
    %119 = tpu.matmul %117, %118, %cst_59 {dimension_numbers = #tpu.dot_dimension_numbers<[1], [0], [0], [1], [0, 0, 1, 1], [], []>} : vector<8x8xf32>, vector<8x32xf32>, vector<8x32xf32> -> vector<8x32xf32>
    %120 = arith.addf %96, %119 : vector<8x32xf32>
    %121 = vector.extract_strided_slice %39 {offsets = [0, 24], sizes = [8, 8], strides = [1, 1]} : vector<8x32xf32> to vector<8x8xf32>
    %122 = vector.extract_strided_slice %42 {offsets = [0, 24], sizes = [8, 8], strides = [1, 1]} : vector<8x32xf32> to vector<8x8xf32>
    %cst_60 = arith.constant dense<0.000000e+00> : vector<8x8xf32>
    %123 = tpu.matmul %121, %122, %cst_60 {dimension_numbers = #tpu.dot_dimension_numbers<[1], [1], [0], [0], [0, 0, 1, 0], [], []>} : vector<8x8xf32>, vector<8x8xf32>, vector<8x8xf32> -> vector<8x8xf32>
    %cst_61 = arith.constant 0.353553385 : f32
    %124 = vector.broadcast %cst_61 : f32 to vector<8x8xf32>
    %125 = arith.mulf %123, %124 : vector<8x8xf32>
    %cst_62 = arith.constant 0.000000e+00 : f32
    %126 = vector.broadcast %cst_62 : f32 to vector<8x8xf32>
    %127 = arith.cmpf oeq, %47, %126 : vector<8x8xf32>
    %cst_63 = arith.constant -1.000000e+09 : f32
    %128 = vector.broadcast %cst_63 : f32 to vector<8x8xf32>
    %129 = arith.select %127, %128, %125 : vector<8x8xi1>, vector<8x8xf32>
    %cst_64 = arith.constant dense<0xFF800000> : vector<8xf32>
    %130 = vector.multi_reduction <maximumf>, %129, %cst_64 [1] : vector<8x8xf32> to vector<8xf32>
    %131 = vector.shape_cast %130 : vector<8xf32> to vector<8x1xf32>
    %132 = vector.broadcast %131 : vector<8x1xf32> to vector<8x8xf32>
    %133 = arith.subf %129, %132 : vector<8x8xf32>
    %134 = math.exp %133 : vector<8x8xf32>
    %cst_65 = arith.constant dense<0.000000e+00> : vector<8xf32>
    %135 = vector.multi_reduction <add>, %134, %cst_65 [1] : vector<8x8xf32> to vector<8xf32>
    %136 = vector.shape_cast %135 : vector<8xf32> to vector<8x1xf32>
    %137 = tpu.reciprocal %136 {approx = true} : vector<8x1xf32> -> vector<8x1xf32>
    %138 = vector.broadcast %137 : vector<8x1xf32> to vector<8x8xf32>
    %139 = arith.mulf %134, %138 : vector<8x8xf32>
    %140 = vector.extract_strided_slice %45 {offsets = [0, 24], sizes = [8, 8], strides = [1, 1]} : vector<8x32xf32> to vector<8x8xf32>
    %cst_66 = arith.constant dense<0.000000e+00> : vector<8x8xf32>
    %141 = tpu.matmul %139, %140, %cst_66 {dimension_numbers = #tpu.dot_dimension_numbers<[1], [0], [0], [1], [0, 0, 1, 1], [], []>} : vector<8x8xf32>, vector<8x8xf32>, vector<8x8xf32> -> vector<8x8xf32>
    %142 = vector.extract_strided_slice %35 {offsets = [24, 0], sizes = [8, 32], strides = [1, 1]} : vector<32x32xf32> to vector<8x32xf32>
    %cst_67 = arith.constant dense<0.000000e+00> : vector<8x32xf32>
    %143 = tpu.matmul %141, %142, %cst_67 {dimension_numbers = #tpu.dot_dimension_numbers<[1], [0], [0], [1], [0, 0, 1, 1], [], []>} : vector<8x8xf32>, vector<8x32xf32>, vector<8x32xf32> -> vector<8x32xf32>
    %144 = arith.addf %120, %143 : vector<8x32xf32>
    %145 = vector.broadcast %36 : vector<1x32xf32> to vector<8x32xf32>
    %146 = arith.addf %144, %145 : vector<8x32xf32>
    %147 = arith.addf %1, %146 : vector<8x32xf32>
    %c0_68 = arith.constant 0 : index
    %c0_69 = arith.constant 0 : index
    %c0_70 = arith.constant 0 : index
    %148 = vector.load %arg14[%c0_68, %c0_69, %c0_70] : memref<1x8x32xf32, #tpu.memory_space<vmem>>, vector<1x8x32xf32>
    %149 = vector.shape_cast %148 : vector<1x8x32xf32> to vector<8x32xf32>
    %150 = vector.shape_cast %147 : vector<8x32xf32> to vector<1x8x32xf32>
    tpu.vector_store %arg14[%c0_68, %c0_69, %c0_70], %150 {strides = array<i32>} : memref<1x8x32xf32, #tpu.memory_space<vmem>>, vector<1x8x32xf32>,
    return
  }
  func.func @transform_0(%arg0: i32) -> (i32, i32, i32) {
    %c0_i32 = arith.constant 0 : i32
    %c0_i32_0 = arith.constant 0 : i32
    %c0_i32_1 = arith.constant 0 : i32
    return %arg0, %c0_i32, %c0_i32_0 : i32, i32, i32
  }
  func.func @transform_1(%arg0: i32) -> (i32, i32, i32) {
    %c0_i32 = arith.constant 0 : i32
    %c0_i32_0 = arith.constant 0 : i32
    %c0_i32_1 = arith.constant 0 : i32
    return %arg0, %c0_i32, %c0_i32_0 : i32, i32, i32
  }
  func.func @transform_2(%arg0: i32) -> (i32, i32, i32) {
    %c0_i32 = arith.constant 0 : i32
    %c0_i32_0 = arith.constant 0 : i32
    %c0_i32_1 = arith.constant 0 : i32
    return %arg0, %c0_i32, %c0_i32_0 : i32, i32, i32
  }
  func.func @transform_3(%arg0: i32) -> (i32, i32) {
    %c0_i32 = arith.constant 0 : i32
    %c0_i32_0 = arith.constant 0 : i32
    %c0_i32_1 = arith.constant 0 : i32
    return %c0_i32, %c0_i32_0 : i32, i32
  }
  func.func @transform_4(%arg0: i32) -> (i32, i32) {
    %c0_i32 = arith.constant 0 : i32
    %c0_i32_0 = arith.constant 0 : i32
    %c0_i32_1 = arith.constant 0 : i32
    return %c0_i32, %c0_i32_0 : i32, i32
  }
  func.func @transform_5(%arg0: i32) -> (i32, i32) {
    %c0_i32 = arith.constant 0 : i32
    %c0_i32_0 = arith.constant 0 : i32
    %c0_i32_1 = arith.constant 0 : i32
    return %c0_i32, %c0_i32_0 : i32, i32
  }
  func.func @transform_6(%arg0: i32) -> (i32, i32) {
    %c0_i32 = arith.constant 0 : i32
    %c0_i32_0 = arith.constant 0 : i32
    %c0_i32_1 = arith.constant 0 : i32
    return %c0_i32, %c0_i32_0 : i32, i32
  }
  func.func @transform_7(%arg0: i32) -> (i32, i32) {
    %c0_i32 = arith.constant 0 : i32
    %c0_i32_0 = arith.constant 0 : i32
    %c0_i32_1 = arith.constant 0 : i32
    return %c0_i32, %c0_i32_0 : i32, i32
  }
  func.func @transform_8(%arg0: i32) -> (i32, i32) {
    %c0_i32 = arith.constant 0 : i32
    %c0_i32_0 = arith.constant 0 : i32
    %c0_i32_1 = arith.constant 0 : i32
    return %c0_i32, %c0_i32_0 : i32, i32
  }
  func.func @transform_9(%arg0: i32) -> (i32, i32) {
    %c0_i32 = arith.constant 0 : i32
    %c0_i32_0 = arith.constant 0 : i32
    %c0_i32_1 = arith.constant 0 : i32
    return %c0_i32, %c0_i32_0 : i32, i32
  }
  func.func @transform_10(%arg0: i32) -> (i32, i32) {
    %c0_i32 = arith.constant 0 : i32
    %c0_i32_0 = arith.constant 0 : i32
    %c0_i32_1 = arith.constant 0 : i32
    return %c0_i32, %c0_i32_0 : i32, i32
  }
  func.func @transform_11(%arg0: i32) -> (i32, i32) {
    %c0_i32 = arith.constant 0 : i32
    %c0_i32_0 = arith.constant 0 : i32
    %c0_i32_1 = arith.constant 0 : i32
    return %c0_i32, %c0_i32_0 : i32, i32
  }
  func.func @transform_12(%arg0: i32) -> (i32, i32) {
    %c0_i32 = arith.constant 0 : i32
    %c0_i32_0 = arith.constant 0 : i32
    %c0_i32_1 = arith.constant 0 : i32
    return %c0_i32, %c0_i32_0 : i32, i32
  }
  func.func @transform_13(%arg0: i32) -> (i32, i32, i32) {
    %c0_i32 = arith.constant 0 : i32
    %c0_i32_0 = arith.constant 0 : i32
    %c0_i32_1 = arith.constant 0 : i32
    return %arg0, %c0_i32, %c0_i32_0 : i32, i32, i32
  }
}

module attributes {stable_mosaic.version = 11 : i64} {
  func.func @_ffn_kernel(%arg0: i32, %arg1: memref<1x8x32xf32, #tpu.memory_space<vmem>>, %arg2: memref<1x32xf32, #tpu.memory_space<vmem>>, %arg3: memref<1x32xf32, #tpu.memory_space<vmem>>, %arg4: memref<32x64xf32, #tpu.memory_space<vmem>>, %arg5: memref<1x64xf32, #tpu.memory_space<vmem>>, %arg6: memref<64x32xf32, #tpu.memory_space<vmem>>, %arg7: memref<1x32xf32, #tpu.memory_space<vmem>>, %arg8: memref<1x8x32xf32, #tpu.memory_space<vmem>>) attributes {dimension_semantics = [#tpu.dimension_semantics<parallel>], iteration_bounds = array<i64: 2>, scalar_prefetch = 0 : i64, scratch_operands = 0 : i64, tpu.core_type = #tpu.core_type<tc>, window_params = [{transform_indices = @transform_0, window_bounds = array<i64: 1, 8, 32>}, {pipeline_mode = #tpu.pipeline_mode<synchronous>, transform_indices = @transform_1, window_bounds = array<i64: 1, 32>}, {pipeline_mode = #tpu.pipeline_mode<synchronous>, transform_indices = @transform_2, window_bounds = array<i64: 1, 32>}, {pipeline_mode = #tpu.pipeline_mode<synchronous>, transform_indices = @transform_3, window_bounds = array<i64: 32, 64>}, {pipeline_mode = #tpu.pipeline_mode<synchronous>, transform_indices = @transform_4, window_bounds = array<i64: 1, 64>}, {pipeline_mode = #tpu.pipeline_mode<synchronous>, transform_indices = @transform_5, window_bounds = array<i64: 64, 32>}, {pipeline_mode = #tpu.pipeline_mode<synchronous>, transform_indices = @transform_6, window_bounds = array<i64: 1, 32>}, {transform_indices = @transform_7, window_bounds = array<i64: 1, 8, 32>}]} {
    %c0 = arith.constant 0 : index
    %c0_0 = arith.constant 0 : index
    %c0_1 = arith.constant 0 : index
    %0 = vector.load %arg1[%c0, %c0_0, %c0_1] : memref<1x8x32xf32, #tpu.memory_space<vmem>>, vector<1x8x32xf32>
    %1 = vector.shape_cast %0 : vector<1x8x32xf32> to vector<8x32xf32>
    %c0_2 = arith.constant 0 : index
    %c0_3 = arith.constant 0 : index
    %2 = vector.load %arg2[%c0_2, %c0_3] : memref<1x32xf32, #tpu.memory_space<vmem>>, vector<1x32xf32>
    %c0_4 = arith.constant 0 : index
    %c0_5 = arith.constant 0 : index
    %3 = vector.load %arg3[%c0_4, %c0_5] : memref<1x32xf32, #tpu.memory_space<vmem>>, vector<1x32xf32>
    %cst = arith.constant dense<0.000000e+00> : vector<8xf32>
    %4 = vector.multi_reduction <add>, %1, %cst [1] : vector<8x32xf32> to vector<8xf32>
    %5 = vector.shape_cast %4 : vector<8xf32> to vector<8x1xf32>
    %cst_6 = arith.constant 3.200000e+01 : f32
    %6 = vector.broadcast %cst_6 : f32 to vector<8x1xf32>
    %7 = arith.divf %5, %6 : vector<8x1xf32>
    %8 = vector.broadcast %7 : vector<8x1xf32> to vector<8x32xf32>
    %9 = arith.subf %1, %8 : vector<8x32xf32>
    %10 = arith.mulf %9, %9 : vector<8x32xf32>
    %cst_7 = arith.constant dense<0.000000e+00> : vector<8xf32>
    %11 = vector.multi_reduction <add>, %10, %cst_7 [1] : vector<8x32xf32> to vector<8xf32>
    %12 = vector.shape_cast %11 : vector<8xf32> to vector<8x1xf32>
    %cst_8 = arith.constant 0.0322580636 : f32
    %13 = vector.broadcast %cst_8 : f32 to vector<8x1xf32>
    %14 = arith.mulf %12, %13 : vector<8x1xf32>
    %15 = math.sqrt %14 : vector<8x1xf32>
    %cst_9 = arith.constant 9.99999997E-7 : f32
    %16 = vector.broadcast %cst_9 : f32 to vector<8x1xf32>
    %17 = arith.addf %15, %16 : vector<8x1xf32>
    %18 = tpu.reciprocal %17 {approx = true} : vector<8x1xf32> -> vector<8x1xf32>
    %19 = vector.broadcast %2 : vector<1x32xf32> to vector<8x32xf32>
    %20 = arith.mulf %19, %9 : vector<8x32xf32>
    %21 = vector.broadcast %18 : vector<8x1xf32> to vector<8x32xf32>
    %22 = arith.mulf %20, %21 : vector<8x32xf32>
    %23 = vector.broadcast %3 : vector<1x32xf32> to vector<8x32xf32>
    %24 = arith.addf %22, %23 : vector<8x32xf32>
    %c0_10 = arith.constant 0 : index
    %c0_11 = arith.constant 0 : index
    %25 = vector.load %arg4[%c0_10, %c0_11] : memref<32x64xf32, #tpu.memory_space<vmem>>, vector<32x64xf32>
    %cst_12 = arith.constant dense<0.000000e+00> : vector<8x64xf32>
    %26 = tpu.matmul %24, %25, %cst_12 {dimension_numbers = #tpu.dot_dimension_numbers<[1], [0], [0], [1], [0, 0, 1, 1], [], []>} : vector<8x32xf32>, vector<32x64xf32>, vector<8x64xf32> -> vector<8x64xf32>
    %c0_13 = arith.constant 0 : index
    %c0_14 = arith.constant 0 : index
    %27 = vector.load %arg5[%c0_13, %c0_14] : memref<1x64xf32, #tpu.memory_space<vmem>>, vector<1x64xf32>
    %28 = vector.broadcast %27 : vector<1x64xf32> to vector<8x64xf32>
    %29 = arith.addf %26, %28 : vector<8x64xf32>
    %cst_15 = arith.constant 0.000000e+00 : f32
    %30 = vector.broadcast %cst_15 : f32 to vector<8x64xf32>
    %31 = arith.maximumf %29, %30 : vector<8x64xf32>
    %c0_16 = arith.constant 0 : index
    %c0_17 = arith.constant 0 : index
    %32 = vector.load %arg6[%c0_16, %c0_17] : memref<64x32xf32, #tpu.memory_space<vmem>>, vector<64x32xf32>
    %cst_18 = arith.constant dense<0.000000e+00> : vector<8x32xf32>
    %33 = tpu.matmul %31, %32, %cst_18 {dimension_numbers = #tpu.dot_dimension_numbers<[1], [0], [0], [1], [0, 0, 1, 1], [], []>} : vector<8x64xf32>, vector<64x32xf32>, vector<8x32xf32> -> vector<8x32xf32>
    %c0_19 = arith.constant 0 : index
    %c0_20 = arith.constant 0 : index
    %34 = vector.load %arg7[%c0_19, %c0_20] : memref<1x32xf32, #tpu.memory_space<vmem>>, vector<1x32xf32>
    %35 = vector.broadcast %34 : vector<1x32xf32> to vector<8x32xf32>
    %36 = arith.addf %33, %35 : vector<8x32xf32>
    %37 = arith.addf %1, %36 : vector<8x32xf32>
    %c0_21 = arith.constant 0 : index
    %c0_22 = arith.constant 0 : index
    %c0_23 = arith.constant 0 : index
    %38 = vector.load %arg8[%c0_21, %c0_22, %c0_23] : memref<1x8x32xf32, #tpu.memory_space<vmem>>, vector<1x8x32xf32>
    %39 = vector.shape_cast %38 : vector<1x8x32xf32> to vector<8x32xf32>
    %40 = vector.shape_cast %37 : vector<8x32xf32> to vector<1x8x32xf32>
    tpu.vector_store %arg8[%c0_21, %c0_22, %c0_23], %40 {strides = array<i32>} : memref<1x8x32xf32, #tpu.memory_space<vmem>>, vector<1x8x32xf32>,
    return
  }
  func.func @transform_0(%arg0: i32) -> (i32, i32, i32) {
    %c0_i32 = arith.constant 0 : i32
    %c0_i32_0 = arith.constant 0 : i32
    %c0_i32_1 = arith.constant 0 : i32
    return %arg0, %c0_i32, %c0_i32_0 : i32, i32, i32
  }
  func.func @transform_1(%arg0: i32) -> (i32, i32) {
    %c0_i32 = arith.constant 0 : i32
    %c0_i32_0 = arith.constant 0 : i32
    %c0_i32_1 = arith.constant 0 : i32
    return %c0_i32, %c0_i32_0 : i32, i32
  }
  func.func @transform_2(%arg0: i32) -> (i32, i32) {
    %c0_i32 = arith.constant 0 : i32
    %c0_i32_0 = arith.constant 0 : i32
    %c0_i32_1 = arith.constant 0 : i32
    return %c0_i32, %c0_i32_0 : i32, i32
  }
  func.func @transform_3(%arg0: i32) -> (i32, i32) {
    %c0_i32 = arith.constant 0 : i32
    %c0_i32_0 = arith.constant 0 : i32
    %c0_i32_1 = arith.constant 0 : i32
    return %c0_i32, %c0_i32_0 : i32, i32
  }
  func.func @transform_4(%arg0: i32) -> (i32, i32) {
    %c0_i32 = arith.constant 0 : i32
    %c0_i32_0 = arith.constant 0 : i32
    %c0_i32_1 = arith.constant 0 : i32
    return %c0_i32, %c0_i32_0 : i32, i32
  }
  func.func @transform_5(%arg0: i32) -> (i32, i32) {
    %c0_i32 = arith.constant 0 : i32
    %c0_i32_0 = arith.constant 0 : i32
    %c0_i32_1 = arith.constant 0 : i32
    return %c0_i32, %c0_i32_0 : i32, i32
  }
  func.func @transform_6(%arg0: i32) -> (i32, i32) {
    %c0_i32 = arith.constant 0 : i32
    %c0_i32_0 = arith.constant 0 : i32
    %c0_i32_1 = arith.constant 0 : i32
    return %c0_i32, %c0_i32_0 : i32, i32
  }
  func.func @transform_7(%arg0: i32) -> (i32, i32, i32) {
    %c0_i32 = arith.constant 0 : i32
    %c0_i32_0 = arith.constant 0 : i32
    %c0_i32_1 = arith.constant 0 : i32
    return %arg0, %c0_i32, %c0_i32_0 : i32, i32, i32
  }
}

module attributes {stable_mosaic.version = 11 : i64} {
  func.func @_final_norm_kernel(%arg0: i32, %arg1: memref<1x8x32xf32, #tpu.memory_space<vmem>>, %arg2: memref<1x32xf32, #tpu.memory_space<vmem>>, %arg3: memref<1x32xf32, #tpu.memory_space<vmem>>, %arg4: memref<1x8x32xf32, #tpu.memory_space<vmem>>) attributes {dimension_semantics = [#tpu.dimension_semantics<parallel>], iteration_bounds = array<i64: 2>, scalar_prefetch = 0 : i64, scratch_operands = 0 : i64, tpu.core_type = #tpu.core_type<tc>, window_params = [{transform_indices = @transform_0, window_bounds = array<i64: 1, 8, 32>}, {pipeline_mode = #tpu.pipeline_mode<synchronous>, transform_indices = @transform_1, window_bounds = array<i64: 1, 32>}, {pipeline_mode = #tpu.pipeline_mode<synchronous>, transform_indices = @transform_2, window_bounds = array<i64: 1, 32>}, {transform_indices = @transform_3, window_bounds = array<i64: 1, 8, 32>}]} {
    %c0 = arith.constant 0 : index
    %c0_0 = arith.constant 0 : index
    %c0_1 = arith.constant 0 : index
    %0 = vector.load %arg1[%c0, %c0_0, %c0_1] : memref<1x8x32xf32, #tpu.memory_space<vmem>>, vector<1x8x32xf32>
    %1 = vector.shape_cast %0 : vector<1x8x32xf32> to vector<8x32xf32>
    %c0_2 = arith.constant 0 : index
    %c0_3 = arith.constant 0 : index
    %2 = vector.load %arg2[%c0_2, %c0_3] : memref<1x32xf32, #tpu.memory_space<vmem>>, vector<1x32xf32>
    %c0_4 = arith.constant 0 : index
    %c0_5 = arith.constant 0 : index
    %3 = vector.load %arg3[%c0_4, %c0_5] : memref<1x32xf32, #tpu.memory_space<vmem>>, vector<1x32xf32>
    %cst = arith.constant dense<0.000000e+00> : vector<8xf32>
    %4 = vector.multi_reduction <add>, %1, %cst [1] : vector<8x32xf32> to vector<8xf32>
    %5 = vector.shape_cast %4 : vector<8xf32> to vector<8x1xf32>
    %cst_6 = arith.constant 3.200000e+01 : f32
    %6 = vector.broadcast %cst_6 : f32 to vector<8x1xf32>
    %7 = arith.divf %5, %6 : vector<8x1xf32>
    %8 = vector.broadcast %7 : vector<8x1xf32> to vector<8x32xf32>
    %9 = arith.subf %1, %8 : vector<8x32xf32>
    %10 = arith.mulf %9, %9 : vector<8x32xf32>
    %cst_7 = arith.constant dense<0.000000e+00> : vector<8xf32>
    %11 = vector.multi_reduction <add>, %10, %cst_7 [1] : vector<8x32xf32> to vector<8xf32>
    %12 = vector.shape_cast %11 : vector<8xf32> to vector<8x1xf32>
    %cst_8 = arith.constant 0.0322580636 : f32
    %13 = vector.broadcast %cst_8 : f32 to vector<8x1xf32>
    %14 = arith.mulf %12, %13 : vector<8x1xf32>
    %15 = math.sqrt %14 : vector<8x1xf32>
    %cst_9 = arith.constant 9.99999997E-7 : f32
    %16 = vector.broadcast %cst_9 : f32 to vector<8x1xf32>
    %17 = arith.addf %15, %16 : vector<8x1xf32>
    %18 = tpu.reciprocal %17 {approx = true} : vector<8x1xf32> -> vector<8x1xf32>
    %19 = vector.broadcast %2 : vector<1x32xf32> to vector<8x32xf32>
    %20 = arith.mulf %19, %9 : vector<8x32xf32>
    %21 = vector.broadcast %18 : vector<8x1xf32> to vector<8x32xf32>
    %22 = arith.mulf %20, %21 : vector<8x32xf32>
    %23 = vector.broadcast %3 : vector<1x32xf32> to vector<8x32xf32>
    %24 = arith.addf %22, %23 : vector<8x32xf32>
    %c0_10 = arith.constant 0 : index
    %c0_11 = arith.constant 0 : index
    %c0_12 = arith.constant 0 : index
    %25 = vector.load %arg4[%c0_10, %c0_11, %c0_12] : memref<1x8x32xf32, #tpu.memory_space<vmem>>, vector<1x8x32xf32>
    %26 = vector.shape_cast %25 : vector<1x8x32xf32> to vector<8x32xf32>
    %27 = vector.shape_cast %24 : vector<8x32xf32> to vector<1x8x32xf32>
    tpu.vector_store %arg4[%c0_10, %c0_11, %c0_12], %27 {strides = array<i32>} : memref<1x8x32xf32, #tpu.memory_space<vmem>>, vector<1x8x32xf32>,
    return
  }
  func.func @transform_0(%arg0: i32) -> (i32, i32, i32) {
    %c0_i32 = arith.constant 0 : i32
    %c0_i32_0 = arith.constant 0 : i32
    %c0_i32_1 = arith.constant 0 : i32
    return %arg0, %c0_i32, %c0_i32_0 : i32, i32, i32
  }
  func.func @transform_1(%arg0: i32) -> (i32, i32) {
    %c0_i32 = arith.constant 0 : i32
    %c0_i32_0 = arith.constant 0 : i32
    %c0_i32_1 = arith.constant 0 : i32
    return %c0_i32, %c0_i32_0 : i32, i32
  }
  func.func @transform_2(%arg0: i32) -> (i32, i32) {
    %c0_i32 = arith.constant 0 : i32
    %c0_i32_0 = arith.constant 0 : i32
    %c0_i32_1 = arith.constant 0 : i32
    return %c0_i32, %c0_i32_0 : i32, i32
  }
  func.func @transform_3(%arg0: i32) -> (i32, i32, i32) {
    %c0_i32 = arith.constant 0 : i32
    %c0_i32_0 = arith.constant 0 : i32
    %c0_i32_1 = arith.constant 0 : i32
    return %arg0, %c0_i32, %c0_i32_0 : i32, i32, i32
  }
}

</mosaic_0001>

<llo_original>
// kernel: my_decoder.9
$region0: #{my_decoder.9}
  #allocation0 [shape = 'u32[]', space=smem, size = 0x4, offset = 0x4, fixed_abs, tag = 'smem constant byte address 0x4 - core index']
  #allocation1 [shape = 'u32[72,128]{1,0:T(1,128)}', space=vmem, size = 0x9000, scoped, tag = 'internal scratch']
  %s0 = inlined_call_operand.vmem [shape: f32[2,8,32], index: 0, kind: input, shape index: {}, may-alias: {0,7}]
  %s1 = inlined_call_operand.vmem [shape: f32[1,32], index: 1, kind: input, shape index: {}]
  %s2 = inlined_call_operand.vmem [shape: f32[1,32], index: 2, kind: input, shape index: {}]
  %s3 = inlined_call_operand.vmem [shape: f32[32,64], index: 3, kind: input, shape index: {}]
  %s4 = inlined_call_operand.hbm [shape: f32[1,64], index: 4, kind: input, shape index: {}]
  %s5 = inlined_call_operand.vmem [shape: f32[64,32], index: 5, kind: input, shape index: {}]
  %s6 = inlined_call_operand.hbm [shape: f32[1,32], index: 6, kind: input, shape index: {}]
  %s7 = inlined_call_operand.vmem [shape: f32[2,8,32], index: 7, kind: output, shape index: {}, may-alias: {0,7}]
  %s8 = sld [smem:[#allocation0]]
  $region69: #{my_decoder.9} parent=0
    _
  %s10 = ssub.s32 1, %s8
  %s11 = scalar_select 0, %s10, %s8
  $region1: #{my_decoder.9} parent=0
    #allocation2 [shape = 'u8[512]{0}', space=vmem, size = 0x400, scoped, tag = 'input window, operand 4, single buffered']
    #allocation3 [shape = 's32[2]{0}', space=sflag, size = 0x8, scoped, tag = 'scoped memory for my_decoder.9']
    #allocation4 [shape = 'u8[512]{0}', space=vmem, size = 0x400, scoped, tag = 'input window, operand 6, single buffered']
    #allocation5 [shape = 's32[1]{0}', space=sflag, size = 0x4, scoped, tag = 'scoped memory for my_decoder.9']
    %12 = vsyncpa [#allocation3], 0
    %13 = vsyncpa [#allocation5], 0
    loop: start=0, step=1, limit=4
    $region2: #{my_decoder.9} parent=1 // loop_pre_header
      _
    $region3: #{my_decoder.9} parent=1 // loop_header
      %s15 = sphi 0, %s19
      %p16 = scmp.ge.s32.totalorder %s15, 4
      %s25 = sphi 0, %s27
      %s28 = sphi 0, %s25
      %s29 = sphi 0, %s28
      %s45 = sphi 0, %s29
      %s49 = sphi 0, %s49
      %s51 = sphi 0, %s49
      %s52 = sphi 0, %s51
      %s66 = sphi 0, %s52
      %s70 = sphi 0, %s70
      %s72 = sphi 0, %s70
      %s73 = sphi 0, %s72
      %s87 = sphi 0, %s73
      %s91 = sphi 0, %s91
      %s93 = sphi 0, %s91
      %s94 = sphi 0, %s93
      %s108 = sphi 0, %s94
      %s112 = sphi 0, %s112
      %s114 = sphi 0, %s112
      %s115 = sphi 0, %s114
      %s129 = sphi 0, %s115
      %s133 = sphi 0, %s133
      %s135 = sphi 0, %s133
      %s136 = sphi 0, %s135
      %s150 = sphi 0, %s136
      %s154 = sphi 0, %s154
      %s156 = sphi 0, %s154
      %s157 = sphi 0, %s156
      %s171 = sphi 0, %s157
      %s177 = sphi 0, %s179
      %s180 = sphi 0, %s177
      %s181 = sphi 0, %s180
      %s197 = sphi 0, %s181
    $region4: #{my_decoder.9} parent=1 // loop_header_branch
      %18 = sbr.rel (%p16) target = $region8
    $region5: #{my_decoder.9} parent=1 // loop_body
      %s20 = ssub.s32 %s15, 1
      %s21 = ssub.s32 %s15, 2
      %s22 = sadd.s32 %s15, 1
      %s23 = ssub.s32 %s15, %s22
      %p24 = scmp.eq.s32.totalorder %s23, 0
      %s26 = sadd.s32 %s25, 1
      %s27 = scalar_select %p24, %s25, %s26
      %p30 = pneg %p24
      %p31 = scmp.eq.s32.totalorder %s15, 1
      %p32 = por %p30, %p31
      %p33 = scmp.ne.s32.totalorder %s25, %s28
      %p34 = scmp.eq.s32.totalorder %s15, 0
      %p35 = por %p33, %p34
      %p36 = scmp.ne.s32.totalorder %s25, %s28
      %p37 = scmp.eq.s32.totalorder %s20, 1
      %p38 = por %p36, %p37
      %p39 = scmp.ne.s32.totalorder %s28, %s29
      %p40 = scmp.eq.s32.totalorder %s20, 0
      %p41 = por %p39, %p40
      %p42 = scmp.ne.s32.totalorder %s28, %s29
      %p43 = scmp.eq.s32.totalorder %s21, 1
      %p44 = por %p42, %p43
      %p46 = scmp.ne.s32.totalorder %s29, %s45
      %p47 = scmp.eq.s32.totalorder %s21, 0
      %p48 = por %p46, %p47
      %s50 = sadd.s32 %s49, 1
      %p53 = scmp.eq.s32.totalorder %s15, 1
      %p54 = scmp.ne.s32.totalorder %s49, %s51
      %p55 = scmp.eq.s32.totalorder %s15, 0
      %p56 = por %p54, %p55
      %p57 = scmp.ne.s32.totalorder %s49, %s51
      %p58 = scmp.eq.s32.totalorder %s20, 1
      %p59 = por %p57, %p58
      %p60 = scmp.ne.s32.totalorder %s51, %s52
      %p61 = scmp.eq.s32.totalorder %s20, 0
      %p62 = por %p60, %p61
      %p63 = scmp.ne.s32.totalorder %s51, %s52
      %p64 = scmp.eq.s32.totalorder %s21, 1
      %p65 = por %p63, %p64
      %p67 = scmp.ne.s32.totalorder %s52, %s66
      %p68 = scmp.eq.s32.totalorder %s21, 0
      %p69 = por %p67, %p68
      %s71 = sadd.s32 %s70, 1
      %p74 = scmp.eq.s32.totalorder %s15, 1
      %p75 = scmp.ne.s32.totalorder %s70, %s72
      %p76 = scmp.eq.s32.totalorder %s15, 0
      %p77 = por %p75, %p76
      %p78 = scmp.ne.s32.totalorder %s70, %s72
      %p79 = scmp.eq.s32.totalorder %s20, 1
      %p80 = por %p78, %p79
      %p81 = scmp.ne.s32.totalorder %s72, %s73
      %p82 = scmp.eq.s32.totalorder %s20, 0
      %p83 = por %p81, %p82
      %p84 = scmp.ne.s32.totalorder %s72, %s73
      %p85 = scmp.eq.s32.totalorder %s21, 1
      %p86 = por %p84, %p85
      %p88 = scmp.ne.s32.totalorder %s73, %s87
      %p89 = scmp.eq.s32.totalorder %s21, 0
      %p90 = por %p88, %p89
      %s92 = sadd.s32 %s91, 1
      %p95 = scmp.eq.s32.totalorder %s15, 1
      %p96 = scmp.ne.s32.totalorder %s91, %s93
      %p97 = scmp.eq.s32.totalorder %s15, 0
      %p98 = por %p96, %p97
      %p99 = scmp.ne.s32.totalorder %s91, %s93
      %p100 = scmp.eq.s32.totalorder %s20, 1
      %p101 = por %p99, %p100
      %p102 = scmp.ne.s32.totalorder %s93, %s94
      %p103 = scmp.eq.s32.totalorder %s20, 0
      %p104 = por %p102, %p103
      %p105 = scmp.ne.s32.totalorder %s93, %s94
      %p106 = scmp.eq.s32.totalorder %s21, 1
      %p107 = por %p105, %p106
      %p109 = scmp.ne.s32.totalorder %s94, %s108
      %p110 = scmp.eq.s32.totalorder %s21, 0
      %p111 = por %p109, %p110
      %s113 = sadd.s32 %s112, 1
      %p116 = scmp.eq.s32.totalorder %s15, 1
      %p117 = scmp.ne.s32.totalorder %s112, %s114
      %p118 = scmp.eq.s32.totalorder %s15, 0
      %p119 = por %p117, %p118
      %p120 = scmp.ne.s32.totalorder %s112, %s114
      %p121 = scmp.eq.s32.totalorder %s20, 1
      %p122 = por %p120, %p121
      %p123 = scmp.ne.s32.totalorder %s114, %s115
      %p124 = scmp.eq.s32.totalorder %s20, 0
      %p125 = por %p123, %p124
      %p126 = scmp.ne.s32.totalorder %s114, %s115
      %p127 = scmp.eq.s32.totalorder %s21, 1
      %p128 = por %p126, %p127
      %p130 = scmp.ne.s32.totalorder %s115, %s129
      %p131 = scmp.eq.s32.totalorder %s21, 0
      %p132 = por %p130, %p131
      %s134 = sadd.s32 %s133, 1
      %p137 = scmp.eq.s32.totalorder %s15, 1
      %p138 = scmp.ne.s32.totalorder %s133, %s135
      %p139 = scmp.eq.s32.totalorder %s15, 0
      %p140 = por %p138, %p139
      %p141 = scmp.ne.s32.totalorder %s133, %s135
      %p142 = scmp.eq.s32.totalorder %s20, 1
      %p143 = por %p141, %p142
      %p144 = scmp.ne.s32.totalorder %s135, %s136
      %p145 = scmp.eq.s32.totalorder %s20, 0
      %p146 = por %p144, %p145
      %p147 = scmp.ne.s32.totalorder %s135, %s136
      %p148 = scmp.eq.s32.totalorder %s21, 1
      %p149 = por %p147, %p148
      %p151 = scmp.ne.s32.totalorder %s136, %s150
      %p152 = scmp.eq.s32.totalorder %s21, 0
      %p153 = por %p151, %p152
      %s155 = sadd.s32 %s154, 1
      %p158 = scmp.eq.s32.totalorder %s15, 1
      %p159 = scmp.ne.s32.totalorder %s154, %s156
      %p160 = scmp.eq.s32.totalorder %s15, 0
      %p161 = por %p159, %p160
      %p162 = scmp.ne.s32.totalorder %s154, %s156
      %p163 = scmp.eq.s32.totalorder %s20, 1
      %p164 = por %p162, %p163
      %p165 = scmp.ne.s32.totalorder %s156, %s157
      %p166 = scmp.eq.s32.totalorder %s20, 0
      %p167 = por %p165, %p166
      %p168 = scmp.ne.s32.totalorder %s156, %s157
      %p169 = scmp.eq.s32.totalorder %s21, 1
      %p170 = por %p168, %p169
      %p172 = scmp.ne.s32.totalorder %s157, %s171
      %p173 = scmp.eq.s32.totalorder %s21, 0
      %p174 = por %p172, %p173
      %s175 = ssub.s32 %s15, %s22
      %p176 = scmp.eq.s32.totalorder %s175, 0
      %s178 = sadd.s32 %s177, 1
      %s179 = scalar_select %p176, %s177, %s178
      %p182 = pneg %p176
      %p183 = scmp.eq.s32.totalorder %s15, 1
      %p184 = por %p182, %p183
      %p185 = scmp.ne.s32.totalorder %s177, %s180
      %p186 = scmp.eq.s32.totalorder %s15, 0
      %p187 = por %p185, %p186
      %p188 = scmp.ne.s32.totalorder %s177, %s180
      %p189 = scmp.eq.s32.totalorder %s20, 1
      %p190 = por %p188, %p189
      %p191 = scmp.ne.s32.totalorder %s180, %s181
      %p192 = scmp.eq.s32.totalorder %s20, 0
      %p193 = por %p191, %p192
      %p194 = scmp.ne.s32.totalorder %s180, %s181
      %p195 = scmp.eq.s32.totalorder %s21, 1
      %p196 = por %p194, %p195
      %p198 = scmp.ne.s32.totalorder %s181, %s197
      %p199 = scmp.eq.s32.totalorder %s21, 0
      %p200 = por %p198, %p199
      %p201 = scmp.le.s32.totalorder 1, %s15
      %p202 = scmp.lt.s32.totalorder %s15, 3
      %p203 = pnand %p201, %p202
      %p204 = pneg %p203
      // Predicated region
      $region9: #{my_decoder.9} parent=5 // pred_check
        _
      $region10: #{my_decoder.9} parent=5 // pred_check_branch
        %206 = sbr.rel (%p203) target = $region12
      $region11: #{my_decoder.9} parent=5 // pred_region
        %s207 = ssub.s32 %s15, 1
        // Predicated region
        $region13: #{my_decoder.9} parent=11 // pred_check
          %p208 = pneg %p62
        $region14: #{my_decoder.9} parent=11 // pred_check_branch
          %210 = sbr.rel (%p208) target = $region16
        $region15: #{my_decoder.9} parent=11 // pred_region
          _
        $region16: #{my_decoder.9} parent=11 // pred_fallthru
          _
        // Predicated region
        $region17: #{my_decoder.9} parent=11 // pred_check
          %p211 = pneg %p83
        $region18: #{my_decoder.9} parent=11 // pred_check_branch
          %213 = sbr.rel (%p211) target = $region20
        $region19: #{my_decoder.9} parent=11 // pred_region
          _
        $region20: #{my_decoder.9} parent=11 // pred_fallthru
          _
        // Predicated region
        $region21: #{my_decoder.9} parent=11 // pred_check
          %p214 = pneg %p104
        $region22: #{my_decoder.9} parent=11 // pred_check_branch
          %216 = sbr.rel (%p214) target = $region24
        $region23: #{my_decoder.9} parent=11 // pred_region
          _
        $region24: #{my_decoder.9} parent=11 // pred_fallthru
          _
        // Predicated region
        $region25: #{my_decoder.9} parent=11 // pred_check
          %p217 = pneg %p125
        $region26: #{my_decoder.9} parent=11 // pred_check_branch
          %219 = sbr.rel (%p217) target = $region28
        $region27: #{my_decoder.9} parent=11 // pred_region
          %221 = vsyncadd [#allocation3], 0
          %s223 = sshll.u32 %s4, 4
          %s224 = int_to_ptr.hbm [resolvable:$true] %s223
          %s225 = sshll.u32 [#allocation2], 4
          %s226 = int_to_ptr.vmem [resolvable:$true] %s225
          %228 = dma.hbm_to_vmem [thread:$0]  %s224, 16, %s226, [#allocation3]
        $region28: #{my_decoder.9} parent=11 // pred_fallthru
          _
        // Predicated region
        $region29: #{my_decoder.9} parent=11 // pred_check
          %p229 = pneg %p146
        $region30: #{my_decoder.9} parent=11 // pred_check_branch
          %231 = sbr.rel (%p229) target = $region32
        $region31: #{my_decoder.9} parent=11 // pred_region
          _
        $region32: #{my_decoder.9} parent=11 // pred_fallthru
          _
        // Predicated region
        $region33: #{my_decoder.9} parent=11 // pred_check
          %p232 = pneg %p167
        $region34: #{my_decoder.9} parent=11 // pred_check_branch
          %234 = sbr.rel (%p232) target = $region36
        $region35: #{my_decoder.9} parent=11 // pred_region
          %236 = vsyncadd [#allocation5], 0
          %s238 = sshll.u32 %s6, 4
          %s239 = int_to_ptr.hbm [resolvable:$true] %s238
          %s240 = sshll.u32 [#allocation4], 4
          %s241 = int_to_ptr.vmem [resolvable:$true] %s240
          %243 = dma.hbm_to_vmem [thread:$0]  %s239, 16, %s241, [#allocation5]
        $region36: #{my_decoder.9} parent=11 // pred_fallthru
          _
      $region12: #{my_decoder.9} parent=5 // pred_fallthru
        _
      %p244 = scmp.lt.s32.totalorder %s15, 2
      // Predicated region
      $region37: #{my_decoder.9} parent=5 // pred_check
        %p245 = pneg %p244
      $region38: #{my_decoder.9} parent=5 // pred_check_branch
        %247 = sbr.rel (%p245) target = $region40
      $region39: #{my_decoder.9} parent=5 // pred_region
        // Predicated region
        $region41: #{my_decoder.9} parent=39 // pred_check
          %p248 = pneg %p35
        $region42: #{my_decoder.9} parent=39 // pred_check_branch
          %250 = sbr.rel (%p248) target = $region44
        $region43: #{my_decoder.9} parent=39 // pred_region
          %p251 = scmp.lt.s32.totalorder %s15, 1
          %s252 = scalar_select %p251, %s15, 1
          %s253 = smul.addr %s252, 8
          %s254 = scalar_lea.vmem %s0, %s253
        $region44: #{my_decoder.9} parent=39 // pred_fallthru
          _
      $region40: #{my_decoder.9} parent=5 // pred_fallthru
        _
      %p255 = scmp.le.s32.totalorder 1, %s15
      %p256 = scmp.lt.s32.totalorder %s15, 3
      %p257 = pnand %p255, %p256
      %p258 = pneg %p257
      // Predicated region
      $region45: #{my_decoder.9} parent=5 // pred_check
        _
      $region46: #{my_decoder.9} parent=5 // pred_check_branch
        %260 = sbr.rel (%p257) target = $region48
      $region47: #{my_decoder.9} parent=5 // pred_region
        %s261 = ssub.s32 %s15, 1
        // Predicated region
        $region49: #{my_decoder.9} parent=47 // pred_check
          %p262 = pneg %p125
        $region50: #{my_decoder.9} parent=47 // pred_check_branch
          %264 = sbr.rel (%p262) target = $region52
        $region51: #{my_decoder.9} parent=47 // pred_region
          %266 = dma.done [#allocation3], 16
        $region52: #{my_decoder.9} parent=47 // pred_fallthru
          _
        // Predicated region
        $region53: #{my_decoder.9} parent=47 // pred_check
          %p267 = pneg %p167
        $region54: #{my_decoder.9} parent=47 // pred_check_branch
          %269 = sbr.rel (%p267) target = $region56
        $region55: #{my_decoder.9} parent=47 // pred_region
          %271 = dma.done [#allocation5], 16
        $region56: #{my_decoder.9} parent=47 // pred_fallthru
          _
        %p272 = scmp.lt.s32.totalorder %s20, 1
        %s273 = scalar_select %p272, %s20, 1
        %s274 = smul.addr %s273, 8
        %s275 = scalar_lea.vmem %s0, %s274
        %p276 = pneg %p41
        %p277 = pneg %p38
        %p278 = pneg %p62
        %p279 = pneg %p59
        %p280 = pneg %p83
        %p281 = pneg %p80
        %p282 = pneg %p104
        %p283 = pneg %p101
        %p284 = pneg %p125
        %p285 = pneg %p122
        %p286 = pneg %p146
        %p287 = pneg %p143
        %p288 = pneg %p167
        %p289 = pneg %p164
        %p290 = pneg %p193
        %p291 = pneg %p190
        %p292 = scmp.lt.s32.totalorder %s20, 1
        %s293 = scalar_select %p292, %s20, 1
        %s294 = smul.addr %s293, 8
        %s295 = scalar_lea.vmem %s7, %s294
        %p296 = scmp.lt.s32.totalorder %s20, 1
        %s297 = scalar_select %p296, %s20, 1
        %s298 = smul.addr %s297, 8
        %s299 = scalar_lea.vmem %s0, %s298
        %p300 = scmp.lt.s32.totalorder %s20, 1
        %s301 = scalar_select %p300, %s20, 1
        %s302 = smul.addr %s301, 8
        %s303 = scalar_lea.vmem %s7, %s302
        %v304 = vld [vmem:[%s299] sm:$0xff]
        %v305 = vld [vmem:[%s1] sm:$0x1]
        %v306 = vld [vmem:[%s2] sm:$0x1]
        %vm307 = vcmask 261120
        %v308 = vsel %vm307, %v304, 0.0
        %309 = vadd.xlane.f32.xlu0 %v308
        %v310 = vpop.xlane.xlu0 %309
        %v311 = vrcp.pop 32.0
        %v312 = vmul.f32 32.0, %v311
        %v313 = vsub.f32 1.0, %v312
        %v314 = vmul.f32 %v311, %v313
        %v315 = vadd.f32 %v311, %v314
        %vm316 = vweird.f32 %v311
        %v317 = vsel %vm316, %v311, %v315
        %v318 = vmul.f32 %v310, %v317
        %v319 = vsub.f32 %v304, %v318
        %v320 = vmul.f32 %v319, %v319
        %v321 = vsel %vm307, %v320, 0.0
        %322 = vadd.xlane.f32.xlu0 %v321
        %v323 = vpop.xlane.xlu0 %322
        %v324 = vmul.f32 %v323, 0.032258064
        %v325 = vrsqrt.pop %v324
        %v326 = vmul.f32 %v325, %v324
        %v327 = vmul.f32 %v326, %v325
        %v328 = vmul.f32 0.5, %v327
        %v329 = vsub.f32 1.5, %v328
        %v330 = vmul.f32 %v325, %v329
        %v331 = vmul.f32 %v324, %v330
        %vm332 = vcmp.eq.f32.partialorder %v324, inf
        %v333 = vsel %vm332, %v324, %v331
        %vm334 = vcmp.eq.f32.partialorder %v324, 0.0
        %v335 = vand.u32 %v324, 2147483648
        %v336 = vsel %vm334, %v335, %v333
        %v337 = vadd.f32 %v336, 1e-06
        %v338 = vrcp.pop %v337
        %v340 = vperm.slane %v305, 0
        %v342 = vmul.f32 %v340, %v319
        %v343 = vmul.f32 %v342, %v338
        %v345 = vperm.slane %v306, 0
        %v347 = vadd.f32 %v343, %v345
        %v348 = vld [vmem:[%s3] sm:$0xff]
        %v349 = vld [vmem:[%s3 + $0x8] sm:$0xff]
        %v350 = vld [vmem:[%s3 + $0x10] sm:$0xff]
        %v351 = vld [vmem:[%s3 + $0x18] sm:$0xff]
        %v352 = vld [vmem:[#allocation2] sm:$0x1]
        %v354 = vperm.slane %v352, 0
        %v357 = vsel %vm307, %v347, 0
        %359 = vmatpush.msra.mxu0 0.0
        %360 = vmatpush.msra.mxu0 0.0
        %361 = vmatpush.msra.mxu0 0.0
        %362 = vmatpush.msra.mxu0 0.0
        %363 = vmatpush.msra.mxu0 0.0
        %364 = vmatpush.msra.mxu0 0.0
        %365 = vmatpush.msra.mxu0 0.0
        %366 = vmatpush.msra.mxu0 0.0
        %367 = vmatpush.msra.mxu0 0.0
        %368 = vmatpush.msra.mxu0 0.0
        %369 = vmatpush.msra.mxu0 0.0
        %370 = vmatpush.msra.mxu0 0.0
        %371 = vmatpush.msra.mxu0 %v351
        %372 = vmatpush.msra.mxu0 %v350
        %373 = vmatpush.msra.mxu0 %v349
        %374 = vmatpush.msra.mxu0 %v348
        %375 = vmatmul.f32.gmra.mxu0 %v357
        %v376 = vpop.f32.mrf.mxu0
        %v377 = vadd.f32 %v354, %v376
        %378 = vdwg.mxu0
        %v379 = vmax.f32 %v377, 0.0
        %v380 = vld [vmem:[%s5] sm:$0xff]
        %v381 = vld [vmem:[%s5 + $0x8] sm:$0xff]
        %v382 = vld [vmem:[%s5 + $0x10] sm:$0xff]
        %v383 = vld [vmem:[%s5 + $0x18] sm:$0xff]
        %v384 = vld [vmem:[%s5 + $0x20] sm:$0xff]
        %v385 = vld [vmem:[%s5 + $0x28] sm:$0xff]
        %v386 = vld [vmem:[%s5 + $0x30] sm:$0xff]
        %v387 = vld [vmem:[%s5 + $0x38] sm:$0xff]
        %v388 = vld [vmem:[#allocation4] sm:$0x1]
        %v390 = vperm.slane %v388, 0
        %vm392 = vcmask 523264
        %v394 = vsel %vm392, %v379, 0
        %396 = vmatpush.msra.mxu0 0.0
        %397 = vmatpush.msra.mxu0 0.0
        %398 = vmatpush.msra.mxu0 0.0
        %399 = vmatpush.msra.mxu0 0.0
        %400 = vmatpush.msra.mxu0 0.0
        %401 = vmatpush.msra.mxu0 0.0
        %402 = vmatpush.msra.mxu0 0.0
        %403 = vmatpush.msra.mxu0 0.0
        %404 = vmatpush.msra.mxu0 %v387
        %405 = vmatpush.msra.mxu0 %v386
        %406 = vmatpush.msra.mxu0 %v385
        %407 = vmatpush.msra.mxu0 %v384
        %408 = vmatpush.msra.mxu0 %v383
        %409 = vmatpush.msra.mxu0 %v382
        %410 = vmatpush.msra.mxu0 %v381
        %411 = vmatpush.msra.mxu0 %v380
        %412 = vmatmul.f32.gmra.mxu0 %v394
        %v413 = vpop.f32.mrf.mxu0
        %v414 = vadd.f32 %v390, %v413
        %415 = vdwg.mxu0
        %v416 = vadd.f32 %v304, %v414
        %417 = vst.msk [vmem:[%s303] sm:$0xff] %vm307, %v416
        %p418 = scmp.lt.s32.totalorder %s20, 1
        %s419 = scalar_select %p418, %s20, 1
        %s420 = smul.addr %s419, 8
        %s421 = scalar_lea.vmem %s7, %s420
        // Predicated region
        $region57: #{my_decoder.9} parent=47 // pred_check
          %p422 = pneg %p190
        $region58: #{my_decoder.9} parent=47 // pred_check_branch
          %424 = sbr.rel (%p422) target = $region60
        $region59: #{my_decoder.9} parent=47 // pred_region
          _
        $region60: #{my_decoder.9} parent=47 // pred_fallthru
          _
      $region48: #{my_decoder.9} parent=5 // pred_fallthru
        _
      %p425 = scmp.le.s32.totalorder 2, %s15
      // Predicated region
      $region61: #{my_decoder.9} parent=5 // pred_check
        %p426 = pneg %p425
      $region62: #{my_decoder.9} parent=5 // pred_check_branch
        %428 = sbr.rel (%p426) target = $region64
      $region63: #{my_decoder.9} parent=5 // pred_region
        %s429 = ssub.s32 %s15, 2
        // Predicated region
        $region65: #{my_decoder.9} parent=63 // pred_check
          %p430 = pneg %p196
        $region66: #{my_decoder.9} parent=63 // pred_check_branch
          %432 = sbr.rel (%p430) target = $region68
        $region67: #{my_decoder.9} parent=63 // pred_region
          %p433 = scmp.lt.s32.totalorder %s21, 1
          %s434 = scalar_select %p433, %s21, 1
          %s435 = smul.addr %s434, 8
          %s436 = scalar_lea.vmem %s7, %s435
        $region68: #{my_decoder.9} parent=63 // pred_fallthru
          _
      $region64: #{my_decoder.9} parent=5 // pred_fallthru
        _
    $region6: #{my_decoder.9} parent=1 // loop_footer
      %s19 = sadd.s32 1, %s15
    $region7: #{my_decoder.9} parent=1 // loop_footer_branch
      %14 = sbr.rel target = $region3
    $region8: #{my_decoder.9} parent=1 // loop_exit
      _
    %437 = vsyncpa [#allocation3], 1
    %s438 = scalar_lea.sflag [#allocation3], 1
    %439 = vsyncpa %s438, 1
    %440 = vsyncpa [#allocation5], 1

// kernel: my_decoder.8
$region0: #{my_decoder.8}
  #allocation0 [shape = 'u32[]', space=smem, size = 0x4, offset = 0x4, fixed_abs, tag = 'smem constant byte address 0x4 - core index']
  #allocation1 [shape = 'u32[72,128]{1,0:T(1,128)}', space=vmem, size = 0x9000, scoped, tag = 'internal scratch']
  %s0 = inlined_call_operand.vmem [shape: f32[2,8,32], index: 0, kind: input, shape index: {}, may-alias: {0,13}]
  %s1 = inlined_call_operand.hbm [shape: f32[2,8,32], index: 1, kind: input, shape index: {}]
  %s2 = inlined_call_operand.vmem [shape: f32[2,1,8], index: 2, kind: input, shape index: {}]
  %s3 = inlined_call_operand.hbm [shape: f32[1,32], index: 3, kind: input, shape index: {}]
  %s4 = inlined_call_operand.hbm [shape: f32[1,32], index: 4, kind: input, shape index: {}]
  %s5 = inlined_call_operand.hbm [shape: f32[32,32], index: 5, kind: input, shape index: {}]
  %s6 = inlined_call_operand.hbm [shape: f32[1,32], index: 6, kind: input, shape index: {}]
  %s7 = inlined_call_operand.hbm [shape: f32[32,32], index: 7, kind: input, shape index: {}]
  %s8 = inlined_call_operand.hbm [shape: f32[1,32], index: 8, kind: input, shape index: {}]
  %s9 = inlined_call_operand.hbm [shape: f32[32,32], index: 9, kind: input, shape index: {}]
  %s10 = inlined_call_operand.hbm [shape: f32[1,32], index: 10, kind: input, shape index: {}]
  %s11 = inlined_call_operand.hbm [shape: f32[32,32], index: 11, kind: input, shape index: {}]
  %s12 = inlined_call_operand.hbm [shape: f32[1,32], index: 12, kind: input, shape index: {}]
  %s13 = inlined_call_operand.vmem [shape: f32[2,8,32], index: 13, kind: output, shape index: {}, may-alias: {0,13}]
  %s14 = sld [smem:[#allocation0]]
  $region129: #{my_decoder.8} parent=0
    _
  %s16 = ssub.s32 1, %s14
  %s17 = scalar_select 0, %s16, %s14
  $region1: #{my_decoder.8} parent=0
    #allocation2 [shape = 'u8[8192]{0}', space=vmem, size = 0x2000, scoped, tag = 'input window, operand 1']
    #allocation3 [shape = 's32[2]{0}', space=sflag, size = 0x8, scoped, tag = 'scoped memory for my_decoder.8']
    #allocation4 [shape = 'u8[512]{0}', space=vmem, size = 0x400, scoped, tag = 'input window, operand 3, single buffered']
    #allocation5 [shape = 's32[1]{0}', space=sflag, size = 0x4, scoped, tag = 'scoped memory for my_decoder.8']
    #allocation6 [shape = 'u8[512]{0}', space=vmem, size = 0x400, scoped, tag = 'input window, operand 4, single buffered']
    #allocation7 [shape = 'u8[16384]{0}', space=vmem, size = 0x4000, scoped, tag = 'input window, operand 5, single buffered']
    #allocation8 [shape = 's32[1]{0}', space=sflag, size = 0x4, scoped, tag = 'scoped memory for my_decoder.8']
    #allocation9 [shape = 'u8[512]{0}', space=vmem, size = 0x400, scoped, tag = 'input window, operand 6, single buffered']
    #allocation10 [shape = 'u8[16384]{0}', space=vmem, size = 0x4000, scoped, tag = 'input window, operand 7, single buffered']
    #allocation11 [shape = 's32[1]{0}', space=sflag, size = 0x4, scoped, tag = 'scoped memory for my_decoder.8']
    #allocation12 [shape = 'u8[512]{0}', space=vmem, size = 0x400, scoped, tag = 'input window, operand 8, single buffered']
    #allocation13 [shape = 'u8[16384]{0}', space=vmem, size = 0x4000, scoped, tag = 'input window, operand 9, single buffered']
    #allocation14 [shape = 's32[1]{0}', space=sflag, size = 0x4, scoped, tag = 'scoped memory for my_decoder.8']
    #allocation15 [shape = 'u8[512]{0}', space=vmem, size = 0x400, scoped, tag = 'input window, operand 10, single buffered']
    #allocation16 [shape = 'u8[16384]{0}', space=vmem, size = 0x4000, scoped, tag = 'input window, operand 11, single buffered']
    #allocation17 [shape = 's32[1]{0}', space=sflag, size = 0x4, scoped, tag = 'scoped memory for my_decoder.8']
    #allocation18 [shape = 'u8[512]{0}', space=vmem, size = 0x400, scoped, tag = 'input window, operand 12, single buffered']
    %18 = vsyncpa [#allocation3], 0
    %s19 = scalar_lea.sflag [#allocation3], 1
    %20 = vsyncpa %s19, 0
    %21 = vsyncpa [#allocation5], 0
    %22 = vsyncpa [#allocation8], 0
    %23 = vsyncpa [#allocation11], 0
    %24 = vsyncpa [#allocation14], 0
    %25 = vsyncpa [#allocation17], 0
    loop: start=0, step=1, limit=4
    $region2: #{my_decoder.8} parent=1 // loop_pre_header
      _
    $region3: #{my_decoder.8} parent=1 // loop_header
      %s27 = sphi 0, %s31
      %p28 = scmp.ge.s32.totalorder %s27, 4
      %s37 = sphi 0, %s39
      %s40 = sphi 0, %s37
      %s41 = sphi 0, %s40
      %s57 = sphi 0, %s41
      %s63 = sphi 0, %s65
      %s66 = sphi 0, %s63
      %s67 = sphi 0, %s66
      %s83 = sphi 0, %s67
      %s89 = sphi 0, %s91
      %s92 = sphi 0, %s89
      %s93 = sphi 0, %s92
      %s109 = sphi 0, %s93
      %s113 = sphi 0, %s113
      %s115 = sphi 0, %s113
      %s116 = sphi 0, %s115
      %s130 = sphi 0, %s116
      %s134 = sphi 0, %s134
      %s136 = sphi 0, %s134
      %s137 = sphi 0, %s136
      %s151 = sphi 0, %s137
      %s155 = sphi 0, %s155
      %s157 = sphi 0, %s155
      %s158 = sphi 0, %s157
      %s172 = sphi 0, %s158
      %s176 = sphi 0, %s176
      %s178 = sphi 0, %s176
      %s179 = sphi 0, %s178
      %s193 = sphi 0, %s179
      %s197 = sphi 0, %s197
      %s199 = sphi 0, %s197
      %s200 = sphi 0, %s199
      %s214 = sphi 0, %s200
      %s218 = sphi 0, %s218
      %s220 = sphi 0, %s218
      %s221 = sphi 0, %s220
      %s235 = sphi 0, %s221
      %s239 = sphi 0, %s239
      %s241 = sphi 0, %s239
      %s242 = sphi 0, %s241
      %s256 = sphi 0, %s242
      %s260 = sphi 0, %s260
      %s262 = sphi 0, %s260
      %s263 = sphi 0, %s262
      %s277 = sphi 0, %s263
      %s281 = sphi 0, %s281
      %s283 = sphi 0, %s281
      %s284 = sphi 0, %s283
      %s298 = sphi 0, %s284
      %s302 = sphi 0, %s302
      %s304 = sphi 0, %s302
      %s305 = sphi 0, %s304
      %s319 = sphi 0, %s305
      %s325 = sphi 0, %s327
      %s328 = sphi 0, %s325
      %s329 = sphi 0, %s328
      %s345 = sphi 0, %s329
    $region4: #{my_decoder.8} parent=1 // loop_header_branch
      %30 = sbr.rel (%p28) target = $region8
    $region5: #{my_decoder.8} parent=1 // loop_body
      %s32 = ssub.s32 %s27, 1
      %s33 = ssub.s32 %s27, 2
      %s34 = sadd.s32 %s27, 1
      %s35 = ssub.s32 %s27, %s34
      %p36 = scmp.eq.s32.totalorder %s35, 0
      %s38 = sadd.s32 %s37, 1
      %s39 = scalar_select %p36, %s37, %s38
      %p42 = pneg %p36
      %p43 = scmp.eq.s32.totalorder %s27, 1
      %p44 = por %p42, %p43
      %p45 = scmp.ne.s32.totalorder %s37, %s40
      %p46 = scmp.eq.s32.totalorder %s27, 0
      %p47 = por %p45, %p46
      %p48 = scmp.ne.s32.totalorder %s37, %s40
      %p49 = scmp.eq.s32.totalorder %s32, 1
      %p50 = por %p48, %p49
      %p51 = scmp.ne.s32.totalorder %s40, %s41
      %p52 = scmp.eq.s32.totalorder %s32, 0
      %p53 = por %p51, %p52
      %p54 = scmp.ne.s32.totalorder %s40, %s41
      %p55 = scmp.eq.s32.totalorder %s33, 1
      %p56 = por %p54, %p55
      %p58 = scmp.ne.s32.totalorder %s41, %s57
      %p59 = scmp.eq.s32.totalorder %s33, 0
      %p60 = por %p58, %p59
      %s61 = ssub.s32 %s27, %s34
      %p62 = scmp.eq.s32.totalorder %s61, 0
      %s64 = sadd.s32 %s63, 1
      %s65 = scalar_select %p62, %s63, %s64
      %p68 = pneg %p62
      %p69 = scmp.eq.s32.totalorder %s27, 1
      %p70 = por %p68, %p69
      %p71 = scmp.ne.s32.totalorder %s63, %s66
      %p72 = scmp.eq.s32.totalorder %s27, 0
      %p73 = por %p71, %p72
      %p74 = scmp.ne.s32.totalorder %s63, %s66
      %p75 = scmp.eq.s32.totalorder %s32, 1
      %p76 = por %p74, %p75
      %p77 = scmp.ne.s32.totalorder %s66, %s67
      %p78 = scmp.eq.s32.totalorder %s32, 0
      %p79 = por %p77, %p78
      %p80 = scmp.ne.s32.totalorder %s66, %s67
      %p81 = scmp.eq.s32.totalorder %s33, 1
      %p82 = por %p80, %p81
      %p84 = scmp.ne.s32.totalorder %s67, %s83
      %p85 = scmp.eq.s32.totalorder %s33, 0
      %p86 = por %p84, %p85
      %s87 = ssub.s32 %s27, %s34
      %p88 = scmp.eq.s32.totalorder %s87, 0
      %s90 = sadd.s32 %s89, 1
      %s91 = scalar_select %p88, %s89, %s90
      %p94 = pneg %p88
      %p95 = scmp.eq.s32.totalorder %s27, 1
      %p96 = por %p94, %p95
      %p97 = scmp.ne.s32.totalorder %s89, %s92
      %p98 = scmp.eq.s32.totalorder %s27, 0
      %p99 = por %p97, %p98
      %p100 = scmp.ne.s32.totalorder %s89, %s92
      %p101 = scmp.eq.s32.totalorder %s32, 1
      %p102 = por %p100, %p101
      %p103 = scmp.ne.s32.totalorder %s92, %s93
      %p104 = scmp.eq.s32.totalorder %s32, 0
      %p105 = por %p103, %p104
      %p106 = scmp.ne.s32.totalorder %s92, %s93
      %p107 = scmp.eq.s32.totalorder %s33, 1
      %p108 = por %p106, %p107
      %p110 = scmp.ne.s32.totalorder %s93, %s109
      %p111 = scmp.eq.s32.totalorder %s33, 0
      %p112 = por %p110, %p111
      %s114 = sadd.s32 %s113, 1
      %p117 = scmp.eq.s32.totalorder %s27, 1
      %p118 = scmp.ne.s32.totalorder %s113, %s115
      %p119 = scmp.eq.s32.totalorder %s27, 0
      %p120 = por %p118, %p119
      %p121 = scmp.ne.s32.totalorder %s113, %s115
      %p122 = scmp.eq.s32.totalorder %s32, 1
      %p123 = por %p121, %p122
      %p124 = scmp.ne.s32.totalorder %s115, %s116
      %p125 = scmp.eq.s32.totalorder %s32, 0
      %p126 = por %p124, %p125
      %p127 = scmp.ne.s32.totalorder %s115, %s116
      %p128 = scmp.eq.s32.totalorder %s33, 1
      %p129 = por %p127, %p128
      %p131 = scmp.ne.s32.totalorder %s116, %s130
      %p132 = scmp.eq.s32.totalorder %s33, 0
      %p133 = por %p131, %p132
      %s135 = sadd.s32 %s134, 1
      %p138 = scmp.eq.s32.totalorder %s27, 1
      %p139 = scmp.ne.s32.totalorder %s134, %s136
      %p140 = scmp.eq.s32.totalorder %s27, 0
      %p141 = por %p139, %p140
      %p142 = scmp.ne.s32.totalorder %s134, %s136
      %p143 = scmp.eq.s32.totalorder %s32, 1
      %p144 = por %p142, %p143
      %p145 = scmp.ne.s32.totalorder %s136, %s137
      %p146 = scmp.eq.s32.totalorder %s32, 0
      %p147 = por %p145, %p146
      %p148 = scmp.ne.s32.totalorder %s136, %s137
      %p149 = scmp.eq.s32.totalorder %s33, 1
      %p150 = por %p148, %p149
      %p152 = scmp.ne.s32.totalorder %s137, %s151
      %p153 = scmp.eq.s32.totalorder %s33, 0
      %p154 = por %p152, %p153
      %s156 = sadd.s32 %s155, 1
      %p159 = scmp.eq.s32.totalorder %s27, 1
      %p160 = scmp.ne.s32.totalorder %s155, %s157
      %p161 = scmp.eq.s32.totalorder %s27, 0
      %p162 = por %p160, %p161
      %p163 = scmp.ne.s32.totalorder %s155, %s157
      %p164 = scmp.eq.s32.totalorder %s32, 1
      %p165 = por %p163, %p164
      %p166 = scmp.ne.s32.totalorder %s157, %s158
      %p167 = scmp.eq.s32.totalorder %s32, 0
      %p168 = por %p166, %p167
      %p169 = scmp.ne.s32.totalorder %s157, %s158
      %p170 = scmp.eq.s32.totalorder %s33, 1
      %p171 = por %p169, %p170
      %p173 = scmp.ne.s32.totalorder %s158, %s172
      %p174 = scmp.eq.s32.totalorder %s33, 0
      %p175 = por %p173, %p174
      %s177 = sadd.s32 %s176, 1
      %p180 = scmp.eq.s32.totalorder %s27, 1
      %p181 = scmp.ne.s32.totalorder %s176, %s178
      %p182 = scmp.eq.s32.totalorder %s27, 0
      %p183 = por %p181, %p182
      %p184 = scmp.ne.s32.totalorder %s176, %s178
      %p185 = scmp.eq.s32.totalorder %s32, 1
      %p186 = por %p184, %p185
      %p187 = scmp.ne.s32.totalorder %s178, %s179
      %p188 = scmp.eq.s32.totalorder %s32, 0
      %p189 = por %p187, %p188
      %p190 = scmp.ne.s32.totalorder %s178, %s179
      %p191 = scmp.eq.s32.totalorder %s33, 1
      %p192 = por %p190, %p191
      %p194 = scmp.ne.s32.totalorder %s179, %s193
      %p195 = scmp.eq.s32.totalorder %s33, 0
      %p196 = por %p194, %p195
      %s198 = sadd.s32 %s197, 1
      %p201 = scmp.eq.s32.totalorder %s27, 1
      %p202 = scmp.ne.s32.totalorder %s197, %s199
      %p203 = scmp.eq.s32.totalorder %s27, 0
      %p204 = por %p202, %p203
      %p205 = scmp.ne.s32.totalorder %s197, %s199
      %p206 = scmp.eq.s32.totalorder %s32, 1
      %p207 = por %p205, %p206
      %p208 = scmp.ne.s32.totalorder %s199, %s200
      %p209 = scmp.eq.s32.totalorder %s32, 0
      %p210 = por %p208, %p209
      %p211 = scmp.ne.s32.totalorder %s199, %s200
      %p212 = scmp.eq.s32.totalorder %s33, 1
      %p213 = por %p211, %p212
      %p215 = scmp.ne.s32.totalorder %s200, %s214
      %p216 = scmp.eq.s32.totalorder %s33, 0
      %p217 = por %p215, %p216
      %s219 = sadd.s32 %s218, 1
      %p222 = scmp.eq.s32.totalorder %s27, 1
      %p223 = scmp.ne.s32.totalorder %s218, %s220
      %p224 = scmp.eq.s32.totalorder %s27, 0
      %p225 = por %p223, %p224
      %p226 = scmp.ne.s32.totalorder %s218, %s220
      %p227 = scmp.eq.s32.totalorder %s32, 1
      %p228 = por %p226, %p227
      %p229 = scmp.ne.s32.totalorder %s220, %s221
      %p230 = scmp.eq.s32.totalorder %s32, 0
      %p231 = por %p229, %p230
      %p232 = scmp.ne.s32.totalorder %s220, %s221
      %p233 = scmp.eq.s32.totalorder %s33, 1
      %p234 = por %p232, %p233
      %p236 = scmp.ne.s32.totalorder %s221, %s235
      %p237 = scmp.eq.s32.totalorder %s33, 0
      %p238 = por %p236, %p237
      %s240 = sadd.s32 %s239, 1
      %p243 = scmp.eq.s32.totalorder %s27, 1
      %p244 = scmp.ne.s32.totalorder %s239, %s241
      %p245 = scmp.eq.s32.totalorder %s27, 0
      %p246 = por %p244, %p245
      %p247 = scmp.ne.s32.totalorder %s239, %s241
      %p248 = scmp.eq.s32.totalorder %s32, 1
      %p249 = por %p247, %p248
      %p250 = scmp.ne.s32.totalorder %s241, %s242
      %p251 = scmp.eq.s32.totalorder %s32, 0
      %p252 = por %p250, %p251
      %p253 = scmp.ne.s32.totalorder %s241, %s242
      %p254 = scmp.eq.s32.totalorder %s33, 1
      %p255 = por %p253, %p254
      %p257 = scmp.ne.s32.totalorder %s242, %s256
      %p258 = scmp.eq.s32.totalorder %s33, 0
      %p259 = por %p257, %p258
      %s261 = sadd.s32 %s260, 1
      %p264 = scmp.eq.s32.totalorder %s27, 1
      %p265 = scmp.ne.s32.totalorder %s260, %s262
      %p266 = scmp.eq.s32.totalorder %s27, 0
      %p267 = por %p265, %p266
      %p268 = scmp.ne.s32.totalorder %s260, %s262
      %p269 = scmp.eq.s32.totalorder %s32, 1
      %p270 = por %p268, %p269
      %p271 = scmp.ne.s32.totalorder %s262, %s263
      %p272 = scmp.eq.s32.totalorder %s32, 0
      %p273 = por %p271, %p272
      %p274 = scmp.ne.s32.totalorder %s262, %s263
      %p275 = scmp.eq.s32.totalorder %s33, 1
      %p276 = por %p274, %p275
      %p278 = scmp.ne.s32.totalorder %s263, %s277
      %p279 = scmp.eq.s32.totalorder %s33, 0
      %p280 = por %p278, %p279
      %s282 = sadd.s32 %s281, 1
      %p285 = scmp.eq.s32.totalorder %s27, 1
      %p286 = scmp.ne.s32.totalorder %s281, %s283
      %p287 = scmp.eq.s32.totalorder %s27, 0
      %p288 = por %p286, %p287
      %p289 = scmp.ne.s32.totalorder %s281, %s283
      %p290 = scmp.eq.s32.totalorder %s32, 1
      %p291 = por %p289, %p290
      %p292 = scmp.ne.s32.totalorder %s283, %s284
      %p293 = scmp.eq.s32.totalorder %s32, 0
      %p294 = por %p292, %p293
      %p295 = scmp.ne.s32.totalorder %s283, %s284
      %p296 = scmp.eq.s32.totalorder %s33, 1
      %p297 = por %p295, %p296
      %p299 = scmp.ne.s32.totalorder %s284, %s298
      %p300 = scmp.eq.s32.totalorder %s33, 0
      %p301 = por %p299, %p300
      %s303 = sadd.s32 %s302, 1
      %p306 = scmp.eq.s32.totalorder %s27, 1
      %p307 = scmp.ne.s32.totalorder %s302, %s304
      %p308 = scmp.eq.s32.totalorder %s27, 0
      %p309 = por %p307, %p308
      %p310 = scmp.ne.s32.totalorder %s302, %s304
      %p311 = scmp.eq.s32.totalorder %s32, 1
      %p312 = por %p310, %p311
      %p313 = scmp.ne.s32.totalorder %s304, %s305
      %p314 = scmp.eq.s32.totalorder %s32, 0
      %p315 = por %p313, %p314
      %p316 = scmp.ne.s32.totalorder %s304, %s305
      %p317 = scmp.eq.s32.totalorder %s33, 1
      %p318 = por %p316, %p317
      %p320 = scmp.ne.s32.totalorder %s305, %s319
      %p321 = scmp.eq.s32.totalorder %s33, 0
      %p322 = por %p320, %p321
      %s323 = ssub.s32 %s27, %s34
      %p324 = scmp.eq.s32.totalorder %s323, 0
      %s326 = sadd.s32 %s325, 1
      %s327 = scalar_select %p324, %s325, %s326
      %p330 = pneg %p324
      %p331 = scmp.eq.s32.totalorder %s27, 1
      %p332 = por %p330, %p331
      %p333 = scmp.ne.s32.totalorder %s325, %s328
      %p334 = scmp.eq.s32.totalorder %s27, 0
      %p335 = por %p333, %p334
      %p336 = scmp.ne.s32.totalorder %s325, %s328
      %p337 = scmp.eq.s32.totalorder %s32, 1
      %p338 = por %p336, %p337
      %p339 = scmp.ne.s32.totalorder %s328, %s329
      %p340 = scmp.eq.s32.totalorder %s32, 0
      %p341 = por %p339, %p340
      %p342 = scmp.ne.s32.totalorder %s328, %s329
      %p343 = scmp.eq.s32.totalorder %s33, 1
      %p344 = por %p342, %p343
      %p346 = scmp.ne.s32.totalorder %s329, %s345
      %p347 = scmp.eq.s32.totalorder %s33, 0
      %p348 = por %p346, %p347
      %p349 = scmp.le.s32.totalorder 1, %s27
      %p350 = scmp.lt.s32.totalorder %s27, 3
      %p351 = pnand %p349, %p350
      %p352 = pneg %p351
      // Predicated region
      $region9: #{my_decoder.8} parent=5 // pred_check
        _
      $region10: #{my_decoder.8} parent=5 // pred_check_branch
        %354 = sbr.rel (%p351) target = $region12
      $region11: #{my_decoder.8} parent=5 // pred_region
        %s355 = ssub.s32 %s27, 1
        // Predicated region
        $region13: #{my_decoder.8} parent=11 // pred_check
          %p356 = pneg %p126
        $region14: #{my_decoder.8} parent=11 // pred_check_branch
          %358 = sbr.rel (%p356) target = $region16
        $region15: #{my_decoder.8} parent=11 // pred_region
          %360 = vsyncadd [#allocation5], 0
          %s362 = sshll.u32 %s3, 4
          %s363 = int_to_ptr.hbm [resolvable:$true] %s362
          %s364 = sshll.u32 [#allocation4], 4
          %s365 = int_to_ptr.vmem [resolvable:$true] %s364
          %367 = dma.hbm_to_vmem [thread:$0]  %s363, 16, %s365, [#allocation5]
        $region16: #{my_decoder.8} parent=11 // pred_fallthru
          _
        // Predicated region
        $region17: #{my_decoder.8} parent=11 // pred_check
          %p368 = pneg %p147
        $region18: #{my_decoder.8} parent=11 // pred_check_branch
          %370 = sbr.rel (%p368) target = $region20
        $region19: #{my_decoder.8} parent=11 // pred_region
          %372 = vsyncadd [#allocation5], 0
          %s374 = sshll.u32 %s4, 4
          %s375 = int_to_ptr.hbm [resolvable:$true] %s374
          %s376 = sshll.u32 [#allocation6], 4
          %s377 = int_to_ptr.vmem [resolvable:$true] %s376
          %379 = dma.hbm_to_vmem [thread:$0]  %s375, 16, %s377, [#allocation5]
        $region20: #{my_decoder.8} parent=11 // pred_fallthru
          _
        // Predicated region
        $region21: #{my_decoder.8} parent=11 // pred_check
          %p380 = pneg %p168
        $region22: #{my_decoder.8} parent=11 // pred_check_branch
          %382 = sbr.rel (%p380) target = $region24
        $region23: #{my_decoder.8} parent=11 // pred_region
          %384 = vsyncadd [#allocation8], 0
          %s385 = sshll.u32 %s5, 4
          %s386 = int_to_ptr.hbm [resolvable:$true] %s385
          %s387 = sshll.u32 [#allocation7], 4
          %s388 = int_to_ptr.vmem [resolvable:$true] %s387
          %393 = dma.hbm_to_vmem [thread:$0]  %s386, 512, %s388, [#allocation8], 128, 128, 8
        $region24: #{my_decoder.8} parent=11 // pred_fallthru
          _
        // Predicated region
        $region25: #{my_decoder.8} parent=11 // pred_check
          %p394 = pneg %p189
        $region26: #{my_decoder.8} parent=11 // pred_check_branch
          %396 = sbr.rel (%p394) target = $region28
        $region27: #{my_decoder.8} parent=11 // pred_region
          %398 = vsyncadd [#allocation8], 0
          %s400 = sshll.u32 %s6, 4
          %s401 = int_to_ptr.hbm [resolvable:$true] %s400
          %s402 = sshll.u32 [#allocation9], 4
          %s403 = int_to_ptr.vmem [resolvable:$true] %s402
          %405 = dma.hbm_to_vmem [thread:$0]  %s401, 16, %s403, [#allocation8]
        $region28: #{my_decoder.8} parent=11 // pred_fallthru
          _
        // Predicated region
        $region29: #{my_decoder.8} parent=11 // pred_check
          %p406 = pneg %p210
        $region30: #{my_decoder.8} parent=11 // pred_check_branch
          %408 = sbr.rel (%p406) target = $region32
        $region31: #{my_decoder.8} parent=11 // pred_region
          %410 = vsyncadd [#allocation11], 0
          %s411 = sshll.u32 %s7, 4
          %s412 = int_to_ptr.hbm [resolvable:$true] %s411
          %s413 = sshll.u32 [#allocation10], 4
          %s414 = int_to_ptr.vmem [resolvable:$true] %s413
          %419 = dma.hbm_to_vmem [thread:$0]  %s412, 512, %s414, [#allocation11], 128, 128, 8
        $region32: #{my_decoder.8} parent=11 // pred_fallthru
          _
        // Predicated region
        $region33: #{my_decoder.8} parent=11 // pred_check
          %p420 = pneg %p231
        $region34: #{my_decoder.8} parent=11 // pred_check_branch
          %422 = sbr.rel (%p420) target = $region36
        $region35: #{my_decoder.8} parent=11 // pred_region
          %424 = vsyncadd [#allocation11], 0
          %s426 = sshll.u32 %s8, 4
          %s427 = int_to_ptr.hbm [resolvable:$true] %s426
          %s428 = sshll.u32 [#allocation12], 4
          %s429 = int_to_ptr.vmem [resolvable:$true] %s428
          %431 = dma.hbm_to_vmem [thread:$0]  %s427, 16, %s429, [#allocation11]
        $region36: #{my_decoder.8} parent=11 // pred_fallthru
          _
        // Predicated region
        $region37: #{my_decoder.8} parent=11 // pred_check
          %p432 = pneg %p252
        $region38: #{my_decoder.8} parent=11 // pred_check_branch
          %434 = sbr.rel (%p432) target = $region40
        $region39: #{my_decoder.8} parent=11 // pred_region
          %436 = vsyncadd [#allocation14], 0
          %s437 = sshll.u32 %s9, 4
          %s438 = int_to_ptr.hbm [resolvable:$true] %s437
          %s439 = sshll.u32 [#allocation13], 4
          %s440 = int_to_ptr.vmem [resolvable:$true] %s439
          %445 = dma.hbm_to_vmem [thread:$0]  %s438, 512, %s440, [#allocation14], 128, 128, 8
        $region40: #{my_decoder.8} parent=11 // pred_fallthru
          _
        // Predicated region
        $region41: #{my_decoder.8} parent=11 // pred_check
          %p446 = pneg %p273
        $region42: #{my_decoder.8} parent=11 // pred_check_branch
          %448 = sbr.rel (%p446) target = $region44
        $region43: #{my_decoder.8} parent=11 // pred_region
          %450 = vsyncadd [#allocation14], 0
          %s452 = sshll.u32 %s10, 4
          %s453 = int_to_ptr.hbm [resolvable:$true] %s452
          %s454 = sshll.u32 [#allocation15], 4
          %s455 = int_to_ptr.vmem [resolvable:$true] %s454
          %457 = dma.hbm_to_vmem [thread:$0]  %s453, 16, %s455, [#allocation14]
        $region44: #{my_decoder.8} parent=11 // pred_fallthru
          _
        // Predicated region
        $region45: #{my_decoder.8} parent=11 // pred_check
          %p458 = pneg %p294
        $region46: #{my_decoder.8} parent=11 // pred_check_branch
          %460 = sbr.rel (%p458) target = $region48
        $region47: #{my_decoder.8} parent=11 // pred_region
          %462 = vsyncadd [#allocation17], 0
          %s463 = sshll.u32 %s11, 4
          %s464 = int_to_ptr.hbm [resolvable:$true] %s463
          %s465 = sshll.u32 [#allocation16], 4
          %s466 = int_to_ptr.vmem [resolvable:$true] %s465
          %471 = dma.hbm_to_vmem [thread:$0]  %s464, 512, %s466, [#allocation17], 128, 128, 8
        $region48: #{my_decoder.8} parent=11 // pred_fallthru
          _
        // Predicated region
        $region49: #{my_decoder.8} parent=11 // pred_check
          %p472 = pneg %p315
        $region50: #{my_decoder.8} parent=11 // pred_check_branch
          %474 = sbr.rel (%p472) target = $region52
        $region51: #{my_decoder.8} parent=11 // pred_region
          %476 = vsyncadd [#allocation17], 0
          %s478 = sshll.u32 %s12, 4
          %s479 = int_to_ptr.hbm [resolvable:$true] %s478
          %s480 = sshll.u32 [#allocation18], 4
          %s481 = int_to_ptr.vmem [resolvable:$true] %s480
          %483 = dma.hbm_to_vmem [thread:$0]  %s479, 16, %s481, [#allocation17]
        $region52: #{my_decoder.8} parent=11 // pred_fallthru
          _
      $region12: #{my_decoder.8} parent=5 // pred_fallthru
        _
      %p484 = scmp.lt.s32.totalorder %s27, 2
      // Predicated region
      $region53: #{my_decoder.8} parent=5 // pred_check
        %p485 = pneg %p484
      $region54: #{my_decoder.8} parent=5 // pred_check_branch
        %487 = sbr.rel (%p485) target = $region56
      $region55: #{my_decoder.8} parent=5 // pred_region
        // Predicated region
        $region57: #{my_decoder.8} parent=55 // pred_check
          %p488 = pneg %p47
        $region58: #{my_decoder.8} parent=55 // pred_check_branch
          %490 = sbr.rel (%p488) target = $region60
        $region59: #{my_decoder.8} parent=55 // pred_region
          %p491 = scmp.lt.s32.totalorder %s27, 1
          %s492 = scalar_select %p491, %s27, 1
          %s493 = smul.addr %s492, 8
          %s494 = scalar_lea.vmem %s0, %s493
        $region60: #{my_decoder.8} parent=55 // pred_fallthru
          _
        // Predicated region
        $region61: #{my_decoder.8} parent=55 // pred_check
          %p495 = pneg %p73
        $region62: #{my_decoder.8} parent=55 // pred_check_branch
          %497 = sbr.rel (%p495) target = $region64
        $region63: #{my_decoder.8} parent=55 // pred_region
          %s498 = sand.u32 %s63, 1
          %s499 = scalar_lea.sflag [#allocation3], %s498
          %s500 = sand.u32 %s63, 1
          %s501 = smul.addr %s500, 8
          %s502 = scalar_lea.vmem [#allocation2], %s501
          %504 = vsyncadd %s499, 0
          %s505 = smul.addr %s27, 8
          %s506 = scalar_lea.hbm %s1, %s505
          %s508 = sshll.u32 %s506, 4
          %s509 = int_to_ptr.hbm [resolvable:$true] %s508
          %s510 = sshll.u32 %s502, 4
          %s511 = int_to_ptr.vmem [resolvable:$true] %s510
          %513 = dma.hbm_to_vmem [thread:$0]  %s509, 128, %s511, %s499
        $region64: #{my_decoder.8} parent=55 // pred_fallthru
          _
        // Predicated region
        $region65: #{my_decoder.8} parent=55 // pred_check
          %p514 = pneg %p99
        $region66: #{my_decoder.8} parent=55 // pred_check_branch
          %516 = sbr.rel (%p514) target = $region68
        $region67: #{my_decoder.8} parent=55 // pred_region
          %p517 = scmp.lt.s32.totalorder %s27, 1
          %s518 = scalar_select %p517, %s27, 1
          %s519 = scalar_lea.vmem %s2, %s518
        $region68: #{my_decoder.8} parent=55 // pred_fallthru
          _
      $region56: #{my_decoder.8} parent=5 // pred_fallthru
        _
      %p520 = scmp.le.s32.totalorder 1, %s27
      %p521 = scmp.lt.s32.totalorder %s27, 3
      %p522 = pnand %p520, %p521
      %p523 = pneg %p522
      // Predicated region
      $region69: #{my_decoder.8} parent=5 // pred_check
        _
      $region70: #{my_decoder.8} parent=5 // pred_check_branch
        %525 = sbr.rel (%p522) target = $region72
      $region71: #{my_decoder.8} parent=5 // pred_region
        %s526 = ssub.s32 %s27, 1
        %s527 = sand.u32 %s66, 1
        %s528 = scalar_lea.sflag [#allocation3], %s527
        %s529 = sand.u32 %s66, 1
        %s530 = smul.addr %s529, 8
        %s531 = scalar_lea.vmem [#allocation2], %s530
        // Predicated region
        $region73: #{my_decoder.8} parent=71 // pred_check
          %p532 = pneg %p79
        $region74: #{my_decoder.8} parent=71 // pred_check_branch
          %534 = sbr.rel (%p532) target = $region76
        $region75: #{my_decoder.8} parent=71 // pred_region
          %536 = dma.done %s528, 128
        $region76: #{my_decoder.8} parent=71 // pred_fallthru
          _
        // Predicated region
        $region77: #{my_decoder.8} parent=71 // pred_check
          %p537 = pneg %p126
        $region78: #{my_decoder.8} parent=71 // pred_check_branch
          %539 = sbr.rel (%p537) target = $region80
        $region79: #{my_decoder.8} parent=71 // pred_region
          %541 = dma.done [#allocation5], 16
        $region80: #{my_decoder.8} parent=71 // pred_fallthru
          _
        // Predicated region
        $region81: #{my_decoder.8} parent=71 // pred_check
          %p542 = pneg %p147
        $region82: #{my_decoder.8} parent=71 // pred_check_branch
          %544 = sbr.rel (%p542) target = $region84
        $region83: #{my_decoder.8} parent=71 // pred_region
          %546 = dma.done [#allocation5], 16
        $region84: #{my_decoder.8} parent=71 // pred_fallthru
          _
        // Predicated region
        $region85: #{my_decoder.8} parent=71 // pred_check
          %p547 = pneg %p168
        $region86: #{my_decoder.8} parent=71 // pred_check_branch
          %549 = sbr.rel (%p547) target = $region88
        $region87: #{my_decoder.8} parent=71 // pred_region
          %551 = dma.done [#allocation8], 512
        $region88: #{my_decoder.8} parent=71 // pred_fallthru
          _
        // Predicated region
        $region89: #{my_decoder.8} parent=71 // pred_check
          %p552 = pneg %p189
        $region90: #{my_decoder.8} parent=71 // pred_check_branch
          %554 = sbr.rel (%p552) target = $region92
        $region91: #{my_decoder.8} parent=71 // pred_region
          %556 = dma.done [#allocation8], 16
        $region92: #{my_decoder.8} parent=71 // pred_fallthru
          _
        // Predicated region
        $region93: #{my_decoder.8} parent=71 // pred_check
          %p557 = pneg %p210
        $region94: #{my_decoder.8} parent=71 // pred_check_branch
          %559 = sbr.rel (%p557) target = $region96
        $region95: #{my_decoder.8} parent=71 // pred_region
          %561 = dma.done [#allocation11], 512
        $region96: #{my_decoder.8} parent=71 // pred_fallthru
          _
        // Predicated region
        $region97: #{my_decoder.8} parent=71 // pred_check
          %p562 = pneg %p231
        $region98: #{my_decoder.8} parent=71 // pred_check_branch
          %564 = sbr.rel (%p562) target = $region100
        $region99: #{my_decoder.8} parent=71 // pred_region
          %566 = dma.done [#allocation11], 16
        $region100: #{my_decoder.8} parent=71 // pred_fallthru
          _
        // Predicated region
        $region101: #{my_decoder.8} parent=71 // pred_check
          %p567 = pneg %p252
        $region102: #{my_decoder.8} parent=71 // pred_check_branch
          %569 = sbr.rel (%p567) target = $region104
        $region103: #{my_decoder.8} parent=71 // pred_region
          %571 = dma.done [#allocation14], 512
        $region104: #{my_decoder.8} parent=71 // pred_fallthru
          _
        // Predicated region
        $region105: #{my_decoder.8} parent=71 // pred_check
          %p572 = pneg %p273
        $region106: #{my_decoder.8} parent=71 // pred_check_branch
          %574 = sbr.rel (%p572) target = $region108
        $region107: #{my_decoder.8} parent=71 // pred_region
          %576 = dma.done [#allocation14], 16
        $region108: #{my_decoder.8} parent=71 // pred_fallthru
          _
        // Predicated region
        $region109: #{my_decoder.8} parent=71 // pred_check
          %p577 = pneg %p294
        $region110: #{my_decoder.8} parent=71 // pred_check_branch
          %579 = sbr.rel (%p577) target = $region112
        $region111: #{my_decoder.8} parent=71 // pred_region
          %581 = dma.done [#allocation17], 512
        $region112: #{my_decoder.8} parent=71 // pred_fallthru
          _
        // Predicated region
        $region113: #{my_decoder.8} parent=71 // pred_check
          %p582 = pneg %p315
        $region114: #{my_decoder.8} parent=71 // pred_check_branch
          %584 = sbr.rel (%p582) target = $region116
        $region115: #{my_decoder.8} parent=71 // pred_region
          %586 = dma.done [#allocation17], 16
        $region116: #{my_decoder.8} parent=71 // pred_fallthru
          _
        %p587 = scmp.lt.s32.totalorder %s32, 1
        %s588 = scalar_select %p587, %s32, 1
        %s589 = smul.addr %s588, 8
        %s590 = scalar_lea.vmem %s0, %s589
        %p591 = pneg %p53
        %p592 = pneg %p50
        %s593 = sand.u32 %s66, 1
        %s594 = scalar_lea.sflag [#allocation3], %s593
        %s595 = sand.u32 %s66, 1
        %s596 = smul.addr %s595, 8
        %s597 = scalar_lea.vmem [#allocation2], %s596
        %p598 = pneg %p79
        %p599 = pneg %p76
        %p600 = scmp.lt.s32.totalorder %s32, 1
        %s601 = scalar_select %p600, %s32, 1
        %s602 = scalar_lea.vmem %s2, %s601
        %p603 = pneg %p105
        %p604 = pneg %p102
        %p605 = pneg %p126
        %p606 = pneg %p123
        %p607 = pneg %p147
        %p608 = pneg %p144
        %p609 = pneg %p168
        %p610 = pneg %p165
        %p611 = pneg %p189
        %p612 = pneg %p186
        %p613 = pneg %p210
        %p614 = pneg %p207
        %p615 = pneg %p231
        %p616 = pneg %p228
        %p617 = pneg %p252
        %p618 = pneg %p249
        %p619 = pneg %p273
        %p620 = pneg %p270
        %p621 = pneg %p294
        %p622 = pneg %p291
        %p623 = pneg %p315
        %p624 = pneg %p312
        %p625 = pneg %p341
        %p626 = pneg %p338
        %p627 = scmp.lt.s32.totalorder %s32, 1
        %s628 = scalar_select %p627, %s32, 1
        %s629 = smul.addr %s628, 8
        %s630 = scalar_lea.vmem %s13, %s629
        %p631 = scmp.lt.s32.totalorder %s32, 1
        %s632 = scalar_select %p631, %s32, 1
        %s633 = smul.addr %s632, 8
        %s634 = scalar_lea.vmem %s0, %s633
        %p635 = scmp.lt.s32.totalorder %s32, 1
        %s636 = scalar_select %p635, %s32, 1
        %s637 = scalar_lea.vmem %s2, %s636
        %p638 = scmp.lt.s32.totalorder %s32, 1
        %s639 = scalar_select %p638, %s32, 1
        %s640 = smul.addr %s639, 8
        %s641 = scalar_lea.vmem %s13, %s640
        %v642 = vld [vmem:[%s634] sm:$0xff]
        %v643 = vld [vmem:[%s531] sm:$0xff]
        %v644 = vld [vmem:[#allocation4] sm:$0x1]
        %v645 = vld [vmem:[#allocation6] sm:$0x1]
        %vm646 = vcmask 261120
        %v647 = vsel %vm646, %v642, 0.0
        %648 = vadd.xlane.f32.xlu0 %v647
        %v649 = vpop.xlane.xlu0 %648
        %v650 = vrcp.pop 32.0
        %v651 = vmul.f32 32.0, %v650
        %v652 = vsub.f32 1.0, %v651
        %v653 = vmul.f32 %v650, %v652
        %v654 = vadd.f32 %v650, %v653
        %vm655 = vweird.f32 %v650
        %v656 = vsel %vm655, %v650, %v654
        %v657 = vmul.f32 %v649, %v656
        %v658 = vsub.f32 %v642, %v657
        %v659 = vmul.f32 %v658, %v658
        %v660 = vsel %vm646, %v659, 0.0
        %661 = vadd.xlane.f32.xlu0 %v660
        %v662 = vpop.xlane.xlu0 %661
        %v663 = vmul.f32 %v662, 0.032258064
        %v664 = vrsqrt.pop %v663
        %v665 = vmul.f32 %v664, %v663
        %v666 = vmul.f32 %v665, %v664
        %v667 = vmul.f32 0.5, %v666
        %v668 = vsub.f32 1.5, %v667
        %v669 = vmul.f32 %v664, %v668
        %v670 = vmul.f32 %v663, %v669
        %vm671 = vcmp.eq.f32.partialorder %v663, inf
        %v672 = vsel %vm671, %v663, %v670
        %vm673 = vcmp.eq.f32.partialorder %v663, 0.0
        %v674 = vand.u32 %v663, 2147483648
        %v675 = vsel %vm673, %v674, %v672
        %v676 = vadd.f32 %v675, 1e-06
        %v677 = vrcp.pop %v676
        %v679 = vperm.slane %v644, 0
        %v681 = vmul.f32 %v679, %v658
        %v682 = vmul.f32 %v681, %v677
        %v684 = vperm.slane %v645, 0
        %v686 = vadd.f32 %v682, %v684
        %v687 = vld [vmem:[%s637] sm:$0x1]
        %v688 = vld [vmem:[#allocation7] sm:$0xff]
        %v689 = vld [vmem:[#allocation7 + $0x8] sm:$0xff]
        %v690 = vld [vmem:[#allocation7 + $0x10] sm:$0xff]
        %v691 = vld [vmem:[#allocation7 + $0x18] sm:$0xff]
        %v692 = vld [vmem:[#allocation9] sm:$0x1]
        %v693 = vld [vmem:[#allocation10] sm:$0xff]
        %v694 = vld [vmem:[#allocation10 + $0x8] sm:$0xff]
        %v695 = vld [vmem:[#allocation10 + $0x10] sm:$0xff]
        %v696 = vld [vmem:[#allocation10 + $0x18] sm:$0xff]
        %v697 = vld [vmem:[#allocation12] sm:$0x1]
        %v698 = vld [vmem:[#allocation13] sm:$0xff]
        %v699 = vld [vmem:[#allocation13 + $0x8] sm:$0xff]
        %v700 = vld [vmem:[#allocation13 + $0x10] sm:$0xff]
        %v701 = vld [vmem:[#allocation13 + $0x18] sm:$0xff]
        %v702 = vld [vmem:[#allocation15] sm:$0x1]
        %v703 = vld [vmem:[#allocation16] sm:$0xff]
        %v704 = vld [vmem:[#allocation16 + $0x8] sm:$0xff]
        %v705 = vld [vmem:[#allocation16 + $0x10] sm:$0xff]
        %v706 = vld [vmem:[#allocation16 + $0x18] sm:$0xff]
        %v707 = vld [vmem:[#allocation18] sm:$0x1]
        %v709 = vperm.slane %v692, 0
        %v712 = vsel %vm646, %v686, 0
        %714 = vmatpush.msra.mxu0 0.0
        %715 = vmatpush.msra.mxu0 0.0
        %716 = vmatpush.msra.mxu0 0.0
        %717 = vmatpush.msra.mxu0 0.0
        %718 = vmatpush.msra.mxu0 0.0
        %719 = vmatpush.msra.mxu0 0.0
        %720 = vmatpush.msra.mxu0 0.0
        %721 = vmatpush.msra.mxu0 0.0
        %722 = vmatpush.msra.mxu0 0.0
        %723 = vmatpush.msra.mxu0 0.0
        %724 = vmatpush.msra.mxu0 0.0
        %725 = vmatpush.msra.mxu0 0.0
        %726 = vmatpush.msra.mxu0 %v691
        %727 = vmatpush.msra.mxu0 %v690
        %728 = vmatpush.msra.mxu0 %v689
        %729 = vmatpush.msra.mxu0 %v688
        %730 = vmatmul.f32.gmra.mxu0 %v712
        %v731 = vpop.f32.mrf.mxu0
        %v732 = vadd.f32 %v709, %v731
        %733 = vdwg.mxu0
        %v735 = vperm.slane %v697, 0
        %v738 = vsel %vm646, %v643, 0
        %740 = vmatpush.msra.mxu0 0.0
        %741 = vmatpush.msra.mxu0 0.0
        %742 = vmatpush.msra.mxu0 0.0
        %743 = vmatpush.msra.mxu0 0.0
        %744 = vmatpush.msra.mxu0 0.0
        %745 = vmatpush.msra.mxu0 0.0
        %746 = vmatpush.msra.mxu0 0.0
        %747 = vmatpush.msra.mxu0 0.0
        %748 = vmatpush.msra.mxu0 0.0
        %749 = vmatpush.msra.mxu0 0.0
        %750 = vmatpush.msra.mxu0 0.0
        %751 = vmatpush.msra.mxu0 0.0
        %752 = vmatpush.msra.mxu0 %v696
        %753 = vmatpush.msra.mxu0 %v695
        %754 = vmatpush.msra.mxu0 %v694
        %755 = vmatpush.msra.mxu0 %v693
        %756 = vmatmul.f32.gmra.mxu0 %v738
        %v757 = vpop.f32.mrf.mxu0
        %v758 = vadd.f32 %v735, %v757
        %759 = vdwg.mxu0
        %v761 = vperm.slane %v702, 0
        %763 = vmatpush.msra.mxu0 0.0
        %764 = vmatpush.msra.mxu0 0.0
        %765 = vmatpush.msra.mxu0 0.0
        %766 = vmatpush.msra.mxu0 0.0
        %767 = vmatpush.msra.mxu0 0.0
        %768 = vmatpush.msra.mxu0 0.0
        %769 = vmatpush.msra.mxu0 0.0
        %770 = vmatpush.msra.mxu0 0.0
        %771 = vmatpush.msra.mxu0 0.0
        %772 = vmatpush.msra.mxu0 0.0
        %773 = vmatpush.msra.mxu0 0.0
        %774 = vmatpush.msra.mxu0 0.0
        %775 = vmatpush.msra.mxu0 %v701
        %776 = vmatpush.msra.mxu0 %v700
        %777 = vmatpush.msra.mxu0 %v699
        %778 = vmatpush.msra.mxu0 %v698
        %779 = vmatmul.f32.gmra.mxu0 %v738
        %v780 = vpop.f32.mrf.mxu0
        %v781 = vadd.f32 %v761, %v780
        %782 = vdwg.mxu0
        %v784 = vperm.slane %v687, 0
        %vm786 = vcmask 64512
        %v788 = vsel %vm786, %v732, 0
        %v791 = vsel %vm786, %v758, 0
        %793 = vmatpush.xpose.msra.mxu0 0.0
        %794 = vmatpush.xpose.msra.mxu0 0.0
        %795 = vmatpush.xpose.msra.mxu0 0.0
        %796 = vmatpush.xpose.msra.mxu0 0.0
        %797 = vmatpush.xpose.msra.mxu0 0.0
        %798 = vmatpush.xpose.msra.mxu0 0.0
        %799 = vmatpush.xpose.msra.mxu0 0.0
        %800 = vmatpush.xpose.msra.mxu0 0.0
        %801 = vmatpush.xpose.msra.mxu0 0.0
        %802 = vmatpush.xpose.msra.mxu0 0.0
        %803 = vmatpush.xpose.msra.mxu0 0.0
        %804 = vmatpush.xpose.msra.mxu0 0.0
        %805 = vmatpush.xpose.msra.mxu0 0.0
        %806 = vmatpush.xpose.msra.mxu0 0.0
        %807 = vmatpush.xpose.msra.mxu0 0.0
        %808 = vmatpush.xpose.msra.mxu0 %v791
        %809 = vmatmul.f32.gmra.mxu0 %v788
        %v810 = vpop.f32.mrf.mxu0
        %v811 = vadd.f32 0.0, %v810
        %812 = vdwg.mxu0
        %v813 = vmul.f32 %v811, 0.35355338
        %vm814 = vcmp.eq.f32.partialorder %v784, 0.0
        %v815 = vsel %vm814, -1e+09, %v813
        %v816 = vsel %vm786, %v815, -inf
        %817 = vmax.xlane.f32.xlu0 %v816
        %v818 = vpop.xlane.xlu0 %817
        %v819 = vsub.f32 %v815, %v818
        %v820 = vmul.f32 %v819, 1.442695
        %v821 = vpow.pop %v820
        %v822 = vsel %vm786, %v821, 0.0
        %823 = vadd.xlane.f32.xlu0 %v822
        %v824 = vpop.xlane.xlu0 %823
        %v825 = vrcp.pop %v824
        %v826 = vmul.f32 %v821, %v825
        %v828 = vsel %vm786, %v826, 0
        %830 = vmatpush.msra.mxu0 0.0
        %831 = vmatpush.msra.mxu0 0.0
        %832 = vmatpush.msra.mxu0 0.0
        %833 = vmatpush.msra.mxu0 0.0
        %834 = vmatpush.msra.mxu0 0.0
        %835 = vmatpush.msra.mxu0 0.0
        %836 = vmatpush.msra.mxu0 0.0
        %837 = vmatpush.msra.mxu0 0.0
        %838 = vmatpush.msra.mxu0 0.0
        %839 = vmatpush.msra.mxu0 0.0
        %840 = vmatpush.msra.mxu0 0.0
        %841 = vmatpush.msra.mxu0 0.0
        %842 = vmatpush.msra.mxu0 0.0
        %843 = vmatpush.msra.mxu0 0.0
        %844 = vmatpush.msra.mxu0 0.0
        %845 = vmatpush.msra.mxu0 %v781
        %846 = vmatmul.f32.gmra.mxu0 %v828
        %v847 = vpop.f32.mrf.mxu0
        %v848 = vadd.f32 0.0, %v847
        %849 = vdwg.mxu0
        %850 = vrot.lane.b32.xlu0 %v732, 120
        %v851 = vpop.permute.xlu0 %850
        %852 = vrot.lane.b32.xlu0 %v758, 120
        %v853 = vpop.permute.xlu0 %852
        %v854 = vsel %vm786, %v851, 0
        %v856 = vsel %vm786, %v853, 0
        %858 = vmatpush.xpose.msra.mxu0 0.0
        %859 = vmatpush.xpose.msra.mxu0 0.0
        %860 = vmatpush.xpose.msra.mxu0 0.0
        %861 = vmatpush.xpose.msra.mxu0 0.0
        %862 = vmatpush.xpose.msra.mxu0 0.0
        %863 = vmatpush.xpose.msra.mxu0 0.0
        %864 = vmatpush.xpose.msra.mxu0 0.0
        %865 = vmatpush.xpose.msra.mxu0 0.0
        %866 = vmatpush.xpose.msra.mxu0 0.0
        %867 = vmatpush.xpose.msra.mxu0 0.0
        %868 = vmatpush.xpose.msra.mxu0 0.0
        %869 = vmatpush.xpose.msra.mxu0 0.0
        %870 = vmatpush.xpose.msra.mxu0 0.0
        %871 = vmatpush.xpose.msra.mxu0 0.0
        %872 = vmatpush.xpose.msra.mxu0 0.0
        %873 = vmatpush.xpose.msra.mxu0 %v856
        %874 = vmatmul.f32.gmra.mxu0 %v854
        %v875 = vpop.f32.mrf.mxu0
        %v876 = vadd.f32 0.0, %v875
        %877 = vdwg.mxu0
        %v878 = vmul.f32 %v876, 0.35355338
        %v879 = vsel %vm814, -1e+09, %v878
        %v880 = vsel %vm786, %v879, -inf
        %881 = vmax.xlane.f32.xlu0 %v880
        %v882 = vpop.xlane.xlu0 %881
        %v883 = vsub.f32 %v879, %v882
        %v884 = vmul.f32 %v883, 1.442695
        %v885 = vpow.pop %v884
        %v886 = vsel %vm786, %v885, 0.0
        %887 = vadd.xlane.f32.xlu0 %v886
        %v888 = vpop.xlane.xlu0 %887
        %v889 = vrcp.pop %v888
        %v890 = vmul.f32 %v885, %v889
        %892 = vrot.lane.b32.xlu0 %v781, 120
        %v893 = vpop.permute.xlu0 %892
        %v896 = vsel %vm786, %v890, 0
        %898 = vmatpush.msra.mxu0 0.0
        %899 = vmatpush.msra.mxu0 0.0
        %900 = vmatpush.msra.mxu0 0.0
        %901 = vmatpush.msra.mxu0 0.0
        %902 = vmatpush.msra.mxu0 0.0
        %903 = vmatpush.msra.mxu0 0.0
        %904 = vmatpush.msra.mxu0 0.0
        %905 = vmatpush.msra.mxu0 0.0
        %906 = vmatpush.msra.mxu0 0.0
        %907 = vmatpush.msra.mxu0 0.0
        %908 = vmatpush.msra.mxu0 0.0
        %909 = vmatpush.msra.mxu0 0.0
        %910 = vmatpush.msra.mxu0 0.0
        %911 = vmatpush.msra.mxu0 0.0
        %912 = vmatpush.msra.mxu0 0.0
        %913 = vmatpush.msra.mxu0 %v893
        %914 = vmatmul.f32.gmra.mxu0 %v896
        %v915 = vpop.f32.mrf.mxu0
        %v916 = vadd.f32 0.0, %v915
        %917 = vdwg.mxu0
        %v919 = vsel %vm786, %v916, 0
        %921 = vmatpush.msra.mxu0 0.0
        %922 = vmatpush.msra.mxu0 0.0
        %923 = vmatpush.msra.mxu0 0.0
        %924 = vmatpush.msra.mxu0 0.0
        %925 = vmatpush.msra.mxu0 0.0
        %926 = vmatpush.msra.mxu0 0.0
        %927 = vmatpush.msra.mxu0 0.0
        %928 = vmatpush.msra.mxu0 0.0
        %929 = vmatpush.msra.mxu0 0.0
        %930 = vmatpush.msra.mxu0 0.0
        %931 = vmatpush.msra.mxu0 0.0
        %932 = vmatpush.msra.mxu0 0.0
        %933 = vmatpush.msra.mxu0 0.0
        %934 = vmatpush.msra.mxu0 0.0
        %935 = vmatpush.msra.mxu0 0.0
        %936 = vmatpush.msra.mxu0 %v704
        %937 = vmatmul.f32.gmra.mxu0 %v919
        %v938 = vpop.f32.mrf.mxu0
        %v939 = vadd.f32 0.0, %v938
        %940 = vdwg.mxu0
        %v942 = vsel %vm786, %v848, 0
        %944 = vmatpush.msra.mxu0 0.0
        %945 = vmatpush.msra.mxu0 0.0
        %946 = vmatpush.msra.mxu0 0.0
        %947 = vmatpush.msra.mxu0 0.0
        %948 = vmatpush.msra.mxu0 0.0
        %949 = vmatpush.msra.mxu0 0.0
        %950 = vmatpush.msra.mxu0 0.0
        %951 = vmatpush.msra.mxu0 0.0
        %952 = vmatpush.msra.mxu0 0.0
        %953 = vmatpush.msra.mxu0 0.0
        %954 = vmatpush.msra.mxu0 0.0
        %955 = vmatpush.msra.mxu0 0.0
        %956 = vmatpush.msra.mxu0 0.0
        %957 = vmatpush.msra.mxu0 0.0
        %958 = vmatpush.msra.mxu0 0.0
        %959 = vmatpush.msra.mxu0 %v703
        %960 = vmatmul.f32.gmra.mxu0 %v942
        %v961 = vpop.f32.mrf.mxu0
        %v962 = vadd.f32 %v939, %v961
        %963 = vdwg.mxu0
        %964 = vrot.lane.b32.xlu0 %v732, 112
        %v965 = vpop.permute.xlu0 %964
        %966 = vrot.lane.b32.xlu0 %v758, 112
        %v967 = vpop.permute.xlu0 %966
        %v968 = vsel %vm786, %v965, 0
        %v970 = vsel %vm786, %v967, 0
        %972 = vmatpush.xpose.msra.mxu0 0.0
        %973 = vmatpush.xpose.msra.mxu0 0.0
        %974 = vmatpush.xpose.msra.mxu0 0.0
        %975 = vmatpush.xpose.msra.mxu0 0.0
        %976 = vmatpush.xpose.msra.mxu0 0.0
        %977 = vmatpush.xpose.msra.mxu0 0.0
        %978 = vmatpush.xpose.msra.mxu0 0.0
        %979 = vmatpush.xpose.msra.mxu0 0.0
        %980 = vmatpush.xpose.msra.mxu0 0.0
        %981 = vmatpush.xpose.msra.mxu0 0.0
        %982 = vmatpush.xpose.msra.mxu0 0.0
        %983 = vmatpush.xpose.msra.mxu0 0.0
        %984 = vmatpush.xpose.msra.mxu0 0.0
        %985 = vmatpush.xpose.msra.mxu0 0.0
        %986 = vmatpush.xpose.msra.mxu0 0.0
        %987 = vmatpush.xpose.msra.mxu0 %v970
        %988 = vmatmul.f32.gmra.mxu0 %v968
        %v989 = vpop.f32.mrf.mxu0
        %v990 = vadd.f32 0.0, %v989
        %991 = vdwg.mxu0
        %v992 = vmul.f32 %v990, 0.35355338
        %v993 = vsel %vm814, -1e+09, %v992
        %v994 = vsel %vm786, %v993, -inf
        %995 = vmax.xlane.f32.xlu0 %v994
        %v996 = vpop.xlane.xlu0 %995
        %v997 = vsub.f32 %v993, %v996
        %v998 = vmul.f32 %v997, 1.442695
        %v999 = vpow.pop %v998
        %v1000 = vsel %vm786, %v999, 0.0
        %1001 = vadd.xlane.f32.xlu0 %v1000
        %v1002 = vpop.xlane.xlu0 %1001
        %v1003 = vrcp.pop %v1002
        %v1004 = vmul.f32 %v999, %v1003
        %1005 = vrot.lane.b32.xlu0 %v781, 112
        %v1006 = vpop.permute.xlu0 %1005
        %v1009 = vsel %vm786, %v1004, 0
        %1011 = vmatpush.msra.mxu0 0.0
        %1012 = vmatpush.msra.mxu0 0.0
        %1013 = vmatpush.msra.mxu0 0.0
        %1014 = vmatpush.msra.mxu0 0.0
        %1015 = vmatpush.msra.mxu0 0.0
        %1016 = vmatpush.msra.mxu0 0.0
        %1017 = vmatpush.msra.mxu0 0.0
        %1018 = vmatpush.msra.mxu0 0.0
        %1019 = vmatpush.msra.mxu0 0.0
        %1020 = vmatpush.msra.mxu0 0.0
        %1021 = vmatpush.msra.mxu0 0.0
        %1022 = vmatpush.msra.mxu0 0.0
        %1023 = vmatpush.msra.mxu0 0.0
        %1024 = vmatpush.msra.mxu0 0.0
        %1025 = vmatpush.msra.mxu0 0.0
        %1026 = vmatpush.msra.mxu0 %v1006
        %1027 = vmatmul.f32.gmra.mxu0 %v1009
        %v1028 = vpop.f32.mrf.mxu0
        %v1029 = vadd.f32 0.0, %v1028
        %1030 = vdwg.mxu0
        %v1032 = vsel %vm786, %v1029, 0
        %1034 = vmatpush.msra.mxu0 0.0
        %1035 = vmatpush.msra.mxu0 0.0
        %1036 = vmatpush.msra.mxu0 0.0
        %1037 = vmatpush.msra.mxu0 0.0
        %1038 = vmatpush.msra.mxu0 0.0
        %1039 = vmatpush.msra.mxu0 0.0
        %1040 = vmatpush.msra.mxu0 0.0
        %1041 = vmatpush.msra.mxu0 0.0
        %1042 = vmatpush.msra.mxu0 0.0
        %1043 = vmatpush.msra.mxu0 0.0
        %1044 = vmatpush.msra.mxu0 0.0
        %1045 = vmatpush.msra.mxu0 0.0
        %1046 = vmatpush.msra.mxu0 0.0
        %1047 = vmatpush.msra.mxu0 0.0
        %1048 = vmatpush.msra.mxu0 0.0
        %1049 = vmatpush.msra.mxu0 %v705
        %1050 = vmatmul.f32.gmra.mxu0 %v1032
        %v1051 = vpop.f32.mrf.mxu0
        %v1052 = vadd.f32 0.0, %v1051
        %1053 = vdwg.mxu0
        %v1054 = vadd.f32 %v962, %v1052
        %1055 = vrot.lane.b32.xlu0 %v732, 104
        %v1056 = vpop.permute.xlu0 %1055
        %1057 = vrot.lane.b32.xlu0 %v758, 104
        %v1058 = vpop.permute.xlu0 %1057
        %v1059 = vsel %vm786, %v1056, 0
        %v1061 = vsel %vm786, %v1058, 0
        %1063 = vmatpush.xpose.msra.mxu0 0.0
        %1064 = vmatpush.xpose.msra.mxu0 0.0
        %1065 = vmatpush.xpose.msra.mxu0 0.0
        %1066 = vmatpush.xpose.msra.mxu0 0.0
        %1067 = vmatpush.xpose.msra.mxu0 0.0
        %1068 = vmatpush.xpose.msra.mxu0 0.0
        %1069 = vmatpush.xpose.msra.mxu0 0.0
        %1070 = vmatpush.xpose.msra.mxu0 0.0
        %1071 = vmatpush.xpose.msra.mxu0 0.0
        %1072 = vmatpush.xpose.msra.mxu0 0.0
        %1073 = vmatpush.xpose.msra.mxu0 0.0
        %1074 = vmatpush.xpose.msra.mxu0 0.0
        %1075 = vmatpush.xpose.msra.mxu0 0.0
        %1076 = vmatpush.xpose.msra.mxu0 0.0
        %1077 = vmatpush.xpose.msra.mxu0 0.0
        %1078 = vmatpush.xpose.msra.mxu0 %v1061
        %1079 = vmatmul.f32.gmra.mxu0 %v1059
        %v1080 = vpop.f32.mrf.mxu0
        %v1081 = vadd.f32 0.0, %v1080
        %1082 = vdwg.mxu0
        %v1083 = vmul.f32 %v1081, 0.35355338
        %v1084 = vsel %vm814, -1e+09, %v1083
        %v1085 = vsel %vm786, %v1084, -inf
        %1086 = vmax.xlane.f32.xlu0 %v1085
        %v1087 = vpop.xlane.xlu0 %1086
        %v1088 = vsub.f32 %v1084, %v1087
        %v1089 = vmul.f32 %v1088, 1.442695
        %v1090 = vpow.pop %v1089
        %v1091 = vsel %vm786, %v1090, 0.0
        %1092 = vadd.xlane.f32.xlu0 %v1091
        %v1093 = vpop.xlane.xlu0 %1092
        %v1094 = vrcp.pop %v1093
        %v1095 = vmul.f32 %v1090, %v1094
        %1096 = vrot.lane.b32.xlu0 %v781, 104
        %v1097 = vpop.permute.xlu0 %1096
        %v1100 = vsel %vm786, %v1095, 0
        %1102 = vmatpush.msra.mxu0 0.0
        %1103 = vmatpush.msra.mxu0 0.0
        %1104 = vmatpush.msra.mxu0 0.0
        %1105 = vmatpush.msra.mxu0 0.0
        %1106 = vmatpush.msra.mxu0 0.0
        %1107 = vmatpush.msra.mxu0 0.0
        %1108 = vmatpush.msra.mxu0 0.0
        %1109 = vmatpush.msra.mxu0 0.0
        %1110 = vmatpush.msra.mxu0 0.0
        %1111 = vmatpush.msra.mxu0 0.0
        %1112 = vmatpush.msra.mxu0 0.0
        %1113 = vmatpush.msra.mxu0 0.0
        %1114 = vmatpush.msra.mxu0 0.0
        %1115 = vmatpush.msra.mxu0 0.0
        %1116 = vmatpush.msra.mxu0 0.0
        %1117 = vmatpush.msra.mxu0 %v1097
        %1118 = vmatmul.f32.gmra.mxu0 %v1100
        %v1119 = vpop.f32.mrf.mxu0
        %v1120 = vadd.f32 0.0, %v1119
        %1121 = vdwg.mxu0
        %v1123 = vsel %vm786, %v1120, 0
        %1125 = vmatpush.msra.mxu0 0.0
        %1126 = vmatpush.msra.mxu0 0.0
        %1127 = vmatpush.msra.mxu0 0.0
        %1128 = vmatpush.msra.mxu0 0.0
        %1129 = vmatpush.msra.mxu0 0.0
        %1130 = vmatpush.msra.mxu0 0.0
        %1131 = vmatpush.msra.mxu0 0.0
        %1132 = vmatpush.msra.mxu0 0.0
        %1133 = vmatpush.msra.mxu0 0.0
        %1134 = vmatpush.msra.mxu0 0.0
        %1135 = vmatpush.msra.mxu0 0.0
        %1136 = vmatpush.msra.mxu0 0.0
        %1137 = vmatpush.msra.mxu0 0.0
        %1138 = vmatpush.msra.mxu0 0.0
        %1139 = vmatpush.msra.mxu0 0.0
        %1140 = vmatpush.msra.mxu0 %v706
        %1141 = vmatmul.f32.gmra.mxu0 %v1123
        %v1142 = vpop.f32.mrf.mxu0
        %v1143 = vadd.f32 0.0, %v1142
        %1144 = vdwg.mxu0
        %v1145 = vadd.f32 %v1054, %v1143
        %v1147 = vperm.slane %v707, 0
        %v1149 = vadd.f32 %v1145, %v1147
        %v1150 = vadd.f32 %v642, %v1149
        %1151 = vst.msk [vmem:[%s641] sm:$0xff] %vm646, %v1150
        %p1152 = scmp.lt.s32.totalorder %s32, 1
        %s1153 = scalar_select %p1152, %s32, 1
        %s1154 = smul.addr %s1153, 8
        %s1155 = scalar_lea.vmem %s13, %s1154
        // Predicated region
        $region117: #{my_decoder.8} parent=71 // pred_check
          %p1156 = pneg %p338
        $region118: #{my_decoder.8} parent=71 // pred_check_branch
          %1158 = sbr.rel (%p1156) target = $region120
        $region119: #{my_decoder.8} parent=71 // pred_region
          _
        $region120: #{my_decoder.8} parent=71 // pred_fallthru
          _
      $region72: #{my_decoder.8} parent=5 // pred_fallthru
        _
      %p1159 = scmp.le.s32.totalorder 2, %s27
      // Predicated region
      $region121: #{my_decoder.8} parent=5 // pred_check
        %p1160 = pneg %p1159
      $region122: #{my_decoder.8} parent=5 // pred_check_branch
        %1162 = sbr.rel (%p1160) target = $region124
      $region123: #{my_decoder.8} parent=5 // pred_region
        %s1163 = ssub.s32 %s27, 2
        // Predicated region
        $region125: #{my_decoder.8} parent=123 // pred_check
          %p1164 = pneg %p344
        $region126: #{my_decoder.8} parent=123 // pred_check_branch
          %1166 = sbr.rel (%p1164) target = $region128
        $region127: #{my_decoder.8} parent=123 // pred_region
          %p1167 = scmp.lt.s32.totalorder %s33, 1
          %s1168 = scalar_select %p1167, %s33, 1
          %s1169 = smul.addr %s1168, 8
          %s1170 = scalar_lea.vmem %s13, %s1169
        $region128: #{my_decoder.8} parent=123 // pred_fallthru
          _
      $region124: #{my_decoder.8} parent=5 // pred_fallthru
        _
    $region6: #{my_decoder.8} parent=1 // loop_footer
      %s31 = sadd.s32 1, %s27
    $region7: #{my_decoder.8} parent=1 // loop_footer_branch
      %26 = sbr.rel target = $region3
    $region8: #{my_decoder.8} parent=1 // loop_exit
      _
    %1171 = vsyncpa [#allocation3], 1
    %s1172 = scalar_lea.sflag [#allocation3], 1
    %1173 = vsyncpa %s1172, 1
    %1174 = vsyncpa [#allocation5], 1
    %1175 = vsyncpa [#allocation8], 1
    %1176 = vsyncpa [#allocation11], 1
    %1177 = vsyncpa [#allocation14], 1
    %1178 = vsyncpa [#allocation17], 1

// kernel: my_decoder.7
$region0: #{my_decoder.7}
  #allocation0 [shape = 'u32[]', space=smem, size = 0x4, offset = 0x4, fixed_abs, tag = 'smem constant byte address 0x4 - core index']
  #allocation1 [shape = 'u32[72,128]{1,0:T(1,128)}', space=vmem, size = 0x9000, scoped, tag = 'internal scratch']
  %s0 = inlined_call_operand.vmem [shape: f32[2,8,32], index: 0, kind: input, shape index: {}, may-alias: {0,12}]
  %s1 = inlined_call_operand.hbm [shape: f32[1,8,8], index: 1, kind: input, shape index: {}]
  %s2 = inlined_call_operand.hbm [shape: f32[1,32], index: 2, kind: input, shape index: {}]
  %s3 = inlined_call_operand.hbm [shape: f32[1,32], index: 3, kind: input, shape index: {}]
  %s4 = inlined_call_operand.hbm [shape: f32[32,32], index: 4, kind: input, shape index: {}]
  %s5 = inlined_call_operand.hbm [shape: f32[1,32], index: 5, kind: input, shape index: {}]
  %s6 = inlined_call_operand.hbm [shape: f32[32,32], index: 6, kind: input, shape index: {}]
  %s7 = inlined_call_operand.hbm [shape: f32[1,32], index: 7, kind: input, shape index: {}]
  %s8 = inlined_call_operand.hbm [shape: f32[32,32], index: 8, kind: input, shape index: {}]
  %s9 = inlined_call_operand.hbm [shape: f32[1,32], index: 9, kind: input, shape index: {}]
  %s10 = inlined_call_operand.hbm [shape: f32[32,32], index: 10, kind: input, shape index: {}]
  %s11 = inlined_call_operand.hbm [shape: f32[1,32], index: 11, kind: input, shape index: {}]
  %s12 = inlined_call_operand.vmem [shape: f32[2,8,32], index: 12, kind: output, shape index: {}, may-alias: {0,12}]
  %s13 = sld [smem:[#allocation0]]
  $region125: #{my_decoder.7} parent=0
    _
  %s15 = ssub.s32 1, %s13
  %s16 = scalar_select 0, %s15, %s13
  $region1: #{my_decoder.7} parent=0
    #allocation2 [shape = 'u8[4096]{0}', space=vmem, size = 0x1000, scoped, tag = 'input window, operand 1, single buffered']
    #allocation3 [shape = 's32[2]{0}', space=sflag, size = 0x8, scoped, tag = 'scoped memory for my_decoder.7']
    #allocation4 [shape = 'u8[512]{0}', space=vmem, size = 0x400, scoped, tag = 'input window, operand 2, single buffered']
    #allocation5 [shape = 's32[1]{0}', space=sflag, size = 0x4, scoped, tag = 'scoped memory for my_decoder.7']
    #allocation6 [shape = 'u8[512]{0}', space=vmem, size = 0x400, scoped, tag = 'input window, operand 3, single buffered']
    #allocation7 [shape = 'u8[16384]{0}', space=vmem, size = 0x4000, scoped, tag = 'input window, operand 4, single buffered']
    #allocation8 [shape = 's32[1]{0}', space=sflag, size = 0x4, scoped, tag = 'scoped memory for my_decoder.7']
    #allocation9 [shape = 'u8[512]{0}', space=vmem, size = 0x400, scoped, tag = 'input window, operand 5, single buffered']
    #allocation10 [shape = 'u8[16384]{0}', space=vmem, size = 0x4000, scoped, tag = 'input window, operand 6, single buffered']
    #allocation11 [shape = 's32[1]{0}', space=sflag, size = 0x4, scoped, tag = 'scoped memory for my_decoder.7']
    #allocation12 [shape = 'u8[512]{0}', space=vmem, size = 0x400, scoped, tag = 'input window, operand 7, single buffered']
    #allocation13 [shape = 'u8[16384]{0}', space=vmem, size = 0x4000, scoped, tag = 'input window, operand 8, single buffered']
    #allocation14 [shape = 's32[1]{0}', space=sflag, size = 0x4, scoped, tag = 'scoped memory for my_decoder.7']
    #allocation15 [shape = 'u8[512]{0}', space=vmem, size = 0x400, scoped, tag = 'input window, operand 9, single buffered']
    #allocation16 [shape = 'u8[16384]{0}', space=vmem, size = 0x4000, scoped, tag = 'input window, operand 10, single buffered']
    #allocation17 [shape = 's32[1]{0}', space=sflag, size = 0x4, scoped, tag = 'scoped memory for my_decoder.7']
    #allocation18 [shape = 'u8[512]{0}', space=vmem, size = 0x400, scoped, tag = 'input window, operand 11, single buffered']
    %17 = vsyncpa [#allocation3], 0
    %18 = vsyncpa [#allocation5], 0
    %19 = vsyncpa [#allocation8], 0
    %20 = vsyncpa [#allocation11], 0
    %21 = vsyncpa [#allocation14], 0
    %22 = vsyncpa [#allocation17], 0
    loop: start=0, step=1, limit=4
    $region2: #{my_decoder.7} parent=1 // loop_pre_header
      _
    $region3: #{my_decoder.7} parent=1 // loop_header
      %s24 = sphi 0, %s28
      %p25 = scmp.ge.s32.totalorder %s24, 4
      %s34 = sphi 0, %s36
      %s37 = sphi 0, %s34
      %s38 = sphi 0, %s37
      %s54 = sphi 0, %s38
      %s58 = sphi 0, %s58
      %s60 = sphi 0, %s58
      %s61 = sphi 0, %s60
      %s75 = sphi 0, %s61
      %s79 = sphi 0, %s79
      %s81 = sphi 0, %s79
      %s82 = sphi 0, %s81
      %s96 = sphi 0, %s82
      %s100 = sphi 0, %s100
      %s102 = sphi 0, %s100
      %s103 = sphi 0, %s102
      %s117 = sphi 0, %s103
      %s121 = sphi 0, %s121
      %s123 = sphi 0, %s121
      %s124 = sphi 0, %s123
      %s138 = sphi 0, %s124
      %s142 = sphi 0, %s142
      %s144 = sphi 0, %s142
      %s145 = sphi 0, %s144
      %s159 = sphi 0, %s145
      %s163 = sphi 0, %s163
      %s165 = sphi 0, %s163
      %s166 = sphi 0, %s165
      %s180 = sphi 0, %s166
      %s184 = sphi 0, %s184
      %s186 = sphi 0, %s184
      %s187 = sphi 0, %s186
      %s201 = sphi 0, %s187
      %s205 = sphi 0, %s205
      %s207 = sphi 0, %s205
      %s208 = sphi 0, %s207
      %s222 = sphi 0, %s208
      %s226 = sphi 0, %s226
      %s228 = sphi 0, %s226
      %s229 = sphi 0, %s228
      %s243 = sphi 0, %s229
      %s247 = sphi 0, %s247
      %s249 = sphi 0, %s247
      %s250 = sphi 0, %s249
      %s264 = sphi 0, %s250
      %s268 = sphi 0, %s268
      %s270 = sphi 0, %s268
      %s271 = sphi 0, %s270
      %s285 = sphi 0, %s271
      %s291 = sphi 0, %s293
      %s294 = sphi 0, %s291
      %s295 = sphi 0, %s294
      %s311 = sphi 0, %s295
    $region4: #{my_decoder.7} parent=1 // loop_header_branch
      %27 = sbr.rel (%p25) target = $region8
    $region5: #{my_decoder.7} parent=1 // loop_body
      %s29 = ssub.s32 %s24, 1
      %s30 = ssub.s32 %s24, 2
      %s31 = sadd.s32 %s24, 1
      %s32 = ssub.s32 %s24, %s31
      %p33 = scmp.eq.s32.totalorder %s32, 0
      %s35 = sadd.s32 %s34, 1
      %s36 = scalar_select %p33, %s34, %s35
      %p39 = pneg %p33
      %p40 = scmp.eq.s32.totalorder %s24, 1
      %p41 = por %p39, %p40
      %p42 = scmp.ne.s32.totalorder %s34, %s37
      %p43 = scmp.eq.s32.totalorder %s24, 0
      %p44 = por %p42, %p43
      %p45 = scmp.ne.s32.totalorder %s34, %s37
      %p46 = scmp.eq.s32.totalorder %s29, 1
      %p47 = por %p45, %p46
      %p48 = scmp.ne.s32.totalorder %s37, %s38
      %p49 = scmp.eq.s32.totalorder %s29, 0
      %p50 = por %p48, %p49
      %p51 = scmp.ne.s32.totalorder %s37, %s38
      %p52 = scmp.eq.s32.totalorder %s30, 1
      %p53 = por %p51, %p52
      %p55 = scmp.ne.s32.totalorder %s38, %s54
      %p56 = scmp.eq.s32.totalorder %s30, 0
      %p57 = por %p55, %p56
      %s59 = sadd.s32 %s58, 1
      %p62 = scmp.eq.s32.totalorder %s24, 1
      %p63 = scmp.ne.s32.totalorder %s58, %s60
      %p64 = scmp.eq.s32.totalorder %s24, 0
      %p65 = por %p63, %p64
      %p66 = scmp.ne.s32.totalorder %s58, %s60
      %p67 = scmp.eq.s32.totalorder %s29, 1
      %p68 = por %p66, %p67
      %p69 = scmp.ne.s32.totalorder %s60, %s61
      %p70 = scmp.eq.s32.totalorder %s29, 0
      %p71 = por %p69, %p70
      %p72 = scmp.ne.s32.totalorder %s60, %s61
      %p73 = scmp.eq.s32.totalorder %s30, 1
      %p74 = por %p72, %p73
      %p76 = scmp.ne.s32.totalorder %s61, %s75
      %p77 = scmp.eq.s32.totalorder %s30, 0
      %p78 = por %p76, %p77
      %s80 = sadd.s32 %s79, 1
      %p83 = scmp.eq.s32.totalorder %s24, 1
      %p84 = scmp.ne.s32.totalorder %s79, %s81
      %p85 = scmp.eq.s32.totalorder %s24, 0
      %p86 = por %p84, %p85
      %p87 = scmp.ne.s32.totalorder %s79, %s81
      %p88 = scmp.eq.s32.totalorder %s29, 1
      %p89 = por %p87, %p88
      %p90 = scmp.ne.s32.totalorder %s81, %s82
      %p91 = scmp.eq.s32.totalorder %s29, 0
      %p92 = por %p90, %p91
      %p93 = scmp.ne.s32.totalorder %s81, %s82
      %p94 = scmp.eq.s32.totalorder %s30, 1
      %p95 = por %p93, %p94
      %p97 = scmp.ne.s32.totalorder %s82, %s96
      %p98 = scmp.eq.s32.totalorder %s30, 0
      %p99 = por %p97, %p98
      %s101 = sadd.s32 %s100, 1
      %p104 = scmp.eq.s32.totalorder %s24, 1
      %p105 = scmp.ne.s32.totalorder %s100, %s102
      %p106 = scmp.eq.s32.totalorder %s24, 0
      %p107 = por %p105, %p106
      %p108 = scmp.ne.s32.totalorder %s100, %s102
      %p109 = scmp.eq.s32.totalorder %s29, 1
      %p110 = por %p108, %p109
      %p111 = scmp.ne.s32.totalorder %s102, %s103
      %p112 = scmp.eq.s32.totalorder %s29, 0
      %p113 = por %p111, %p112
      %p114 = scmp.ne.s32.totalorder %s102, %s103
      %p115 = scmp.eq.s32.totalorder %s30, 1
      %p116 = por %p114, %p115
      %p118 = scmp.ne.s32.totalorder %s103, %s117
      %p119 = scmp.eq.s32.totalorder %s30, 0
      %p120 = por %p118, %p119
      %s122 = sadd.s32 %s121, 1
      %p125 = scmp.eq.s32.totalorder %s24, 1
      %p126 = scmp.ne.s32.totalorder %s121, %s123
      %p127 = scmp.eq.s32.totalorder %s24, 0
      %p128 = por %p126, %p127
      %p129 = scmp.ne.s32.totalorder %s121, %s123
      %p130 = scmp.eq.s32.totalorder %s29, 1
      %p131 = por %p129, %p130
      %p132 = scmp.ne.s32.totalorder %s123, %s124
      %p133 = scmp.eq.s32.totalorder %s29, 0
      %p134 = por %p132, %p133
      %p135 = scmp.ne.s32.totalorder %s123, %s124
      %p136 = scmp.eq.s32.totalorder %s30, 1
      %p137 = por %p135, %p136
      %p139 = scmp.ne.s32.totalorder %s124, %s138
      %p140 = scmp.eq.s32.totalorder %s30, 0
      %p141 = por %p139, %p140
      %s143 = sadd.s32 %s142, 1
      %p146 = scmp.eq.s32.totalorder %s24, 1
      %p147 = scmp.ne.s32.totalorder %s142, %s144
      %p148 = scmp.eq.s32.totalorder %s24, 0
      %p149 = por %p147, %p148
      %p150 = scmp.ne.s32.totalorder %s142, %s144
      %p151 = scmp.eq.s32.totalorder %s29, 1
      %p152 = por %p150, %p151
      %p153 = scmp.ne.s32.totalorder %s144, %s145
      %p154 = scmp.eq.s32.totalorder %s29, 0
      %p155 = por %p153, %p154
      %p156 = scmp.ne.s32.totalorder %s144, %s145
      %p157 = scmp.eq.s32.totalorder %s30, 1
      %p158 = por %p156, %p157
      %p160 = scmp.ne.s32.totalorder %s145, %s159
      %p161 = scmp.eq.s32.totalorder %s30, 0
      %p162 = por %p160, %p161
      %s164 = sadd.s32 %s163, 1
      %p167 = scmp.eq.s32.totalorder %s24, 1
      %p168 = scmp.ne.s32.totalorder %s163, %s165
      %p169 = scmp.eq.s32.totalorder %s24, 0
      %p170 = por %p168, %p169
      %p171 = scmp.ne.s32.totalorder %s163, %s165
      %p172 = scmp.eq.s32.totalorder %s29, 1
      %p173 = por %p171, %p172
      %p174 = scmp.ne.s32.totalorder %s165, %s166
      %p175 = scmp.eq.s32.totalorder %s29, 0
      %p176 = por %p174, %p175
      %p177 = scmp.ne.s32.totalorder %s165, %s166
      %p178 = scmp.eq.s32.totalorder %s30, 1
      %p179 = por %p177, %p178
      %p181 = scmp.ne.s32.totalorder %s166, %s180
      %p182 = scmp.eq.s32.totalorder %s30, 0
      %p183 = por %p181, %p182
      %s185 = sadd.s32 %s184, 1
      %p188 = scmp.eq.s32.totalorder %s24, 1
      %p189 = scmp.ne.s32.totalorder %s184, %s186
      %p190 = scmp.eq.s32.totalorder %s24, 0
      %p191 = por %p189, %p190
      %p192 = scmp.ne.s32.totalorder %s184, %s186
      %p193 = scmp.eq.s32.totalorder %s29, 1
      %p194 = por %p192, %p193
      %p195 = scmp.ne.s32.totalorder %s186, %s187
      %p196 = scmp.eq.s32.totalorder %s29, 0
      %p197 = por %p195, %p196
      %p198 = scmp.ne.s32.totalorder %s186, %s187
      %p199 = scmp.eq.s32.totalorder %s30, 1
      %p200 = por %p198, %p199
      %p202 = scmp.ne.s32.totalorder %s187, %s201
      %p203 = scmp.eq.s32.totalorder %s30, 0
      %p204 = por %p202, %p203
      %s206 = sadd.s32 %s205, 1
      %p209 = scmp.eq.s32.totalorder %s24, 1
      %p210 = scmp.ne.s32.totalorder %s205, %s207
      %p211 = scmp.eq.s32.totalorder %s24, 0
      %p212 = por %p210, %p211
      %p213 = scmp.ne.s32.totalorder %s205, %s207
      %p214 = scmp.eq.s32.totalorder %s29, 1
      %p215 = por %p213, %p214
      %p216 = scmp.ne.s32.totalorder %s207, %s208
      %p217 = scmp.eq.s32.totalorder %s29, 0
      %p218 = por %p216, %p217
      %p219 = scmp.ne.s32.totalorder %s207, %s208
      %p220 = scmp.eq.s32.totalorder %s30, 1
      %p221 = por %p219, %p220
      %p223 = scmp.ne.s32.totalorder %s208, %s222
      %p224 = scmp.eq.s32.totalorder %s30, 0
      %p225 = por %p223, %p224
      %s227 = sadd.s32 %s226, 1
      %p230 = scmp.eq.s32.totalorder %s24, 1
      %p231 = scmp.ne.s32.totalorder %s226, %s228
      %p232 = scmp.eq.s32.totalorder %s24, 0
      %p233 = por %p231, %p232
      %p234 = scmp.ne.s32.totalorder %s226, %s228
      %p235 = scmp.eq.s32.totalorder %s29, 1
      %p236 = por %p234, %p235
      %p237 = scmp.ne.s32.totalorder %s228, %s229
      %p238 = scmp.eq.s32.totalorder %s29, 0
      %p239 = por %p237, %p238
      %p240 = scmp.ne.s32.totalorder %s228, %s229
      %p241 = scmp.eq.s32.totalorder %s30, 1
      %p242 = por %p240, %p241
      %p244 = scmp.ne.s32.totalorder %s229, %s243
      %p245 = scmp.eq.s32.totalorder %s30, 0
      %p246 = por %p244, %p245
      %s248 = sadd.s32 %s247, 1
      %p251 = scmp.eq.s32.totalorder %s24, 1
      %p252 = scmp.ne.s32.totalorder %s247, %s249
      %p253 = scmp.eq.s32.totalorder %s24, 0
      %p254 = por %p252, %p253
      %p255 = scmp.ne.s32.totalorder %s247, %s249
      %p256 = scmp.eq.s32.totalorder %s29, 1
      %p257 = por %p255, %p256
      %p258 = scmp.ne.s32.totalorder %s249, %s250
      %p259 = scmp.eq.s32.totalorder %s29, 0
      %p260 = por %p258, %p259
      %p261 = scmp.ne.s32.totalorder %s249, %s250
      %p262 = scmp.eq.s32.totalorder %s30, 1
      %p263 = por %p261, %p262
      %p265 = scmp.ne.s32.totalorder %s250, %s264
      %p266 = scmp.eq.s32.totalorder %s30, 0
      %p267 = por %p265, %p266
      %s269 = sadd.s32 %s268, 1
      %p272 = scmp.eq.s32.totalorder %s24, 1
      %p273 = scmp.ne.s32.totalorder %s268, %s270
      %p274 = scmp.eq.s32.totalorder %s24, 0
      %p275 = por %p273, %p274
      %p276 = scmp.ne.s32.totalorder %s268, %s270
      %p277 = scmp.eq.s32.totalorder %s29, 1
      %p278 = por %p276, %p277
      %p279 = scmp.ne.s32.totalorder %s270, %s271
      %p280 = scmp.eq.s32.totalorder %s29, 0
      %p281 = por %p279, %p280
      %p282 = scmp.ne.s32.totalorder %s270, %s271
      %p283 = scmp.eq.s32.totalorder %s30, 1
      %p284 = por %p282, %p283
      %p286 = scmp.ne.s32.totalorder %s271, %s285
      %p287 = scmp.eq.s32.totalorder %s30, 0
      %p288 = por %p286, %p287
      %s289 = ssub.s32 %s24, %s31
      %p290 = scmp.eq.s32.totalorder %s289, 0
      %s292 = sadd.s32 %s291, 1
      %s293 = scalar_select %p290, %s291, %s292
      %p296 = pneg %p290
      %p297 = scmp.eq.s32.totalorder %s24, 1
      %p298 = por %p296, %p297
      %p299 = scmp.ne.s32.totalorder %s291, %s294
      %p300 = scmp.eq.s32.totalorder %s24, 0
      %p301 = por %p299, %p300
      %p302 = scmp.ne.s32.totalorder %s291, %s294
      %p303 = scmp.eq.s32.totalorder %s29, 1
      %p304 = por %p302, %p303
      %p305 = scmp.ne.s32.totalorder %s294, %s295
      %p306 = scmp.eq.s32.totalorder %s29, 0
      %p307 = por %p305, %p306
      %p308 = scmp.ne.s32.totalorder %s294, %s295
      %p309 = scmp.eq.s32.totalorder %s30, 1
      %p310 = por %p308, %p309
      %p312 = scmp.ne.s32.totalorder %s295, %s311
      %p313 = scmp.eq.s32.totalorder %s30, 0
      %p314 = por %p312, %p313
      %p315 = scmp.le.s32.totalorder 1, %s24
      %p316 = scmp.lt.s32.totalorder %s24, 3
      %p317 = pnand %p315, %p316
      %p318 = pneg %p317
      // Predicated region
      $region9: #{my_decoder.7} parent=5 // pred_check
        _
      $region10: #{my_decoder.7} parent=5 // pred_check_branch
        %320 = sbr.rel (%p317) target = $region12
      $region11: #{my_decoder.7} parent=5 // pred_region
        %s321 = ssub.s32 %s24, 1
        // Predicated region
        $region13: #{my_decoder.7} parent=11 // pred_check
          %p322 = pneg %p71
        $region14: #{my_decoder.7} parent=11 // pred_check_branch
          %324 = sbr.rel (%p322) target = $region16
        $region15: #{my_decoder.7} parent=11 // pred_region
          %326 = vsyncadd [#allocation3], 0
          %s328 = sshll.u32 %s1, 4
          %s329 = int_to_ptr.hbm [resolvable:$true] %s328
          %s330 = sshll.u32 [#allocation2], 4
          %s331 = int_to_ptr.vmem [resolvable:$true] %s330
          %333 = dma.hbm_to_vmem [thread:$0]  %s329, 128, %s331, [#allocation3]
        $region16: #{my_decoder.7} parent=11 // pred_fallthru
          _
        // Predicated region
        $region17: #{my_decoder.7} parent=11 // pred_check
          %p334 = pneg %p92
        $region18: #{my_decoder.7} parent=11 // pred_check_branch
          %336 = sbr.rel (%p334) target = $region20
        $region19: #{my_decoder.7} parent=11 // pred_region
          %338 = vsyncadd [#allocation5], 0
          %s340 = sshll.u32 %s2, 4
          %s341 = int_to_ptr.hbm [resolvable:$true] %s340
          %s342 = sshll.u32 [#allocation4], 4
          %s343 = int_to_ptr.vmem [resolvable:$true] %s342
          %345 = dma.hbm_to_vmem [thread:$0]  %s341, 16, %s343, [#allocation5]
        $region20: #{my_decoder.7} parent=11 // pred_fallthru
          _
        // Predicated region
        $region21: #{my_decoder.7} parent=11 // pred_check
          %p346 = pneg %p113
        $region22: #{my_decoder.7} parent=11 // pred_check_branch
          %348 = sbr.rel (%p346) target = $region24
        $region23: #{my_decoder.7} parent=11 // pred_region
          %350 = vsyncadd [#allocation5], 0
          %s352 = sshll.u32 %s3, 4
          %s353 = int_to_ptr.hbm [resolvable:$true] %s352
          %s354 = sshll.u32 [#allocation6], 4
          %s355 = int_to_ptr.vmem [resolvable:$true] %s354
          %357 = dma.hbm_to_vmem [thread:$0]  %s353, 16, %s355, [#allocation5]
        $region24: #{my_decoder.7} parent=11 // pred_fallthru
          _
        // Predicated region
        $region25: #{my_decoder.7} parent=11 // pred_check
          %p358 = pneg %p134
        $region26: #{my_decoder.7} parent=11 // pred_check_branch
          %360 = sbr.rel (%p358) target = $region28
        $region27: #{my_decoder.7} parent=11 // pred_region
          %362 = vsyncadd [#allocation8], 0
          %s363 = sshll.u32 %s4, 4
          %s364 = int_to_ptr.hbm [resolvable:$true] %s363
          %s365 = sshll.u32 [#allocation7], 4
          %s366 = int_to_ptr.vmem [resolvable:$true] %s365
          %371 = dma.hbm_to_vmem [thread:$0]  %s364, 512, %s366, [#allocation8], 128, 128, 8
        $region28: #{my_decoder.7} parent=11 // pred_fallthru
          _
        // Predicated region
        $region29: #{my_decoder.7} parent=11 // pred_check
          %p372 = pneg %p155
        $region30: #{my_decoder.7} parent=11 // pred_check_branch
          %374 = sbr.rel (%p372) target = $region32
        $region31: #{my_decoder.7} parent=11 // pred_region
          %376 = vsyncadd [#allocation8], 0
          %s378 = sshll.u32 %s5, 4
          %s379 = int_to_ptr.hbm [resolvable:$true] %s378
          %s380 = sshll.u32 [#allocation9], 4
          %s381 = int_to_ptr.vmem [resolvable:$true] %s380
          %383 = dma.hbm_to_vmem [thread:$0]  %s379, 16, %s381, [#allocation8]
        $region32: #{my_decoder.7} parent=11 // pred_fallthru
          _
        // Predicated region
        $region33: #{my_decoder.7} parent=11 // pred_check
          %p384 = pneg %p176
        $region34: #{my_decoder.7} parent=11 // pred_check_branch
          %386 = sbr.rel (%p384) target = $region36
        $region35: #{my_decoder.7} parent=11 // pred_region
          %388 = vsyncadd [#allocation11], 0
          %s389 = sshll.u32 %s6, 4
          %s390 = int_to_ptr.hbm [resolvable:$true] %s389
          %s391 = sshll.u32 [#allocation10], 4
          %s392 = int_to_ptr.vmem [resolvable:$true] %s391
          %397 = dma.hbm_to_vmem [thread:$0]  %s390, 512, %s392, [#allocation11], 128, 128, 8
        $region36: #{my_decoder.7} parent=11 // pred_fallthru
          _
        // Predicated region
        $region37: #{my_decoder.7} parent=11 // pred_check
          %p398 = pneg %p197
        $region38: #{my_decoder.7} parent=11 // pred_check_branch
          %400 = sbr.rel (%p398) target = $region40
        $region39: #{my_decoder.7} parent=11 // pred_region
          %402 = vsyncadd [#allocation11], 0
          %s404 = sshll.u32 %s7, 4
          %s405 = int_to_ptr.hbm [resolvable:$true] %s404
          %s406 = sshll.u32 [#allocation12], 4
          %s407 = int_to_ptr.vmem [resolvable:$true] %s406
          %409 = dma.hbm_to_vmem [thread:$0]  %s405, 16, %s407, [#allocation11]
        $region40: #{my_decoder.7} parent=11 // pred_fallthru
          _
        // Predicated region
        $region41: #{my_decoder.7} parent=11 // pred_check
          %p410 = pneg %p218
        $region42: #{my_decoder.7} parent=11 // pred_check_branch
          %412 = sbr.rel (%p410) target = $region44
        $region43: #{my_decoder.7} parent=11 // pred_region
          %414 = vsyncadd [#allocation14], 0
          %s415 = sshll.u32 %s8, 4
          %s416 = int_to_ptr.hbm [resolvable:$true] %s415
          %s417 = sshll.u32 [#allocation13], 4
          %s418 = int_to_ptr.vmem [resolvable:$true] %s417
          %423 = dma.hbm_to_vmem [thread:$0]  %s416, 512, %s418, [#allocation14], 128, 128, 8
        $region44: #{my_decoder.7} parent=11 // pred_fallthru
          _
        // Predicated region
        $region45: #{my_decoder.7} parent=11 // pred_check
          %p424 = pneg %p239
        $region46: #{my_decoder.7} parent=11 // pred_check_branch
          %426 = sbr.rel (%p424) target = $region48
        $region47: #{my_decoder.7} parent=11 // pred_region
          %428 = vsyncadd [#allocation14], 0
          %s430 = sshll.u32 %s9, 4
          %s431 = int_to_ptr.hbm [resolvable:$true] %s430
          %s432 = sshll.u32 [#allocation15], 4
          %s433 = int_to_ptr.vmem [resolvable:$true] %s432
          %435 = dma.hbm_to_vmem [thread:$0]  %s431, 16, %s433, [#allocation14]
        $region48: #{my_decoder.7} parent=11 // pred_fallthru
          _
        // Predicated region
        $region49: #{my_decoder.7} parent=11 // pred_check
          %p436 = pneg %p260
        $region50: #{my_decoder.7} parent=11 // pred_check_branch
          %438 = sbr.rel (%p436) target = $region52
        $region51: #{my_decoder.7} parent=11 // pred_region
          %440 = vsyncadd [#allocation17], 0
          %s441 = sshll.u32 %s10, 4
          %s442 = int_to_ptr.hbm [resolvable:$true] %s441
          %s443 = sshll.u32 [#allocation16], 4
          %s444 = int_to_ptr.vmem [resolvable:$true] %s443
          %449 = dma.hbm_to_vmem [thread:$0]  %s442, 512, %s444, [#allocation17], 128, 128, 8
        $region52: #{my_decoder.7} parent=11 // pred_fallthru
          _
        // Predicated region
        $region53: #{my_decoder.7} parent=11 // pred_check
          %p450 = pneg %p281
        $region54: #{my_decoder.7} parent=11 // pred_check_branch
          %452 = sbr.rel (%p450) target = $region56
        $region55: #{my_decoder.7} parent=11 // pred_region
          %454 = vsyncadd [#allocation17], 0
          %s456 = sshll.u32 %s11, 4
          %s457 = int_to_ptr.hbm [resolvable:$true] %s456
          %s458 = sshll.u32 [#allocation18], 4
          %s459 = int_to_ptr.vmem [resolvable:$true] %s458
          %461 = dma.hbm_to_vmem [thread:$0]  %s457, 16, %s459, [#allocation17]
        $region56: #{my_decoder.7} parent=11 // pred_fallthru
          _
      $region12: #{my_decoder.7} parent=5 // pred_fallthru
        _
      %p462 = scmp.lt.s32.totalorder %s24, 2
      // Predicated region
      $region57: #{my_decoder.7} parent=5 // pred_check
        %p463 = pneg %p462
      $region58: #{my_decoder.7} parent=5 // pred_check_branch
        %465 = sbr.rel (%p463) target = $region60
      $region59: #{my_decoder.7} parent=5 // pred_region
        // Predicated region
        $region61: #{my_decoder.7} parent=59 // pred_check
          %p466 = pneg %p44
        $region62: #{my_decoder.7} parent=59 // pred_check_branch
          %468 = sbr.rel (%p466) target = $region64
        $region63: #{my_decoder.7} parent=59 // pred_region
          %p469 = scmp.lt.s32.totalorder %s24, 1
          %s470 = scalar_select %p469, %s24, 1
          %s471 = smul.addr %s470, 8
          %s472 = scalar_lea.vmem %s0, %s471
        $region64: #{my_decoder.7} parent=59 // pred_fallthru
          _
      $region60: #{my_decoder.7} parent=5 // pred_fallthru
        _
      %p473 = scmp.le.s32.totalorder 1, %s24
      %p474 = scmp.lt.s32.totalorder %s24, 3
      %p475 = pnand %p473, %p474
      %p476 = pneg %p475
      // Predicated region
      $region65: #{my_decoder.7} parent=5 // pred_check
        _
      $region66: #{my_decoder.7} parent=5 // pred_check_branch
        %478 = sbr.rel (%p475) target = $region68
      $region67: #{my_decoder.7} parent=5 // pred_region
        %s479 = ssub.s32 %s24, 1
        // Predicated region
        $region69: #{my_decoder.7} parent=67 // pred_check
          %p480 = pneg %p71
        $region70: #{my_decoder.7} parent=67 // pred_check_branch
          %482 = sbr.rel (%p480) target = $region72
        $region71: #{my_decoder.7} parent=67 // pred_region
          %484 = dma.done [#allocation3], 128
        $region72: #{my_decoder.7} parent=67 // pred_fallthru
          _
        // Predicated region
        $region73: #{my_decoder.7} parent=67 // pred_check
          %p485 = pneg %p92
        $region74: #{my_decoder.7} parent=67 // pred_check_branch
          %487 = sbr.rel (%p485) target = $region76
        $region75: #{my_decoder.7} parent=67 // pred_region
          %489 = dma.done [#allocation5], 16
        $region76: #{my_decoder.7} parent=67 // pred_fallthru
          _
        // Predicated region
        $region77: #{my_decoder.7} parent=67 // pred_check
          %p490 = pneg %p113
        $region78: #{my_decoder.7} parent=67 // pred_check_branch
          %492 = sbr.rel (%p490) target = $region80
        $region79: #{my_decoder.7} parent=67 // pred_region
          %494 = dma.done [#allocation5], 16
        $region80: #{my_decoder.7} parent=67 // pred_fallthru
          _
        // Predicated region
        $region81: #{my_decoder.7} parent=67 // pred_check
          %p495 = pneg %p134
        $region82: #{my_decoder.7} parent=67 // pred_check_branch
          %497 = sbr.rel (%p495) target = $region84
        $region83: #{my_decoder.7} parent=67 // pred_region
          %499 = dma.done [#allocation8], 512
        $region84: #{my_decoder.7} parent=67 // pred_fallthru
          _
        // Predicated region
        $region85: #{my_decoder.7} parent=67 // pred_check
          %p500 = pneg %p155
        $region86: #{my_decoder.7} parent=67 // pred_check_branch
          %502 = sbr.rel (%p500) target = $region88
        $region87: #{my_decoder.7} parent=67 // pred_region
          %504 = dma.done [#allocation8], 16
        $region88: #{my_decoder.7} parent=67 // pred_fallthru
          _
        // Predicated region
        $region89: #{my_decoder.7} parent=67 // pred_check
          %p505 = pneg %p176
        $region90: #{my_decoder.7} parent=67 // pred_check_branch
          %507 = sbr.rel (%p505) target = $region92
        $region91: #{my_decoder.7} parent=67 // pred_region
          %509 = dma.done [#allocation11], 512
        $region92: #{my_decoder.7} parent=67 // pred_fallthru
          _
        // Predicated region
        $region93: #{my_decoder.7} parent=67 // pred_check
          %p510 = pneg %p197
        $region94: #{my_decoder.7} parent=67 // pred_check_branch
          %512 = sbr.rel (%p510) target = $region96
        $region95: #{my_decoder.7} parent=67 // pred_region
          %514 = dma.done [#allocation11], 16
        $region96: #{my_decoder.7} parent=67 // pred_fallthru
          _
        // Predicated region
        $region97: #{my_decoder.7} parent=67 // pred_check
          %p515 = pneg %p218
        $region98: #{my_decoder.7} parent=67 // pred_check_branch
          %517 = sbr.rel (%p515) target = $region100
        $region99: #{my_decoder.7} parent=67 // pred_region
          %519 = dma.done [#allocation14], 512
        $region100: #{my_decoder.7} parent=67 // pred_fallthru
          _
        // Predicated region
        $region101: #{my_decoder.7} parent=67 // pred_check
          %p520 = pneg %p239
        $region102: #{my_decoder.7} parent=67 // pred_check_branch
          %522 = sbr.rel (%p520) target = $region104
        $region103: #{my_decoder.7} parent=67 // pred_region
          %524 = dma.done [#allocation14], 16
        $region104: #{my_decoder.7} parent=67 // pred_fallthru
          _
        // Predicated region
        $region105: #{my_decoder.7} parent=67 // pred_check
          %p525 = pneg %p260
        $region106: #{my_decoder.7} parent=67 // pred_check_branch
          %527 = sbr.rel (%p525) target = $region108
        $region107: #{my_decoder.7} parent=67 // pred_region
          %529 = dma.done [#allocation17], 512
        $region108: #{my_decoder.7} parent=67 // pred_fallthru
          _
        // Predicated region
        $region109: #{my_decoder.7} parent=67 // pred_check
          %p530 = pneg %p281
        $region110: #{my_decoder.7} parent=67 // pred_check_branch
          %532 = sbr.rel (%p530) target = $region112
        $region111: #{my_decoder.7} parent=67 // pred_region
          %534 = dma.done [#allocation17], 16
        $region112: #{my_decoder.7} parent=67 // pred_fallthru
          _
        %p535 = scmp.lt.s32.totalorder %s29, 1
        %s536 = scalar_select %p535, %s29, 1
        %s537 = smul.addr %s536, 8
        %s538 = scalar_lea.vmem %s0, %s537
        %p539 = pneg %p50
        %p540 = pneg %p47
        %p541 = pneg %p71
        %p542 = pneg %p68
        %p543 = pneg %p92
        %p544 = pneg %p89
        %p545 = pneg %p113
        %p546 = pneg %p110
        %p547 = pneg %p134
        %p548 = pneg %p131
        %p549 = pneg %p155
        %p550 = pneg %p152
        %p551 = pneg %p176
        %p552 = pneg %p173
        %p553 = pneg %p197
        %p554 = pneg %p194
        %p555 = pneg %p218
        %p556 = pneg %p215
        %p557 = pneg %p239
        %p558 = pneg %p236
        %p559 = pneg %p260
        %p560 = pneg %p257
        %p561 = pneg %p281
        %p562 = pneg %p278
        %p563 = pneg %p307
        %p564 = pneg %p304
        %p565 = scmp.lt.s32.totalorder %s29, 1
        %s566 = scalar_select %p565, %s29, 1
        %s567 = smul.addr %s566, 8
        %s568 = scalar_lea.vmem %s12, %s567
        %p569 = scmp.lt.s32.totalorder %s29, 1
        %s570 = scalar_select %p569, %s29, 1
        %s571 = smul.addr %s570, 8
        %s572 = scalar_lea.vmem %s0, %s571
        %p573 = scmp.lt.s32.totalorder %s29, 1
        %s574 = scalar_select %p573, %s29, 1
        %s575 = smul.addr %s574, 8
        %s576 = scalar_lea.vmem %s12, %s575
        %v577 = vld [vmem:[%s572] sm:$0xff]
        %v578 = vld [vmem:[#allocation4] sm:$0x1]
        %v579 = vld [vmem:[#allocation6] sm:$0x1]
        %vm580 = vcmask 261120
        %v581 = vsel %vm580, %v577, 0.0
        %582 = vadd.xlane.f32.xlu0 %v581
        %v583 = vpop.xlane.xlu0 %582
        %v584 = vrcp.pop 32.0
        %v585 = vmul.f32 32.0, %v584
        %v586 = vsub.f32 1.0, %v585
        %v587 = vmul.f32 %v584, %v586
        %v588 = vadd.f32 %v584, %v587
        %vm589 = vweird.f32 %v584
        %v590 = vsel %vm589, %v584, %v588
        %v591 = vmul.f32 %v583, %v590
        %v592 = vsub.f32 %v577, %v591
        %v593 = vmul.f32 %v592, %v592
        %v594 = vsel %vm580, %v593, 0.0
        %595 = vadd.xlane.f32.xlu0 %v594
        %v596 = vpop.xlane.xlu0 %595
        %v597 = vmul.f32 %v596, 0.032258064
        %v598 = vrsqrt.pop %v597
        %v599 = vmul.f32 %v598, %v597
        %v600 = vmul.f32 %v599, %v598
        %v601 = vmul.f32 0.5, %v600
        %v602 = vsub.f32 1.5, %v601
        %v603 = vmul.f32 %v598, %v602
        %v604 = vmul.f32 %v597, %v603
        %vm605 = vcmp.eq.f32.partialorder %v597, inf
        %v606 = vsel %vm605, %v597, %v604
        %vm607 = vcmp.eq.f32.partialorder %v597, 0.0
        %v608 = vand.u32 %v597, 2147483648
        %v609 = vsel %vm607, %v608, %v606
        %v610 = vadd.f32 %v609, 1e-06
        %v611 = vrcp.pop %v610
        %v613 = vperm.slane %v578, 0
        %v615 = vmul.f32 %v613, %v592
        %v616 = vmul.f32 %v615, %v611
        %v618 = vperm.slane %v579, 0
        %v620 = vadd.f32 %v616, %v618
        %v621 = vld [vmem:[#allocation2] sm:$0xff]
        %v622 = vld [vmem:[#allocation7] sm:$0xff]
        %v623 = vld [vmem:[#allocation7 + $0x8] sm:$0xff]
        %v624 = vld [vmem:[#allocation7 + $0x10] sm:$0xff]
        %v625 = vld [vmem:[#allocation7 + $0x18] sm:$0xff]
        %v626 = vld [vmem:[#allocation9] sm:$0x1]
        %v627 = vld [vmem:[#allocation10] sm:$0xff]
        %v628 = vld [vmem:[#allocation10 + $0x8] sm:$0xff]
        %v629 = vld [vmem:[#allocation10 + $0x10] sm:$0xff]
        %v630 = vld [vmem:[#allocation10 + $0x18] sm:$0xff]
        %v631 = vld [vmem:[#allocation12] sm:$0x1]
        %v632 = vld [vmem:[#allocation13] sm:$0xff]
        %v633 = vld [vmem:[#allocation13 + $0x8] sm:$0xff]
        %v634 = vld [vmem:[#allocation13 + $0x10] sm:$0xff]
        %v635 = vld [vmem:[#allocation13 + $0x18] sm:$0xff]
        %v636 = vld [vmem:[#allocation15] sm:$0x1]
        %v637 = vld [vmem:[#allocation16] sm:$0xff]
        %v638 = vld [vmem:[#allocation16 + $0x8] sm:$0xff]
        %v639 = vld [vmem:[#allocation16 + $0x10] sm:$0xff]
        %v640 = vld [vmem:[#allocation16 + $0x18] sm:$0xff]
        %v641 = vld [vmem:[#allocation18] sm:$0x1]
        %v643 = vperm.slane %v626, 0
        %v646 = vsel %vm580, %v620, 0
        %648 = vmatpush.msra.mxu0 0.0
        %649 = vmatpush.msra.mxu0 0.0
        %650 = vmatpush.msra.mxu0 0.0
        %651 = vmatpush.msra.mxu0 0.0
        %652 = vmatpush.msra.mxu0 0.0
        %653 = vmatpush.msra.mxu0 0.0
        %654 = vmatpush.msra.mxu0 0.0
        %655 = vmatpush.msra.mxu0 0.0
        %656 = vmatpush.msra.mxu0 0.0
        %657 = vmatpush.msra.mxu0 0.0
        %658 = vmatpush.msra.mxu0 0.0
        %659 = vmatpush.msra.mxu0 0.0
        %660 = vmatpush.msra.mxu0 %v625
        %661 = vmatpush.msra.mxu0 %v624
        %662 = vmatpush.msra.mxu0 %v623
        %663 = vmatpush.msra.mxu0 %v622
        %664 = vmatmul.f32.gmra.mxu0 %v646
        %v665 = vpop.f32.mrf.mxu0
        %v666 = vadd.f32 %v643, %v665
        %667 = vdwg.mxu0
        %v669 = vperm.slane %v631, 0
        %671 = vmatpush.msra.mxu0 0.0
        %672 = vmatpush.msra.mxu0 0.0
        %673 = vmatpush.msra.mxu0 0.0
        %674 = vmatpush.msra.mxu0 0.0
        %675 = vmatpush.msra.mxu0 0.0
        %676 = vmatpush.msra.mxu0 0.0
        %677 = vmatpush.msra.mxu0 0.0
        %678 = vmatpush.msra.mxu0 0.0
        %679 = vmatpush.msra.mxu0 0.0
        %680 = vmatpush.msra.mxu0 0.0
        %681 = vmatpush.msra.mxu0 0.0
        %682 = vmatpush.msra.mxu0 0.0
        %683 = vmatpush.msra.mxu0 %v630
        %684 = vmatpush.msra.mxu0 %v629
        %685 = vmatpush.msra.mxu0 %v628
        %686 = vmatpush.msra.mxu0 %v627
        %687 = vmatmul.f32.gmra.mxu0 %v646
        %v688 = vpop.f32.mrf.mxu0
        %v689 = vadd.f32 %v669, %v688
        %690 = vdwg.mxu0
        %v692 = vperm.slane %v636, 0
        %694 = vmatpush.msra.mxu0 0.0
        %695 = vmatpush.msra.mxu0 0.0
        %696 = vmatpush.msra.mxu0 0.0
        %697 = vmatpush.msra.mxu0 0.0
        %698 = vmatpush.msra.mxu0 0.0
        %699 = vmatpush.msra.mxu0 0.0
        %700 = vmatpush.msra.mxu0 0.0
        %701 = vmatpush.msra.mxu0 0.0
        %702 = vmatpush.msra.mxu0 0.0
        %703 = vmatpush.msra.mxu0 0.0
        %704 = vmatpush.msra.mxu0 0.0
        %705 = vmatpush.msra.mxu0 0.0
        %706 = vmatpush.msra.mxu0 %v635
        %707 = vmatpush.msra.mxu0 %v634
        %708 = vmatpush.msra.mxu0 %v633
        %709 = vmatpush.msra.mxu0 %v632
        %710 = vmatmul.f32.gmra.mxu0 %v646
        %v711 = vpop.f32.mrf.mxu0
        %v712 = vadd.f32 %v692, %v711
        %713 = vdwg.mxu0
        %vm714 = vcmask 64512
        %v716 = vsel %vm714, %v666, 0
        %v719 = vsel %vm714, %v689, 0
        %721 = vmatpush.xpose.msra.mxu0 0.0
        %722 = vmatpush.xpose.msra.mxu0 0.0
        %723 = vmatpush.xpose.msra.mxu0 0.0
        %724 = vmatpush.xpose.msra.mxu0 0.0
        %725 = vmatpush.xpose.msra.mxu0 0.0
        %726 = vmatpush.xpose.msra.mxu0 0.0
        %727 = vmatpush.xpose.msra.mxu0 0.0
        %728 = vmatpush.xpose.msra.mxu0 0.0
        %729 = vmatpush.xpose.msra.mxu0 0.0
        %730 = vmatpush.xpose.msra.mxu0 0.0
        %731 = vmatpush.xpose.msra.mxu0 0.0
        %732 = vmatpush.xpose.msra.mxu0 0.0
        %733 = vmatpush.xpose.msra.mxu0 0.0
        %734 = vmatpush.xpose.msra.mxu0 0.0
        %735 = vmatpush.xpose.msra.mxu0 0.0
        %736 = vmatpush.xpose.msra.mxu0 %v719
        %737 = vmatmul.f32.gmra.mxu0 %v716
        %v738 = vpop.f32.mrf.mxu0
        %v739 = vadd.f32 0.0, %v738
        %740 = vdwg.mxu0
        %v741 = vmul.f32 %v739, 0.35355338
        %vm742 = vcmp.eq.f32.partialorder %v621, 0.0
        %v743 = vsel %vm742, -1e+09, %v741
        %v744 = vsel %vm714, %v743, -inf
        %745 = vmax.xlane.f32.xlu0 %v744
        %v746 = vpop.xlane.xlu0 %745
        %v747 = vsub.f32 %v743, %v746
        %v748 = vmul.f32 %v747, 1.442695
        %v749 = vpow.pop %v748
        %v750 = vsel %vm714, %v749, 0.0
        %751 = vadd.xlane.f32.xlu0 %v750
        %v752 = vpop.xlane.xlu0 %751
        %v753 = vrcp.pop %v752
        %v754 = vmul.f32 %v749, %v753
        %v756 = vsel %vm714, %v754, 0
        %758 = vmatpush.msra.mxu0 0.0
        %759 = vmatpush.msra.mxu0 0.0
        %760 = vmatpush.msra.mxu0 0.0
        %761 = vmatpush.msra.mxu0 0.0
        %762 = vmatpush.msra.mxu0 0.0
        %763 = vmatpush.msra.mxu0 0.0
        %764 = vmatpush.msra.mxu0 0.0
        %765 = vmatpush.msra.mxu0 0.0
        %766 = vmatpush.msra.mxu0 0.0
        %767 = vmatpush.msra.mxu0 0.0
        %768 = vmatpush.msra.mxu0 0.0
        %769 = vmatpush.msra.mxu0 0.0
        %770 = vmatpush.msra.mxu0 0.0
        %771 = vmatpush.msra.mxu0 0.0
        %772 = vmatpush.msra.mxu0 0.0
        %773 = vmatpush.msra.mxu0 %v712
        %774 = vmatmul.f32.gmra.mxu0 %v756
        %v775 = vpop.f32.mrf.mxu0
        %v776 = vadd.f32 0.0, %v775
        %777 = vdwg.mxu0
        %778 = vrot.lane.b32.xlu0 %v666, 120
        %v779 = vpop.permute.xlu0 %778
        %780 = vrot.lane.b32.xlu0 %v689, 120
        %v781 = vpop.permute.xlu0 %780
        %v782 = vsel %vm714, %v779, 0
        %v784 = vsel %vm714, %v781, 0
        %786 = vmatpush.xpose.msra.mxu0 0.0
        %787 = vmatpush.xpose.msra.mxu0 0.0
        %788 = vmatpush.xpose.msra.mxu0 0.0
        %789 = vmatpush.xpose.msra.mxu0 0.0
        %790 = vmatpush.xpose.msra.mxu0 0.0
        %791 = vmatpush.xpose.msra.mxu0 0.0
        %792 = vmatpush.xpose.msra.mxu0 0.0
        %793 = vmatpush.xpose.msra.mxu0 0.0
        %794 = vmatpush.xpose.msra.mxu0 0.0
        %795 = vmatpush.xpose.msra.mxu0 0.0
        %796 = vmatpush.xpose.msra.mxu0 0.0
        %797 = vmatpush.xpose.msra.mxu0 0.0
        %798 = vmatpush.xpose.msra.mxu0 0.0
        %799 = vmatpush.xpose.msra.mxu0 0.0
        %800 = vmatpush.xpose.msra.mxu0 0.0
        %801 = vmatpush.xpose.msra.mxu0 %v784
        %802 = vmatmul.f32.gmra.mxu0 %v782
        %v803 = vpop.f32.mrf.mxu0
        %v804 = vadd.f32 0.0, %v803
        %805 = vdwg.mxu0
        %v806 = vmul.f32 %v804, 0.35355338
        %v807 = vsel %vm742, -1e+09, %v806
        %v808 = vsel %vm714, %v807, -inf
        %809 = vmax.xlane.f32.xlu0 %v808
        %v810 = vpop.xlane.xlu0 %809
        %v811 = vsub.f32 %v807, %v810
        %v812 = vmul.f32 %v811, 1.442695
        %v813 = vpow.pop %v812
        %v814 = vsel %vm714, %v813, 0.0
        %815 = vadd.xlane.f32.xlu0 %v814
        %v816 = vpop.xlane.xlu0 %815
        %v817 = vrcp.pop %v816
        %v818 = vmul.f32 %v813, %v817
        %820 = vrot.lane.b32.xlu0 %v712, 120
        %v821 = vpop.permute.xlu0 %820
        %v824 = vsel %vm714, %v818, 0
        %826 = vmatpush.msra.mxu0 0.0
        %827 = vmatpush.msra.mxu0 0.0
        %828 = vmatpush.msra.mxu0 0.0
        %829 = vmatpush.msra.mxu0 0.0
        %830 = vmatpush.msra.mxu0 0.0
        %831 = vmatpush.msra.mxu0 0.0
        %832 = vmatpush.msra.mxu0 0.0
        %833 = vmatpush.msra.mxu0 0.0
        %834 = vmatpush.msra.mxu0 0.0
        %835 = vmatpush.msra.mxu0 0.0
        %836 = vmatpush.msra.mxu0 0.0
        %837 = vmatpush.msra.mxu0 0.0
        %838 = vmatpush.msra.mxu0 0.0
        %839 = vmatpush.msra.mxu0 0.0
        %840 = vmatpush.msra.mxu0 0.0
        %841 = vmatpush.msra.mxu0 %v821
        %842 = vmatmul.f32.gmra.mxu0 %v824
        %v843 = vpop.f32.mrf.mxu0
        %v844 = vadd.f32 0.0, %v843
        %845 = vdwg.mxu0
        %v847 = vsel %vm714, %v844, 0
        %849 = vmatpush.msra.mxu0 0.0
        %850 = vmatpush.msra.mxu0 0.0
        %851 = vmatpush.msra.mxu0 0.0
        %852 = vmatpush.msra.mxu0 0.0
        %853 = vmatpush.msra.mxu0 0.0
        %854 = vmatpush.msra.mxu0 0.0
        %855 = vmatpush.msra.mxu0 0.0
        %856 = vmatpush.msra.mxu0 0.0
        %857 = vmatpush.msra.mxu0 0.0
        %858 = vmatpush.msra.mxu0 0.0
        %859 = vmatpush.msra.mxu0 0.0
        %860 = vmatpush.msra.mxu0 0.0
        %861 = vmatpush.msra.mxu0 0.0
        %862 = vmatpush.msra.mxu0 0.0
        %863 = vmatpush.msra.mxu0 0.0
        %864 = vmatpush.msra.mxu0 %v638
        %865 = vmatmul.f32.gmra.mxu0 %v847
        %v866 = vpop.f32.mrf.mxu0
        %v867 = vadd.f32 0.0, %v866
        %868 = vdwg.mxu0
        %v870 = vsel %vm714, %v776, 0
        %872 = vmatpush.msra.mxu0 0.0
        %873 = vmatpush.msra.mxu0 0.0
        %874 = vmatpush.msra.mxu0 0.0
        %875 = vmatpush.msra.mxu0 0.0
        %876 = vmatpush.msra.mxu0 0.0
        %877 = vmatpush.msra.mxu0 0.0
        %878 = vmatpush.msra.mxu0 0.0
        %879 = vmatpush.msra.mxu0 0.0
        %880 = vmatpush.msra.mxu0 0.0
        %881 = vmatpush.msra.mxu0 0.0
        %882 = vmatpush.msra.mxu0 0.0
        %883 = vmatpush.msra.mxu0 0.0
        %884 = vmatpush.msra.mxu0 0.0
        %885 = vmatpush.msra.mxu0 0.0
        %886 = vmatpush.msra.mxu0 0.0
        %887 = vmatpush.msra.mxu0 %v637
        %888 = vmatmul.f32.gmra.mxu0 %v870
        %v889 = vpop.f32.mrf.mxu0
        %v890 = vadd.f32 %v867, %v889
        %891 = vdwg.mxu0
        %892 = vrot.lane.b32.xlu0 %v666, 112
        %v893 = vpop.permute.xlu0 %892
        %894 = vrot.lane.b32.xlu0 %v689, 112
        %v895 = vpop.permute.xlu0 %894
        %v896 = vsel %vm714, %v893, 0
        %v898 = vsel %vm714, %v895, 0
        %900 = vmatpush.xpose.msra.mxu0 0.0
        %901 = vmatpush.xpose.msra.mxu0 0.0
        %902 = vmatpush.xpose.msra.mxu0 0.0
        %903 = vmatpush.xpose.msra.mxu0 0.0
        %904 = vmatpush.xpose.msra.mxu0 0.0
        %905 = vmatpush.xpose.msra.mxu0 0.0
        %906 = vmatpush.xpose.msra.mxu0 0.0
        %907 = vmatpush.xpose.msra.mxu0 0.0
        %908 = vmatpush.xpose.msra.mxu0 0.0
        %909 = vmatpush.xpose.msra.mxu0 0.0
        %910 = vmatpush.xpose.msra.mxu0 0.0
        %911 = vmatpush.xpose.msra.mxu0 0.0
        %912 = vmatpush.xpose.msra.mxu0 0.0
        %913 = vmatpush.xpose.msra.mxu0 0.0
        %914 = vmatpush.xpose.msra.mxu0 0.0
        %915 = vmatpush.xpose.msra.mxu0 %v898
        %916 = vmatmul.f32.gmra.mxu0 %v896
        %v917 = vpop.f32.mrf.mxu0
        %v918 = vadd.f32 0.0, %v917
        %919 = vdwg.mxu0
        %v920 = vmul.f32 %v918, 0.35355338
        %v921 = vsel %vm742, -1e+09, %v920
        %v922 = vsel %vm714, %v921, -inf
        %923 = vmax.xlane.f32.xlu0 %v922
        %v924 = vpop.xlane.xlu0 %923
        %v925 = vsub.f32 %v921, %v924
        %v926 = vmul.f32 %v925, 1.442695
        %v927 = vpow.pop %v926
        %v928 = vsel %vm714, %v927, 0.0
        %929 = vadd.xlane.f32.xlu0 %v928
        %v930 = vpop.xlane.xlu0 %929
        %v931 = vrcp.pop %v930
        %v932 = vmul.f32 %v927, %v931
        %933 = vrot.lane.b32.xlu0 %v712, 112
        %v934 = vpop.permute.xlu0 %933
        %v937 = vsel %vm714, %v932, 0
        %939 = vmatpush.msra.mxu0 0.0
        %940 = vmatpush.msra.mxu0 0.0
        %941 = vmatpush.msra.mxu0 0.0
        %942 = vmatpush.msra.mxu0 0.0
        %943 = vmatpush.msra.mxu0 0.0
        %944 = vmatpush.msra.mxu0 0.0
        %945 = vmatpush.msra.mxu0 0.0
        %946 = vmatpush.msra.mxu0 0.0
        %947 = vmatpush.msra.mxu0 0.0
        %948 = vmatpush.msra.mxu0 0.0
        %949 = vmatpush.msra.mxu0 0.0
        %950 = vmatpush.msra.mxu0 0.0
        %951 = vmatpush.msra.mxu0 0.0
        %952 = vmatpush.msra.mxu0 0.0
        %953 = vmatpush.msra.mxu0 0.0
        %954 = vmatpush.msra.mxu0 %v934
        %955 = vmatmul.f32.gmra.mxu0 %v937
        %v956 = vpop.f32.mrf.mxu0
        %v957 = vadd.f32 0.0, %v956
        %958 = vdwg.mxu0
        %v960 = vsel %vm714, %v957, 0
        %962 = vmatpush.msra.mxu0 0.0
        %963 = vmatpush.msra.mxu0 0.0
        %964 = vmatpush.msra.mxu0 0.0
        %965 = vmatpush.msra.mxu0 0.0
        %966 = vmatpush.msra.mxu0 0.0
        %967 = vmatpush.msra.mxu0 0.0
        %968 = vmatpush.msra.mxu0 0.0
        %969 = vmatpush.msra.mxu0 0.0
        %970 = vmatpush.msra.mxu0 0.0
        %971 = vmatpush.msra.mxu0 0.0
        %972 = vmatpush.msra.mxu0 0.0
        %973 = vmatpush.msra.mxu0 0.0
        %974 = vmatpush.msra.mxu0 0.0
        %975 = vmatpush.msra.mxu0 0.0
        %976 = vmatpush.msra.mxu0 0.0
        %977 = vmatpush.msra.mxu0 %v639
        %978 = vmatmul.f32.gmra.mxu0 %v960
        %v979 = vpop.f32.mrf.mxu0
        %v980 = vadd.f32 0.0, %v979
        %981 = vdwg.mxu0
        %v982 = vadd.f32 %v890, %v980
        %983 = vrot.lane.b32.xlu0 %v666, 104
        %v984 = vpop.permute.xlu0 %983
        %985 = vrot.lane.b32.xlu0 %v689, 104
        %v986 = vpop.permute.xlu0 %985
        %v987 = vsel %vm714, %v984, 0
        %v989 = vsel %vm714, %v986, 0
        %991 = vmatpush.xpose.msra.mxu0 0.0
        %992 = vmatpush.xpose.msra.mxu0 0.0
        %993 = vmatpush.xpose.msra.mxu0 0.0
        %994 = vmatpush.xpose.msra.mxu0 0.0
        %995 = vmatpush.xpose.msra.mxu0 0.0
        %996 = vmatpush.xpose.msra.mxu0 0.0
        %997 = vmatpush.xpose.msra.mxu0 0.0
        %998 = vmatpush.xpose.msra.mxu0 0.0
        %999 = vmatpush.xpose.msra.mxu0 0.0
        %1000 = vmatpush.xpose.msra.mxu0 0.0
        %1001 = vmatpush.xpose.msra.mxu0 0.0
        %1002 = vmatpush.xpose.msra.mxu0 0.0
        %1003 = vmatpush.xpose.msra.mxu0 0.0
        %1004 = vmatpush.xpose.msra.mxu0 0.0
        %1005 = vmatpush.xpose.msra.mxu0 0.0
        %1006 = vmatpush.xpose.msra.mxu0 %v989
        %1007 = vmatmul.f32.gmra.mxu0 %v987
        %v1008 = vpop.f32.mrf.mxu0
        %v1009 = vadd.f32 0.0, %v1008
        %1010 = vdwg.mxu0
        %v1011 = vmul.f32 %v1009, 0.35355338
        %v1012 = vsel %vm742, -1e+09, %v1011
        %v1013 = vsel %vm714, %v1012, -inf
        %1014 = vmax.xlane.f32.xlu0 %v1013
        %v1015 = vpop.xlane.xlu0 %1014
        %v1016 = vsub.f32 %v1012, %v1015
        %v1017 = vmul.f32 %v1016, 1.442695
        %v1018 = vpow.pop %v1017
        %v1019 = vsel %vm714, %v1018, 0.0
        %1020 = vadd.xlane.f32.xlu0 %v1019
        %v1021 = vpop.xlane.xlu0 %1020
        %v1022 = vrcp.pop %v1021
        %v1023 = vmul.f32 %v1018, %v1022
        %1024 = vrot.lane.b32.xlu0 %v712, 104
        %v1025 = vpop.permute.xlu0 %1024
        %v1028 = vsel %vm714, %v1023, 0
        %1030 = vmatpush.msra.mxu0 0.0
        %1031 = vmatpush.msra.mxu0 0.0
        %1032 = vmatpush.msra.mxu0 0.0
        %1033 = vmatpush.msra.mxu0 0.0
        %1034 = vmatpush.msra.mxu0 0.0
        %1035 = vmatpush.msra.mxu0 0.0
        %1036 = vmatpush.msra.mxu0 0.0
        %1037 = vmatpush.msra.mxu0 0.0
        %1038 = vmatpush.msra.mxu0 0.0
        %1039 = vmatpush.msra.mxu0 0.0
        %1040 = vmatpush.msra.mxu0 0.0
        %1041 = vmatpush.msra.mxu0 0.0
        %1042 = vmatpush.msra.mxu0 0.0
        %1043 = vmatpush.msra.mxu0 0.0
        %1044 = vmatpush.msra.mxu0 0.0
        %1045 = vmatpush.msra.mxu0 %v1025
        %1046 = vmatmul.f32.gmra.mxu0 %v1028
        %v1047 = vpop.f32.mrf.mxu0
        %v1048 = vadd.f32 0.0, %v1047
        %1049 = vdwg.mxu0
        %v1051 = vsel %vm714, %v1048, 0
        %1053 = vmatpush.msra.mxu0 0.0
        %1054 = vmatpush.msra.mxu0 0.0
        %1055 = vmatpush.msra.mxu0 0.0
        %1056 = vmatpush.msra.mxu0 0.0
        %1057 = vmatpush.msra.mxu0 0.0
        %1058 = vmatpush.msra.mxu0 0.0
        %1059 = vmatpush.msra.mxu0 0.0
        %1060 = vmatpush.msra.mxu0 0.0
        %1061 = vmatpush.msra.mxu0 0.0
        %1062 = vmatpush.msra.mxu0 0.0
        %1063 = vmatpush.msra.mxu0 0.0
        %1064 = vmatpush.msra.mxu0 0.0
        %1065 = vmatpush.msra.mxu0 0.0
        %1066 = vmatpush.msra.mxu0 0.0
        %1067 = vmatpush.msra.mxu0 0.0
        %1068 = vmatpush.msra.mxu0 %v640
        %1069 = vmatmul.f32.gmra.mxu0 %v1051
        %v1070 = vpop.f32.mrf.mxu0
        %v1071 = vadd.f32 0.0, %v1070
        %1072 = vdwg.mxu0
        %v1073 = vadd.f32 %v982, %v1071
        %v1075 = vperm.slane %v641, 0
        %v1077 = vadd.f32 %v1073, %v1075
        %v1078 = vadd.f32 %v577, %v1077
        %1079 = vst.msk [vmem:[%s576] sm:$0xff] %vm580, %v1078
        %p1080 = scmp.lt.s32.totalorder %s29, 1
        %s1081 = scalar_select %p1080, %s29, 1
        %s1082 = smul.addr %s1081, 8
        %s1083 = scalar_lea.vmem %s12, %s1082
        // Predicated region
        $region113: #{my_decoder.7} parent=67 // pred_check
          %p1084 = pneg %p304
        $region114: #{my_decoder.7} parent=67 // pred_check_branch
          %1086 = sbr.rel (%p1084) target = $region116
        $region115: #{my_decoder.7} parent=67 // pred_region
          _
        $region116: #{my_decoder.7} parent=67 // pred_fallthru
          _
      $region68: #{my_decoder.7} parent=5 // pred_fallthru
        _
      %p1087 = scmp.le.s32.totalorder 2, %s24
      // Predicated region
      $region117: #{my_decoder.7} parent=5 // pred_check
        %p1088 = pneg %p1087
      $region118: #{my_decoder.7} parent=5 // pred_check_branch
        %1090 = sbr.rel (%p1088) target = $region120
      $region119: #{my_decoder.7} parent=5 // pred_region
        %s1091 = ssub.s32 %s24, 2
        // Predicated region
        $region121: #{my_decoder.7} parent=119 // pred_check
          %p1092 = pneg %p310
        $region122: #{my_decoder.7} parent=119 // pred_check_branch
          %1094 = sbr.rel (%p1092) target = $region124
        $region123: #{my_decoder.7} parent=119 // pred_region
          %p1095 = scmp.lt.s32.totalorder %s30, 1
          %s1096 = scalar_select %p1095, %s30, 1
          %s1097 = smul.addr %s1096, 8
          %s1098 = scalar_lea.vmem %s12, %s1097
        $region124: #{my_decoder.7} parent=119 // pred_fallthru
          _
      $region120: #{my_decoder.7} parent=5 // pred_fallthru
        _
    $region6: #{my_decoder.7} parent=1 // loop_footer
      %s28 = sadd.s32 1, %s24
    $region7: #{my_decoder.7} parent=1 // loop_footer_branch
      %23 = sbr.rel target = $region3
    $region8: #{my_decoder.7} parent=1 // loop_exit
      _
    %1099 = vsyncpa [#allocation3], 1
    %s1100 = scalar_lea.sflag [#allocation3], 1
    %1101 = vsyncpa %s1100, 1
    %1102 = vsyncpa [#allocation5], 1
    %1103 = vsyncpa [#allocation8], 1
    %1104 = vsyncpa [#allocation11], 1
    %1105 = vsyncpa [#allocation14], 1
    %1106 = vsyncpa [#allocation17], 1

// kernel: my_decoder.10
$region0: #{my_decoder.10}
  #allocation0 [shape = 'u32[]', space=smem, size = 0x4, offset = 0x4, fixed_abs, tag = 'smem constant byte address 0x4 - core index']
  #allocation1 [shape = 'u32[72,128]{1,0:T(1,128)}', space=vmem, size = 0x9000, scoped, tag = 'internal scratch']
  %s0 = inlined_call_operand.vmem [shape: f32[2,8,32], index: 0, kind: input, shape index: {}, may-alias: {0,12}]
  %s1 = inlined_call_operand.hbm [shape: f32[1,8,8], index: 1, kind: input, shape index: {}]
  %s2 = inlined_call_operand.hbm [shape: f32[1,32], index: 2, kind: input, shape index: {}]
  %s3 = inlined_call_operand.hbm [shape: f32[1,32], index: 3, kind: input, shape index: {}]
  %s4 = inlined_call_operand.vmem [shape: f32[32,32], index: 4, kind: input, shape index: {}]
  %s5 = inlined_call_operand.hbm [shape: f32[1,32], index: 5, kind: input, shape index: {}]
  %s6 = inlined_call_operand.hbm [shape: f32[32,32], index: 6, kind: input, shape index: {}]
  %s7 = inlined_call_operand.hbm [shape: f32[1,32], index: 7, kind: input, shape index: {}]
  %s8 = inlined_call_operand.hbm [shape: f32[32,32], index: 8, kind: input, shape index: {}]
  %s9 = inlined_call_operand.hbm [shape: f32[1,32], index: 9, kind: input, shape index: {}]
  %s10 = inlined_call_operand.hbm [shape: f32[32,32], index: 10, kind: input, shape index: {}]
  %s11 = inlined_call_operand.hbm [shape: f32[1,32], index: 11, kind: input, shape index: {}]
  %s12 = inlined_call_operand.vmem [shape: f32[2,8,32], index: 12, kind: output, shape index: {}, may-alias: {0,12}]
  %s13 = sld [smem:[#allocation0]]
  $region121: #{my_decoder.10} parent=0
    _
  %s15 = ssub.s32 1, %s13
  %s16 = scalar_select 0, %s15, %s13
  $region1: #{my_decoder.10} parent=0
    #allocation2 [shape = 'u8[4096]{0}', space=vmem, size = 0x1000, scoped, tag = 'input window, operand 1, single buffered']
    #allocation3 [shape = 's32[2]{0}', space=sflag, size = 0x8, scoped, tag = 'scoped memory for my_decoder.10']
    #allocation4 [shape = 'u8[512]{0}', space=vmem, size = 0x400, scoped, tag = 'input window, operand 2, single buffered']
    #allocation5 [shape = 's32[1]{0}', space=sflag, size = 0x4, scoped, tag = 'scoped memory for my_decoder.10']
    #allocation6 [shape = 'u8[512]{0}', space=vmem, size = 0x400, scoped, tag = 'input window, operand 3, single buffered']
    #allocation7 [shape = 'u8[512]{0}', space=vmem, size = 0x400, scoped, tag = 'input window, operand 5, single buffered']
    #allocation8 [shape = 's32[1]{0}', space=sflag, size = 0x4, scoped, tag = 'scoped memory for my_decoder.10']
    #allocation9 [shape = 'u8[16384]{0}', space=vmem, size = 0x4000, scoped, tag = 'input window, operand 6, single buffered']
    #allocation10 [shape = 'u8[512]{0}', space=vmem, size = 0x400, scoped, tag = 'input window, operand 7, single buffered']
    #allocation11 [shape = 's32[1]{0}', space=sflag, size = 0x4, scoped, tag = 'scoped memory for my_decoder.10']
    #allocation12 [shape = 'u8[16384]{0}', space=vmem, size = 0x4000, scoped, tag = 'input window, operand 8, single buffered']
    #allocation13 [shape = 'u8[512]{0}', space=vmem, size = 0x400, scoped, tag = 'input window, operand 9, single buffered']
    #allocation14 [shape = 's32[1]{0}', space=sflag, size = 0x4, scoped, tag = 'scoped memory for my_decoder.10']
    #allocation15 [shape = 'u8[16384]{0}', space=vmem, size = 0x4000, scoped, tag = 'input window, operand 10, single buffered']
    #allocation16 [shape = 'u8[512]{0}', space=vmem, size = 0x400, scoped, tag = 'input window, operand 11, single buffered']
    #allocation17 [shape = 's32[1]{0}', space=sflag, size = 0x4, scoped, tag = 'scoped memory for my_decoder.10']
    %17 = vsyncpa [#allocation3], 0
    %18 = vsyncpa [#allocation5], 0
    %19 = vsyncpa [#allocation8], 0
    %20 = vsyncpa [#allocation11], 0
    %21 = vsyncpa [#allocation14], 0
    %22 = vsyncpa [#allocation17], 0
    loop: start=0, step=1, limit=4
    $region2: #{my_decoder.10} parent=1 // loop_pre_header
      _
    $region3: #{my_decoder.10} parent=1 // loop_header
      %s24 = sphi 0, %s28
      %p25 = scmp.ge.s32.totalorder %s24, 4
      %s34 = sphi 0, %s36
      %s37 = sphi 0, %s34
      %s38 = sphi 0, %s37
      %s54 = sphi 0, %s38
      %s58 = sphi 0, %s58
      %s60 = sphi 0, %s58
      %s61 = sphi 0, %s60
      %s75 = sphi 0, %s61
      %s79 = sphi 0, %s79
      %s81 = sphi 0, %s79
      %s82 = sphi 0, %s81
      %s96 = sphi 0, %s82
      %s100 = sphi 0, %s100
      %s102 = sphi 0, %s100
      %s103 = sphi 0, %s102
      %s117 = sphi 0, %s103
      %s121 = sphi 0, %s121
      %s123 = sphi 0, %s121
      %s124 = sphi 0, %s123
      %s138 = sphi 0, %s124
      %s142 = sphi 0, %s142
      %s144 = sphi 0, %s142
      %s145 = sphi 0, %s144
      %s159 = sphi 0, %s145
      %s163 = sphi 0, %s163
      %s165 = sphi 0, %s163
      %s166 = sphi 0, %s165
      %s180 = sphi 0, %s166
      %s184 = sphi 0, %s184
      %s186 = sphi 0, %s184
      %s187 = sphi 0, %s186
      %s201 = sphi 0, %s187
      %s205 = sphi 0, %s205
      %s207 = sphi 0, %s205
      %s208 = sphi 0, %s207
      %s222 = sphi 0, %s208
      %s226 = sphi 0, %s226
      %s228 = sphi 0, %s226
      %s229 = sphi 0, %s228
      %s243 = sphi 0, %s229
      %s247 = sphi 0, %s247
      %s249 = sphi 0, %s247
      %s250 = sphi 0, %s249
      %s264 = sphi 0, %s250
      %s268 = sphi 0, %s268
      %s270 = sphi 0, %s268
      %s271 = sphi 0, %s270
      %s285 = sphi 0, %s271
      %s291 = sphi 0, %s293
      %s294 = sphi 0, %s291
      %s295 = sphi 0, %s294
      %s311 = sphi 0, %s295
    $region4: #{my_decoder.10} parent=1 // loop_header_branch
      %27 = sbr.rel (%p25) target = $region8
    $region5: #{my_decoder.10} parent=1 // loop_body
      %s29 = ssub.s32 %s24, 1
      %s30 = ssub.s32 %s24, 2
      %s31 = sadd.s32 %s24, 1
      %s32 = ssub.s32 %s24, %s31
      %p33 = scmp.eq.s32.totalorder %s32, 0
      %s35 = sadd.s32 %s34, 1
      %s36 = scalar_select %p33, %s34, %s35
      %p39 = pneg %p33
      %p40 = scmp.eq.s32.totalorder %s24, 1
      %p41 = por %p39, %p40
      %p42 = scmp.ne.s32.totalorder %s34, %s37
      %p43 = scmp.eq.s32.totalorder %s24, 0
      %p44 = por %p42, %p43
      %p45 = scmp.ne.s32.totalorder %s34, %s37
      %p46 = scmp.eq.s32.totalorder %s29, 1
      %p47 = por %p45, %p46
      %p48 = scmp.ne.s32.totalorder %s37, %s38
      %p49 = scmp.eq.s32.totalorder %s29, 0
      %p50 = por %p48, %p49
      %p51 = scmp.ne.s32.totalorder %s37, %s38
      %p52 = scmp.eq.s32.totalorder %s30, 1
      %p53 = por %p51, %p52
      %p55 = scmp.ne.s32.totalorder %s38, %s54
      %p56 = scmp.eq.s32.totalorder %s30, 0
      %p57 = por %p55, %p56
      %s59 = sadd.s32 %s58, 1
      %p62 = scmp.eq.s32.totalorder %s24, 1
      %p63 = scmp.ne.s32.totalorder %s58, %s60
      %p64 = scmp.eq.s32.totalorder %s24, 0
      %p65 = por %p63, %p64
      %p66 = scmp.ne.s32.totalorder %s58, %s60
      %p67 = scmp.eq.s32.totalorder %s29, 1
      %p68 = por %p66, %p67
      %p69 = scmp.ne.s32.totalorder %s60, %s61
      %p70 = scmp.eq.s32.totalorder %s29, 0
      %p71 = por %p69, %p70
      %p72 = scmp.ne.s32.totalorder %s60, %s61
      %p73 = scmp.eq.s32.totalorder %s30, 1
      %p74 = por %p72, %p73
      %p76 = scmp.ne.s32.totalorder %s61, %s75
      %p77 = scmp.eq.s32.totalorder %s30, 0
      %p78 = por %p76, %p77
      %s80 = sadd.s32 %s79, 1
      %p83 = scmp.eq.s32.totalorder %s24, 1
      %p84 = scmp.ne.s32.totalorder %s79, %s81
      %p85 = scmp.eq.s32.totalorder %s24, 0
      %p86 = por %p84, %p85
      %p87 = scmp.ne.s32.totalorder %s79, %s81
      %p88 = scmp.eq.s32.totalorder %s29, 1
      %p89 = por %p87, %p88
      %p90 = scmp.ne.s32.totalorder %s81, %s82
      %p91 = scmp.eq.s32.totalorder %s29, 0
      %p92 = por %p90, %p91
      %p93 = scmp.ne.s32.totalorder %s81, %s82
      %p94 = scmp.eq.s32.totalorder %s30, 1
      %p95 = por %p93, %p94
      %p97 = scmp.ne.s32.totalorder %s82, %s96
      %p98 = scmp.eq.s32.totalorder %s30, 0
      %p99 = por %p97, %p98
      %s101 = sadd.s32 %s100, 1
      %p104 = scmp.eq.s32.totalorder %s24, 1
      %p105 = scmp.ne.s32.totalorder %s100, %s102
      %p106 = scmp.eq.s32.totalorder %s24, 0
      %p107 = por %p105, %p106
      %p108 = scmp.ne.s32.totalorder %s100, %s102
      %p109 = scmp.eq.s32.totalorder %s29, 1
      %p110 = por %p108, %p109
      %p111 = scmp.ne.s32.totalorder %s102, %s103
      %p112 = scmp.eq.s32.totalorder %s29, 0
      %p113 = por %p111, %p112
      %p114 = scmp.ne.s32.totalorder %s102, %s103
      %p115 = scmp.eq.s32.totalorder %s30, 1
      %p116 = por %p114, %p115
      %p118 = scmp.ne.s32.totalorder %s103, %s117
      %p119 = scmp.eq.s32.totalorder %s30, 0
      %p120 = por %p118, %p119
      %s122 = sadd.s32 %s121, 1
      %p125 = scmp.eq.s32.totalorder %s24, 1
      %p126 = scmp.ne.s32.totalorder %s121, %s123
      %p127 = scmp.eq.s32.totalorder %s24, 0
      %p128 = por %p126, %p127
      %p129 = scmp.ne.s32.totalorder %s121, %s123
      %p130 = scmp.eq.s32.totalorder %s29, 1
      %p131 = por %p129, %p130
      %p132 = scmp.ne.s32.totalorder %s123, %s124
      %p133 = scmp.eq.s32.totalorder %s29, 0
      %p134 = por %p132, %p133
      %p135 = scmp.ne.s32.totalorder %s123, %s124
      %p136 = scmp.eq.s32.totalorder %s30, 1
      %p137 = por %p135, %p136
      %p139 = scmp.ne.s32.totalorder %s124, %s138
      %p140 = scmp.eq.s32.totalorder %s30, 0
      %p141 = por %p139, %p140
      %s143 = sadd.s32 %s142, 1
      %p146 = scmp.eq.s32.totalorder %s24, 1
      %p147 = scmp.ne.s32.totalorder %s142, %s144
      %p148 = scmp.eq.s32.totalorder %s24, 0
      %p149 = por %p147, %p148
      %p150 = scmp.ne.s32.totalorder %s142, %s144
      %p151 = scmp.eq.s32.totalorder %s29, 1
      %p152 = por %p150, %p151
      %p153 = scmp.ne.s32.totalorder %s144, %s145
      %p154 = scmp.eq.s32.totalorder %s29, 0
      %p155 = por %p153, %p154
      %p156 = scmp.ne.s32.totalorder %s144, %s145
      %p157 = scmp.eq.s32.totalorder %s30, 1
      %p158 = por %p156, %p157
      %p160 = scmp.ne.s32.totalorder %s145, %s159
      %p161 = scmp.eq.s32.totalorder %s30, 0
      %p162 = por %p160, %p161
      %s164 = sadd.s32 %s163, 1
      %p167 = scmp.eq.s32.totalorder %s24, 1
      %p168 = scmp.ne.s32.totalorder %s163, %s165
      %p169 = scmp.eq.s32.totalorder %s24, 0
      %p170 = por %p168, %p169
      %p171 = scmp.ne.s32.totalorder %s163, %s165
      %p172 = scmp.eq.s32.totalorder %s29, 1
      %p173 = por %p171, %p172
      %p174 = scmp.ne.s32.totalorder %s165, %s166
      %p175 = scmp.eq.s32.totalorder %s29, 0
      %p176 = por %p174, %p175
      %p177 = scmp.ne.s32.totalorder %s165, %s166
      %p178 = scmp.eq.s32.totalorder %s30, 1
      %p179 = por %p177, %p178
      %p181 = scmp.ne.s32.totalorder %s166, %s180
      %p182 = scmp.eq.s32.totalorder %s30, 0
      %p183 = por %p181, %p182
      %s185 = sadd.s32 %s184, 1
      %p188 = scmp.eq.s32.totalorder %s24, 1
      %p189 = scmp.ne.s32.totalorder %s184, %s186
      %p190 = scmp.eq.s32.totalorder %s24, 0
      %p191 = por %p189, %p190
      %p192 = scmp.ne.s32.totalorder %s184, %s186
      %p193 = scmp.eq.s32.totalorder %s29, 1
      %p194 = por %p192, %p193
      %p195 = scmp.ne.s32.totalorder %s186, %s187
      %p196 = scmp.eq.s32.totalorder %s29, 0
      %p197 = por %p195, %p196
      %p198 = scmp.ne.s32.totalorder %s186, %s187
      %p199 = scmp.eq.s32.totalorder %s30, 1
      %p200 = por %p198, %p199
      %p202 = scmp.ne.s32.totalorder %s187, %s201
      %p203 = scmp.eq.s32.totalorder %s30, 0
      %p204 = por %p202, %p203
      %s206 = sadd.s32 %s205, 1
      %p209 = scmp.eq.s32.totalorder %s24, 1
      %p210 = scmp.ne.s32.totalorder %s205, %s207
      %p211 = scmp.eq.s32.totalorder %s24, 0
      %p212 = por %p210, %p211
      %p213 = scmp.ne.s32.totalorder %s205, %s207
      %p214 = scmp.eq.s32.totalorder %s29, 1
      %p215 = por %p213, %p214
      %p216 = scmp.ne.s32.totalorder %s207, %s208
      %p217 = scmp.eq.s32.totalorder %s29, 0
      %p218 = por %p216, %p217
      %p219 = scmp.ne.s32.totalorder %s207, %s208
      %p220 = scmp.eq.s32.totalorder %s30, 1
      %p221 = por %p219, %p220
      %p223 = scmp.ne.s32.totalorder %s208, %s222
      %p224 = scmp.eq.s32.totalorder %s30, 0
      %p225 = por %p223, %p224
      %s227 = sadd.s32 %s226, 1
      %p230 = scmp.eq.s32.totalorder %s24, 1
      %p231 = scmp.ne.s32.totalorder %s226, %s228
      %p232 = scmp.eq.s32.totalorder %s24, 0
      %p233 = por %p231, %p232
      %p234 = scmp.ne.s32.totalorder %s226, %s228
      %p235 = scmp.eq.s32.totalorder %s29, 1
      %p236 = por %p234, %p235
      %p237 = scmp.ne.s32.totalorder %s228, %s229
      %p238 = scmp.eq.s32.totalorder %s29, 0
      %p239 = por %p237, %p238
      %p240 = scmp.ne.s32.totalorder %s228, %s229
      %p241 = scmp.eq.s32.totalorder %s30, 1
      %p242 = por %p240, %p241
      %p244 = scmp.ne.s32.totalorder %s229, %s243
      %p245 = scmp.eq.s32.totalorder %s30, 0
      %p246 = por %p244, %p245
      %s248 = sadd.s32 %s247, 1
      %p251 = scmp.eq.s32.totalorder %s24, 1
      %p252 = scmp.ne.s32.totalorder %s247, %s249
      %p253 = scmp.eq.s32.totalorder %s24, 0
      %p254 = por %p252, %p253
      %p255 = scmp.ne.s32.totalorder %s247, %s249
      %p256 = scmp.eq.s32.totalorder %s29, 1
      %p257 = por %p255, %p256
      %p258 = scmp.ne.s32.totalorder %s249, %s250
      %p259 = scmp.eq.s32.totalorder %s29, 0
      %p260 = por %p258, %p259
      %p261 = scmp.ne.s32.totalorder %s249, %s250
      %p262 = scmp.eq.s32.totalorder %s30, 1
      %p263 = por %p261, %p262
      %p265 = scmp.ne.s32.totalorder %s250, %s264
      %p266 = scmp.eq.s32.totalorder %s30, 0
      %p267 = por %p265, %p266
      %s269 = sadd.s32 %s268, 1
      %p272 = scmp.eq.s32.totalorder %s24, 1
      %p273 = scmp.ne.s32.totalorder %s268, %s270
      %p274 = scmp.eq.s32.totalorder %s24, 0
      %p275 = por %p273, %p274
      %p276 = scmp.ne.s32.totalorder %s268, %s270
      %p277 = scmp.eq.s32.totalorder %s29, 1
      %p278 = por %p276, %p277
      %p279 = scmp.ne.s32.totalorder %s270, %s271
      %p280 = scmp.eq.s32.totalorder %s29, 0
      %p281 = por %p279, %p280
      %p282 = scmp.ne.s32.totalorder %s270, %s271
      %p283 = scmp.eq.s32.totalorder %s30, 1
      %p284 = por %p282, %p283
      %p286 = scmp.ne.s32.totalorder %s271, %s285
      %p287 = scmp.eq.s32.totalorder %s30, 0
      %p288 = por %p286, %p287
      %s289 = ssub.s32 %s24, %s31
      %p290 = scmp.eq.s32.totalorder %s289, 0
      %s292 = sadd.s32 %s291, 1
      %s293 = scalar_select %p290, %s291, %s292
      %p296 = pneg %p290
      %p297 = scmp.eq.s32.totalorder %s24, 1
      %p298 = por %p296, %p297
      %p299 = scmp.ne.s32.totalorder %s291, %s294
      %p300 = scmp.eq.s32.totalorder %s24, 0
      %p301 = por %p299, %p300
      %p302 = scmp.ne.s32.totalorder %s291, %s294
      %p303 = scmp.eq.s32.totalorder %s29, 1
      %p304 = por %p302, %p303
      %p305 = scmp.ne.s32.totalorder %s294, %s295
      %p306 = scmp.eq.s32.totalorder %s29, 0
      %p307 = por %p305, %p306
      %p308 = scmp.ne.s32.totalorder %s294, %s295
      %p309 = scmp.eq.s32.totalorder %s30, 1
      %p310 = por %p308, %p309
      %p312 = scmp.ne.s32.totalorder %s295, %s311
      %p313 = scmp.eq.s32.totalorder %s30, 0
      %p314 = por %p312, %p313
      %p315 = scmp.le.s32.totalorder 1, %s24
      %p316 = scmp.lt.s32.totalorder %s24, 3
      %p317 = pnand %p315, %p316
      %p318 = pneg %p317
      // Predicated region
      $region9: #{my_decoder.10} parent=5 // pred_check
        _
      $region10: #{my_decoder.10} parent=5 // pred_check_branch
        %320 = sbr.rel (%p317) target = $region12
      $region11: #{my_decoder.10} parent=5 // pred_region
        %s321 = ssub.s32 %s24, 1
        // Predicated region
        $region13: #{my_decoder.10} parent=11 // pred_check
          %p322 = pneg %p71
        $region14: #{my_decoder.10} parent=11 // pred_check_branch
          %324 = sbr.rel (%p322) target = $region16
        $region15: #{my_decoder.10} parent=11 // pred_region
          %326 = vsyncadd [#allocation3], 0
          %s328 = sshll.u32 %s1, 4
          %s329 = int_to_ptr.hbm [resolvable:$true] %s328
          %s330 = sshll.u32 [#allocation2], 4
          %s331 = int_to_ptr.vmem [resolvable:$true] %s330
          %333 = dma.hbm_to_vmem [thread:$0]  %s329, 128, %s331, [#allocation3]
        $region16: #{my_decoder.10} parent=11 // pred_fallthru
          _
        // Predicated region
        $region17: #{my_decoder.10} parent=11 // pred_check
          %p334 = pneg %p92
        $region18: #{my_decoder.10} parent=11 // pred_check_branch
          %336 = sbr.rel (%p334) target = $region20
        $region19: #{my_decoder.10} parent=11 // pred_region
          %338 = vsyncadd [#allocation5], 0
          %s340 = sshll.u32 %s2, 4
          %s341 = int_to_ptr.hbm [resolvable:$true] %s340
          %s342 = sshll.u32 [#allocation4], 4
          %s343 = int_to_ptr.vmem [resolvable:$true] %s342
          %345 = dma.hbm_to_vmem [thread:$0]  %s341, 16, %s343, [#allocation5]
        $region20: #{my_decoder.10} parent=11 // pred_fallthru
          _
        // Predicated region
        $region21: #{my_decoder.10} parent=11 // pred_check
          %p346 = pneg %p113
        $region22: #{my_decoder.10} parent=11 // pred_check_branch
          %348 = sbr.rel (%p346) target = $region24
        $region23: #{my_decoder.10} parent=11 // pred_region
          %350 = vsyncadd [#allocation5], 0
          %s352 = sshll.u32 %s3, 4
          %s353 = int_to_ptr.hbm [resolvable:$true] %s352
          %s354 = sshll.u32 [#allocation6], 4
          %s355 = int_to_ptr.vmem [resolvable:$true] %s354
          %357 = dma.hbm_to_vmem [thread:$0]  %s353, 16, %s355, [#allocation5]
        $region24: #{my_decoder.10} parent=11 // pred_fallthru
          _
        // Predicated region
        $region25: #{my_decoder.10} parent=11 // pred_check
          %p358 = pneg %p134
        $region26: #{my_decoder.10} parent=11 // pred_check_branch
          %360 = sbr.rel (%p358) target = $region28
        $region27: #{my_decoder.10} parent=11 // pred_region
          _
        $region28: #{my_decoder.10} parent=11 // pred_fallthru
          _
        // Predicated region
        $region29: #{my_decoder.10} parent=11 // pred_check
          %p361 = pneg %p155
        $region30: #{my_decoder.10} parent=11 // pred_check_branch
          %363 = sbr.rel (%p361) target = $region32
        $region31: #{my_decoder.10} parent=11 // pred_region
          %365 = vsyncadd [#allocation8], 0
          %s367 = sshll.u32 %s5, 4
          %s368 = int_to_ptr.hbm [resolvable:$true] %s367
          %s369 = sshll.u32 [#allocation7], 4
          %s370 = int_to_ptr.vmem [resolvable:$true] %s369
          %372 = dma.hbm_to_vmem [thread:$0]  %s368, 16, %s370, [#allocation8]
        $region32: #{my_decoder.10} parent=11 // pred_fallthru
          _
        // Predicated region
        $region33: #{my_decoder.10} parent=11 // pred_check
          %p373 = pneg %p176
        $region34: #{my_decoder.10} parent=11 // pred_check_branch
          %375 = sbr.rel (%p373) target = $region36
        $region35: #{my_decoder.10} parent=11 // pred_region
          %377 = vsyncadd [#allocation8], 0
          %s378 = sshll.u32 %s6, 4
          %s379 = int_to_ptr.hbm [resolvable:$true] %s378
          %s380 = sshll.u32 [#allocation9], 4
          %s381 = int_to_ptr.vmem [resolvable:$true] %s380
          %386 = dma.hbm_to_vmem [thread:$0]  %s379, 512, %s381, [#allocation8], 128, 128, 8
        $region36: #{my_decoder.10} parent=11 // pred_fallthru
          _
        // Predicated region
        $region37: #{my_decoder.10} parent=11 // pred_check
          %p387 = pneg %p197
        $region38: #{my_decoder.10} parent=11 // pred_check_branch
          %389 = sbr.rel (%p387) target = $region40
        $region39: #{my_decoder.10} parent=11 // pred_region
          %391 = vsyncadd [#allocation11], 0
          %s393 = sshll.u32 %s7, 4
          %s394 = int_to_ptr.hbm [resolvable:$true] %s393
          %s395 = sshll.u32 [#allocation10], 4
          %s396 = int_to_ptr.vmem [resolvable:$true] %s395
          %398 = dma.hbm_to_vmem [thread:$0]  %s394, 16, %s396, [#allocation11]
        $region40: #{my_decoder.10} parent=11 // pred_fallthru
          _
        // Predicated region
        $region41: #{my_decoder.10} parent=11 // pred_check
          %p399 = pneg %p218
        $region42: #{my_decoder.10} parent=11 // pred_check_branch
          %401 = sbr.rel (%p399) target = $region44
        $region43: #{my_decoder.10} parent=11 // pred_region
          %403 = vsyncadd [#allocation11], 0
          %s404 = sshll.u32 %s8, 4
          %s405 = int_to_ptr.hbm [resolvable:$true] %s404
          %s406 = sshll.u32 [#allocation12], 4
          %s407 = int_to_ptr.vmem [resolvable:$true] %s406
          %412 = dma.hbm_to_vmem [thread:$0]  %s405, 512, %s407, [#allocation11], 128, 128, 8
        $region44: #{my_decoder.10} parent=11 // pred_fallthru
          _
        // Predicated region
        $region45: #{my_decoder.10} parent=11 // pred_check
          %p413 = pneg %p239
        $region46: #{my_decoder.10} parent=11 // pred_check_branch
          %415 = sbr.rel (%p413) target = $region48
        $region47: #{my_decoder.10} parent=11 // pred_region
          %417 = vsyncadd [#allocation14], 0
          %s419 = sshll.u32 %s9, 4
          %s420 = int_to_ptr.hbm [resolvable:$true] %s419
          %s421 = sshll.u32 [#allocation13], 4
          %s422 = int_to_ptr.vmem [resolvable:$true] %s421
          %424 = dma.hbm_to_vmem [thread:$0]  %s420, 16, %s422, [#allocation14]
        $region48: #{my_decoder.10} parent=11 // pred_fallthru
          _
        // Predicated region
        $region49: #{my_decoder.10} parent=11 // pred_check
          %p425 = pneg %p260
        $region50: #{my_decoder.10} parent=11 // pred_check_branch
          %427 = sbr.rel (%p425) target = $region52
        $region51: #{my_decoder.10} parent=11 // pred_region
          %429 = vsyncadd [#allocation14], 0
          %s430 = sshll.u32 %s10, 4
          %s431 = int_to_ptr.hbm [resolvable:$true] %s430
          %s432 = sshll.u32 [#allocation15], 4
          %s433 = int_to_ptr.vmem [resolvable:$true] %s432
          %438 = dma.hbm_to_vmem [thread:$0]  %s431, 512, %s433, [#allocation14], 128, 128, 8
        $region52: #{my_decoder.10} parent=11 // pred_fallthru
          _
        // Predicated region
        $region53: #{my_decoder.10} parent=11 // pred_check
          %p439 = pneg %p281
        $region54: #{my_decoder.10} parent=11 // pred_check_branch
          %441 = sbr.rel (%p439) target = $region56
        $region55: #{my_decoder.10} parent=11 // pred_region
          %443 = vsyncadd [#allocation17], 0
          %s445 = sshll.u32 %s11, 4
          %s446 = int_to_ptr.hbm [resolvable:$true] %s445
          %s447 = sshll.u32 [#allocation16], 4
          %s448 = int_to_ptr.vmem [resolvable:$true] %s447
          %450 = dma.hbm_to_vmem [thread:$0]  %s446, 16, %s448, [#allocation17]
        $region56: #{my_decoder.10} parent=11 // pred_fallthru
          _
      $region12: #{my_decoder.10} parent=5 // pred_fallthru
        _
      %p451 = scmp.lt.s32.totalorder %s24, 2
      // Predicated region
      $region57: #{my_decoder.10} parent=5 // pred_check
        %p452 = pneg %p451
      $region58: #{my_decoder.10} parent=5 // pred_check_branch
        %454 = sbr.rel (%p452) target = $region60
      $region59: #{my_decoder.10} parent=5 // pred_region
        // Predicated region
        $region61: #{my_decoder.10} parent=59 // pred_check
          %p455 = pneg %p44
        $region62: #{my_decoder.10} parent=59 // pred_check_branch
          %457 = sbr.rel (%p455) target = $region64
        $region63: #{my_decoder.10} parent=59 // pred_region
          %p458 = scmp.lt.s32.totalorder %s24, 1
          %s459 = scalar_select %p458, %s24, 1
          %s460 = smul.addr %s459, 8
          %s461 = scalar_lea.vmem %s0, %s460
        $region64: #{my_decoder.10} parent=59 // pred_fallthru
          _
      $region60: #{my_decoder.10} parent=5 // pred_fallthru
        _
      %p462 = scmp.le.s32.totalorder 1, %s24
      %p463 = scmp.lt.s32.totalorder %s24, 3
      %p464 = pnand %p462, %p463
      %p465 = pneg %p464
      // Predicated region
      $region65: #{my_decoder.10} parent=5 // pred_check
        _
      $region66: #{my_decoder.10} parent=5 // pred_check_branch
        %467 = sbr.rel (%p464) target = $region68
      $region67: #{my_decoder.10} parent=5 // pred_region
        %s468 = ssub.s32 %s24, 1
        // Predicated region
        $region69: #{my_decoder.10} parent=67 // pred_check
          %p469 = pneg %p71
        $region70: #{my_decoder.10} parent=67 // pred_check_branch
          %471 = sbr.rel (%p469) target = $region72
        $region71: #{my_decoder.10} parent=67 // pred_region
          %473 = dma.done [#allocation3], 128
        $region72: #{my_decoder.10} parent=67 // pred_fallthru
          _
        // Predicated region
        $region73: #{my_decoder.10} parent=67 // pred_check
          %p474 = pneg %p92
        $region74: #{my_decoder.10} parent=67 // pred_check_branch
          %476 = sbr.rel (%p474) target = $region76
        $region75: #{my_decoder.10} parent=67 // pred_region
          %478 = dma.done [#allocation5], 16
        $region76: #{my_decoder.10} parent=67 // pred_fallthru
          _
        // Predicated region
        $region77: #{my_decoder.10} parent=67 // pred_check
          %p479 = pneg %p113
        $region78: #{my_decoder.10} parent=67 // pred_check_branch
          %481 = sbr.rel (%p479) target = $region80
        $region79: #{my_decoder.10} parent=67 // pred_region
          %483 = dma.done [#allocation5], 16
        $region80: #{my_decoder.10} parent=67 // pred_fallthru
          _
        // Predicated region
        $region81: #{my_decoder.10} parent=67 // pred_check
          %p484 = pneg %p155
        $region82: #{my_decoder.10} parent=67 // pred_check_branch
          %486 = sbr.rel (%p484) target = $region84
        $region83: #{my_decoder.10} parent=67 // pred_region
          %488 = dma.done [#allocation8], 16
        $region84: #{my_decoder.10} parent=67 // pred_fallthru
          _
        // Predicated region
        $region85: #{my_decoder.10} parent=67 // pred_check
          %p489 = pneg %p176
        $region86: #{my_decoder.10} parent=67 // pred_check_branch
          %491 = sbr.rel (%p489) target = $region88
        $region87: #{my_decoder.10} parent=67 // pred_region
          %493 = dma.done [#allocation8], 512
        $region88: #{my_decoder.10} parent=67 // pred_fallthru
          _
        // Predicated region
        $region89: #{my_decoder.10} parent=67 // pred_check
          %p494 = pneg %p197
        $region90: #{my_decoder.10} parent=67 // pred_check_branch
          %496 = sbr.rel (%p494) target = $region92
        $region91: #{my_decoder.10} parent=67 // pred_region
          %498 = dma.done [#allocation11], 16
        $region92: #{my_decoder.10} parent=67 // pred_fallthru
          _
        // Predicated region
        $region93: #{my_decoder.10} parent=67 // pred_check
          %p499 = pneg %p218
        $region94: #{my_decoder.10} parent=67 // pred_check_branch
          %501 = sbr.rel (%p499) target = $region96
        $region95: #{my_decoder.10} parent=67 // pred_region
          %503 = dma.done [#allocation11], 512
        $region96: #{my_decoder.10} parent=67 // pred_fallthru
          _
        // Predicated region
        $region97: #{my_decoder.10} parent=67 // pred_check
          %p504 = pneg %p239
        $region98: #{my_decoder.10} parent=67 // pred_check_branch
          %506 = sbr.rel (%p504) target = $region100
        $region99: #{my_decoder.10} parent=67 // pred_region
          %508 = dma.done [#allocation14], 16
        $region100: #{my_decoder.10} parent=67 // pred_fallthru
          _
        // Predicated region
        $region101: #{my_decoder.10} parent=67 // pred_check
          %p509 = pneg %p260
        $region102: #{my_decoder.10} parent=67 // pred_check_branch
          %511 = sbr.rel (%p509) target = $region104
        $region103: #{my_decoder.10} parent=67 // pred_region
          %513 = dma.done [#allocation14], 512
        $region104: #{my_decoder.10} parent=67 // pred_fallthru
          _
        // Predicated region
        $region105: #{my_decoder.10} parent=67 // pred_check
          %p514 = pneg %p281
        $region106: #{my_decoder.10} parent=67 // pred_check_branch
          %516 = sbr.rel (%p514) target = $region108
        $region107: #{my_decoder.10} parent=67 // pred_region
          %518 = dma.done [#allocation17], 16
        $region108: #{my_decoder.10} parent=67 // pred_fallthru
          _
        %p519 = scmp.lt.s32.totalorder %s29, 1
        %s520 = scalar_select %p519, %s29, 1
        %s521 = smul.addr %s520, 8
        %s522 = scalar_lea.vmem %s0, %s521
        %p523 = pneg %p50
        %p524 = pneg %p47
        %p525 = pneg %p71
        %p526 = pneg %p68
        %p527 = pneg %p92
        %p528 = pneg %p89
        %p529 = pneg %p113
        %p530 = pneg %p110
        %p531 = pneg %p134
        %p532 = pneg %p131
        %p533 = pneg %p155
        %p534 = pneg %p152
        %p535 = pneg %p176
        %p536 = pneg %p173
        %p537 = pneg %p197
        %p538 = pneg %p194
        %p539 = pneg %p218
        %p540 = pneg %p215
        %p541 = pneg %p239
        %p542 = pneg %p236
        %p543 = pneg %p260
        %p544 = pneg %p257
        %p545 = pneg %p281
        %p546 = pneg %p278
        %p547 = pneg %p307
        %p548 = pneg %p304
        %p549 = scmp.lt.s32.totalorder %s29, 1
        %s550 = scalar_select %p549, %s29, 1
        %s551 = smul.addr %s550, 8
        %s552 = scalar_lea.vmem %s12, %s551
        %p553 = scmp.lt.s32.totalorder %s29, 1
        %s554 = scalar_select %p553, %s29, 1
        %s555 = smul.addr %s554, 8
        %s556 = scalar_lea.vmem %s0, %s555
        %p557 = scmp.lt.s32.totalorder %s29, 1
        %s558 = scalar_select %p557, %s29, 1
        %s559 = smul.addr %s558, 8
        %s560 = scalar_lea.vmem %s12, %s559
        %v561 = vld [vmem:[%s556] sm:$0xff]
        %v562 = vld [vmem:[#allocation4] sm:$0x1]
        %v563 = vld [vmem:[#allocation6] sm:$0x1]
        %vm564 = vcmask 261120
        %v565 = vsel %vm564, %v561, 0.0
        %566 = vadd.xlane.f32.xlu0 %v565
        %v567 = vpop.xlane.xlu0 %566
        %v568 = vrcp.pop 32.0
        %v569 = vmul.f32 32.0, %v568
        %v570 = vsub.f32 1.0, %v569
        %v571 = vmul.f32 %v568, %v570
        %v572 = vadd.f32 %v568, %v571
        %vm573 = vweird.f32 %v568
        %v574 = vsel %vm573, %v568, %v572
        %v575 = vmul.f32 %v567, %v574
        %v576 = vsub.f32 %v561, %v575
        %v577 = vmul.f32 %v576, %v576
        %v578 = vsel %vm564, %v577, 0.0
        %579 = vadd.xlane.f32.xlu0 %v578
        %v580 = vpop.xlane.xlu0 %579
        %v581 = vmul.f32 %v580, 0.032258064
        %v582 = vrsqrt.pop %v581
        %v583 = vmul.f32 %v582, %v581
        %v584 = vmul.f32 %v583, %v582
        %v585 = vmul.f32 0.5, %v584
        %v586 = vsub.f32 1.5, %v585
        %v587 = vmul.f32 %v582, %v586
        %v588 = vmul.f32 %v581, %v587
        %vm589 = vcmp.eq.f32.partialorder %v581, inf
        %v590 = vsel %vm589, %v581, %v588
        %vm591 = vcmp.eq.f32.partialorder %v581, 0.0
        %v592 = vand.u32 %v581, 2147483648
        %v593 = vsel %vm591, %v592, %v590
        %v594 = vadd.f32 %v593, 1e-06
        %v595 = vrcp.pop %v594
        %v597 = vperm.slane %v562, 0
        %v599 = vmul.f32 %v597, %v576
        %v600 = vmul.f32 %v599, %v595
        %v602 = vperm.slane %v563, 0
        %v604 = vadd.f32 %v600, %v602
        %v605 = vld [vmem:[#allocation2] sm:$0xff]
        %v606 = vld [vmem:[%s4] sm:$0xff]
        %v607 = vld [vmem:[%s4 + $0x8] sm:$0xff]
        %v608 = vld [vmem:[%s4 + $0x10] sm:$0xff]
        %v609 = vld [vmem:[%s4 + $0x18] sm:$0xff]
        %v610 = vld [vmem:[#allocation7] sm:$0x1]
        %v611 = vld [vmem:[#allocation9] sm:$0xff]
        %v612 = vld [vmem:[#allocation9 + $0x8] sm:$0xff]
        %v613 = vld [vmem:[#allocation9 + $0x10] sm:$0xff]
        %v614 = vld [vmem:[#allocation9 + $0x18] sm:$0xff]
        %v615 = vld [vmem:[#allocation10] sm:$0x1]
        %v616 = vld [vmem:[#allocation12] sm:$0xff]
        %v617 = vld [vmem:[#allocation12 + $0x8] sm:$0xff]
        %v618 = vld [vmem:[#allocation12 + $0x10] sm:$0xff]
        %v619 = vld [vmem:[#allocation12 + $0x18] sm:$0xff]
        %v620 = vld [vmem:[#allocation13] sm:$0x1]
        %v621 = vld [vmem:[#allocation15] sm:$0xff]
        %v622 = vld [vmem:[#allocation15 + $0x8] sm:$0xff]
        %v623 = vld [vmem:[#allocation15 + $0x10] sm:$0xff]
        %v624 = vld [vmem:[#allocation15 + $0x18] sm:$0xff]
        %v625 = vld [vmem:[#allocation16] sm:$0x1]
        %v627 = vperm.slane %v610, 0
        %v630 = vsel %vm564, %v604, 0
        %632 = vmatpush.msra.mxu0 0.0
        %633 = vmatpush.msra.mxu0 0.0
        %634 = vmatpush.msra.mxu0 0.0
        %635 = vmatpush.msra.mxu0 0.0
        %636 = vmatpush.msra.mxu0 0.0
        %637 = vmatpush.msra.mxu0 0.0
        %638 = vmatpush.msra.mxu0 0.0
        %639 = vmatpush.msra.mxu0 0.0
        %640 = vmatpush.msra.mxu0 0.0
        %641 = vmatpush.msra.mxu0 0.0
        %642 = vmatpush.msra.mxu0 0.0
        %643 = vmatpush.msra.mxu0 0.0
        %644 = vmatpush.msra.mxu0 %v609
        %645 = vmatpush.msra.mxu0 %v608
        %646 = vmatpush.msra.mxu0 %v607
        %647 = vmatpush.msra.mxu0 %v606
        %648 = vmatmul.f32.gmra.mxu0 %v630
        %v649 = vpop.f32.mrf.mxu0
        %v650 = vadd.f32 %v627, %v649
        %651 = vdwg.mxu0
        %v653 = vperm.slane %v615, 0
        %655 = vmatpush.msra.mxu0 0.0
        %656 = vmatpush.msra.mxu0 0.0
        %657 = vmatpush.msra.mxu0 0.0
        %658 = vmatpush.msra.mxu0 0.0
        %659 = vmatpush.msra.mxu0 0.0
        %660 = vmatpush.msra.mxu0 0.0
        %661 = vmatpush.msra.mxu0 0.0
        %662 = vmatpush.msra.mxu0 0.0
        %663 = vmatpush.msra.mxu0 0.0
        %664 = vmatpush.msra.mxu0 0.0
        %665 = vmatpush.msra.mxu0 0.0
        %666 = vmatpush.msra.mxu0 0.0
        %667 = vmatpush.msra.mxu0 %v614
        %668 = vmatpush.msra.mxu0 %v613
        %669 = vmatpush.msra.mxu0 %v612
        %670 = vmatpush.msra.mxu0 %v611
        %671 = vmatmul.f32.gmra.mxu0 %v630
        %v672 = vpop.f32.mrf.mxu0
        %v673 = vadd.f32 %v653, %v672
        %674 = vdwg.mxu0
        %v676 = vperm.slane %v620, 0
        %678 = vmatpush.msra.mxu0 0.0
        %679 = vmatpush.msra.mxu0 0.0
        %680 = vmatpush.msra.mxu0 0.0
        %681 = vmatpush.msra.mxu0 0.0
        %682 = vmatpush.msra.mxu0 0.0
        %683 = vmatpush.msra.mxu0 0.0
        %684 = vmatpush.msra.mxu0 0.0
        %685 = vmatpush.msra.mxu0 0.0
        %686 = vmatpush.msra.mxu0 0.0
        %687 = vmatpush.msra.mxu0 0.0
        %688 = vmatpush.msra.mxu0 0.0
        %689 = vmatpush.msra.mxu0 0.0
        %690 = vmatpush.msra.mxu0 %v619
        %691 = vmatpush.msra.mxu0 %v618
        %692 = vmatpush.msra.mxu0 %v617
        %693 = vmatpush.msra.mxu0 %v616
        %694 = vmatmul.f32.gmra.mxu0 %v630
        %v695 = vpop.f32.mrf.mxu0
        %v696 = vadd.f32 %v676, %v695
        %697 = vdwg.mxu0
        %vm698 = vcmask 64512
        %v700 = vsel %vm698, %v650, 0
        %v703 = vsel %vm698, %v673, 0
        %705 = vmatpush.xpose.msra.mxu0 0.0
        %706 = vmatpush.xpose.msra.mxu0 0.0
        %707 = vmatpush.xpose.msra.mxu0 0.0
        %708 = vmatpush.xpose.msra.mxu0 0.0
        %709 = vmatpush.xpose.msra.mxu0 0.0
        %710 = vmatpush.xpose.msra.mxu0 0.0
        %711 = vmatpush.xpose.msra.mxu0 0.0
        %712 = vmatpush.xpose.msra.mxu0 0.0
        %713 = vmatpush.xpose.msra.mxu0 0.0
        %714 = vmatpush.xpose.msra.mxu0 0.0
        %715 = vmatpush.xpose.msra.mxu0 0.0
        %716 = vmatpush.xpose.msra.mxu0 0.0
        %717 = vmatpush.xpose.msra.mxu0 0.0
        %718 = vmatpush.xpose.msra.mxu0 0.0
        %719 = vmatpush.xpose.msra.mxu0 0.0
        %720 = vmatpush.xpose.msra.mxu0 %v703
        %721 = vmatmul.f32.gmra.mxu0 %v700
        %v722 = vpop.f32.mrf.mxu0
        %v723 = vadd.f32 0.0, %v722
        %724 = vdwg.mxu0
        %v725 = vmul.f32 %v723, 0.35355338
        %vm726 = vcmp.eq.f32.partialorder %v605, 0.0
        %v727 = vsel %vm726, -1e+09, %v725
        %v728 = vsel %vm698, %v727, -inf
        %729 = vmax.xlane.f32.xlu0 %v728
        %v730 = vpop.xlane.xlu0 %729
        %v731 = vsub.f32 %v727, %v730
        %v732 = vmul.f32 %v731, 1.442695
        %v733 = vpow.pop %v732
        %v734 = vsel %vm698, %v733, 0.0
        %735 = vadd.xlane.f32.xlu0 %v734
        %v736 = vpop.xlane.xlu0 %735
        %v737 = vrcp.pop %v736
        %v738 = vmul.f32 %v733, %v737
        %v740 = vsel %vm698, %v738, 0
        %742 = vmatpush.msra.mxu0 0.0
        %743 = vmatpush.msra.mxu0 0.0
        %744 = vmatpush.msra.mxu0 0.0
        %745 = vmatpush.msra.mxu0 0.0
        %746 = vmatpush.msra.mxu0 0.0
        %747 = vmatpush.msra.mxu0 0.0
        %748 = vmatpush.msra.mxu0 0.0
        %749 = vmatpush.msra.mxu0 0.0
        %750 = vmatpush.msra.mxu0 0.0
        %751 = vmatpush.msra.mxu0 0.0
        %752 = vmatpush.msra.mxu0 0.0
        %753 = vmatpush.msra.mxu0 0.0
        %754 = vmatpush.msra.mxu0 0.0
        %755 = vmatpush.msra.mxu0 0.0
        %756 = vmatpush.msra.mxu0 0.0
        %757 = vmatpush.msra.mxu0 %v696
        %758 = vmatmul.f32.gmra.mxu0 %v740
        %v759 = vpop.f32.mrf.mxu0
        %v760 = vadd.f32 0.0, %v759
        %761 = vdwg.mxu0
        %762 = vrot.lane.b32.xlu0 %v650, 120
        %v763 = vpop.permute.xlu0 %762
        %764 = vrot.lane.b32.xlu0 %v673, 120
        %v765 = vpop.permute.xlu0 %764
        %v766 = vsel %vm698, %v763, 0
        %v768 = vsel %vm698, %v765, 0
        %770 = vmatpush.xpose.msra.mxu0 0.0
        %771 = vmatpush.xpose.msra.mxu0 0.0
        %772 = vmatpush.xpose.msra.mxu0 0.0
        %773 = vmatpush.xpose.msra.mxu0 0.0
        %774 = vmatpush.xpose.msra.mxu0 0.0
        %775 = vmatpush.xpose.msra.mxu0 0.0
        %776 = vmatpush.xpose.msra.mxu0 0.0
        %777 = vmatpush.xpose.msra.mxu0 0.0
        %778 = vmatpush.xpose.msra.mxu0 0.0
        %779 = vmatpush.xpose.msra.mxu0 0.0
        %780 = vmatpush.xpose.msra.mxu0 0.0
        %781 = vmatpush.xpose.msra.mxu0 0.0
        %782 = vmatpush.xpose.msra.mxu0 0.0
        %783 = vmatpush.xpose.msra.mxu0 0.0
        %784 = vmatpush.xpose.msra.mxu0 0.0
        %785 = vmatpush.xpose.msra.mxu0 %v768
        %786 = vmatmul.f32.gmra.mxu0 %v766
        %v787 = vpop.f32.mrf.mxu0
        %v788 = vadd.f32 0.0, %v787
        %789 = vdwg.mxu0
        %v790 = vmul.f32 %v788, 0.35355338
        %v791 = vsel %vm726, -1e+09, %v790
        %v792 = vsel %vm698, %v791, -inf
        %793 = vmax.xlane.f32.xlu0 %v792
        %v794 = vpop.xlane.xlu0 %793
        %v795 = vsub.f32 %v791, %v794
        %v796 = vmul.f32 %v795, 1.442695
        %v797 = vpow.pop %v796
        %v798 = vsel %vm698, %v797, 0.0
        %799 = vadd.xlane.f32.xlu0 %v798
        %v800 = vpop.xlane.xlu0 %799
        %v801 = vrcp.pop %v800
        %v802 = vmul.f32 %v797, %v801
        %804 = vrot.lane.b32.xlu0 %v696, 120
        %v805 = vpop.permute.xlu0 %804
        %v808 = vsel %vm698, %v802, 0
        %810 = vmatpush.msra.mxu0 0.0
        %811 = vmatpush.msra.mxu0 0.0
        %812 = vmatpush.msra.mxu0 0.0
        %813 = vmatpush.msra.mxu0 0.0
        %814 = vmatpush.msra.mxu0 0.0
        %815 = vmatpush.msra.mxu0 0.0
        %816 = vmatpush.msra.mxu0 0.0
        %817 = vmatpush.msra.mxu0 0.0
        %818 = vmatpush.msra.mxu0 0.0
        %819 = vmatpush.msra.mxu0 0.0
        %820 = vmatpush.msra.mxu0 0.0
        %821 = vmatpush.msra.mxu0 0.0
        %822 = vmatpush.msra.mxu0 0.0
        %823 = vmatpush.msra.mxu0 0.0
        %824 = vmatpush.msra.mxu0 0.0
        %825 = vmatpush.msra.mxu0 %v805
        %826 = vmatmul.f32.gmra.mxu0 %v808
        %v827 = vpop.f32.mrf.mxu0
        %v828 = vadd.f32 0.0, %v827
        %829 = vdwg.mxu0
        %v831 = vsel %vm698, %v828, 0
        %833 = vmatpush.msra.mxu0 0.0
        %834 = vmatpush.msra.mxu0 0.0
        %835 = vmatpush.msra.mxu0 0.0
        %836 = vmatpush.msra.mxu0 0.0
        %837 = vmatpush.msra.mxu0 0.0
        %838 = vmatpush.msra.mxu0 0.0
        %839 = vmatpush.msra.mxu0 0.0
        %840 = vmatpush.msra.mxu0 0.0
        %841 = vmatpush.msra.mxu0 0.0
        %842 = vmatpush.msra.mxu0 0.0
        %843 = vmatpush.msra.mxu0 0.0
        %844 = vmatpush.msra.mxu0 0.0
        %845 = vmatpush.msra.mxu0 0.0
        %846 = vmatpush.msra.mxu0 0.0
        %847 = vmatpush.msra.mxu0 0.0
        %848 = vmatpush.msra.mxu0 %v622
        %849 = vmatmul.f32.gmra.mxu0 %v831
        %v850 = vpop.f32.mrf.mxu0
        %v851 = vadd.f32 0.0, %v850
        %852 = vdwg.mxu0
        %v854 = vsel %vm698, %v760, 0
        %856 = vmatpush.msra.mxu0 0.0
        %857 = vmatpush.msra.mxu0 0.0
        %858 = vmatpush.msra.mxu0 0.0
        %859 = vmatpush.msra.mxu0 0.0
        %860 = vmatpush.msra.mxu0 0.0
        %861 = vmatpush.msra.mxu0 0.0
        %862 = vmatpush.msra.mxu0 0.0
        %863 = vmatpush.msra.mxu0 0.0
        %864 = vmatpush.msra.mxu0 0.0
        %865 = vmatpush.msra.mxu0 0.0
        %866 = vmatpush.msra.mxu0 0.0
        %867 = vmatpush.msra.mxu0 0.0
        %868 = vmatpush.msra.mxu0 0.0
        %869 = vmatpush.msra.mxu0 0.0
        %870 = vmatpush.msra.mxu0 0.0
        %871 = vmatpush.msra.mxu0 %v621
        %872 = vmatmul.f32.gmra.mxu0 %v854
        %v873 = vpop.f32.mrf.mxu0
        %v874 = vadd.f32 %v851, %v873
        %875 = vdwg.mxu0
        %876 = vrot.lane.b32.xlu0 %v650, 112
        %v877 = vpop.permute.xlu0 %876
        %878 = vrot.lane.b32.xlu0 %v673, 112
        %v879 = vpop.permute.xlu0 %878
        %v880 = vsel %vm698, %v877, 0
        %v882 = vsel %vm698, %v879, 0
        %884 = vmatpush.xpose.msra.mxu0 0.0
        %885 = vmatpush.xpose.msra.mxu0 0.0
        %886 = vmatpush.xpose.msra.mxu0 0.0
        %887 = vmatpush.xpose.msra.mxu0 0.0
        %888 = vmatpush.xpose.msra.mxu0 0.0
        %889 = vmatpush.xpose.msra.mxu0 0.0
        %890 = vmatpush.xpose.msra.mxu0 0.0
        %891 = vmatpush.xpose.msra.mxu0 0.0
        %892 = vmatpush.xpose.msra.mxu0 0.0
        %893 = vmatpush.xpose.msra.mxu0 0.0
        %894 = vmatpush.xpose.msra.mxu0 0.0
        %895 = vmatpush.xpose.msra.mxu0 0.0
        %896 = vmatpush.xpose.msra.mxu0 0.0
        %897 = vmatpush.xpose.msra.mxu0 0.0
        %898 = vmatpush.xpose.msra.mxu0 0.0
        %899 = vmatpush.xpose.msra.mxu0 %v882
        %900 = vmatmul.f32.gmra.mxu0 %v880
        %v901 = vpop.f32.mrf.mxu0
        %v902 = vadd.f32 0.0, %v901
        %903 = vdwg.mxu0
        %v904 = vmul.f32 %v902, 0.35355338
        %v905 = vsel %vm726, -1e+09, %v904
        %v906 = vsel %vm698, %v905, -inf
        %907 = vmax.xlane.f32.xlu0 %v906
        %v908 = vpop.xlane.xlu0 %907
        %v909 = vsub.f32 %v905, %v908
        %v910 = vmul.f32 %v909, 1.442695
        %v911 = vpow.pop %v910
        %v912 = vsel %vm698, %v911, 0.0
        %913 = vadd.xlane.f32.xlu0 %v912
        %v914 = vpop.xlane.xlu0 %913
        %v915 = vrcp.pop %v914
        %v916 = vmul.f32 %v911, %v915
        %917 = vrot.lane.b32.xlu0 %v696, 112
        %v918 = vpop.permute.xlu0 %917
        %v921 = vsel %vm698, %v916, 0
        %923 = vmatpush.msra.mxu0 0.0
        %924 = vmatpush.msra.mxu0 0.0
        %925 = vmatpush.msra.mxu0 0.0
        %926 = vmatpush.msra.mxu0 0.0
        %927 = vmatpush.msra.mxu0 0.0
        %928 = vmatpush.msra.mxu0 0.0
        %929 = vmatpush.msra.mxu0 0.0
        %930 = vmatpush.msra.mxu0 0.0
        %931 = vmatpush.msra.mxu0 0.0
        %932 = vmatpush.msra.mxu0 0.0
        %933 = vmatpush.msra.mxu0 0.0
        %934 = vmatpush.msra.mxu0 0.0
        %935 = vmatpush.msra.mxu0 0.0
        %936 = vmatpush.msra.mxu0 0.0
        %937 = vmatpush.msra.mxu0 0.0
        %938 = vmatpush.msra.mxu0 %v918
        %939 = vmatmul.f32.gmra.mxu0 %v921
        %v940 = vpop.f32.mrf.mxu0
        %v941 = vadd.f32 0.0, %v940
        %942 = vdwg.mxu0
        %v944 = vsel %vm698, %v941, 0
        %946 = vmatpush.msra.mxu0 0.0
        %947 = vmatpush.msra.mxu0 0.0
        %948 = vmatpush.msra.mxu0 0.0
        %949 = vmatpush.msra.mxu0 0.0
        %950 = vmatpush.msra.mxu0 0.0
        %951 = vmatpush.msra.mxu0 0.0
        %952 = vmatpush.msra.mxu0 0.0
        %953 = vmatpush.msra.mxu0 0.0
        %954 = vmatpush.msra.mxu0 0.0
        %955 = vmatpush.msra.mxu0 0.0
        %956 = vmatpush.msra.mxu0 0.0
        %957 = vmatpush.msra.mxu0 0.0
        %958 = vmatpush.msra.mxu0 0.0
        %959 = vmatpush.msra.mxu0 0.0
        %960 = vmatpush.msra.mxu0 0.0
        %961 = vmatpush.msra.mxu0 %v623
        %962 = vmatmul.f32.gmra.mxu0 %v944
        %v963 = vpop.f32.mrf.mxu0
        %v964 = vadd.f32 0.0, %v963
        %965 = vdwg.mxu0
        %v966 = vadd.f32 %v874, %v964
        %967 = vrot.lane.b32.xlu0 %v650, 104
        %v968 = vpop.permute.xlu0 %967
        %969 = vrot.lane.b32.xlu0 %v673, 104
        %v970 = vpop.permute.xlu0 %969
        %v971 = vsel %vm698, %v968, 0
        %v973 = vsel %vm698, %v970, 0
        %975 = vmatpush.xpose.msra.mxu0 0.0
        %976 = vmatpush.xpose.msra.mxu0 0.0
        %977 = vmatpush.xpose.msra.mxu0 0.0
        %978 = vmatpush.xpose.msra.mxu0 0.0
        %979 = vmatpush.xpose.msra.mxu0 0.0
        %980 = vmatpush.xpose.msra.mxu0 0.0
        %981 = vmatpush.xpose.msra.mxu0 0.0
        %982 = vmatpush.xpose.msra.mxu0 0.0
        %983 = vmatpush.xpose.msra.mxu0 0.0
        %984 = vmatpush.xpose.msra.mxu0 0.0
        %985 = vmatpush.xpose.msra.mxu0 0.0
        %986 = vmatpush.xpose.msra.mxu0 0.0
        %987 = vmatpush.xpose.msra.mxu0 0.0
        %988 = vmatpush.xpose.msra.mxu0 0.0
        %989 = vmatpush.xpose.msra.mxu0 0.0
        %990 = vmatpush.xpose.msra.mxu0 %v973
        %991 = vmatmul.f32.gmra.mxu0 %v971
        %v992 = vpop.f32.mrf.mxu0
        %v993 = vadd.f32 0.0, %v992
        %994 = vdwg.mxu0
        %v995 = vmul.f32 %v993, 0.35355338
        %v996 = vsel %vm726, -1e+09, %v995
        %v997 = vsel %vm698, %v996, -inf
        %998 = vmax.xlane.f32.xlu0 %v997
        %v999 = vpop.xlane.xlu0 %998
        %v1000 = vsub.f32 %v996, %v999
        %v1001 = vmul.f32 %v1000, 1.442695
        %v1002 = vpow.pop %v1001
        %v1003 = vsel %vm698, %v1002, 0.0
        %1004 = vadd.xlane.f32.xlu0 %v1003
        %v1005 = vpop.xlane.xlu0 %1004
        %v1006 = vrcp.pop %v1005
        %v1007 = vmul.f32 %v1002, %v1006
        %1008 = vrot.lane.b32.xlu0 %v696, 104
        %v1009 = vpop.permute.xlu0 %1008
        %v1012 = vsel %vm698, %v1007, 0
        %1014 = vmatpush.msra.mxu0 0.0
        %1015 = vmatpush.msra.mxu0 0.0
        %1016 = vmatpush.msra.mxu0 0.0
        %1017 = vmatpush.msra.mxu0 0.0
        %1018 = vmatpush.msra.mxu0 0.0
        %1019 = vmatpush.msra.mxu0 0.0
        %1020 = vmatpush.msra.mxu0 0.0
        %1021 = vmatpush.msra.mxu0 0.0
        %1022 = vmatpush.msra.mxu0 0.0
        %1023 = vmatpush.msra.mxu0 0.0
        %1024 = vmatpush.msra.mxu0 0.0
        %1025 = vmatpush.msra.mxu0 0.0
        %1026 = vmatpush.msra.mxu0 0.0
        %1027 = vmatpush.msra.mxu0 0.0
        %1028 = vmatpush.msra.mxu0 0.0
        %1029 = vmatpush.msra.mxu0 %v1009
        %1030 = vmatmul.f32.gmra.mxu0 %v1012
        %v1031 = vpop.f32.mrf.mxu0
        %v1032 = vadd.f32 0.0, %v1031
        %1033 = vdwg.mxu0
        %v1035 = vsel %vm698, %v1032, 0
        %1037 = vmatpush.msra.mxu0 0.0
        %1038 = vmatpush.msra.mxu0 0.0
        %1039 = vmatpush.msra.mxu0 0.0
        %1040 = vmatpush.msra.mxu0 0.0
        %1041 = vmatpush.msra.mxu0 0.0
        %1042 = vmatpush.msra.mxu0 0.0
        %1043 = vmatpush.msra.mxu0 0.0
        %1044 = vmatpush.msra.mxu0 0.0
        %1045 = vmatpush.msra.mxu0 0.0
        %1046 = vmatpush.msra.mxu0 0.0
        %1047 = vmatpush.msra.mxu0 0.0
        %1048 = vmatpush.msra.mxu0 0.0
        %1049 = vmatpush.msra.mxu0 0.0
        %1050 = vmatpush.msra.mxu0 0.0
        %1051 = vmatpush.msra.mxu0 0.0
        %1052 = vmatpush.msra.mxu0 %v624
        %1053 = vmatmul.f32.gmra.mxu0 %v1035
        %v1054 = vpop.f32.mrf.mxu0
        %v1055 = vadd.f32 0.0, %v1054
        %1056 = vdwg.mxu0
        %v1057 = vadd.f32 %v966, %v1055
        %v1059 = vperm.slane %v625, 0
        %v1061 = vadd.f32 %v1057, %v1059
        %v1062 = vadd.f32 %v561, %v1061
        %1063 = vst.msk [vmem:[%s560] sm:$0xff] %vm564, %v1062
        %p1064 = scmp.lt.s32.totalorder %s29, 1
        %s1065 = scalar_select %p1064, %s29, 1
        %s1066 = smul.addr %s1065, 8
        %s1067 = scalar_lea.vmem %s12, %s1066
        // Predicated region
        $region109: #{my_decoder.10} parent=67 // pred_check
          %p1068 = pneg %p304
        $region110: #{my_decoder.10} parent=67 // pred_check_branch
          %1070 = sbr.rel (%p1068) target = $region112
        $region111: #{my_decoder.10} parent=67 // pred_region
          _
        $region112: #{my_decoder.10} parent=67 // pred_fallthru
          _
      $region68: #{my_decoder.10} parent=5 // pred_fallthru
        _
      %p1071 = scmp.le.s32.totalorder 2, %s24
      // Predicated region
      $region113: #{my_decoder.10} parent=5 // pred_check
        %p1072 = pneg %p1071
      $region114: #{my_decoder.10} parent=5 // pred_check_branch
        %1074 = sbr.rel (%p1072) target = $region116
      $region115: #{my_decoder.10} parent=5 // pred_region
        %s1075 = ssub.s32 %s24, 2
        // Predicated region
        $region117: #{my_decoder.10} parent=115 // pred_check
          %p1076 = pneg %p310
        $region118: #{my_decoder.10} parent=115 // pred_check_branch
          %1078 = sbr.rel (%p1076) target = $region120
        $region119: #{my_decoder.10} parent=115 // pred_region
          %p1079 = scmp.lt.s32.totalorder %s30, 1
          %s1080 = scalar_select %p1079, %s30, 1
          %s1081 = smul.addr %s1080, 8
          %s1082 = scalar_lea.vmem %s12, %s1081
        $region120: #{my_decoder.10} parent=115 // pred_fallthru
          _
      $region116: #{my_decoder.10} parent=5 // pred_fallthru
        _
    $region6: #{my_decoder.10} parent=1 // loop_footer
      %s28 = sadd.s32 1, %s24
    $region7: #{my_decoder.10} parent=1 // loop_footer_branch
      %23 = sbr.rel target = $region3
    $region8: #{my_decoder.10} parent=1 // loop_exit
      _
    %1083 = vsyncpa [#allocation3], 1
    %s1084 = scalar_lea.sflag [#allocation3], 1
    %1085 = vsyncpa %s1084, 1
    %1086 = vsyncpa [#allocation5], 1
    %1087 = vsyncpa [#allocation8], 1
    %1088 = vsyncpa [#allocation11], 1
    %1089 = vsyncpa [#allocation14], 1
    %1090 = vsyncpa [#allocation17], 1

// kernel: my_decoder.11
$region0: #{my_decoder.11}
  #allocation0 [shape = 'u32[]', space=smem, size = 0x4, offset = 0x4, fixed_abs, tag = 'smem constant byte address 0x4 - core index']
  #allocation1 [shape = 'u32[72,128]{1,0:T(1,128)}', space=vmem, size = 0x9000, scoped, tag = 'internal scratch']
  %s0 = inlined_call_operand.vmem [shape: f32[2,8,32], index: 0, kind: input, shape index: {}, may-alias: {0,13}]
  %s1 = inlined_call_operand.hbm [shape: f32[2,8,32], index: 1, kind: input, shape index: {}]
  %s2 = inlined_call_operand.vmem [shape: f32[2,1,8], index: 2, kind: input, shape index: {}]
  %s3 = inlined_call_operand.vmem [shape: f32[1,32], index: 3, kind: input, shape index: {}]
  %s4 = inlined_call_operand.hbm [shape: f32[1,32], index: 4, kind: input, shape index: {}]
  %s5 = inlined_call_operand.hbm [shape: f32[32,32], index: 5, kind: input, shape index: {}]
  %s6 = inlined_call_operand.hbm [shape: f32[1,32], index: 6, kind: input, shape index: {}]
  %s7 = inlined_call_operand.hbm [shape: f32[32,32], index: 7, kind: input, shape index: {}]
  %s8 = inlined_call_operand.hbm [shape: f32[1,32], index: 8, kind: input, shape index: {}]
  %s9 = inlined_call_operand.vmem [shape: f32[32,32], index: 9, kind: input, shape index: {}]
  %s10 = inlined_call_operand.hbm [shape: f32[1,32], index: 10, kind: input, shape index: {}]
  %s11 = inlined_call_operand.hbm [shape: f32[32,32], index: 11, kind: input, shape index: {}]
  %s12 = inlined_call_operand.hbm [shape: f32[1,32], index: 12, kind: input, shape index: {}]
  %s13 = inlined_call_operand.vmem [shape: f32[2,8,32], index: 13, kind: output, shape index: {}, may-alias: {0,13}]
  %s14 = sld [smem:[#allocation0]]
  $region121: #{my_decoder.11} parent=0
    _
  %s16 = ssub.s32 1, %s14
  %s17 = scalar_select 0, %s16, %s14
  $region1: #{my_decoder.11} parent=0
    #allocation2 [shape = 'u8[8192]{0}', space=vmem, size = 0x2000, scoped, tag = 'input window, operand 1']
    #allocation3 [shape = 's32[2]{0}', space=sflag, size = 0x8, scoped, tag = 'scoped memory for my_decoder.11']
    #allocation4 [shape = 'u8[512]{0}', space=vmem, size = 0x400, scoped, tag = 'input window, operand 4, single buffered']
    #allocation5 [shape = 's32[1]{0}', space=sflag, size = 0x4, scoped, tag = 'scoped memory for my_decoder.11']
    #allocation6 [shape = 'u8[16384]{0}', space=vmem, size = 0x4000, scoped, tag = 'input window, operand 5, single buffered']
    #allocation7 [shape = 'u8[512]{0}', space=vmem, size = 0x400, scoped, tag = 'input window, operand 6, single buffered']
    #allocation8 [shape = 's32[1]{0}', space=sflag, size = 0x4, scoped, tag = 'scoped memory for my_decoder.11']
    #allocation9 [shape = 'u8[16384]{0}', space=vmem, size = 0x4000, scoped, tag = 'input window, operand 7, single buffered']
    #allocation10 [shape = 'u8[512]{0}', space=vmem, size = 0x400, scoped, tag = 'input window, operand 8, single buffered']
    #allocation11 [shape = 's32[1]{0}', space=sflag, size = 0x4, scoped, tag = 'scoped memory for my_decoder.11']
    #allocation12 [shape = 'u8[512]{0}', space=vmem, size = 0x400, scoped, tag = 'input window, operand 10, single buffered']
    #allocation13 [shape = 'u8[16384]{0}', space=vmem, size = 0x4000, scoped, tag = 'input window, operand 11, single buffered']
    #allocation14 [shape = 's32[1]{0}', space=sflag, size = 0x4, scoped, tag = 'scoped memory for my_decoder.11']
    #allocation15 [shape = 'u8[512]{0}', space=vmem, size = 0x400, scoped, tag = 'input window, operand 12, single buffered']
    %18 = vsyncpa [#allocation3], 0
    %s19 = scalar_lea.sflag [#allocation3], 1
    %20 = vsyncpa %s19, 0
    %21 = vsyncpa [#allocation5], 0
    %22 = vsyncpa [#allocation8], 0
    %23 = vsyncpa [#allocation11], 0
    %24 = vsyncpa [#allocation14], 0
    loop: start=0, step=1, limit=4
    $region2: #{my_decoder.11} parent=1 // loop_pre_header
      _
    $region3: #{my_decoder.11} parent=1 // loop_header
      %s26 = sphi 0, %s30
      %p27 = scmp.ge.s32.totalorder %s26, 4
      %s36 = sphi 0, %s38
      %s39 = sphi 0, %s36
      %s40 = sphi 0, %s39
      %s56 = sphi 0, %s40
      %s62 = sphi 0, %s64
      %s65 = sphi 0, %s62
      %s66 = sphi 0, %s65
      %s82 = sphi 0, %s66
      %s88 = sphi 0, %s90
      %s91 = sphi 0, %s88
      %s92 = sphi 0, %s91
      %s108 = sphi 0, %s92
      %s112 = sphi 0, %s112
      %s114 = sphi 0, %s112
      %s115 = sphi 0, %s114
      %s129 = sphi 0, %s115
      %s133 = sphi 0, %s133
      %s135 = sphi 0, %s133
      %s136 = sphi 0, %s135
      %s150 = sphi 0, %s136
      %s154 = sphi 0, %s154
      %s156 = sphi 0, %s154
      %s157 = sphi 0, %s156
      %s171 = sphi 0, %s157
      %s175 = sphi 0, %s175
      %s177 = sphi 0, %s175
      %s178 = sphi 0, %s177
      %s192 = sphi 0, %s178
      %s196 = sphi 0, %s196
      %s198 = sphi 0, %s196
      %s199 = sphi 0, %s198
      %s213 = sphi 0, %s199
      %s217 = sphi 0, %s217
      %s219 = sphi 0, %s217
      %s220 = sphi 0, %s219
      %s234 = sphi 0, %s220
      %s238 = sphi 0, %s238
      %s240 = sphi 0, %s238
      %s241 = sphi 0, %s240
      %s255 = sphi 0, %s241
      %s259 = sphi 0, %s259
      %s261 = sphi 0, %s259
      %s262 = sphi 0, %s261
      %s276 = sphi 0, %s262
      %s280 = sphi 0, %s280
      %s282 = sphi 0, %s280
      %s283 = sphi 0, %s282
      %s297 = sphi 0, %s283
      %s301 = sphi 0, %s301
      %s303 = sphi 0, %s301
      %s304 = sphi 0, %s303
      %s318 = sphi 0, %s304
      %s324 = sphi 0, %s326
      %s327 = sphi 0, %s324
      %s328 = sphi 0, %s327
      %s344 = sphi 0, %s328
    $region4: #{my_decoder.11} parent=1 // loop_header_branch
      %29 = sbr.rel (%p27) target = $region8
    $region5: #{my_decoder.11} parent=1 // loop_body
      %s31 = ssub.s32 %s26, 1
      %s32 = ssub.s32 %s26, 2
      %s33 = sadd.s32 %s26, 1
      %s34 = ssub.s32 %s26, %s33
      %p35 = scmp.eq.s32.totalorder %s34, 0
      %s37 = sadd.s32 %s36, 1
      %s38 = scalar_select %p35, %s36, %s37
      %p41 = pneg %p35
      %p42 = scmp.eq.s32.totalorder %s26, 1
      %p43 = por %p41, %p42
      %p44 = scmp.ne.s32.totalorder %s36, %s39
      %p45 = scmp.eq.s32.totalorder %s26, 0
      %p46 = por %p44, %p45
      %p47 = scmp.ne.s32.totalorder %s36, %s39
      %p48 = scmp.eq.s32.totalorder %s31, 1
      %p49 = por %p47, %p48
      %p50 = scmp.ne.s32.totalorder %s39, %s40
      %p51 = scmp.eq.s32.totalorder %s31, 0
      %p52 = por %p50, %p51
      %p53 = scmp.ne.s32.totalorder %s39, %s40
      %p54 = scmp.eq.s32.totalorder %s32, 1
      %p55 = por %p53, %p54
      %p57 = scmp.ne.s32.totalorder %s40, %s56
      %p58 = scmp.eq.s32.totalorder %s32, 0
      %p59 = por %p57, %p58
      %s60 = ssub.s32 %s26, %s33
      %p61 = scmp.eq.s32.totalorder %s60, 0
      %s63 = sadd.s32 %s62, 1
      %s64 = scalar_select %p61, %s62, %s63
      %p67 = pneg %p61
      %p68 = scmp.eq.s32.totalorder %s26, 1
      %p69 = por %p67, %p68
      %p70 = scmp.ne.s32.totalorder %s62, %s65
      %p71 = scmp.eq.s32.totalorder %s26, 0
      %p72 = por %p70, %p71
      %p73 = scmp.ne.s32.totalorder %s62, %s65
      %p74 = scmp.eq.s32.totalorder %s31, 1
      %p75 = por %p73, %p74
      %p76 = scmp.ne.s32.totalorder %s65, %s66
      %p77 = scmp.eq.s32.totalorder %s31, 0
      %p78 = por %p76, %p77
      %p79 = scmp.ne.s32.totalorder %s65, %s66
      %p80 = scmp.eq.s32.totalorder %s32, 1
      %p81 = por %p79, %p80
      %p83 = scmp.ne.s32.totalorder %s66, %s82
      %p84 = scmp.eq.s32.totalorder %s32, 0
      %p85 = por %p83, %p84
      %s86 = ssub.s32 %s26, %s33
      %p87 = scmp.eq.s32.totalorder %s86, 0
      %s89 = sadd.s32 %s88, 1
      %s90 = scalar_select %p87, %s88, %s89
      %p93 = pneg %p87
      %p94 = scmp.eq.s32.totalorder %s26, 1
      %p95 = por %p93, %p94
      %p96 = scmp.ne.s32.totalorder %s88, %s91
      %p97 = scmp.eq.s32.totalorder %s26, 0
      %p98 = por %p96, %p97
      %p99 = scmp.ne.s32.totalorder %s88, %s91
      %p100 = scmp.eq.s32.totalorder %s31, 1
      %p101 = por %p99, %p100
      %p102 = scmp.ne.s32.totalorder %s91, %s92
      %p103 = scmp.eq.s32.totalorder %s31, 0
      %p104 = por %p102, %p103
      %p105 = scmp.ne.s32.totalorder %s91, %s92
      %p106 = scmp.eq.s32.totalorder %s32, 1
      %p107 = por %p105, %p106
      %p109 = scmp.ne.s32.totalorder %s92, %s108
      %p110 = scmp.eq.s32.totalorder %s32, 0
      %p111 = por %p109, %p110
      %s113 = sadd.s32 %s112, 1
      %p116 = scmp.eq.s32.totalorder %s26, 1
      %p117 = scmp.ne.s32.totalorder %s112, %s114
      %p118 = scmp.eq.s32.totalorder %s26, 0
      %p119 = por %p117, %p118
      %p120 = scmp.ne.s32.totalorder %s112, %s114
      %p121 = scmp.eq.s32.totalorder %s31, 1
      %p122 = por %p120, %p121
      %p123 = scmp.ne.s32.totalorder %s114, %s115
      %p124 = scmp.eq.s32.totalorder %s31, 0
      %p125 = por %p123, %p124
      %p126 = scmp.ne.s32.totalorder %s114, %s115
      %p127 = scmp.eq.s32.totalorder %s32, 1
      %p128 = por %p126, %p127
      %p130 = scmp.ne.s32.totalorder %s115, %s129
      %p131 = scmp.eq.s32.totalorder %s32, 0
      %p132 = por %p130, %p131
      %s134 = sadd.s32 %s133, 1
      %p137 = scmp.eq.s32.totalorder %s26, 1
      %p138 = scmp.ne.s32.totalorder %s133, %s135
      %p139 = scmp.eq.s32.totalorder %s26, 0
      %p140 = por %p138, %p139
      %p141 = scmp.ne.s32.totalorder %s133, %s135
      %p142 = scmp.eq.s32.totalorder %s31, 1
      %p143 = por %p141, %p142
      %p144 = scmp.ne.s32.totalorder %s135, %s136
      %p145 = scmp.eq.s32.totalorder %s31, 0
      %p146 = por %p144, %p145
      %p147 = scmp.ne.s32.totalorder %s135, %s136
      %p148 = scmp.eq.s32.totalorder %s32, 1
      %p149 = por %p147, %p148
      %p151 = scmp.ne.s32.totalorder %s136, %s150
      %p152 = scmp.eq.s32.totalorder %s32, 0
      %p153 = por %p151, %p152
      %s155 = sadd.s32 %s154, 1
      %p158 = scmp.eq.s32.totalorder %s26, 1
      %p159 = scmp.ne.s32.totalorder %s154, %s156
      %p160 = scmp.eq.s32.totalorder %s26, 0
      %p161 = por %p159, %p160
      %p162 = scmp.ne.s32.totalorder %s154, %s156
      %p163 = scmp.eq.s32.totalorder %s31, 1
      %p164 = por %p162, %p163
      %p165 = scmp.ne.s32.totalorder %s156, %s157
      %p166 = scmp.eq.s32.totalorder %s31, 0
      %p167 = por %p165, %p166
      %p168 = scmp.ne.s32.totalorder %s156, %s157
      %p169 = scmp.eq.s32.totalorder %s32, 1
      %p170 = por %p168, %p169
      %p172 = scmp.ne.s32.totalorder %s157, %s171
      %p173 = scmp.eq.s32.totalorder %s32, 0
      %p174 = por %p172, %p173
      %s176 = sadd.s32 %s175, 1
      %p179 = scmp.eq.s32.totalorder %s26, 1
      %p180 = scmp.ne.s32.totalorder %s175, %s177
      %p181 = scmp.eq.s32.totalorder %s26, 0
      %p182 = por %p180, %p181
      %p183 = scmp.ne.s32.totalorder %s175, %s177
      %p184 = scmp.eq.s32.totalorder %s31, 1
      %p185 = por %p183, %p184
      %p186 = scmp.ne.s32.totalorder %s177, %s178
      %p187 = scmp.eq.s32.totalorder %s31, 0
      %p188 = por %p186, %p187
      %p189 = scmp.ne.s32.totalorder %s177, %s178
      %p190 = scmp.eq.s32.totalorder %s32, 1
      %p191 = por %p189, %p190
      %p193 = scmp.ne.s32.totalorder %s178, %s192
      %p194 = scmp.eq.s32.totalorder %s32, 0
      %p195 = por %p193, %p194
      %s197 = sadd.s32 %s196, 1
      %p200 = scmp.eq.s32.totalorder %s26, 1
      %p201 = scmp.ne.s32.totalorder %s196, %s198
      %p202 = scmp.eq.s32.totalorder %s26, 0
      %p203 = por %p201, %p202
      %p204 = scmp.ne.s32.totalorder %s196, %s198
      %p205 = scmp.eq.s32.totalorder %s31, 1
      %p206 = por %p204, %p205
      %p207 = scmp.ne.s32.totalorder %s198, %s199
      %p208 = scmp.eq.s32.totalorder %s31, 0
      %p209 = por %p207, %p208
      %p210 = scmp.ne.s32.totalorder %s198, %s199
      %p211 = scmp.eq.s32.totalorder %s32, 1
      %p212 = por %p210, %p211
      %p214 = scmp.ne.s32.totalorder %s199, %s213
      %p215 = scmp.eq.s32.totalorder %s32, 0
      %p216 = por %p214, %p215
      %s218 = sadd.s32 %s217, 1
      %p221 = scmp.eq.s32.totalorder %s26, 1
      %p222 = scmp.ne.s32.totalorder %s217, %s219
      %p223 = scmp.eq.s32.totalorder %s26, 0
      %p224 = por %p222, %p223
      %p225 = scmp.ne.s32.totalorder %s217, %s219
      %p226 = scmp.eq.s32.totalorder %s31, 1
      %p227 = por %p225, %p226
      %p228 = scmp.ne.s32.totalorder %s219, %s220
      %p229 = scmp.eq.s32.totalorder %s31, 0
      %p230 = por %p228, %p229
      %p231 = scmp.ne.s32.totalorder %s219, %s220
      %p232 = scmp.eq.s32.totalorder %s32, 1
      %p233 = por %p231, %p232
      %p235 = scmp.ne.s32.totalorder %s220, %s234
      %p236 = scmp.eq.s32.totalorder %s32, 0
      %p237 = por %p235, %p236
      %s239 = sadd.s32 %s238, 1
      %p242 = scmp.eq.s32.totalorder %s26, 1
      %p243 = scmp.ne.s32.totalorder %s238, %s240
      %p244 = scmp.eq.s32.totalorder %s26, 0
      %p245 = por %p243, %p244
      %p246 = scmp.ne.s32.totalorder %s238, %s240
      %p247 = scmp.eq.s32.totalorder %s31, 1
      %p248 = por %p246, %p247
      %p249 = scmp.ne.s32.totalorder %s240, %s241
      %p250 = scmp.eq.s32.totalorder %s31, 0
      %p251 = por %p249, %p250
      %p252 = scmp.ne.s32.totalorder %s240, %s241
      %p253 = scmp.eq.s32.totalorder %s32, 1
      %p254 = por %p252, %p253
      %p256 = scmp.ne.s32.totalorder %s241, %s255
      %p257 = scmp.eq.s32.totalorder %s32, 0
      %p258 = por %p256, %p257
      %s260 = sadd.s32 %s259, 1
      %p263 = scmp.eq.s32.totalorder %s26, 1
      %p264 = scmp.ne.s32.totalorder %s259, %s261
      %p265 = scmp.eq.s32.totalorder %s26, 0
      %p266 = por %p264, %p265
      %p267 = scmp.ne.s32.totalorder %s259, %s261
      %p268 = scmp.eq.s32.totalorder %s31, 1
      %p269 = por %p267, %p268
      %p270 = scmp.ne.s32.totalorder %s261, %s262
      %p271 = scmp.eq.s32.totalorder %s31, 0
      %p272 = por %p270, %p271
      %p273 = scmp.ne.s32.totalorder %s261, %s262
      %p274 = scmp.eq.s32.totalorder %s32, 1
      %p275 = por %p273, %p274
      %p277 = scmp.ne.s32.totalorder %s262, %s276
      %p278 = scmp.eq.s32.totalorder %s32, 0
      %p279 = por %p277, %p278
      %s281 = sadd.s32 %s280, 1
      %p284 = scmp.eq.s32.totalorder %s26, 1
      %p285 = scmp.ne.s32.totalorder %s280, %s282
      %p286 = scmp.eq.s32.totalorder %s26, 0
      %p287 = por %p285, %p286
      %p288 = scmp.ne.s32.totalorder %s280, %s282
      %p289 = scmp.eq.s32.totalorder %s31, 1
      %p290 = por %p288, %p289
      %p291 = scmp.ne.s32.totalorder %s282, %s283
      %p292 = scmp.eq.s32.totalorder %s31, 0
      %p293 = por %p291, %p292
      %p294 = scmp.ne.s32.totalorder %s282, %s283
      %p295 = scmp.eq.s32.totalorder %s32, 1
      %p296 = por %p294, %p295
      %p298 = scmp.ne.s32.totalorder %s283, %s297
      %p299 = scmp.eq.s32.totalorder %s32, 0
      %p300 = por %p298, %p299
      %s302 = sadd.s32 %s301, 1
      %p305 = scmp.eq.s32.totalorder %s26, 1
      %p306 = scmp.ne.s32.totalorder %s301, %s303
      %p307 = scmp.eq.s32.totalorder %s26, 0
      %p308 = por %p306, %p307
      %p309 = scmp.ne.s32.totalorder %s301, %s303
      %p310 = scmp.eq.s32.totalorder %s31, 1
      %p311 = por %p309, %p310
      %p312 = scmp.ne.s32.totalorder %s303, %s304
      %p313 = scmp.eq.s32.totalorder %s31, 0
      %p314 = por %p312, %p313
      %p315 = scmp.ne.s32.totalorder %s303, %s304
      %p316 = scmp.eq.s32.totalorder %s32, 1
      %p317 = por %p315, %p316
      %p319 = scmp.ne.s32.totalorder %s304, %s318
      %p320 = scmp.eq.s32.totalorder %s32, 0
      %p321 = por %p319, %p320
      %s322 = ssub.s32 %s26, %s33
      %p323 = scmp.eq.s32.totalorder %s322, 0
      %s325 = sadd.s32 %s324, 1
      %s326 = scalar_select %p323, %s324, %s325
      %p329 = pneg %p323
      %p330 = scmp.eq.s32.totalorder %s26, 1
      %p331 = por %p329, %p330
      %p332 = scmp.ne.s32.totalorder %s324, %s327
      %p333 = scmp.eq.s32.totalorder %s26, 0
      %p334 = por %p332, %p333
      %p335 = scmp.ne.s32.totalorder %s324, %s327
      %p336 = scmp.eq.s32.totalorder %s31, 1
      %p337 = por %p335, %p336
      %p338 = scmp.ne.s32.totalorder %s327, %s328
      %p339 = scmp.eq.s32.totalorder %s31, 0
      %p340 = por %p338, %p339
      %p341 = scmp.ne.s32.totalorder %s327, %s328
      %p342 = scmp.eq.s32.totalorder %s32, 1
      %p343 = por %p341, %p342
      %p345 = scmp.ne.s32.totalorder %s328, %s344
      %p346 = scmp.eq.s32.totalorder %s32, 0
      %p347 = por %p345, %p346
      %p348 = scmp.le.s32.totalorder 1, %s26
      %p349 = scmp.lt.s32.totalorder %s26, 3
      %p350 = pnand %p348, %p349
      %p351 = pneg %p350
      // Predicated region
      $region9: #{my_decoder.11} parent=5 // pred_check
        _
      $region10: #{my_decoder.11} parent=5 // pred_check_branch
        %353 = sbr.rel (%p350) target = $region12
      $region11: #{my_decoder.11} parent=5 // pred_region
        %s354 = ssub.s32 %s26, 1
        // Predicated region
        $region13: #{my_decoder.11} parent=11 // pred_check
          %p355 = pneg %p125
        $region14: #{my_decoder.11} parent=11 // pred_check_branch
          %357 = sbr.rel (%p355) target = $region16
        $region15: #{my_decoder.11} parent=11 // pred_region
          _
        $region16: #{my_decoder.11} parent=11 // pred_fallthru
          _
        // Predicated region
        $region17: #{my_decoder.11} parent=11 // pred_check
          %p358 = pneg %p146
        $region18: #{my_decoder.11} parent=11 // pred_check_branch
          %360 = sbr.rel (%p358) target = $region20
        $region19: #{my_decoder.11} parent=11 // pred_region
          %362 = vsyncadd [#allocation5], 0
          %s364 = sshll.u32 %s4, 4
          %s365 = int_to_ptr.hbm [resolvable:$true] %s364
          %s366 = sshll.u32 [#allocation4], 4
          %s367 = int_to_ptr.vmem [resolvable:$true] %s366
          %369 = dma.hbm_to_vmem [thread:$0]  %s365, 16, %s367, [#allocation5]
        $region20: #{my_decoder.11} parent=11 // pred_fallthru
          _
        // Predicated region
        $region21: #{my_decoder.11} parent=11 // pred_check
          %p370 = pneg %p167
        $region22: #{my_decoder.11} parent=11 // pred_check_branch
          %372 = sbr.rel (%p370) target = $region24
        $region23: #{my_decoder.11} parent=11 // pred_region
          %374 = vsyncadd [#allocation5], 0
          %s375 = sshll.u32 %s5, 4
          %s376 = int_to_ptr.hbm [resolvable:$true] %s375
          %s377 = sshll.u32 [#allocation6], 4
          %s378 = int_to_ptr.vmem [resolvable:$true] %s377
          %383 = dma.hbm_to_vmem [thread:$0]  %s376, 512, %s378, [#allocation5], 128, 128, 8
        $region24: #{my_decoder.11} parent=11 // pred_fallthru
          _
        // Predicated region
        $region25: #{my_decoder.11} parent=11 // pred_check
          %p384 = pneg %p188
        $region26: #{my_decoder.11} parent=11 // pred_check_branch
          %386 = sbr.rel (%p384) target = $region28
        $region27: #{my_decoder.11} parent=11 // pred_region
          %388 = vsyncadd [#allocation8], 0
          %s390 = sshll.u32 %s6, 4
          %s391 = int_to_ptr.hbm [resolvable:$true] %s390
          %s392 = sshll.u32 [#allocation7], 4
          %s393 = int_to_ptr.vmem [resolvable:$true] %s392
          %395 = dma.hbm_to_vmem [thread:$0]  %s391, 16, %s393, [#allocation8]
        $region28: #{my_decoder.11} parent=11 // pred_fallthru
          _
        // Predicated region
        $region29: #{my_decoder.11} parent=11 // pred_check
          %p396 = pneg %p209
        $region30: #{my_decoder.11} parent=11 // pred_check_branch
          %398 = sbr.rel (%p396) target = $region32
        $region31: #{my_decoder.11} parent=11 // pred_region
          %400 = vsyncadd [#allocation8], 0
          %s401 = sshll.u32 %s7, 4
          %s402 = int_to_ptr.hbm [resolvable:$true] %s401
          %s403 = sshll.u32 [#allocation9], 4
          %s404 = int_to_ptr.vmem [resolvable:$true] %s403
          %409 = dma.hbm_to_vmem [thread:$0]  %s402, 512, %s404, [#allocation8], 128, 128, 8
        $region32: #{my_decoder.11} parent=11 // pred_fallthru
          _
        // Predicated region
        $region33: #{my_decoder.11} parent=11 // pred_check
          %p410 = pneg %p230
        $region34: #{my_decoder.11} parent=11 // pred_check_branch
          %412 = sbr.rel (%p410) target = $region36
        $region35: #{my_decoder.11} parent=11 // pred_region
          %414 = vsyncadd [#allocation11], 0
          %s416 = sshll.u32 %s8, 4
          %s417 = int_to_ptr.hbm [resolvable:$true] %s416
          %s418 = sshll.u32 [#allocation10], 4
          %s419 = int_to_ptr.vmem [resolvable:$true] %s418
          %421 = dma.hbm_to_vmem [thread:$0]  %s417, 16, %s419, [#allocation11]
        $region36: #{my_decoder.11} parent=11 // pred_fallthru
          _
        // Predicated region
        $region37: #{my_decoder.11} parent=11 // pred_check
          %p422 = pneg %p251
        $region38: #{my_decoder.11} parent=11 // pred_check_branch
          %424 = sbr.rel (%p422) target = $region40
        $region39: #{my_decoder.11} parent=11 // pred_region
          _
        $region40: #{my_decoder.11} parent=11 // pred_fallthru
          _
        // Predicated region
        $region41: #{my_decoder.11} parent=11 // pred_check
          %p425 = pneg %p272
        $region42: #{my_decoder.11} parent=11 // pred_check_branch
          %427 = sbr.rel (%p425) target = $region44
        $region43: #{my_decoder.11} parent=11 // pred_region
          %429 = vsyncadd [#allocation11], 0
          %s431 = sshll.u32 %s10, 4
          %s432 = int_to_ptr.hbm [resolvable:$true] %s431
          %s433 = sshll.u32 [#allocation12], 4
          %s434 = int_to_ptr.vmem [resolvable:$true] %s433
          %436 = dma.hbm_to_vmem [thread:$0]  %s432, 16, %s434, [#allocation11]
        $region44: #{my_decoder.11} parent=11 // pred_fallthru
          _
        // Predicated region
        $region45: #{my_decoder.11} parent=11 // pred_check
          %p437 = pneg %p293
        $region46: #{my_decoder.11} parent=11 // pred_check_branch
          %439 = sbr.rel (%p437) target = $region48
        $region47: #{my_decoder.11} parent=11 // pred_region
          %441 = vsyncadd [#allocation14], 0
          %s442 = sshll.u32 %s11, 4
          %s443 = int_to_ptr.hbm [resolvable:$true] %s442
          %s444 = sshll.u32 [#allocation13], 4
          %s445 = int_to_ptr.vmem [resolvable:$true] %s444
          %450 = dma.hbm_to_vmem [thread:$0]  %s443, 512, %s445, [#allocation14], 128, 128, 8
        $region48: #{my_decoder.11} parent=11 // pred_fallthru
          _
        // Predicated region
        $region49: #{my_decoder.11} parent=11 // pred_check
          %p451 = pneg %p314
        $region50: #{my_decoder.11} parent=11 // pred_check_branch
          %453 = sbr.rel (%p451) target = $region52
        $region51: #{my_decoder.11} parent=11 // pred_region
          %455 = vsyncadd [#allocation14], 0
          %s457 = sshll.u32 %s12, 4
          %s458 = int_to_ptr.hbm [resolvable:$true] %s457
          %s459 = sshll.u32 [#allocation15], 4
          %s460 = int_to_ptr.vmem [resolvable:$true] %s459
          %462 = dma.hbm_to_vmem [thread:$0]  %s458, 16, %s460, [#allocation14]
        $region52: #{my_decoder.11} parent=11 // pred_fallthru
          _
      $region12: #{my_decoder.11} parent=5 // pred_fallthru
        _
      %p463 = scmp.lt.s32.totalorder %s26, 2
      // Predicated region
      $region53: #{my_decoder.11} parent=5 // pred_check
        %p464 = pneg %p463
      $region54: #{my_decoder.11} parent=5 // pred_check_branch
        %466 = sbr.rel (%p464) target = $region56
      $region55: #{my_decoder.11} parent=5 // pred_region
        // Predicated region
        $region57: #{my_decoder.11} parent=55 // pred_check
          %p467 = pneg %p46
        $region58: #{my_decoder.11} parent=55 // pred_check_branch
          %469 = sbr.rel (%p467) target = $region60
        $region59: #{my_decoder.11} parent=55 // pred_region
          %p470 = scmp.lt.s32.totalorder %s26, 1
          %s471 = scalar_select %p470, %s26, 1
          %s472 = smul.addr %s471, 8
          %s473 = scalar_lea.vmem %s0, %s472
        $region60: #{my_decoder.11} parent=55 // pred_fallthru
          _
        // Predicated region
        $region61: #{my_decoder.11} parent=55 // pred_check
          %p474 = pneg %p72
        $region62: #{my_decoder.11} parent=55 // pred_check_branch
          %476 = sbr.rel (%p474) target = $region64
        $region63: #{my_decoder.11} parent=55 // pred_region
          %s477 = sand.u32 %s62, 1
          %s478 = scalar_lea.sflag [#allocation3], %s477
          %s479 = sand.u32 %s62, 1
          %s480 = smul.addr %s479, 8
          %s481 = scalar_lea.vmem [#allocation2], %s480
          %483 = vsyncadd %s478, 0
          %s484 = smul.addr %s26, 8
          %s485 = scalar_lea.hbm %s1, %s484
          %s487 = sshll.u32 %s485, 4
          %s488 = int_to_ptr.hbm [resolvable:$true] %s487
          %s489 = sshll.u32 %s481, 4
          %s490 = int_to_ptr.vmem [resolvable:$true] %s489
          %492 = dma.hbm_to_vmem [thread:$0]  %s488, 128, %s490, %s478
        $region64: #{my_decoder.11} parent=55 // pred_fallthru
          _
        // Predicated region
        $region65: #{my_decoder.11} parent=55 // pred_check
          %p493 = pneg %p98
        $region66: #{my_decoder.11} parent=55 // pred_check_branch
          %495 = sbr.rel (%p493) target = $region68
        $region67: #{my_decoder.11} parent=55 // pred_region
          %p496 = scmp.lt.s32.totalorder %s26, 1
          %s497 = scalar_select %p496, %s26, 1
          %s498 = scalar_lea.vmem %s2, %s497
        $region68: #{my_decoder.11} parent=55 // pred_fallthru
          _
      $region56: #{my_decoder.11} parent=5 // pred_fallthru
        _
      %p499 = scmp.le.s32.totalorder 1, %s26
      %p500 = scmp.lt.s32.totalorder %s26, 3
      %p501 = pnand %p499, %p500
      %p502 = pneg %p501
      // Predicated region
      $region69: #{my_decoder.11} parent=5 // pred_check
        _
      $region70: #{my_decoder.11} parent=5 // pred_check_branch
        %504 = sbr.rel (%p501) target = $region72
      $region71: #{my_decoder.11} parent=5 // pred_region
        %s505 = ssub.s32 %s26, 1
        %s506 = sand.u32 %s65, 1
        %s507 = scalar_lea.sflag [#allocation3], %s506
        %s508 = sand.u32 %s65, 1
        %s509 = smul.addr %s508, 8
        %s510 = scalar_lea.vmem [#allocation2], %s509
        // Predicated region
        $region73: #{my_decoder.11} parent=71 // pred_check
          %p511 = pneg %p78
        $region74: #{my_decoder.11} parent=71 // pred_check_branch
          %513 = sbr.rel (%p511) target = $region76
        $region75: #{my_decoder.11} parent=71 // pred_region
          %515 = dma.done %s507, 128
        $region76: #{my_decoder.11} parent=71 // pred_fallthru
          _
        // Predicated region
        $region77: #{my_decoder.11} parent=71 // pred_check
          %p516 = pneg %p146
        $region78: #{my_decoder.11} parent=71 // pred_check_branch
          %518 = sbr.rel (%p516) target = $region80
        $region79: #{my_decoder.11} parent=71 // pred_region
          %520 = dma.done [#allocation5], 16
        $region80: #{my_decoder.11} parent=71 // pred_fallthru
          _
        // Predicated region
        $region81: #{my_decoder.11} parent=71 // pred_check
          %p521 = pneg %p167
        $region82: #{my_decoder.11} parent=71 // pred_check_branch
          %523 = sbr.rel (%p521) target = $region84
        $region83: #{my_decoder.11} parent=71 // pred_region
          %525 = dma.done [#allocation5], 512
        $region84: #{my_decoder.11} parent=71 // pred_fallthru
          _
        // Predicated region
        $region85: #{my_decoder.11} parent=71 // pred_check
          %p526 = pneg %p188
        $region86: #{my_decoder.11} parent=71 // pred_check_branch
          %528 = sbr.rel (%p526) target = $region88
        $region87: #{my_decoder.11} parent=71 // pred_region
          %530 = dma.done [#allocation8], 16
        $region88: #{my_decoder.11} parent=71 // pred_fallthru
          _
        // Predicated region
        $region89: #{my_decoder.11} parent=71 // pred_check
          %p531 = pneg %p209
        $region90: #{my_decoder.11} parent=71 // pred_check_branch
          %533 = sbr.rel (%p531) target = $region92
        $region91: #{my_decoder.11} parent=71 // pred_region
          %535 = dma.done [#allocation8], 512
        $region92: #{my_decoder.11} parent=71 // pred_fallthru
          _
        // Predicated region
        $region93: #{my_decoder.11} parent=71 // pred_check
          %p536 = pneg %p230
        $region94: #{my_decoder.11} parent=71 // pred_check_branch
          %538 = sbr.rel (%p536) target = $region96
        $region95: #{my_decoder.11} parent=71 // pred_region
          %540 = dma.done [#allocation11], 16
        $region96: #{my_decoder.11} parent=71 // pred_fallthru
          _
        // Predicated region
        $region97: #{my_decoder.11} parent=71 // pred_check
          %p541 = pneg %p272
        $region98: #{my_decoder.11} parent=71 // pred_check_branch
          %543 = sbr.rel (%p541) target = $region100
        $region99: #{my_decoder.11} parent=71 // pred_region
          %545 = dma.done [#allocation11], 16
        $region100: #{my_decoder.11} parent=71 // pred_fallthru
          _
        // Predicated region
        $region101: #{my_decoder.11} parent=71 // pred_check
          %p546 = pneg %p293
        $region102: #{my_decoder.11} parent=71 // pred_check_branch
          %548 = sbr.rel (%p546) target = $region104
        $region103: #{my_decoder.11} parent=71 // pred_region
          %550 = dma.done [#allocation14], 512
        $region104: #{my_decoder.11} parent=71 // pred_fallthru
          _
        // Predicated region
        $region105: #{my_decoder.11} parent=71 // pred_check
          %p551 = pneg %p314
        $region106: #{my_decoder.11} parent=71 // pred_check_branch
          %553 = sbr.rel (%p551) target = $region108
        $region107: #{my_decoder.11} parent=71 // pred_region
          %555 = dma.done [#allocation14], 16
        $region108: #{my_decoder.11} parent=71 // pred_fallthru
          _
        %p556 = scmp.lt.s32.totalorder %s31, 1
        %s557 = scalar_select %p556, %s31, 1
        %s558 = smul.addr %s557, 8
        %s559 = scalar_lea.vmem %s0, %s558
        %p560 = pneg %p52
        %p561 = pneg %p49
        %s562 = sand.u32 %s65, 1
        %s563 = scalar_lea.sflag [#allocation3], %s562
        %s564 = sand.u32 %s65, 1
        %s565 = smul.addr %s564, 8
        %s566 = scalar_lea.vmem [#allocation2], %s565
        %p567 = pneg %p78
        %p568 = pneg %p75
        %p569 = scmp.lt.s32.totalorder %s31, 1
        %s570 = scalar_select %p569, %s31, 1
        %s571 = scalar_lea.vmem %s2, %s570
        %p572 = pneg %p104
        %p573 = pneg %p101
        %p574 = pneg %p125
        %p575 = pneg %p122
        %p576 = pneg %p146
        %p577 = pneg %p143
        %p578 = pneg %p167
        %p579 = pneg %p164
        %p580 = pneg %p188
        %p581 = pneg %p185
        %p582 = pneg %p209
        %p583 = pneg %p206
        %p584 = pneg %p230
        %p585 = pneg %p227
        %p586 = pneg %p251
        %p587 = pneg %p248
        %p588 = pneg %p272
        %p589 = pneg %p269
        %p590 = pneg %p293
        %p591 = pneg %p290
        %p592 = pneg %p314
        %p593 = pneg %p311
        %p594 = pneg %p340
        %p595 = pneg %p337
        %p596 = scmp.lt.s32.totalorder %s31, 1
        %s597 = scalar_select %p596, %s31, 1
        %s598 = smul.addr %s597, 8
        %s599 = scalar_lea.vmem %s13, %s598
        %p600 = scmp.lt.s32.totalorder %s31, 1
        %s601 = scalar_select %p600, %s31, 1
        %s602 = smul.addr %s601, 8
        %s603 = scalar_lea.vmem %s0, %s602
        %p604 = scmp.lt.s32.totalorder %s31, 1
        %s605 = scalar_select %p604, %s31, 1
        %s606 = scalar_lea.vmem %s2, %s605
        %p607 = scmp.lt.s32.totalorder %s31, 1
        %s608 = scalar_select %p607, %s31, 1
        %s609 = smul.addr %s608, 8
        %s610 = scalar_lea.vmem %s13, %s609
        %v611 = vld [vmem:[%s603] sm:$0xff]
        %v612 = vld [vmem:[%s510] sm:$0xff]
        %v613 = vld [vmem:[%s3] sm:$0x1]
        %v614 = vld [vmem:[#allocation4] sm:$0x1]
        %vm615 = vcmask 261120
        %v616 = vsel %vm615, %v611, 0.0
        %617 = vadd.xlane.f32.xlu0 %v616
        %v618 = vpop.xlane.xlu0 %617
        %v619 = vrcp.pop 32.0
        %v620 = vmul.f32 32.0, %v619
        %v621 = vsub.f32 1.0, %v620
        %v622 = vmul.f32 %v619, %v621
        %v623 = vadd.f32 %v619, %v622
        %vm624 = vweird.f32 %v619
        %v625 = vsel %vm624, %v619, %v623
        %v626 = vmul.f32 %v618, %v625
        %v627 = vsub.f32 %v611, %v626
        %v628 = vmul.f32 %v627, %v627
        %v629 = vsel %vm615, %v628, 0.0
        %630 = vadd.xlane.f32.xlu0 %v629
        %v631 = vpop.xlane.xlu0 %630
        %v632 = vmul.f32 %v631, 0.032258064
        %v633 = vrsqrt.pop %v632
        %v634 = vmul.f32 %v633, %v632
        %v635 = vmul.f32 %v634, %v633
        %v636 = vmul.f32 0.5, %v635
        %v637 = vsub.f32 1.5, %v636
        %v638 = vmul.f32 %v633, %v637
        %v639 = vmul.f32 %v632, %v638
        %vm640 = vcmp.eq.f32.partialorder %v632, inf
        %v641 = vsel %vm640, %v632, %v639
        %vm642 = vcmp.eq.f32.partialorder %v632, 0.0
        %v643 = vand.u32 %v632, 2147483648
        %v644 = vsel %vm642, %v643, %v641
        %v645 = vadd.f32 %v644, 1e-06
        %v646 = vrcp.pop %v645
        %v648 = vperm.slane %v613, 0
        %v650 = vmul.f32 %v648, %v627
        %v651 = vmul.f32 %v650, %v646
        %v653 = vperm.slane %v614, 0
        %v655 = vadd.f32 %v651, %v653
        %v656 = vld [vmem:[%s606] sm:$0x1]
        %v657 = vld [vmem:[#allocation6] sm:$0xff]
        %v658 = vld [vmem:[#allocation6 + $0x8] sm:$0xff]
        %v659 = vld [vmem:[#allocation6 + $0x10] sm:$0xff]
        %v660 = vld [vmem:[#allocation6 + $0x18] sm:$0xff]
        %v661 = vld [vmem:[#allocation7] sm:$0x1]
        %v662 = vld [vmem:[#allocation9] sm:$0xff]
        %v663 = vld [vmem:[#allocation9 + $0x8] sm:$0xff]
        %v664 = vld [vmem:[#allocation9 + $0x10] sm:$0xff]
        %v665 = vld [vmem:[#allocation9 + $0x18] sm:$0xff]
        %v666 = vld [vmem:[#allocation10] sm:$0x1]
        %v667 = vld [vmem:[%s9] sm:$0xff]
        %v668 = vld [vmem:[%s9 + $0x8] sm:$0xff]
        %v669 = vld [vmem:[%s9 + $0x10] sm:$0xff]
        %v670 = vld [vmem:[%s9 + $0x18] sm:$0xff]
        %v671 = vld [vmem:[#allocation12] sm:$0x1]
        %v672 = vld [vmem:[#allocation13] sm:$0xff]
        %v673 = vld [vmem:[#allocation13 + $0x8] sm:$0xff]
        %v674 = vld [vmem:[#allocation13 + $0x10] sm:$0xff]
        %v675 = vld [vmem:[#allocation13 + $0x18] sm:$0xff]
        %v676 = vld [vmem:[#allocation15] sm:$0x1]
        %v678 = vperm.slane %v661, 0
        %v681 = vsel %vm615, %v655, 0
        %683 = vmatpush.msra.mxu0 0.0
        %684 = vmatpush.msra.mxu0 0.0
        %685 = vmatpush.msra.mxu0 0.0
        %686 = vmatpush.msra.mxu0 0.0
        %687 = vmatpush.msra.mxu0 0.0
        %688 = vmatpush.msra.mxu0 0.0
        %689 = vmatpush.msra.mxu0 0.0
        %690 = vmatpush.msra.mxu0 0.0
        %691 = vmatpush.msra.mxu0 0.0
        %692 = vmatpush.msra.mxu0 0.0
        %693 = vmatpush.msra.mxu0 0.0
        %694 = vmatpush.msra.mxu0 0.0
        %695 = vmatpush.msra.mxu0 %v660
        %696 = vmatpush.msra.mxu0 %v659
        %697 = vmatpush.msra.mxu0 %v658
        %698 = vmatpush.msra.mxu0 %v657
        %699 = vmatmul.f32.gmra.mxu0 %v681
        %v700 = vpop.f32.mrf.mxu0
        %v701 = vadd.f32 %v678, %v700
        %702 = vdwg.mxu0
        %v704 = vperm.slane %v666, 0
        %v707 = vsel %vm615, %v612, 0
        %709 = vmatpush.msra.mxu0 0.0
        %710 = vmatpush.msra.mxu0 0.0
        %711 = vmatpush.msra.mxu0 0.0
        %712 = vmatpush.msra.mxu0 0.0
        %713 = vmatpush.msra.mxu0 0.0
        %714 = vmatpush.msra.mxu0 0.0
        %715 = vmatpush.msra.mxu0 0.0
        %716 = vmatpush.msra.mxu0 0.0
        %717 = vmatpush.msra.mxu0 0.0
        %718 = vmatpush.msra.mxu0 0.0
        %719 = vmatpush.msra.mxu0 0.0
        %720 = vmatpush.msra.mxu0 0.0
        %721 = vmatpush.msra.mxu0 %v665
        %722 = vmatpush.msra.mxu0 %v664
        %723 = vmatpush.msra.mxu0 %v663
        %724 = vmatpush.msra.mxu0 %v662
        %725 = vmatmul.f32.gmra.mxu0 %v707
        %v726 = vpop.f32.mrf.mxu0
        %v727 = vadd.f32 %v704, %v726
        %728 = vdwg.mxu0
        %v730 = vperm.slane %v671, 0
        %732 = vmatpush.msra.mxu0 0.0
        %733 = vmatpush.msra.mxu0 0.0
        %734 = vmatpush.msra.mxu0 0.0
        %735 = vmatpush.msra.mxu0 0.0
        %736 = vmatpush.msra.mxu0 0.0
        %737 = vmatpush.msra.mxu0 0.0
        %738 = vmatpush.msra.mxu0 0.0
        %739 = vmatpush.msra.mxu0 0.0
        %740 = vmatpush.msra.mxu0 0.0
        %741 = vmatpush.msra.mxu0 0.0
        %742 = vmatpush.msra.mxu0 0.0
        %743 = vmatpush.msra.mxu0 0.0
        %744 = vmatpush.msra.mxu0 %v670
        %745 = vmatpush.msra.mxu0 %v669
        %746 = vmatpush.msra.mxu0 %v668
        %747 = vmatpush.msra.mxu0 %v667
        %748 = vmatmul.f32.gmra.mxu0 %v707
        %v749 = vpop.f32.mrf.mxu0
        %v750 = vadd.f32 %v730, %v749
        %751 = vdwg.mxu0
        %v753 = vperm.slane %v656, 0
        %vm755 = vcmask 64512
        %v757 = vsel %vm755, %v701, 0
        %v760 = vsel %vm755, %v727, 0
        %762 = vmatpush.xpose.msra.mxu0 0.0
        %763 = vmatpush.xpose.msra.mxu0 0.0
        %764 = vmatpush.xpose.msra.mxu0 0.0
        %765 = vmatpush.xpose.msra.mxu0 0.0
        %766 = vmatpush.xpose.msra.mxu0 0.0
        %767 = vmatpush.xpose.msra.mxu0 0.0
        %768 = vmatpush.xpose.msra.mxu0 0.0
        %769 = vmatpush.xpose.msra.mxu0 0.0
        %770 = vmatpush.xpose.msra.mxu0 0.0
        %771 = vmatpush.xpose.msra.mxu0 0.0
        %772 = vmatpush.xpose.msra.mxu0 0.0
        %773 = vmatpush.xpose.msra.mxu0 0.0
        %774 = vmatpush.xpose.msra.mxu0 0.0
        %775 = vmatpush.xpose.msra.mxu0 0.0
        %776 = vmatpush.xpose.msra.mxu0 0.0
        %777 = vmatpush.xpose.msra.mxu0 %v760
        %778 = vmatmul.f32.gmra.mxu0 %v757
        %v779 = vpop.f32.mrf.mxu0
        %v780 = vadd.f32 0.0, %v779
        %781 = vdwg.mxu0
        %v782 = vmul.f32 %v780, 0.35355338
        %vm783 = vcmp.eq.f32.partialorder %v753, 0.0
        %v784 = vsel %vm783, -1e+09, %v782
        %v785 = vsel %vm755, %v784, -inf
        %786 = vmax.xlane.f32.xlu0 %v785
        %v787 = vpop.xlane.xlu0 %786
        %v788 = vsub.f32 %v784, %v787
        %v789 = vmul.f32 %v788, 1.442695
        %v790 = vpow.pop %v789
        %v791 = vsel %vm755, %v790, 0.0
        %792 = vadd.xlane.f32.xlu0 %v791
        %v793 = vpop.xlane.xlu0 %792
        %v794 = vrcp.pop %v793
        %v795 = vmul.f32 %v790, %v794
        %v797 = vsel %vm755, %v795, 0
        %799 = vmatpush.msra.mxu0 0.0
        %800 = vmatpush.msra.mxu0 0.0
        %801 = vmatpush.msra.mxu0 0.0
        %802 = vmatpush.msra.mxu0 0.0
        %803 = vmatpush.msra.mxu0 0.0
        %804 = vmatpush.msra.mxu0 0.0
        %805 = vmatpush.msra.mxu0 0.0
        %806 = vmatpush.msra.mxu0 0.0
        %807 = vmatpush.msra.mxu0 0.0
        %808 = vmatpush.msra.mxu0 0.0
        %809 = vmatpush.msra.mxu0 0.0
        %810 = vmatpush.msra.mxu0 0.0
        %811 = vmatpush.msra.mxu0 0.0
        %812 = vmatpush.msra.mxu0 0.0
        %813 = vmatpush.msra.mxu0 0.0
        %814 = vmatpush.msra.mxu0 %v750
        %815 = vmatmul.f32.gmra.mxu0 %v797
        %v816 = vpop.f32.mrf.mxu0
        %v817 = vadd.f32 0.0, %v816
        %818 = vdwg.mxu0
        %819 = vrot.lane.b32.xlu0 %v701, 120
        %v820 = vpop.permute.xlu0 %819
        %821 = vrot.lane.b32.xlu0 %v727, 120
        %v822 = vpop.permute.xlu0 %821
        %v823 = vsel %vm755, %v820, 0
        %v825 = vsel %vm755, %v822, 0
        %827 = vmatpush.xpose.msra.mxu0 0.0
        %828 = vmatpush.xpose.msra.mxu0 0.0
        %829 = vmatpush.xpose.msra.mxu0 0.0
        %830 = vmatpush.xpose.msra.mxu0 0.0
        %831 = vmatpush.xpose.msra.mxu0 0.0
        %832 = vmatpush.xpose.msra.mxu0 0.0
        %833 = vmatpush.xpose.msra.mxu0 0.0
        %834 = vmatpush.xpose.msra.mxu0 0.0
        %835 = vmatpush.xpose.msra.mxu0 0.0
        %836 = vmatpush.xpose.msra.mxu0 0.0
        %837 = vmatpush.xpose.msra.mxu0 0.0
        %838 = vmatpush.xpose.msra.mxu0 0.0
        %839 = vmatpush.xpose.msra.mxu0 0.0
        %840 = vmatpush.xpose.msra.mxu0 0.0
        %841 = vmatpush.xpose.msra.mxu0 0.0
        %842 = vmatpush.xpose.msra.mxu0 %v825
        %843 = vmatmul.f32.gmra.mxu0 %v823
        %v844 = vpop.f32.mrf.mxu0
        %v845 = vadd.f32 0.0, %v844
        %846 = vdwg.mxu0
        %v847 = vmul.f32 %v845, 0.35355338
        %v848 = vsel %vm783, -1e+09, %v847
        %v849 = vsel %vm755, %v848, -inf
        %850 = vmax.xlane.f32.xlu0 %v849
        %v851 = vpop.xlane.xlu0 %850
        %v852 = vsub.f32 %v848, %v851
        %v853 = vmul.f32 %v852, 1.442695
        %v854 = vpow.pop %v853
        %v855 = vsel %vm755, %v854, 0.0
        %856 = vadd.xlane.f32.xlu0 %v855
        %v857 = vpop.xlane.xlu0 %856
        %v858 = vrcp.pop %v857
        %v859 = vmul.f32 %v854, %v858
        %861 = vrot.lane.b32.xlu0 %v750, 120
        %v862 = vpop.permute.xlu0 %861
        %v865 = vsel %vm755, %v859, 0
        %867 = vmatpush.msra.mxu0 0.0
        %868 = vmatpush.msra.mxu0 0.0
        %869 = vmatpush.msra.mxu0 0.0
        %870 = vmatpush.msra.mxu0 0.0
        %871 = vmatpush.msra.mxu0 0.0
        %872 = vmatpush.msra.mxu0 0.0
        %873 = vmatpush.msra.mxu0 0.0
        %874 = vmatpush.msra.mxu0 0.0
        %875 = vmatpush.msra.mxu0 0.0
        %876 = vmatpush.msra.mxu0 0.0
        %877 = vmatpush.msra.mxu0 0.0
        %878 = vmatpush.msra.mxu0 0.0
        %879 = vmatpush.msra.mxu0 0.0
        %880 = vmatpush.msra.mxu0 0.0
        %881 = vmatpush.msra.mxu0 0.0
        %882 = vmatpush.msra.mxu0 %v862
        %883 = vmatmul.f32.gmra.mxu0 %v865
        %v884 = vpop.f32.mrf.mxu0
        %v885 = vadd.f32 0.0, %v884
        %886 = vdwg.mxu0
        %v888 = vsel %vm755, %v885, 0
        %890 = vmatpush.msra.mxu0 0.0
        %891 = vmatpush.msra.mxu0 0.0
        %892 = vmatpush.msra.mxu0 0.0
        %893 = vmatpush.msra.mxu0 0.0
        %894 = vmatpush.msra.mxu0 0.0
        %895 = vmatpush.msra.mxu0 0.0
        %896 = vmatpush.msra.mxu0 0.0
        %897 = vmatpush.msra.mxu0 0.0
        %898 = vmatpush.msra.mxu0 0.0
        %899 = vmatpush.msra.mxu0 0.0
        %900 = vmatpush.msra.mxu0 0.0
        %901 = vmatpush.msra.mxu0 0.0
        %902 = vmatpush.msra.mxu0 0.0
        %903 = vmatpush.msra.mxu0 0.0
        %904 = vmatpush.msra.mxu0 0.0
        %905 = vmatpush.msra.mxu0 %v673
        %906 = vmatmul.f32.gmra.mxu0 %v888
        %v907 = vpop.f32.mrf.mxu0
        %v908 = vadd.f32 0.0, %v907
        %909 = vdwg.mxu0
        %v911 = vsel %vm755, %v817, 0
        %913 = vmatpush.msra.mxu0 0.0
        %914 = vmatpush.msra.mxu0 0.0
        %915 = vmatpush.msra.mxu0 0.0
        %916 = vmatpush.msra.mxu0 0.0
        %917 = vmatpush.msra.mxu0 0.0
        %918 = vmatpush.msra.mxu0 0.0
        %919 = vmatpush.msra.mxu0 0.0
        %920 = vmatpush.msra.mxu0 0.0
        %921 = vmatpush.msra.mxu0 0.0
        %922 = vmatpush.msra.mxu0 0.0
        %923 = vmatpush.msra.mxu0 0.0
        %924 = vmatpush.msra.mxu0 0.0
        %925 = vmatpush.msra.mxu0 0.0
        %926 = vmatpush.msra.mxu0 0.0
        %927 = vmatpush.msra.mxu0 0.0
        %928 = vmatpush.msra.mxu0 %v672
        %929 = vmatmul.f32.gmra.mxu0 %v911
        %v930 = vpop.f32.mrf.mxu0
        %v931 = vadd.f32 %v908, %v930
        %932 = vdwg.mxu0
        %933 = vrot.lane.b32.xlu0 %v701, 112
        %v934 = vpop.permute.xlu0 %933
        %935 = vrot.lane.b32.xlu0 %v727, 112
        %v936 = vpop.permute.xlu0 %935
        %v937 = vsel %vm755, %v934, 0
        %v939 = vsel %vm755, %v936, 0
        %941 = vmatpush.xpose.msra.mxu0 0.0
        %942 = vmatpush.xpose.msra.mxu0 0.0
        %943 = vmatpush.xpose.msra.mxu0 0.0
        %944 = vmatpush.xpose.msra.mxu0 0.0
        %945 = vmatpush.xpose.msra.mxu0 0.0
        %946 = vmatpush.xpose.msra.mxu0 0.0
        %947 = vmatpush.xpose.msra.mxu0 0.0
        %948 = vmatpush.xpose.msra.mxu0 0.0
        %949 = vmatpush.xpose.msra.mxu0 0.0
        %950 = vmatpush.xpose.msra.mxu0 0.0
        %951 = vmatpush.xpose.msra.mxu0 0.0
        %952 = vmatpush.xpose.msra.mxu0 0.0
        %953 = vmatpush.xpose.msra.mxu0 0.0
        %954 = vmatpush.xpose.msra.mxu0 0.0
        %955 = vmatpush.xpose.msra.mxu0 0.0
        %956 = vmatpush.xpose.msra.mxu0 %v939
        %957 = vmatmul.f32.gmra.mxu0 %v937
        %v958 = vpop.f32.mrf.mxu0
        %v959 = vadd.f32 0.0, %v958
        %960 = vdwg.mxu0
        %v961 = vmul.f32 %v959, 0.35355338
        %v962 = vsel %vm783, -1e+09, %v961
        %v963 = vsel %vm755, %v962, -inf
        %964 = vmax.xlane.f32.xlu0 %v963
        %v965 = vpop.xlane.xlu0 %964
        %v966 = vsub.f32 %v962, %v965
        %v967 = vmul.f32 %v966, 1.442695
        %v968 = vpow.pop %v967
        %v969 = vsel %vm755, %v968, 0.0
        %970 = vadd.xlane.f32.xlu0 %v969
        %v971 = vpop.xlane.xlu0 %970
        %v972 = vrcp.pop %v971
        %v973 = vmul.f32 %v968, %v972
        %974 = vrot.lane.b32.xlu0 %v750, 112
        %v975 = vpop.permute.xlu0 %974
        %v978 = vsel %vm755, %v973, 0
        %980 = vmatpush.msra.mxu0 0.0
        %981 = vmatpush.msra.mxu0 0.0
        %982 = vmatpush.msra.mxu0 0.0
        %983 = vmatpush.msra.mxu0 0.0
        %984 = vmatpush.msra.mxu0 0.0
        %985 = vmatpush.msra.mxu0 0.0
        %986 = vmatpush.msra.mxu0 0.0
        %987 = vmatpush.msra.mxu0 0.0
        %988 = vmatpush.msra.mxu0 0.0
        %989 = vmatpush.msra.mxu0 0.0
        %990 = vmatpush.msra.mxu0 0.0
        %991 = vmatpush.msra.mxu0 0.0
        %992 = vmatpush.msra.mxu0 0.0
        %993 = vmatpush.msra.mxu0 0.0
        %994 = vmatpush.msra.mxu0 0.0
        %995 = vmatpush.msra.mxu0 %v975
        %996 = vmatmul.f32.gmra.mxu0 %v978
        %v997 = vpop.f32.mrf.mxu0
        %v998 = vadd.f32 0.0, %v997
        %999 = vdwg.mxu0
        %v1001 = vsel %vm755, %v998, 0
        %1003 = vmatpush.msra.mxu0 0.0
        %1004 = vmatpush.msra.mxu0 0.0
        %1005 = vmatpush.msra.mxu0 0.0
        %1006 = vmatpush.msra.mxu0 0.0
        %1007 = vmatpush.msra.mxu0 0.0
        %1008 = vmatpush.msra.mxu0 0.0
        %1009 = vmatpush.msra.mxu0 0.0
        %1010 = vmatpush.msra.mxu0 0.0
        %1011 = vmatpush.msra.mxu0 0.0
        %1012 = vmatpush.msra.mxu0 0.0
        %1013 = vmatpush.msra.mxu0 0.0
        %1014 = vmatpush.msra.mxu0 0.0
        %1015 = vmatpush.msra.mxu0 0.0
        %1016 = vmatpush.msra.mxu0 0.0
        %1017 = vmatpush.msra.mxu0 0.0
        %1018 = vmatpush.msra.mxu0 %v674
        %1019 = vmatmul.f32.gmra.mxu0 %v1001
        %v1020 = vpop.f32.mrf.mxu0
        %v1021 = vadd.f32 0.0, %v1020
        %1022 = vdwg.mxu0
        %v1023 = vadd.f32 %v931, %v1021
        %1024 = vrot.lane.b32.xlu0 %v701, 104
        %v1025 = vpop.permute.xlu0 %1024
        %1026 = vrot.lane.b32.xlu0 %v727, 104
        %v1027 = vpop.permute.xlu0 %1026
        %v1028 = vsel %vm755, %v1025, 0
        %v1030 = vsel %vm755, %v1027, 0
        %1032 = vmatpush.xpose.msra.mxu0 0.0
        %1033 = vmatpush.xpose.msra.mxu0 0.0
        %1034 = vmatpush.xpose.msra.mxu0 0.0
        %1035 = vmatpush.xpose.msra.mxu0 0.0
        %1036 = vmatpush.xpose.msra.mxu0 0.0
        %1037 = vmatpush.xpose.msra.mxu0 0.0
        %1038 = vmatpush.xpose.msra.mxu0 0.0
        %1039 = vmatpush.xpose.msra.mxu0 0.0
        %1040 = vmatpush.xpose.msra.mxu0 0.0
        %1041 = vmatpush.xpose.msra.mxu0 0.0
        %1042 = vmatpush.xpose.msra.mxu0 0.0
        %1043 = vmatpush.xpose.msra.mxu0 0.0
        %1044 = vmatpush.xpose.msra.mxu0 0.0
        %1045 = vmatpush.xpose.msra.mxu0 0.0
        %1046 = vmatpush.xpose.msra.mxu0 0.0
        %1047 = vmatpush.xpose.msra.mxu0 %v1030
        %1048 = vmatmul.f32.gmra.mxu0 %v1028
        %v1049 = vpop.f32.mrf.mxu0
        %v1050 = vadd.f32 0.0, %v1049
        %1051 = vdwg.mxu0
        %v1052 = vmul.f32 %v1050, 0.35355338
        %v1053 = vsel %vm783, -1e+09, %v1052
        %v1054 = vsel %vm755, %v1053, -inf
        %1055 = vmax.xlane.f32.xlu0 %v1054
        %v1056 = vpop.xlane.xlu0 %1055
        %v1057 = vsub.f32 %v1053, %v1056
        %v1058 = vmul.f32 %v1057, 1.442695
        %v1059 = vpow.pop %v1058
        %v1060 = vsel %vm755, %v1059, 0.0
        %1061 = vadd.xlane.f32.xlu0 %v1060
        %v1062 = vpop.xlane.xlu0 %1061
        %v1063 = vrcp.pop %v1062
        %v1064 = vmul.f32 %v1059, %v1063
        %1065 = vrot.lane.b32.xlu0 %v750, 104
        %v1066 = vpop.permute.xlu0 %1065
        %v1069 = vsel %vm755, %v1064, 0
        %1071 = vmatpush.msra.mxu0 0.0
        %1072 = vmatpush.msra.mxu0 0.0
        %1073 = vmatpush.msra.mxu0 0.0
        %1074 = vmatpush.msra.mxu0 0.0
        %1075 = vmatpush.msra.mxu0 0.0
        %1076 = vmatpush.msra.mxu0 0.0
        %1077 = vmatpush.msra.mxu0 0.0
        %1078 = vmatpush.msra.mxu0 0.0
        %1079 = vmatpush.msra.mxu0 0.0
        %1080 = vmatpush.msra.mxu0 0.0
        %1081 = vmatpush.msra.mxu0 0.0
        %1082 = vmatpush.msra.mxu0 0.0
        %1083 = vmatpush.msra.mxu0 0.0
        %1084 = vmatpush.msra.mxu0 0.0
        %1085 = vmatpush.msra.mxu0 0.0
        %1086 = vmatpush.msra.mxu0 %v1066
        %1087 = vmatmul.f32.gmra.mxu0 %v1069
        %v1088 = vpop.f32.mrf.mxu0
        %v1089 = vadd.f32 0.0, %v1088
        %1090 = vdwg.mxu0
        %v1092 = vsel %vm755, %v1089, 0
        %1094 = vmatpush.msra.mxu0 0.0
        %1095 = vmatpush.msra.mxu0 0.0
        %1096 = vmatpush.msra.mxu0 0.0
        %1097 = vmatpush.msra.mxu0 0.0
        %1098 = vmatpush.msra.mxu0 0.0
        %1099 = vmatpush.msra.mxu0 0.0
        %1100 = vmatpush.msra.mxu0 0.0
        %1101 = vmatpush.msra.mxu0 0.0
        %1102 = vmatpush.msra.mxu0 0.0
        %1103 = vmatpush.msra.mxu0 0.0
        %1104 = vmatpush.msra.mxu0 0.0
        %1105 = vmatpush.msra.mxu0 0.0
        %1106 = vmatpush.msra.mxu0 0.0
        %1107 = vmatpush.msra.mxu0 0.0
        %1108 = vmatpush.msra.mxu0 0.0
        %1109 = vmatpush.msra.mxu0 %v675
        %1110 = vmatmul.f32.gmra.mxu0 %v1092
        %v1111 = vpop.f32.mrf.mxu0
        %v1112 = vadd.f32 0.0, %v1111
        %1113 = vdwg.mxu0
        %v1114 = vadd.f32 %v1023, %v1112
        %v1116 = vperm.slane %v676, 0
        %v1118 = vadd.f32 %v1114, %v1116
        %v1119 = vadd.f32 %v611, %v1118
        %1120 = vst.msk [vmem:[%s610] sm:$0xff] %vm615, %v1119
        %p1121 = scmp.lt.s32.totalorder %s31, 1
        %s1122 = scalar_select %p1121, %s31, 1
        %s1123 = smul.addr %s1122, 8
        %s1124 = scalar_lea.vmem %s13, %s1123
        // Predicated region
        $region109: #{my_decoder.11} parent=71 // pred_check
          %p1125 = pneg %p337
        $region110: #{my_decoder.11} parent=71 // pred_check_branch
          %1127 = sbr.rel (%p1125) target = $region112
        $region111: #{my_decoder.11} parent=71 // pred_region
          _
        $region112: #{my_decoder.11} parent=71 // pred_fallthru
          _
      $region72: #{my_decoder.11} parent=5 // pred_fallthru
        _
      %p1128 = scmp.le.s32.totalorder 2, %s26
      // Predicated region
      $region113: #{my_decoder.11} parent=5 // pred_check
        %p1129 = pneg %p1128
      $region114: #{my_decoder.11} parent=5 // pred_check_branch
        %1131 = sbr.rel (%p1129) target = $region116
      $region115: #{my_decoder.11} parent=5 // pred_region
        %s1132 = ssub.s32 %s26, 2
        // Predicated region
        $region117: #{my_decoder.11} parent=115 // pred_check
          %p1133 = pneg %p343
        $region118: #{my_decoder.11} parent=115 // pred_check_branch
          %1135 = sbr.rel (%p1133) target = $region120
        $region119: #{my_decoder.11} parent=115 // pred_region
          %p1136 = scmp.lt.s32.totalorder %s32, 1
          %s1137 = scalar_select %p1136, %s32, 1
          %s1138 = smul.addr %s1137, 8
          %s1139 = scalar_lea.vmem %s13, %s1138
        $region120: #{my_decoder.11} parent=115 // pred_fallthru
          _
      $region116: #{my_decoder.11} parent=5 // pred_fallthru
        _
    $region6: #{my_decoder.11} parent=1 // loop_footer
      %s30 = sadd.s32 1, %s26
    $region7: #{my_decoder.11} parent=1 // loop_footer_branch
      %25 = sbr.rel target = $region3
    $region8: #{my_decoder.11} parent=1 // loop_exit
      _
    %1140 = vsyncpa [#allocation3], 1
    %s1141 = scalar_lea.sflag [#allocation3], 1
    %1142 = vsyncpa %s1141, 1
    %1143 = vsyncpa [#allocation5], 1
    %1144 = vsyncpa [#allocation8], 1
    %1145 = vsyncpa [#allocation11], 1
    %1146 = vsyncpa [#allocation14], 1

// kernel: my_decoder.12
$region0: #{my_decoder.12}
  #allocation0 [shape = 'u32[]', space=smem, size = 0x4, offset = 0x4, fixed_abs, tag = 'smem constant byte address 0x4 - core index']
  #allocation1 [shape = 'u32[72,128]{1,0:T(1,128)}', space=vmem, size = 0x9000, scoped, tag = 'internal scratch']
  %s0 = inlined_call_operand.vmem [shape: f32[2,8,32], index: 0, kind: input, shape index: {}, may-alias: {0,7}]
  %s1 = inlined_call_operand.vmem [shape: f32[1,32], index: 1, kind: input, shape index: {}]
  %s2 = inlined_call_operand.vmem [shape: f32[1,32], index: 2, kind: input, shape index: {}]
  %s3 = inlined_call_operand.vmem [shape: f32[32,64], index: 3, kind: input, shape index: {}]
  %s4 = inlined_call_operand.vmem [shape: f32[1,64], index: 4, kind: input, shape index: {}]
  %s5 = inlined_call_operand.vmem [shape: f32[64,32], index: 5, kind: input, shape index: {}]
  %s6 = inlined_call_operand.vmem [shape: f32[1,32], index: 6, kind: input, shape index: {}]
  %s7 = inlined_call_operand.vmem [shape: f32[2,8,32], index: 7, kind: output, shape index: {}, may-alias: {0,7}]
  %s8 = sld [smem:[#allocation0]]
  $region61: #{my_decoder.12} parent=0
    _
  %s10 = ssub.s32 1, %s8
  %s11 = scalar_select 0, %s10, %s8
  loop: start=0, step=1, limit=4
  $region2: #{my_decoder.12} parent=0 // loop_pre_header
    _
  $region3: #{my_decoder.12} parent=0 // loop_header
    %s13 = sphi 0, %s17
    %p14 = scmp.ge.s32.totalorder %s13, 4
    %s23 = sphi 0, %s25
    %s26 = sphi 0, %s23
    %s27 = sphi 0, %s26
    %s43 = sphi 0, %s27
    %s47 = sphi 0, %s47
    %s49 = sphi 0, %s47
    %s50 = sphi 0, %s49
    %s64 = sphi 0, %s50
    %s68 = sphi 0, %s68
    %s70 = sphi 0, %s68
    %s71 = sphi 0, %s70
    %s85 = sphi 0, %s71
    %s89 = sphi 0, %s89
    %s91 = sphi 0, %s89
    %s92 = sphi 0, %s91
    %s106 = sphi 0, %s92
    %s110 = sphi 0, %s110
    %s112 = sphi 0, %s110
    %s113 = sphi 0, %s112
    %s127 = sphi 0, %s113
    %s131 = sphi 0, %s131
    %s133 = sphi 0, %s131
    %s134 = sphi 0, %s133
    %s148 = sphi 0, %s134
    %s152 = sphi 0, %s152
    %s154 = sphi 0, %s152
    %s155 = sphi 0, %s154
    %s169 = sphi 0, %s155
    %s175 = sphi 0, %s177
    %s178 = sphi 0, %s175
    %s179 = sphi 0, %s178
    %s195 = sphi 0, %s179
  $region4: #{my_decoder.12} parent=0 // loop_header_branch
    %16 = sbr.rel (%p14) target = $region8
  $region5: #{my_decoder.12} parent=0 // loop_body
    %s18 = ssub.s32 %s13, 1
    %s19 = ssub.s32 %s13, 2
    %s20 = sadd.s32 %s13, 1
    %s21 = ssub.s32 %s13, %s20
    %p22 = scmp.eq.s32.totalorder %s21, 0
    %s24 = sadd.s32 %s23, 1
    %s25 = scalar_select %p22, %s23, %s24
    %p28 = pneg %p22
    %p29 = scmp.eq.s32.totalorder %s13, 1
    %p30 = por %p28, %p29
    %p31 = scmp.ne.s32.totalorder %s23, %s26
    %p32 = scmp.eq.s32.totalorder %s13, 0
    %p33 = por %p31, %p32
    %p34 = scmp.ne.s32.totalorder %s23, %s26
    %p35 = scmp.eq.s32.totalorder %s18, 1
    %p36 = por %p34, %p35
    %p37 = scmp.ne.s32.totalorder %s26, %s27
    %p38 = scmp.eq.s32.totalorder %s18, 0
    %p39 = por %p37, %p38
    %p40 = scmp.ne.s32.totalorder %s26, %s27
    %p41 = scmp.eq.s32.totalorder %s19, 1
    %p42 = por %p40, %p41
    %p44 = scmp.ne.s32.totalorder %s27, %s43
    %p45 = scmp.eq.s32.totalorder %s19, 0
    %p46 = por %p44, %p45
    %s48 = sadd.s32 %s47, 1
    %p51 = scmp.eq.s32.totalorder %s13, 1
    %p52 = scmp.ne.s32.totalorder %s47, %s49
    %p53 = scmp.eq.s32.totalorder %s13, 0
    %p54 = por %p52, %p53
    %p55 = scmp.ne.s32.totalorder %s47, %s49
    %p56 = scmp.eq.s32.totalorder %s18, 1
    %p57 = por %p55, %p56
    %p58 = scmp.ne.s32.totalorder %s49, %s50
    %p59 = scmp.eq.s32.totalorder %s18, 0
    %p60 = por %p58, %p59
    %p61 = scmp.ne.s32.totalorder %s49, %s50
    %p62 = scmp.eq.s32.totalorder %s19, 1
    %p63 = por %p61, %p62
    %p65 = scmp.ne.s32.totalorder %s50, %s64
    %p66 = scmp.eq.s32.totalorder %s19, 0
    %p67 = por %p65, %p66
    %s69 = sadd.s32 %s68, 1
    %p72 = scmp.eq.s32.totalorder %s13, 1
    %p73 = scmp.ne.s32.totalorder %s68, %s70
    %p74 = scmp.eq.s32.totalorder %s13, 0
    %p75 = por %p73, %p74
    %p76 = scmp.ne.s32.totalorder %s68, %s70
    %p77 = scmp.eq.s32.totalorder %s18, 1
    %p78 = por %p76, %p77
    %p79 = scmp.ne.s32.totalorder %s70, %s71
    %p80 = scmp.eq.s32.totalorder %s18, 0
    %p81 = por %p79, %p80
    %p82 = scmp.ne.s32.totalorder %s70, %s71
    %p83 = scmp.eq.s32.totalorder %s19, 1
    %p84 = por %p82, %p83
    %p86 = scmp.ne.s32.totalorder %s71, %s85
    %p87 = scmp.eq.s32.totalorder %s19, 0
    %p88 = por %p86, %p87
    %s90 = sadd.s32 %s89, 1
    %p93 = scmp.eq.s32.totalorder %s13, 1
    %p94 = scmp.ne.s32.totalorder %s89, %s91
    %p95 = scmp.eq.s32.totalorder %s13, 0
    %p96 = por %p94, %p95
    %p97 = scmp.ne.s32.totalorder %s89, %s91
    %p98 = scmp.eq.s32.totalorder %s18, 1
    %p99 = por %p97, %p98
    %p100 = scmp.ne.s32.totalorder %s91, %s92
    %p101 = scmp.eq.s32.totalorder %s18, 0
    %p102 = por %p100, %p101
    %p103 = scmp.ne.s32.totalorder %s91, %s92
    %p104 = scmp.eq.s32.totalorder %s19, 1
    %p105 = por %p103, %p104
    %p107 = scmp.ne.s32.totalorder %s92, %s106
    %p108 = scmp.eq.s32.totalorder %s19, 0
    %p109 = por %p107, %p108
    %s111 = sadd.s32 %s110, 1
    %p114 = scmp.eq.s32.totalorder %s13, 1
    %p115 = scmp.ne.s32.totalorder %s110, %s112
    %p116 = scmp.eq.s32.totalorder %s13, 0
    %p117 = por %p115, %p116
    %p118 = scmp.ne.s32.totalorder %s110, %s112
    %p119 = scmp.eq.s32.totalorder %s18, 1
    %p120 = por %p118, %p119
    %p121 = scmp.ne.s32.totalorder %s112, %s113
    %p122 = scmp.eq.s32.totalorder %s18, 0
    %p123 = por %p121, %p122
    %p124 = scmp.ne.s32.totalorder %s112, %s113
    %p125 = scmp.eq.s32.totalorder %s19, 1
    %p126 = por %p124, %p125
    %p128 = scmp.ne.s32.totalorder %s113, %s127
    %p129 = scmp.eq.s32.totalorder %s19, 0
    %p130 = por %p128, %p129
    %s132 = sadd.s32 %s131, 1
    %p135 = scmp.eq.s32.totalorder %s13, 1
    %p136 = scmp.ne.s32.totalorder %s131, %s133
    %p137 = scmp.eq.s32.totalorder %s13, 0
    %p138 = por %p136, %p137
    %p139 = scmp.ne.s32.totalorder %s131, %s133
    %p140 = scmp.eq.s32.totalorder %s18, 1
    %p141 = por %p139, %p140
    %p142 = scmp.ne.s32.totalorder %s133, %s134
    %p143 = scmp.eq.s32.totalorder %s18, 0
    %p144 = por %p142, %p143
    %p145 = scmp.ne.s32.totalorder %s133, %s134
    %p146 = scmp.eq.s32.totalorder %s19, 1
    %p147 = por %p145, %p146
    %p149 = scmp.ne.s32.totalorder %s134, %s148
    %p150 = scmp.eq.s32.totalorder %s19, 0
    %p151 = por %p149, %p150
    %s153 = sadd.s32 %s152, 1
    %p156 = scmp.eq.s32.totalorder %s13, 1
    %p157 = scmp.ne.s32.totalorder %s152, %s154
    %p158 = scmp.eq.s32.totalorder %s13, 0
    %p159 = por %p157, %p158
    %p160 = scmp.ne.s32.totalorder %s152, %s154
    %p161 = scmp.eq.s32.totalorder %s18, 1
    %p162 = por %p160, %p161
    %p163 = scmp.ne.s32.totalorder %s154, %s155
    %p164 = scmp.eq.s32.totalorder %s18, 0
    %p165 = por %p163, %p164
    %p166 = scmp.ne.s32.totalorder %s154, %s155
    %p167 = scmp.eq.s32.totalorder %s19, 1
    %p168 = por %p166, %p167
    %p170 = scmp.ne.s32.totalorder %s155, %s169
    %p171 = scmp.eq.s32.totalorder %s19, 0
    %p172 = por %p170, %p171
    %s173 = ssub.s32 %s13, %s20
    %p174 = scmp.eq.s32.totalorder %s173, 0
    %s176 = sadd.s32 %s175, 1
    %s177 = scalar_select %p174, %s175, %s176
    %p180 = pneg %p174
    %p181 = scmp.eq.s32.totalorder %s13, 1
    %p182 = por %p180, %p181
    %p183 = scmp.ne.s32.totalorder %s175, %s178
    %p184 = scmp.eq.s32.totalorder %s13, 0
    %p185 = por %p183, %p184
    %p186 = scmp.ne.s32.totalorder %s175, %s178
    %p187 = scmp.eq.s32.totalorder %s18, 1
    %p188 = por %p186, %p187
    %p189 = scmp.ne.s32.totalorder %s178, %s179
    %p190 = scmp.eq.s32.totalorder %s18, 0
    %p191 = por %p189, %p190
    %p192 = scmp.ne.s32.totalorder %s178, %s179
    %p193 = scmp.eq.s32.totalorder %s19, 1
    %p194 = por %p192, %p193
    %p196 = scmp.ne.s32.totalorder %s179, %s195
    %p197 = scmp.eq.s32.totalorder %s19, 0
    %p198 = por %p196, %p197
    %p199 = scmp.le.s32.totalorder 1, %s13
    %p200 = scmp.lt.s32.totalorder %s13, 3
    %p201 = pnand %p199, %p200
    %p202 = pneg %p201
    // Predicated region
    $region9: #{my_decoder.12} parent=5 // pred_check
      _
    $region10: #{my_decoder.12} parent=5 // pred_check_branch
      %204 = sbr.rel (%p201) target = $region12
    $region11: #{my_decoder.12} parent=5 // pred_region
      %s205 = ssub.s32 %s13, 1
      // Predicated region
      $region13: #{my_decoder.12} parent=11 // pred_check
        %p206 = pneg %p60
      $region14: #{my_decoder.12} parent=11 // pred_check_branch
        %208 = sbr.rel (%p206) target = $region16
      $region15: #{my_decoder.12} parent=11 // pred_region
        _
      $region16: #{my_decoder.12} parent=11 // pred_fallthru
        _
      // Predicated region
      $region17: #{my_decoder.12} parent=11 // pred_check
        %p209 = pneg %p81
      $region18: #{my_decoder.12} parent=11 // pred_check_branch
        %211 = sbr.rel (%p209) target = $region20
      $region19: #{my_decoder.12} parent=11 // pred_region
        _
      $region20: #{my_decoder.12} parent=11 // pred_fallthru
        _
      // Predicated region
      $region21: #{my_decoder.12} parent=11 // pred_check
        %p212 = pneg %p102
      $region22: #{my_decoder.12} parent=11 // pred_check_branch
        %214 = sbr.rel (%p212) target = $region24
      $region23: #{my_decoder.12} parent=11 // pred_region
        _
      $region24: #{my_decoder.12} parent=11 // pred_fallthru
        _
      // Predicated region
      $region25: #{my_decoder.12} parent=11 // pred_check
        %p215 = pneg %p123
      $region26: #{my_decoder.12} parent=11 // pred_check_branch
        %217 = sbr.rel (%p215) target = $region28
      $region27: #{my_decoder.12} parent=11 // pred_region
        _
      $region28: #{my_decoder.12} parent=11 // pred_fallthru
        _
      // Predicated region
      $region29: #{my_decoder.12} parent=11 // pred_check
        %p218 = pneg %p144
      $region30: #{my_decoder.12} parent=11 // pred_check_branch
        %220 = sbr.rel (%p218) target = $region32
      $region31: #{my_decoder.12} parent=11 // pred_region
        _
      $region32: #{my_decoder.12} parent=11 // pred_fallthru
        _
      // Predicated region
      $region33: #{my_decoder.12} parent=11 // pred_check
        %p221 = pneg %p165
      $region34: #{my_decoder.12} parent=11 // pred_check_branch
        %223 = sbr.rel (%p221) target = $region36
      $region35: #{my_decoder.12} parent=11 // pred_region
        _
      $region36: #{my_decoder.12} parent=11 // pred_fallthru
        _
    $region12: #{my_decoder.12} parent=5 // pred_fallthru
      _
    %p224 = scmp.lt.s32.totalorder %s13, 2
    // Predicated region
    $region37: #{my_decoder.12} parent=5 // pred_check
      %p225 = pneg %p224
    $region38: #{my_decoder.12} parent=5 // pred_check_branch
      %227 = sbr.rel (%p225) target = $region40
    $region39: #{my_decoder.12} parent=5 // pred_region
      // Predicated region
      $region41: #{my_decoder.12} parent=39 // pred_check
        %p228 = pneg %p33
      $region42: #{my_decoder.12} parent=39 // pred_check_branch
        %230 = sbr.rel (%p228) target = $region44
      $region43: #{my_decoder.12} parent=39 // pred_region
        %p231 = scmp.lt.s32.totalorder %s13, 1
        %s232 = scalar_select %p231, %s13, 1
        %s233 = smul.addr %s232, 8
        %s234 = scalar_lea.vmem %s0, %s233
      $region44: #{my_decoder.12} parent=39 // pred_fallthru
        _
    $region40: #{my_decoder.12} parent=5 // pred_fallthru
      _
    %p235 = scmp.le.s32.totalorder 1, %s13
    %p236 = scmp.lt.s32.totalorder %s13, 3
    %p237 = pnand %p235, %p236
    %p238 = pneg %p237
    // Predicated region
    $region45: #{my_decoder.12} parent=5 // pred_check
      _
    $region46: #{my_decoder.12} parent=5 // pred_check_branch
      %240 = sbr.rel (%p237) target = $region48
    $region47: #{my_decoder.12} parent=5 // pred_region
      %s241 = ssub.s32 %s13, 1
      %p242 = scmp.lt.s32.totalorder %s18, 1
      %s243 = scalar_select %p242, %s18, 1
      %s244 = smul.addr %s243, 8
      %s245 = scalar_lea.vmem %s0, %s244
      %p246 = pneg %p39
      %p247 = pneg %p36
      %p248 = pneg %p60
      %p249 = pneg %p57
      %p250 = pneg %p81
      %p251 = pneg %p78
      %p252 = pneg %p102
      %p253 = pneg %p99
      %p254 = pneg %p123
      %p255 = pneg %p120
      %p256 = pneg %p144
      %p257 = pneg %p141
      %p258 = pneg %p165
      %p259 = pneg %p162
      %p260 = pneg %p191
      %p261 = pneg %p188
      %p262 = scmp.lt.s32.totalorder %s18, 1
      %s263 = scalar_select %p262, %s18, 1
      %s264 = smul.addr %s263, 8
      %s265 = scalar_lea.vmem %s7, %s264
      %p266 = scmp.lt.s32.totalorder %s18, 1
      %s267 = scalar_select %p266, %s18, 1
      %s268 = smul.addr %s267, 8
      %s269 = scalar_lea.vmem %s0, %s268
      %p270 = scmp.lt.s32.totalorder %s18, 1
      %s271 = scalar_select %p270, %s18, 1
      %s272 = smul.addr %s271, 8
      %s273 = scalar_lea.vmem %s7, %s272
      %v274 = vld [vmem:[%s269] sm:$0xff]
      %v275 = vld [vmem:[%s1] sm:$0x1]
      %v276 = vld [vmem:[%s2] sm:$0x1]
      %vm277 = vcmask 261120
      %v278 = vsel %vm277, %v274, 0.0
      %279 = vadd.xlane.f32.xlu0 %v278
      %v280 = vpop.xlane.xlu0 %279
      %v281 = vrcp.pop 32.0
      %v282 = vmul.f32 32.0, %v281
      %v283 = vsub.f32 1.0, %v282
      %v284 = vmul.f32 %v281, %v283
      %v285 = vadd.f32 %v281, %v284
      %vm286 = vweird.f32 %v281
      %v287 = vsel %vm286, %v281, %v285
      %v288 = vmul.f32 %v280, %v287
      %v289 = vsub.f32 %v274, %v288
      %v290 = vmul.f32 %v289, %v289
      %v291 = vsel %vm277, %v290, 0.0
      %292 = vadd.xlane.f32.xlu0 %v291
      %v293 = vpop.xlane.xlu0 %292
      %v294 = vmul.f32 %v293, 0.032258064
      %v295 = vrsqrt.pop %v294
      %v296 = vmul.f32 %v295, %v294
      %v297 = vmul.f32 %v296, %v295
      %v298 = vmul.f32 0.5, %v297
      %v299 = vsub.f32 1.5, %v298
      %v300 = vmul.f32 %v295, %v299
      %v301 = vmul.f32 %v294, %v300
      %vm302 = vcmp.eq.f32.partialorder %v294, inf
      %v303 = vsel %vm302, %v294, %v301
      %vm304 = vcmp.eq.f32.partialorder %v294, 0.0
      %v305 = vand.u32 %v294, 2147483648
      %v306 = vsel %vm304, %v305, %v303
      %v307 = vadd.f32 %v306, 1e-06
      %v308 = vrcp.pop %v307
      %v310 = vperm.slane %v275, 0
      %v312 = vmul.f32 %v310, %v289
      %v313 = vmul.f32 %v312, %v308
      %v315 = vperm.slane %v276, 0
      %v317 = vadd.f32 %v313, %v315
      %v318 = vld [vmem:[%s3] sm:$0xff]
      %v319 = vld [vmem:[%s3 + $0x8] sm:$0xff]
      %v320 = vld [vmem:[%s3 + $0x10] sm:$0xff]
      %v321 = vld [vmem:[%s3 + $0x18] sm:$0xff]
      %v322 = vld [vmem:[%s4] sm:$0x1]
      %v324 = vperm.slane %v322, 0
      %v327 = vsel %vm277, %v317, 0
      %329 = vmatpush.msra.mxu0 0.0
      %330 = vmatpush.msra.mxu0 0.0
      %331 = vmatpush.msra.mxu0 0.0
      %332 = vmatpush.msra.mxu0 0.0
      %333 = vmatpush.msra.mxu0 0.0
      %334 = vmatpush.msra.mxu0 0.0
      %335 = vmatpush.msra.mxu0 0.0
      %336 = vmatpush.msra.mxu0 0.0
      %337 = vmatpush.msra.mxu0 0.0
      %338 = vmatpush.msra.mxu0 0.0
      %339 = vmatpush.msra.mxu0 0.0
      %340 = vmatpush.msra.mxu0 0.0
      %341 = vmatpush.msra.mxu0 %v321
      %342 = vmatpush.msra.mxu0 %v320
      %343 = vmatpush.msra.mxu0 %v319
      %344 = vmatpush.msra.mxu0 %v318
      %345 = vmatmul.f32.gmra.mxu0 %v327
      %v346 = vpop.f32.mrf.mxu0
      %v347 = vadd.f32 %v324, %v346
      %348 = vdwg.mxu0
      %v349 = vmax.f32 %v347, 0.0
      %v350 = vld [vmem:[%s5] sm:$0xff]
      %v351 = vld [vmem:[%s5 + $0x8] sm:$0xff]
      %v352 = vld [vmem:[%s5 + $0x10] sm:$0xff]
      %v353 = vld [vmem:[%s5 + $0x18] sm:$0xff]
      %v354 = vld [vmem:[%s5 + $0x20] sm:$0xff]
      %v355 = vld [vmem:[%s5 + $0x28] sm:$0xff]
      %v356 = vld [vmem:[%s5 + $0x30] sm:$0xff]
      %v357 = vld [vmem:[%s5 + $0x38] sm:$0xff]
      %v358 = vld [vmem:[%s6] sm:$0x1]
      %v360 = vperm.slane %v358, 0
      %vm362 = vcmask 523264
      %v364 = vsel %vm362, %v349, 0
      %366 = vmatpush.msra.mxu0 0.0
      %367 = vmatpush.msra.mxu0 0.0
      %368 = vmatpush.msra.mxu0 0.0
      %369 = vmatpush.msra.mxu0 0.0
      %370 = vmatpush.msra.mxu0 0.0
      %371 = vmatpush.msra.mxu0 0.0
      %372 = vmatpush.msra.mxu0 0.0
      %373 = vmatpush.msra.mxu0 0.0
      %374 = vmatpush.msra.mxu0 %v357
      %375 = vmatpush.msra.mxu0 %v356
      %376 = vmatpush.msra.mxu0 %v355
      %377 = vmatpush.msra.mxu0 %v354
      %378 = vmatpush.msra.mxu0 %v353
      %379 = vmatpush.msra.mxu0 %v352
      %380 = vmatpush.msra.mxu0 %v351
      %381 = vmatpush.msra.mxu0 %v350
      %382 = vmatmul.f32.gmra.mxu0 %v364
      %v383 = vpop.f32.mrf.mxu0
      %v384 = vadd.f32 %v360, %v383
      %385 = vdwg.mxu0
      %v386 = vadd.f32 %v274, %v384
      %387 = vst.msk [vmem:[%s273] sm:$0xff] %vm277, %v386
      %p388 = scmp.lt.s32.totalorder %s18, 1
      %s389 = scalar_select %p388, %s18, 1
      %s390 = smul.addr %s389, 8
      %s391 = scalar_lea.vmem %s7, %s390
      // Predicated region
      $region49: #{my_decoder.12} parent=47 // pred_check
        %p392 = pneg %p188
      $region50: #{my_decoder.12} parent=47 // pred_check_branch
        %394 = sbr.rel (%p392) target = $region52
      $region51: #{my_decoder.12} parent=47 // pred_region
        _
      $region52: #{my_decoder.12} parent=47 // pred_fallthru
        _
    $region48: #{my_decoder.12} parent=5 // pred_fallthru
      _
    %p395 = scmp.le.s32.totalorder 2, %s13
    // Predicated region
    $region53: #{my_decoder.12} parent=5 // pred_check
      %p396 = pneg %p395
    $region54: #{my_decoder.12} parent=5 // pred_check_branch
      %398 = sbr.rel (%p396) target = $region56
    $region55: #{my_decoder.12} parent=5 // pred_region
      %s399 = ssub.s32 %s13, 2
      // Predicated region
      $region57: #{my_decoder.12} parent=55 // pred_check
        %p400 = pneg %p194
      $region58: #{my_decoder.12} parent=55 // pred_check_branch
        %402 = sbr.rel (%p400) target = $region60
      $region59: #{my_decoder.12} parent=55 // pred_region
        %p403 = scmp.lt.s32.totalorder %s19, 1
        %s404 = scalar_select %p403, %s19, 1
        %s405 = smul.addr %s404, 8
        %s406 = scalar_lea.vmem %s7, %s405
      $region60: #{my_decoder.12} parent=55 // pred_fallthru
        _
    $region56: #{my_decoder.12} parent=5 // pred_fallthru
      _
  $region6: #{my_decoder.12} parent=0 // loop_footer
    %s17 = sadd.s32 1, %s13
  $region7: #{my_decoder.12} parent=0 // loop_footer_branch
    %12 = sbr.rel target = $region3
  $region8: #{my_decoder.12} parent=0 // loop_exit
    _

// kernel: my_decoder.13
$region0: #{my_decoder.13}
  #allocation0 [shape = 'u32[]', space=smem, size = 0x4, offset = 0x4, fixed_abs, tag = 'smem constant byte address 0x4 - core index']
  #allocation1 [shape = 'u32[72,128]{1,0:T(1,128)}', space=vmem, size = 0x9000, scoped, tag = 'internal scratch']
  %s0 = inlined_call_operand.vmem [shape: f32[2,8,32], index: 0, kind: input, shape index: {}]
  %s1 = inlined_call_operand.vmem [shape: f32[1,32], index: 1, kind: input, shape index: {}]
  %s2 = inlined_call_operand.vmem [shape: f32[1,32], index: 2, kind: input, shape index: {}]
  %s3 = inlined_call_operand.hbm [shape: f32[2,8,32], index: 3, kind: output, shape index: {}]
  %s4 = sld [smem:[#allocation0]]
  $region45: #{my_decoder.13} parent=0
    _
  %s6 = ssub.s32 1, %s4
  %s7 = scalar_select 0, %s6, %s4
  $region1: #{my_decoder.13} parent=0
    #allocation2 [shape = 'u8[8192]{0}', space=vmem, size = 0x2000, scoped, tag = 'output window, operand 0']
    #allocation3 [shape = 's32[2]{0}', space=sflag, size = 0x8, scoped, tag = 'scoped memory for my_decoder.13']
    %8 = vsyncpa [#allocation3], 0
    %s9 = scalar_lea.sflag [#allocation3], 1
    %10 = vsyncpa %s9, 0
    loop: start=0, step=1, limit=4
    $region2: #{my_decoder.13} parent=1 // loop_pre_header
      _
    $region3: #{my_decoder.13} parent=1 // loop_header
      %s12 = sphi 0, %s16
      %p13 = scmp.ge.s32.totalorder %s12, 4
      %s22 = sphi 0, %s24
      %s25 = sphi 0, %s22
      %s26 = sphi 0, %s25
      %s42 = sphi 0, %s26
      %s46 = sphi 0, %s46
      %s48 = sphi 0, %s46
      %s49 = sphi 0, %s48
      %s63 = sphi 0, %s49
      %s67 = sphi 0, %s67
      %s69 = sphi 0, %s67
      %s70 = sphi 0, %s69
      %s84 = sphi 0, %s70
      %s90 = sphi 0, %s92
      %s93 = sphi 0, %s90
      %s94 = sphi 0, %s93
      %s110 = sphi 0, %s94
    $region4: #{my_decoder.13} parent=1 // loop_header_branch
      %15 = sbr.rel (%p13) target = $region8
    $region5: #{my_decoder.13} parent=1 // loop_body
      %s17 = ssub.s32 %s12, 1
      %s18 = ssub.s32 %s12, 2
      %s19 = sadd.s32 %s12, 1
      %s20 = ssub.s32 %s12, %s19
      %p21 = scmp.eq.s32.totalorder %s20, 0
      %s23 = sadd.s32 %s22, 1
      %s24 = scalar_select %p21, %s22, %s23
      %p27 = pneg %p21
      %p28 = scmp.eq.s32.totalorder %s12, 1
      %p29 = por %p27, %p28
      %p30 = scmp.ne.s32.totalorder %s22, %s25
      %p31 = scmp.eq.s32.totalorder %s12, 0
      %p32 = por %p30, %p31
      %p33 = scmp.ne.s32.totalorder %s22, %s25
      %p34 = scmp.eq.s32.totalorder %s17, 1
      %p35 = por %p33, %p34
      %p36 = scmp.ne.s32.totalorder %s25, %s26
      %p37 = scmp.eq.s32.totalorder %s17, 0
      %p38 = por %p36, %p37
      %p39 = scmp.ne.s32.totalorder %s25, %s26
      %p40 = scmp.eq.s32.totalorder %s18, 1
      %p41 = por %p39, %p40
      %p43 = scmp.ne.s32.totalorder %s26, %s42
      %p44 = scmp.eq.s32.totalorder %s18, 0
      %p45 = por %p43, %p44
      %s47 = sadd.s32 %s46, 1
      %p50 = scmp.eq.s32.totalorder %s12, 1
      %p51 = scmp.ne.s32.totalorder %s46, %s48
      %p52 = scmp.eq.s32.totalorder %s12, 0
      %p53 = por %p51, %p52
      %p54 = scmp.ne.s32.totalorder %s46, %s48
      %p55 = scmp.eq.s32.totalorder %s17, 1
      %p56 = por %p54, %p55
      %p57 = scmp.ne.s32.totalorder %s48, %s49
      %p58 = scmp.eq.s32.totalorder %s17, 0
      %p59 = por %p57, %p58
      %p60 = scmp.ne.s32.totalorder %s48, %s49
      %p61 = scmp.eq.s32.totalorder %s18, 1
      %p62 = por %p60, %p61
      %p64 = scmp.ne.s32.totalorder %s49, %s63
      %p65 = scmp.eq.s32.totalorder %s18, 0
      %p66 = por %p64, %p65
      %s68 = sadd.s32 %s67, 1
      %p71 = scmp.eq.s32.totalorder %s12, 1
      %p72 = scmp.ne.s32.totalorder %s67, %s69
      %p73 = scmp.eq.s32.totalorder %s12, 0
      %p74 = por %p72, %p73
      %p75 = scmp.ne.s32.totalorder %s67, %s69
      %p76 = scmp.eq.s32.totalorder %s17, 1
      %p77 = por %p75, %p76
      %p78 = scmp.ne.s32.totalorder %s69, %s70
      %p79 = scmp.eq.s32.totalorder %s17, 0
      %p80 = por %p78, %p79
      %p81 = scmp.ne.s32.totalorder %s69, %s70
      %p82 = scmp.eq.s32.totalorder %s18, 1
      %p83 = por %p81, %p82
      %p85 = scmp.ne.s32.totalorder %s70, %s84
      %p86 = scmp.eq.s32.totalorder %s18, 0
      %p87 = por %p85, %p86
      %s88 = ssub.s32 %s12, %s19
      %p89 = scmp.eq.s32.totalorder %s88, 0
      %s91 = sadd.s32 %s90, 1
      %s92 = scalar_select %p89, %s90, %s91
      %p95 = pneg %p89
      %p96 = scmp.eq.s32.totalorder %s12, 1
      %p97 = por %p95, %p96
      %p98 = scmp.ne.s32.totalorder %s90, %s93
      %p99 = scmp.eq.s32.totalorder %s12, 0
      %p100 = por %p98, %p99
      %p101 = scmp.ne.s32.totalorder %s90, %s93
      %p102 = scmp.eq.s32.totalorder %s17, 1
      %p103 = por %p101, %p102
      %p104 = scmp.ne.s32.totalorder %s93, %s94
      %p105 = scmp.eq.s32.totalorder %s17, 0
      %p106 = por %p104, %p105
      %p107 = scmp.ne.s32.totalorder %s93, %s94
      %p108 = scmp.eq.s32.totalorder %s18, 1
      %p109 = por %p107, %p108
      %p111 = scmp.ne.s32.totalorder %s94, %s110
      %p112 = scmp.eq.s32.totalorder %s18, 0
      %p113 = por %p111, %p112
      %p114 = scmp.le.s32.totalorder 1, %s12
      %p115 = scmp.lt.s32.totalorder %s12, 3
      %p116 = pnand %p114, %p115
      %p117 = pneg %p116
      // Predicated region
      $region9: #{my_decoder.13} parent=5 // pred_check
        _
      $region10: #{my_decoder.13} parent=5 // pred_check_branch
        %119 = sbr.rel (%p116) target = $region12
      $region11: #{my_decoder.13} parent=5 // pred_region
        %s120 = ssub.s32 %s12, 1
        // Predicated region
        $region13: #{my_decoder.13} parent=11 // pred_check
          %p121 = pneg %p59
        $region14: #{my_decoder.13} parent=11 // pred_check_branch
          %123 = sbr.rel (%p121) target = $region16
        $region15: #{my_decoder.13} parent=11 // pred_region
          _
        $region16: #{my_decoder.13} parent=11 // pred_fallthru
          _
        // Predicated region
        $region17: #{my_decoder.13} parent=11 // pred_check
          %p124 = pneg %p80
        $region18: #{my_decoder.13} parent=11 // pred_check_branch
          %126 = sbr.rel (%p124) target = $region20
        $region19: #{my_decoder.13} parent=11 // pred_region
          _
        $region20: #{my_decoder.13} parent=11 // pred_fallthru
          _
      $region12: #{my_decoder.13} parent=5 // pred_fallthru
        _
      %p127 = scmp.lt.s32.totalorder %s12, 2
      // Predicated region
      $region21: #{my_decoder.13} parent=5 // pred_check
        %p128 = pneg %p127
      $region22: #{my_decoder.13} parent=5 // pred_check_branch
        %130 = sbr.rel (%p128) target = $region24
      $region23: #{my_decoder.13} parent=5 // pred_region
        // Predicated region
        $region25: #{my_decoder.13} parent=23 // pred_check
          %p131 = pneg %p32
        $region26: #{my_decoder.13} parent=23 // pred_check_branch
          %133 = sbr.rel (%p131) target = $region28
        $region27: #{my_decoder.13} parent=23 // pred_region
          %p134 = scmp.lt.s32.totalorder %s12, 1
          %s135 = scalar_select %p134, %s12, 1
          %s136 = smul.addr %s135, 8
          %s137 = scalar_lea.vmem %s0, %s136
        $region28: #{my_decoder.13} parent=23 // pred_fallthru
          _
      $region24: #{my_decoder.13} parent=5 // pred_fallthru
        _
      %p138 = scmp.le.s32.totalorder 1, %s12
      %p139 = scmp.lt.s32.totalorder %s12, 3
      %p140 = pnand %p138, %p139
      %p141 = pneg %p140
      // Predicated region
      $region29: #{my_decoder.13} parent=5 // pred_check
        _
      $region30: #{my_decoder.13} parent=5 // pred_check_branch
        %143 = sbr.rel (%p140) target = $region32
      $region31: #{my_decoder.13} parent=5 // pred_region
        %s144 = ssub.s32 %s12, 1
        %p145 = scmp.lt.s32.totalorder %s17, 1
        %s146 = scalar_select %p145, %s17, 1
        %s147 = smul.addr %s146, 8
        %s148 = scalar_lea.vmem %s0, %s147
        %p149 = pneg %p38
        %p150 = pneg %p35
        %p151 = pneg %p59
        %p152 = pneg %p56
        %p153 = pneg %p80
        %p154 = pneg %p77
        %p155 = pneg %p106
        %p156 = pneg %p103
        %s157 = sand.u32 %s93, 1
        %s158 = scalar_lea.sflag [#allocation3], %s157
        %s159 = sand.u32 %s93, 1
        %s160 = smul.addr %s159, 8
        %s161 = scalar_lea.vmem [#allocation2], %s160
        %p162 = scmp.lt.s32.totalorder %s17, 1
        %s163 = scalar_select %p162, %s17, 1
        %s164 = smul.addr %s163, 8
        %s165 = scalar_lea.vmem %s0, %s164
        %v166 = vld [vmem:[%s165] sm:$0xff]
        %v167 = vld [vmem:[%s1] sm:$0x1]
        %v168 = vld [vmem:[%s2] sm:$0x1]
        %vm169 = vcmask 261120
        %v170 = vsel %vm169, %v166, 0.0
        %171 = vadd.xlane.f32.xlu0 %v170
        %v172 = vpop.xlane.xlu0 %171
        %v173 = vrcp.pop 32.0
        %v174 = vmul.f32 32.0, %v173
        %v175 = vsub.f32 1.0, %v174
        %v176 = vmul.f32 %v173, %v175
        %v177 = vadd.f32 %v173, %v176
        %vm178 = vweird.f32 %v173
        %v179 = vsel %vm178, %v173, %v177
        %v180 = vmul.f32 %v172, %v179
        %v181 = vsub.f32 %v166, %v180
        %v182 = vmul.f32 %v181, %v181
        %v183 = vsel %vm169, %v182, 0.0
        %184 = vadd.xlane.f32.xlu0 %v183
        %v185 = vpop.xlane.xlu0 %184
        %v186 = vmul.f32 %v185, 0.032258064
        %v187 = vrsqrt.pop %v186
        %v188 = vmul.f32 %v187, %v186
        %v189 = vmul.f32 %v188, %v187
        %v190 = vmul.f32 0.5, %v189
        %v191 = vsub.f32 1.5, %v190
        %v192 = vmul.f32 %v187, %v191
        %v193 = vmul.f32 %v186, %v192
        %vm194 = vcmp.eq.f32.partialorder %v186, inf
        %v195 = vsel %vm194, %v186, %v193
        %vm196 = vcmp.eq.f32.partialorder %v186, 0.0
        %v197 = vand.u32 %v186, 2147483648
        %v198 = vsel %vm196, %v197, %v195
        %v199 = vadd.f32 %v198, 1e-06
        %v200 = vrcp.pop %v199
        %v202 = vperm.slane %v167, 0
        %v204 = vmul.f32 %v202, %v181
        %v205 = vmul.f32 %v204, %v200
        %v207 = vperm.slane %v168, 0
        %v209 = vadd.f32 %v205, %v207
        %210 = vst.msk [vmem:[%s161] sm:$0xff] %vm169, %v209
        %s211 = sand.u32 %s93, 1
        %s212 = scalar_lea.sflag [#allocation3], %s211
        %s213 = sand.u32 %s93, 1
        %s214 = smul.addr %s213, 8
        %s215 = scalar_lea.vmem [#allocation2], %s214
        // Predicated region
        $region33: #{my_decoder.13} parent=31 // pred_check
          %p216 = pneg %p103
        $region34: #{my_decoder.13} parent=31 // pred_check_branch
          %218 = sbr.rel (%p216) target = $region36
        $region35: #{my_decoder.13} parent=31 // pred_region
          %220 = vsyncadd %s212, 0
          %s221 = smul.addr %s17, 8
          %s222 = scalar_lea.hbm %s3, %s221
          %s224 = sshll.u32 %s215, 4
          %s225 = int_to_ptr.vmem [resolvable:$true] %s224
          %s226 = sshll.u32 %s222, 4
          %s227 = int_to_ptr.hbm [resolvable:$true] %s226
          %229 = dma.vmem_to_hbm [thread:$0]  %s225, 128, %s227, %s212
        $region36: #{my_decoder.13} parent=31 // pred_fallthru
          _
      $region32: #{my_decoder.13} parent=5 // pred_fallthru
        _
      %p230 = scmp.le.s32.totalorder 2, %s12
      // Predicated region
      $region37: #{my_decoder.13} parent=5 // pred_check
        %p231 = pneg %p230
      $region38: #{my_decoder.13} parent=5 // pred_check_branch
        %233 = sbr.rel (%p231) target = $region40
      $region39: #{my_decoder.13} parent=5 // pred_region
        %s234 = ssub.s32 %s12, 2
        // Predicated region
        $region41: #{my_decoder.13} parent=39 // pred_check
          %p235 = pneg %p109
        $region42: #{my_decoder.13} parent=39 // pred_check_branch
          %237 = sbr.rel (%p235) target = $region44
        $region43: #{my_decoder.13} parent=39 // pred_region
          %s238 = sand.u32 %s94, 1
          %s239 = scalar_lea.sflag [#allocation3], %s238
          %s240 = sand.u32 %s94, 1
          %s241 = smul.addr %s240, 8
          %s242 = scalar_lea.vmem [#allocation2], %s241
          %244 = dma.done %s239, 128
        $region44: #{my_decoder.13} parent=39 // pred_fallthru
          _
      $region40: #{my_decoder.13} parent=5 // pred_fallthru
        _
    $region6: #{my_decoder.13} parent=1 // loop_footer
      %s16 = sadd.s32 1, %s12
    $region7: #{my_decoder.13} parent=1 // loop_footer_branch
      %11 = sbr.rel target = $region3
    $region8: #{my_decoder.13} parent=1 // loop_exit
      _
    %245 = vsyncpa [#allocation3], 1
    %s246 = scalar_lea.sflag [#allocation3], 1
    %247 = vsyncpa %s246, 1

</llo_original>
